<compile_context>
chip_gen: v5e
topology: v5e:2x2
jax: 0.10.0
libtpu: 0.0.40
codegen_flags: <defaults>
</compile_context>

<pallas_src>
import functools

import jax
import jax.numpy as jnp
from jax.experimental import pallas as pl
from jax.experimental.pallas import tpu as pltpu

_EPS = 1e-5


# ---------------------------------------------------------------------------
# In-kernel helpers.  All activations are flattened 2-D [rows, C] matrices
# with row index p = h*(Ws+2) + w ; the two extra columns per row carry
# harmless garbage that is never read back.  Every matmul is strictly 2-D.
# ---------------------------------------------------------------------------
def _zero_pad_border(pad_ref, Hs, Ws):
    """Zero only the rows that interior stores never touch (border + slack)."""
    Wp = Ws + 2
    C = pad_ref.shape[-1]
    dt = pad_ref.dtype
    # top padding row + left pad column of the first interior row
    pad_ref[0:Wp + 1, :] = jnp.zeros((Wp + 1, C), dt)
    # (right pad of interior row i, left pad of interior row i+1) are adjacent
    for i in range(Hs - 1):
        r = (i + 1) * Wp + Ws + 1
        pad_ref[r:r + 2, :] = jnp.zeros((2, C), dt)
    # right pad of the last interior row + bottom padding + shift slack
    r = Hs * Wp + Ws + 1
    pad_ref[r:pad_ref.shape[0], :] = jnp.zeros((pad_ref.shape[0] - r, C), dt)


def _conv3x3_from_pad(pad_ref, w_ref, b_ref, Hs, Ws):
    """3x3 'same' conv (+ folded BN + ReLU) from a zero-bordered buffer.

    pad_ref : [(Hs+3)*(Ws+2), Cin] bf16; input pixel (h, w) lives at row
              (h+1)*(Ws+2) + (w+1); all other rows read below are zero.
    w_ref   : [9, Cin, Cout] bf16, tap index t = 3*ky + kx (BN scale folded).
    b_ref   : [1, Cout]  f32 (conv bias + BN shift folded).
    returns : [Hs*(Ws+2), Cout] f32; rows h*(Ws+2)+w are valid for w < Ws.
    """
    Wp = Ws + 2
    M = Hs * Wp
    acc = None
    for ky in range(3):
        for kx in range(3):
            t = 3 * ky + kx
            shift = ky * Wp + kx                       # contiguous row window
            part = jnp.dot(pad_ref[shift:shift + M, :], w_ref[t],
                           preferred_element_type=jnp.float32)
            acc = part if acc is None else acc + part
    return jnp.maximum(acc + b_ref[...], 0.0)


def _maxpool2_into_pad(src_ref, dst_ref, Hs, Ws):
    """2x2 stride-2 max pool of a conv output, stored into the next pad buffer.

    src_ref : [Hs*(Ws+2), C] f32 conv output (columns >= Ws are garbage).
    dst_ref : [(Hs//2+3)*(Ws//2+2), C] bf16; only interior rows are written.
    """
    Wp = Ws + 2
    Wq = Ws // 2
    Wp_n = Wq + 2
    for i in range(Hs // 2):
        r0 = (2 * i) * Wp
        r1 = (2 * i + 1) * Wp
        a = jnp.maximum(src_ref[pl.ds(r0, Wq, stride=2), :],
                        src_ref[pl.ds(r0 + 1, Wq, stride=2), :])
        b = jnp.maximum(src_ref[pl.ds(r1, Wq, stride=2), :],
                        src_ref[pl.ds(r1 + 1, Wq, stride=2), :])
        d0 = (i + 1) * Wp_n + 1
        dst_ref[d0:d0 + Wq, :] = jnp.maximum(a, b).astype(dst_ref.dtype)


def _fused_kernel(*refs, has_motion, H, W, Bt):
    if has_motion:
        (col_ref, mot_ref, w1, b1, w2, b2, w3, b3, w4, b4, pw, pb,
         m1w, m1b, m2w, m2b, o_ref,
         act1, act2, act3, pad2, pad3, pad4, feat_s) = refs
    else:
        (col_ref, w1, b1, w2, b2, w3, b3, w4, b4, pw, pb, o_ref,
         act1, act2, act3, pad2, pad3, pad4, feat_s) = refs

    # Padding / slack rows are never data-written, so only they need zeroing.
    _zero_pad_border(pad2, H // 2, W // 2)
    _zero_pad_border(pad3, H // 4, W // 4)
    _zero_pad_border(pad4, H // 8, W // 8)

    H4, W4 = H // 8, W // 8
    Wp4 = W4 + 2

    for bi in range(Bt):
        # ---- layer 1: host-side im2col -> one K=32 matmul -----------------
        y = jnp.dot(col_ref[0, bi], w1[...], preferred_element_type=jnp.float32)
        act1[...] = jnp.maximum(y + b1[...], 0.0)            # [H*(W+2), 32]
        _maxpool2_into_pad(act1, pad2, H, W)

        # ---- layers 2..4 ---------------------------------------------------
        act2[...] = _conv3x3_from_pad(pad2, w2, b2, H // 2, W // 2)
        _maxpool2_into_pad(act2, pad3, H // 2, W // 2)

        act3[...] = _conv3x3_from_pad(pad3, w3, b3, H // 4, W // 4)
        _maxpool2_into_pad(act3, pad4, H // 4, W // 4)

        y4 = _conv3x3_from_pad(pad4, w4, b4, H4, W4)          # [H4*Wp4, 256]

        # AdaptiveAvgPool2d((1,1)) over the valid pixels only
        acc = jnp.zeros((1, y4.shape[-1]), jnp.float32)
        for h in range(H4):
            acc = acc + jnp.sum(y4[h * Wp4:h * Wp4 + W4, :],
                                axis=0, keepdims=True)
        feat_s[bi:bi + 1, :] = acc * (1.0 / (H4 * W4))

    # ---- projector (+ folded BatchNorm1d), whole sub-batch (M = Bt) --------
    f = jnp.dot(feat_s[...].astype(jnp.bfloat16), pw[...],
                preferred_element_type=jnp.float32) + pb[...]      # [Bt, feat]

    # ---- motion embedding ---------------------------------------------------
    if has_motion:
        m = mot_ref[0].astype(jnp.bfloat16)                        # [Bt, 6]
        h1 = jnp.maximum(
            jnp.dot(m, m1w[...], preferred_element_type=jnp.float32) + m1b[...],
            0.0)
        mf = jnp.dot(h1.astype(jnp.bfloat16), m2w[...],
                     preferred_element_type=jnp.float32) + m2b[...]
        f = f + 0.2 * mf

    # ---- F.normalize(p=2, dim=1) via rsqrt (EUP slot) ----------------------
    inv = jax.lax.rsqrt(jnp.maximum(jnp.sum(f * f, axis=1, keepdims=True),
                                    1e-24))
    o_ref[0] = (f * inv).astype(o_ref.dtype)


# ---------------------------------------------------------------------------
# Host-side parameter folding (BN eval mode) and layer-1 im2col.
# ---------------------------------------------------------------------------
def _fold_conv_bn(w, b, gamma, beta, rmean, rvar):
    scale = gamma / jnp.sqrt(rvar + _EPS)
    wf = w * scale[None, None, None, :]                    # HWIO scaled
    bf = ((b - rmean) * scale + beta).reshape(1, -1).astype(jnp.float32)
    return wf, bf


def _fold_linear_bn(w, b, gamma, beta, rmean, rvar):
    scale = gamma / jnp.sqrt(rvar + _EPS)
    wf = (w * scale[None, :]).astype(jnp.bfloat16)
    bf = ((b - rmean) * scale + beta).reshape(1, -1).astype(jnp.float32)
    return wf, bf


def _build_col1(x_nhwc):
    """Host-side (XLA) im2col for the Cin=3 first conv: [B, H*(W+2), 32] bf16."""
    B, H, W, _ = x_nhwc.shape
    xp = jnp.pad(x_nhwc, ((0, 0), (1, 1), (1, 1), (0, 0)))
    taps = [xp[:, ky:ky + H, kx:kx + W, :] for ky in range(3) for kx in range(3)]
    col = jnp.concatenate(taps, axis=-1)                   # [B, H, W, 27]
    col = jnp.pad(col, ((0, 0), (0, 0), (0, 2), (0, 5)))   # [B, H, W+2, 32]
    return col.reshape(B, H * (W + 2), 32).astype(jnp.bfloat16)


def _const_spec(arr):
    nd = arr.ndim
    return pl.BlockSpec(arr.shape, lambda g, _nd=nd: (0,) * _nd)


def _pick_block_b(B):
    # Largest sub-batch (<=8) that still leaves >=2 grid steps for pipelining.
    for bt in (8, 4, 2):
        if B % bt == 0 and B // bt >= 2:
            return bt
    return 1


def _vmem_limit_bytes(H, W, Bt, feat, has_motion):
    bf, f4 = 2, 4
    Wp1, Wp2, Wp3, Wp4 = W + 2, W // 2 + 2, W // 4 + 2, W // 8 + 2
    col_blk = Bt * H * Wp1 * 32 * bf
    out_blk = Bt * feat * f4
    acts = (H * Wp1 * 32 + (H // 2) * Wp2 * 64 + (H // 4) * Wp3 * 128) * f4
    pads = ((H // 2 + 3) * Wp2 * 32 + (H // 4 + 3) * Wp3 * 64
            + (H // 8 + 3) * Wp4 * 128) * bf
    wgts = (32 * 32 + 9 * 32 * 64 + 9 * 64 * 128 + 9 * 128 * 256
            + 256 * feat) * bf + (32 + 64 + 128 + 256 + feat) * f4
    if has_motion:
        wgts += (6 * 32 + 32 * feat) * bf + (32 + feat) * f4 + 2 * Bt * 6 * f4
    need = 2 * (col_blk + out_blk) + acts + pads + wgts + Bt * 256 * f4
    return int(min(64 * 2 ** 20, max(32 * 2 ** 20, 2 * need + (4 << 20))))


# ---------------------------------------------------------------------------
# Full forward pass (single fused pallas_call).
# ---------------------------------------------------------------------------
def shuttlecock_forward(params, images_nchw, motion_info=None):
    x = jnp.transpose(images_nchw, (0, 2, 3, 1)).astype(jnp.float32)  # -> NHWC
    B, H, W, Cin = x.shape
    assert Cin == 3 and H % 8 == 0 and W % 8 == 0

    w1, b1 = _fold_conv_bn(params["w1"], params["b1"], params["g1"],
                           params["be1"], params["rm1"], params["rv1"])
    w1 = jnp.pad(w1.reshape(27, 32), ((0, 5), (0, 0))).astype(jnp.bfloat16)
    w2, b2 = _fold_conv_bn(params["w2"], params["b2"], params["g2"],
                           params["be2"], params["rm2"], params["rv2"])
    w2 = w2.reshape(9, 32, 64).astype(jnp.bfloat16)
    w3, b3 = _fold_conv_bn(params["w3"], params["b3"], params["g3"],
                           params["be3"], params["rm3"], params["rv3"])
    w3 = w3.reshape(9, 64, 128).astype(jnp.bfloat16)
    w4, b4 = _fold_conv_bn(params["w4"], params["b4"], params["g4"],
                           params["be4"], params["rm4"], params["rv4"])
    w4 = w4.reshape(9, 128, 256).astype(jnp.bfloat16)
    pw, pb = _fold_linear_bn(params["proj_w"], params["proj_b"],
                             params["proj_gamma"], params["proj_beta"],
                             params["proj_rm"], params["proj_rv"])
    feat = pw.shape[-1]
    has_motion = motion_info is not None

    Bt = _pick_block_b(B)
    G = B // Bt

    col1 = _build_col1(x).reshape(G, Bt, H * (W + 2), 32)

    in_specs = [pl.BlockSpec((1, Bt, H * (W + 2), 32), lambda g: (g, 0, 0, 0))]
    args = [col1]
    if has_motion:
        mot = motion_info.astype(jnp.float32).reshape(G, Bt, 6)
        in_specs.append(pl.BlockSpec((1, Bt, 6), lambda g: (g, 0, 0)))
        args.append(mot)

    weights = [w1, b1, w2, b2, w3, b3, w4, b4, pw, pb]
    if has_motion:
        weights += [params["m1_w"].astype(jnp.bfloat16),
                    params["m1_b"].reshape(1, -1).astype(jnp.float32),
                    params["m2_w"].astype(jnp.bfloat16),
                    params["m2_b"].reshape(1, -1).astype(jnp.float32)]
    for wgt in weights:                       # constant index maps -> one DMA
        in_specs.append(_const_spec(wgt))
        args.append(wgt)

    H2, W2, H3, W3, H4, W4 = H // 2, W // 2, H // 4, W // 4, H // 8, W // 8
    scratch = [
        pltpu.VMEM((H * (W + 2), 32), jnp.float32),             # act1
        pltpu.VMEM((H2 * (W2 + 2), 64), jnp.float32),           # act2
        pltpu.VMEM((H3 * (W3 + 2), 128), jnp.float32),          # act3
        pltpu.VMEM(((H2 + 3) * (W2 + 2), 32), jnp.bfloat16),    # pad2
        pltpu.VMEM(((H3 + 3) * (W3 + 2), 64), jnp.bfloat16),    # pad3
        pltpu.VMEM(((H4 + 3) * (W4 + 2), 128), jnp.bfloat16),   # pad4
        pltpu.VMEM((Bt, 256), jnp.float32),                     # backbone feats
    ]

    kernel = functools.partial(_fused_kernel, has_motion=has_motion,
                               H=H, W=W, Bt=Bt)
    out = pl.pallas_call(
        kernel,
        out_shape=jax.ShapeDtypeStruct((G, Bt, feat), jnp.float32),
        grid=(G,),
        in_specs=in_specs,
        out_specs=pl.BlockSpec((1, Bt, feat), lambda g: (g, 0, 0)),
        scratch_shapes=scratch,
        compiler_params=pltpu.CompilerParams(
            dimension_semantics=("parallel",),
            vmem_limit_bytes=_vmem_limit_bytes(H, W, Bt, feat, has_motion)),
    )(*args)
    return out.reshape(B, feat)


# ---------------------------------------------------------------------------
# Pure-JAX reference (eval-mode BN), parameter init, and self-test.
# ---------------------------------------------------------------------------
def _reference_forward(params, images_nchw, motion_info=None):
    x = jnp.transpose(images_nchw, (0, 2, 3, 1)).astype(jnp.float32)
    for i in (1, 2, 3, 4):
        y = jax.lax.conv_general_dilated(
            x, params[f"w{i}"], window_strides=(1, 1), padding="SAME",
            dimension_numbers=("NHWC", "HWIO", "NHWC")) + params[f"b{i}"]
        scale = params[f"g{i}"] / jnp.sqrt(params[f"rv{i}"] + _EPS)
        y = (y - params[f"rm{i}"]) * scale + params[f"be{i}"]
        y = jnp.maximum(y, 0.0)
        if i < 4:
            y = jax.lax.reduce_window(y, -jnp.inf, jax.lax.max,
                                      (1, 2, 2, 1), (1, 2, 2, 1), "VALID")
        else:
            y = jnp.mean(y, axis=(1, 2))
        x = y
    f = x @ params["proj_w"] + params["proj_b"]
    scale = params["proj_gamma"] / jnp.sqrt(params["proj_rv"] + _EPS)
    f = (f - params["proj_rm"]) * scale + params["proj_beta"]
    if motion_info is not None:
        h = jnp.maximum(motion_info @ params["m1_w"] + params["m1_b"], 0.0)
        f = f + 0.2 * (h @ params["m2_w"] + params["m2_b"])
    return f / jnp.maximum(jnp.linalg.norm(f, axis=1, keepdims=True), 1e-12)


def init_params(key, feature_dim=128):
    ks = jax.random.split(key, 24)
    n = lambda k, s, sc=0.05: jax.random.normal(k, s, jnp.float32) * sc
    p = {}
    chans = [(3, 32), (32, 64), (64, 128), (128, 256)]
    for i, (cin, cout) in enumerate(chans, start=1):
        j = 4 * (i - 1)
        p[f"w{i}"] = n(ks[j + 0], (3, 3, cin, cout))     # HWIO
        p[f"b{i}"] = n(ks[j + 1], (cout,))
        p[f"g{i}"] = 1.0 + n(ks[j + 2], (cout,))
        p[f"be{i}"] = n(ks[j + 3], (cout,))
        p[f"rm{i}"] = jnp.zeros((cout,), jnp.float32)    # BN running stats
        p[f"rv{i}"] = jnp.ones((cout,), jnp.float32)
    p.update({
        "proj_w": n(ks[16], (256, feature_dim)),
        "proj_b": n(ks[17], (feature_dim,)),
        "proj_gamma": 1.0 + n(ks[18], (feature_dim,)),
        "proj_beta": n(ks[19], (feature_dim,)),
        "proj_rm": jnp.zeros((feature_dim,), jnp.float32),
        "proj_rv": jnp.ones((feature_dim,), jnp.float32),
        "m1_w": n(ks[20], (6, 32)), "m1_b": n(ks[21], (32,)),
        "m2_w": n(ks[22], (32, feature_dim)), "m2_b": n(ks[23], (feature_dim,)),
    })
    return p


if __name__ == "__main__":
    key = jax.random.PRNGKey(0)
    k_img, k_motion, k_param = jax.random.split(key, 3)

    B, C, H, W = 4, 3, 16, 16          # small, divisible by 8 for the 3 pools
    feature_dim = 128

    images = jax.random.uniform(k_img, (B, C, H, W), jnp.float32)  # NCHW
    motion = jax.random.normal(k_motion, (B, 6), jnp.float32)
    params = init_params(k_param, feature_dim)

    fwd = jax.jit(shuttlecock_forward)

    feats = jax.block_until_ready(fwd(params, images, motion))
    assert feats.shape == (B, feature_dim)
    norms = jnp.linalg.norm(feats, axis=1)
    assert bool(jnp.all(jnp.abs(norms - 1.0) < 1e-3))
    ref = _reference_forward(params, images, motion)
    assert float(jnp.max(jnp.abs(feats - ref))) < 5e-2              # bf16 tol

    feats_nm = jax.block_until_ready(fwd(params, images, None))
    assert feats_nm.shape == (B, feature_dim)
    ref_nm = _reference_forward(params, images, None)
    assert float(jnp.max(jnp.abs(feats_nm - ref_nm))) < 5e-2

    print("KERNEL_OK")
</pallas_src>

<mosaic_0001>
module attributes {stable_mosaic.version = 11 : i64} {
  func.func @_fused_kernel(%arg0: i32, %arg1: memref<1x2x288x32xbf16, #tpu.memory_space<vmem>>, %arg2: memref<1x2x6xf32, #tpu.memory_space<vmem>>, %arg3: memref<32x32xbf16, #tpu.memory_space<vmem>>, %arg4: memref<1x32xf32, #tpu.memory_space<vmem>>, %arg5: memref<9x32x64xbf16, #tpu.memory_space<vmem>>, %arg6: memref<1x64xf32, #tpu.memory_space<vmem>>, %arg7: memref<9x64x128xbf16, #tpu.memory_space<vmem>>, %arg8: memref<1x128xf32, #tpu.memory_space<vmem>>, %arg9: memref<9x128x256xbf16, #tpu.memory_space<vmem>>, %arg10: memref<1x256xf32, #tpu.memory_space<vmem>>, %arg11: memref<256x128xbf16, #tpu.memory_space<vmem>>, %arg12: memref<1x128xf32, #tpu.memory_space<vmem>>, %arg13: memref<6x32xbf16, #tpu.memory_space<vmem>>, %arg14: memref<1x32xf32, #tpu.memory_space<vmem>>, %arg15: memref<32x128xbf16, #tpu.memory_space<vmem>>, %arg16: memref<1x128xf32, #tpu.memory_space<vmem>>, %arg17: memref<1x2x128xf32, #tpu.memory_space<vmem>>, %arg18: memref<288x32xf32, #tpu.memory_space<vmem>>, %arg19: memref<80x64xf32, #tpu.memory_space<vmem>>, %arg20: memref<24x128xf32, #tpu.memory_space<vmem>>, %arg21: memref<110x32xbf16, #tpu.memory_space<vmem>>, %arg22: memref<42x64xbf16, #tpu.memory_space<vmem>>, %arg23: memref<20x128xbf16, #tpu.memory_space<vmem>>, %arg24: memref<2x256xf32, #tpu.memory_space<vmem>>) attributes {dimension_semantics = [#tpu.dimension_semantics<parallel>], iteration_bounds = array<i64: 2>, scalar_prefetch = 0 : i64, scratch_operands = 7 : i64, tpu.core_type = #tpu.core_type<tc>, window_params = [{transform_indices = @transform_0, window_bounds = array<i64: 1, 2, 288, 32>}, {transform_indices = @transform_1, window_bounds = array<i64: 1, 2, 6>}, {pipeline_mode = #tpu.pipeline_mode<synchronous>, transform_indices = @transform_2, window_bounds = array<i64: 32, 32>}, {pipeline_mode = #tpu.pipeline_mode<synchronous>, transform_indices = @transform_3, window_bounds = array<i64: 1, 32>}, {pipeline_mode = #tpu.pipeline_mode<synchronous>, transform_indices = @transform_4, window_bounds = array<i64: 9, 32, 64>}, {pipeline_mode = #tpu.pipeline_mode<synchronous>, transform_indices = @transform_5, window_bounds = array<i64: 1, 64>}, {pipeline_mode = #tpu.pipeline_mode<synchronous>, transform_indices = @transform_6, window_bounds = array<i64: 9, 64, 128>}, {pipeline_mode = #tpu.pipeline_mode<synchronous>, transform_indices = @transform_7, window_bounds = array<i64: 1, 128>}, {pipeline_mode = #tpu.pipeline_mode<synchronous>, transform_indices = @transform_8, window_bounds = array<i64: 9, 128, 256>}, {pipeline_mode = #tpu.pipeline_mode<synchronous>, transform_indices = @transform_9, window_bounds = array<i64: 1, 256>}, {pipeline_mode = #tpu.pipeline_mode<synchronous>, transform_indices = @transform_10, window_bounds = array<i64: 256, 128>}, {pipeline_mode = #tpu.pipeline_mode<synchronous>, transform_indices = @transform_11, window_bounds = array<i64: 1, 128>}, {pipeline_mode = #tpu.pipeline_mode<synchronous>, transform_indices = @transform_12, window_bounds = array<i64: 6, 32>}, {pipeline_mode = #tpu.pipeline_mode<synchronous>, transform_indices = @transform_13, window_bounds = array<i64: 1, 32>}, {pipeline_mode = #tpu.pipeline_mode<synchronous>, transform_indices = @transform_14, window_bounds = array<i64: 32, 128>}, {pipeline_mode = #tpu.pipeline_mode<synchronous>, transform_indices = @transform_15, window_bounds = array<i64: 1, 128>}, {transform_indices = @transform_16, window_bounds = array<i64: 1, 2, 128>}]} {
    %cst = arith.constant 0.000000e+00 : bf16
    %0 = vector.broadcast %cst : bf16 to vector<11x32xbf16>
    %c0 = arith.constant 0 : index
    %c0_0 = arith.constant 0 : index
    %1 = vector.load %arg21[%c0, %c0_0] : memref<110x32xbf16, #tpu.memory_space<vmem>>, vector<11x32xbf16>
    tpu.vector_store %arg21[%c0, %c0_0], %0 {strides = array<i32>} : memref<110x32xbf16, #tpu.memory_space<vmem>>, vector<11x32xbf16>,
    %cst_1 = arith.constant 0.000000e+00 : bf16
    %2 = vector.broadcast %cst_1 : bf16 to vector<2x32xbf16>
    %c19 = arith.constant 19 : index
    %c0_2 = arith.constant 0 : index
    %3 = vector.load %arg21[%c19, %c0_2] : memref<110x32xbf16, #tpu.memory_space<vmem>>, vector<2x32xbf16>
    tpu.vector_store %arg21[%c19, %c0_2], %2 {strides = array<i32>} : memref<110x32xbf16, #tpu.memory_space<vmem>>, vector<2x32xbf16>,
    %cst_3 = arith.constant 0.000000e+00 : bf16
    %4 = vector.broadcast %cst_3 : bf16 to vector<2x32xbf16>
    %c29 = arith.constant 29 : index
    %c0_4 = arith.constant 0 : index
    %5 = vector.load %arg21[%c29, %c0_4] : memref<110x32xbf16, #tpu.memory_space<vmem>>, vector<2x32xbf16>
    tpu.vector_store %arg21[%c29, %c0_4], %4 {strides = array<i32>} : memref<110x32xbf16, #tpu.memory_space<vmem>>, vector<2x32xbf16>,
    %cst_5 = arith.constant 0.000000e+00 : bf16
    %6 = vector.broadcast %cst_5 : bf16 to vector<2x32xbf16>
    %c39 = arith.constant 39 : index
    %c0_6 = arith.constant 0 : index
    %7 = vector.load %arg21[%c39, %c0_6] : memref<110x32xbf16, #tpu.memory_space<vmem>>, vector<2x32xbf16>
    tpu.vector_store %arg21[%c39, %c0_6], %6 {strides = array<i32>} : memref<110x32xbf16, #tpu.memory_space<vmem>>, vector<2x32xbf16>,
    %cst_7 = arith.constant 0.000000e+00 : bf16
    %8 = vector.broadcast %cst_7 : bf16 to vector<2x32xbf16>
    %c49 = arith.constant 49 : index
    %c0_8 = arith.constant 0 : index
    %9 = vector.load %arg21[%c49, %c0_8] : memref<110x32xbf16, #tpu.memory_space<vmem>>, vector<2x32xbf16>
    tpu.vector_store %arg21[%c49, %c0_8], %8 {strides = array<i32>} : memref<110x32xbf16, #tpu.memory_space<vmem>>, vector<2x32xbf16>,
    %cst_9 = arith.constant 0.000000e+00 : bf16
    %10 = vector.broadcast %cst_9 : bf16 to vector<2x32xbf16>
    %c59 = arith.constant 59 : index
    %c0_10 = arith.constant 0 : index
    %11 = vector.load %arg21[%c59, %c0_10] : memref<110x32xbf16, #tpu.memory_space<vmem>>, vector<2x32xbf16>
    tpu.vector_store %arg21[%c59, %c0_10], %10 {strides = array<i32>} : memref<110x32xbf16, #tpu.memory_space<vmem>>, vector<2x32xbf16>,
    %cst_11 = arith.constant 0.000000e+00 : bf16
    %12 = vector.broadcast %cst_11 : bf16 to vector<2x32xbf16>
    %c69 = arith.constant 69 : index
    %c0_12 = arith.constant 0 : index
    %13 = vector.load %arg21[%c69, %c0_12] : memref<110x32xbf16, #tpu.memory_space<vmem>>, vector<2x32xbf16>
    tpu.vector_store %arg21[%c69, %c0_12], %12 {strides = array<i32>} : memref<110x32xbf16, #tpu.memory_space<vmem>>, vector<2x32xbf16>,
    %cst_13 = arith.constant 0.000000e+00 : bf16
    %14 = vector.broadcast %cst_13 : bf16 to vector<2x32xbf16>
    %c79 = arith.constant 79 : index
    %c0_14 = arith.constant 0 : index
    %15 = vector.load %arg21[%c79, %c0_14] : memref<110x32xbf16, #tpu.memory_space<vmem>>, vector<2x32xbf16>
    tpu.vector_store %arg21[%c79, %c0_14], %14 {strides = array<i32>} : memref<110x32xbf16, #tpu.memory_space<vmem>>, vector<2x32xbf16>,
    %cst_15 = arith.constant 0.000000e+00 : bf16
    %16 = vector.broadcast %cst_15 : bf16 to vector<21x32xbf16>
    %c89 = arith.constant 89 : index
    %c0_16 = arith.constant 0 : index
    %17 = vector.load %arg21[%c89, %c0_16] : memref<110x32xbf16, #tpu.memory_space<vmem>>, vector<21x32xbf16>
    tpu.vector_store %arg21[%c89, %c0_16], %16 {strides = array<i32>} : memref<110x32xbf16, #tpu.memory_space<vmem>>, vector<21x32xbf16>,
    %cst_17 = arith.constant 0.000000e+00 : bf16
    %18 = vector.broadcast %cst_17 : bf16 to vector<7x64xbf16>
    %c0_18 = arith.constant 0 : index
    %c0_19 = arith.constant 0 : index
    %19 = vector.load %arg22[%c0_18, %c0_19] : memref<42x64xbf16, #tpu.memory_space<vmem>>, vector<7x64xbf16>
    tpu.vector_store %arg22[%c0_18, %c0_19], %18 {strides = array<i32>} : memref<42x64xbf16, #tpu.memory_space<vmem>>, vector<7x64xbf16>,
    %cst_20 = arith.constant 0.000000e+00 : bf16
    %20 = vector.broadcast %cst_20 : bf16 to vector<2x64xbf16>
    %c11 = arith.constant 11 : index
    %c0_21 = arith.constant 0 : index
    %21 = vector.load %arg22[%c11, %c0_21] : memref<42x64xbf16, #tpu.memory_space<vmem>>, vector<2x64xbf16>
    tpu.vector_store %arg22[%c11, %c0_21], %20 {strides = array<i32>} : memref<42x64xbf16, #tpu.memory_space<vmem>>, vector<2x64xbf16>,
    %cst_22 = arith.constant 0.000000e+00 : bf16
    %22 = vector.broadcast %cst_22 : bf16 to vector<2x64xbf16>
    %c17 = arith.constant 17 : index
    %c0_23 = arith.constant 0 : index
    %23 = vector.load %arg22[%c17, %c0_23] : memref<42x64xbf16, #tpu.memory_space<vmem>>, vector<2x64xbf16>
    tpu.vector_store %arg22[%c17, %c0_23], %22 {strides = array<i32>} : memref<42x64xbf16, #tpu.memory_space<vmem>>, vector<2x64xbf16>,
    %cst_24 = arith.constant 0.000000e+00 : bf16
    %24 = vector.broadcast %cst_24 : bf16 to vector<2x64xbf16>
    %c23 = arith.constant 23 : index
    %c0_25 = arith.constant 0 : index
    %25 = vector.load %arg22[%c23, %c0_25] : memref<42x64xbf16, #tpu.memory_space<vmem>>, vector<2x64xbf16>
    tpu.vector_store %arg22[%c23, %c0_25], %24 {strides = array<i32>} : memref<42x64xbf16, #tpu.memory_space<vmem>>, vector<2x64xbf16>,
    %cst_26 = arith.constant 0.000000e+00 : bf16
    %26 = vector.broadcast %cst_26 : bf16 to vector<13x64xbf16>
    %c29_27 = arith.constant 29 : index
    %c0_28 = arith.constant 0 : index
    %27 = vector.load %arg22[%c29_27, %c0_28] : memref<42x64xbf16, #tpu.memory_space<vmem>>, vector<13x64xbf16>
    tpu.vector_store %arg22[%c29_27, %c0_28], %26 {strides = array<i32>} : memref<42x64xbf16, #tpu.memory_space<vmem>>, vector<13x64xbf16>,
    %cst_29 = arith.constant 0.000000e+00 : bf16
    %28 = vector.broadcast %cst_29 : bf16 to vector<5x128xbf16>
    %c0_30 = arith.constant 0 : index
    %c0_31 = arith.constant 0 : index
    %29 = vector.load %arg23[%c0_30, %c0_31] : memref<20x128xbf16, #tpu.memory_space<vmem>>, vector<5x128xbf16>
    tpu.vector_store %arg23[%c0_30, %c0_31], %28 {strides = array<i32>} : memref<20x128xbf16, #tpu.memory_space<vmem>>, vector<5x128xbf16>,
    %cst_32 = arith.constant 0.000000e+00 : bf16
    %30 = vector.broadcast %cst_32 : bf16 to vector<2x128xbf16>
    %c7 = arith.constant 7 : index
    %c0_33 = arith.constant 0 : index
    %31 = vector.load %arg23[%c7, %c0_33] : memref<20x128xbf16, #tpu.memory_space<vmem>>, vector<2x128xbf16>
    tpu.vector_store %arg23[%c7, %c0_33], %30 {strides = array<i32>} : memref<20x128xbf16, #tpu.memory_space<vmem>>, vector<2x128xbf16>,
    %cst_34 = arith.constant 0.000000e+00 : bf16
    %32 = vector.broadcast %cst_34 : bf16 to vector<9x128xbf16>
    %c11_35 = arith.constant 11 : index
    %c0_36 = arith.constant 0 : index
    %33 = vector.load %arg23[%c11_35, %c0_36] : memref<20x128xbf16, #tpu.memory_space<vmem>>, vector<9x128xbf16>
    tpu.vector_store %arg23[%c11_35, %c0_36], %32 {strides = array<i32>} : memref<20x128xbf16, #tpu.memory_space<vmem>>, vector<9x128xbf16>,
    %c0_37 = arith.constant 0 : index
    %c0_38 = arith.constant 0 : index
    %c0_39 = arith.constant 0 : index
    %c0_40 = arith.constant 0 : index
    %34 = vector.load %arg1[%c0_37, %c0_38, %c0_39, %c0_40] : memref<1x2x288x32xbf16, #tpu.memory_space<vmem>>, vector<1x1x288x32xbf16>
    %35 = vector.shape_cast %34 : vector<1x1x288x32xbf16> to vector<288x32xbf16>
    %c0_41 = arith.constant 0 : index
    %c0_42 = arith.constant 0 : index
    %36 = vector.load %arg3[%c0_41, %c0_42] : memref<32x32xbf16, #tpu.memory_space<vmem>>, vector<32x32xbf16>
    %cst_43 = arith.constant dense<0.000000e+00> : vector<288x32xf32>
    %37 = tpu.matmul %35, %36, %cst_43 {dimension_numbers = #tpu.dot_dimension_numbers<[1], [0], [0], [1], [0, 0, 1, 1], [], []>} : vector<288x32xbf16>, vector<32x32xbf16>, vector<288x32xf32> -> vector<288x32xf32>
    %c0_44 = arith.constant 0 : index
    %c0_45 = arith.constant 0 : index
    %38 = vector.load %arg4[%c0_44, %c0_45] : memref<1x32xf32, #tpu.memory_space<vmem>>, vector<1x32xf32>
    %39 = vector.broadcast %38 : vector<1x32xf32> to vector<288x32xf32>
    %40 = arith.addf %37, %39 : vector<288x32xf32>
    %cst_46 = arith.constant 0.000000e+00 : f32
    %41 = vector.broadcast %cst_46 : f32 to vector<288x32xf32>
    %42 = arith.maximumf %40, %41 : vector<288x32xf32>
    %c0_47 = arith.constant 0 : index
    %c0_48 = arith.constant 0 : index
    %43 = vector.load %arg18[%c0_47, %c0_48] : memref<288x32xf32, #tpu.memory_space<vmem>>, vector<288x32xf32>
    tpu.vector_store %arg18[%c0_47, %c0_48], %42 {strides = array<i32>} : memref<288x32xf32, #tpu.memory_space<vmem>>, vector<288x32xf32>,
    %c0_49 = arith.constant 0 : index
    %c0_50 = arith.constant 0 : index
    %44 = tpu.strided_load %arg18[%c0_49, %c0_50] {strides = array<i32: 2, 1>} : memref<288x32xf32, #tpu.memory_space<vmem>>, vector<8x32xf32>
    %c1 = arith.constant 1 : index
    %c0_51 = arith.constant 0 : index
    %45 = tpu.strided_load %arg18[%c1, %c0_51] {strides = array<i32: 2, 1>} : memref<288x32xf32, #tpu.memory_space<vmem>>, vector<8x32xf32>
    %46 = arith.maximumf %44, %45 : vector<8x32xf32>
    %c18 = arith.constant 18 : index
    %c0_52 = arith.constant 0 : index
    %47 = tpu.strided_load %arg18[%c18, %c0_52] {strides = array<i32: 2, 1>} : memref<288x32xf32, #tpu.memory_space<vmem>>, vector<8x32xf32>
    %c19_53 = arith.constant 19 : index
    %c0_54 = arith.constant 0 : index
    %48 = tpu.strided_load %arg18[%c19_53, %c0_54] {strides = array<i32: 2, 1>} : memref<288x32xf32, #tpu.memory_space<vmem>>, vector<8x32xf32>
    %49 = arith.maximumf %47, %48 : vector<8x32xf32>
    %50 = arith.maximumf %46, %49 : vector<8x32xf32>
    %51 = arith.truncf %50 : vector<8x32xf32> to vector<8x32xbf16>
    %c11_55 = arith.constant 11 : index
    %c0_56 = arith.constant 0 : index
    %52 = vector.load %arg21[%c11_55, %c0_56] : memref<110x32xbf16, #tpu.memory_space<vmem>>, vector<8x32xbf16>
    tpu.vector_store %arg21[%c11_55, %c0_56], %51 {strides = array<i32>} : memref<110x32xbf16, #tpu.memory_space<vmem>>, vector<8x32xbf16>,
    %c36 = arith.constant 36 : index
    %c0_57 = arith.constant 0 : index
    %53 = tpu.strided_load %arg18[%c36, %c0_57] {strides = array<i32: 2, 1>} : memref<288x32xf32, #tpu.memory_space<vmem>>, vector<8x32xf32>
    %c37 = arith.constant 37 : index
    %c0_58 = arith.constant 0 : index
    %54 = tpu.strided_load %arg18[%c37, %c0_58] {strides = array<i32: 2, 1>} : memref<288x32xf32, #tpu.memory_space<vmem>>, vector<8x32xf32>
    %55 = arith.maximumf %53, %54 : vector<8x32xf32>
    %c54 = arith.constant 54 : index
    %c0_59 = arith.constant 0 : index
    %56 = tpu.strided_load %arg18[%c54, %c0_59] {strides = array<i32: 2, 1>} : memref<288x32xf32, #tpu.memory_space<vmem>>, vector<8x32xf32>
    %c55 = arith.constant 55 : index
    %c0_60 = arith.constant 0 : index
    %57 = tpu.strided_load %arg18[%c55, %c0_60] {strides = array<i32: 2, 1>} : memref<288x32xf32, #tpu.memory_space<vmem>>, vector<8x32xf32>
    %58 = arith.maximumf %56, %57 : vector<8x32xf32>
    %59 = arith.maximumf %55, %58 : vector<8x32xf32>
    %60 = arith.truncf %59 : vector<8x32xf32> to vector<8x32xbf16>
    %c21 = arith.constant 21 : index
    %c0_61 = arith.constant 0 : index
    %61 = vector.load %arg21[%c21, %c0_61] : memref<110x32xbf16, #tpu.memory_space<vmem>>, vector<8x32xbf16>
    tpu.vector_store %arg21[%c21, %c0_61], %60 {strides = array<i32>} : memref<110x32xbf16, #tpu.memory_space<vmem>>, vector<8x32xbf16>,
    %c72 = arith.constant 72 : index
    %c0_62 = arith.constant 0 : index
    %62 = tpu.strided_load %arg18[%c72, %c0_62] {strides = array<i32: 2, 1>} : memref<288x32xf32, #tpu.memory_space<vmem>>, vector<8x32xf32>
    %c73 = arith.constant 73 : index
    %c0_63 = arith.constant 0 : index
    %63 = tpu.strided_load %arg18[%c73, %c0_63] {strides = array<i32: 2, 1>} : memref<288x32xf32, #tpu.memory_space<vmem>>, vector<8x32xf32>
    %64 = arith.maximumf %62, %63 : vector<8x32xf32>
    %c90 = arith.constant 90 : index
    %c0_64 = arith.constant 0 : index
    %65 = tpu.strided_load %arg18[%c90, %c0_64] {strides = array<i32: 2, 1>} : memref<288x32xf32, #tpu.memory_space<vmem>>, vector<8x32xf32>
    %c91 = arith.constant 91 : index
    %c0_65 = arith.constant 0 : index
    %66 = tpu.strided_load %arg18[%c91, %c0_65] {strides = array<i32: 2, 1>} : memref<288x32xf32, #tpu.memory_space<vmem>>, vector<8x32xf32>
    %67 = arith.maximumf %65, %66 : vector<8x32xf32>
    %68 = arith.maximumf %64, %67 : vector<8x32xf32>
    %69 = arith.truncf %68 : vector<8x32xf32> to vector<8x32xbf16>
    %c31 = arith.constant 31 : index
    %c0_66 = arith.constant 0 : index
    %70 = vector.load %arg21[%c31, %c0_66] : memref<110x32xbf16, #tpu.memory_space<vmem>>, vector<8x32xbf16>
    tpu.vector_store %arg21[%c31, %c0_66], %69 {strides = array<i32>} : memref<110x32xbf16, #tpu.memory_space<vmem>>, vector<8x32xbf16>,
    %c108 = arith.constant 108 : index
    %c0_67 = arith.constant 0 : index
    %71 = tpu.strided_load %arg18[%c108, %c0_67] {strides = array<i32: 2, 1>} : memref<288x32xf32, #tpu.memory_space<vmem>>, vector<8x32xf32>
    %c109 = arith.constant 109 : index
    %c0_68 = arith.constant 0 : index
    %72 = tpu.strided_load %arg18[%c109, %c0_68] {strides = array<i32: 2, 1>} : memref<288x32xf32, #tpu.memory_space<vmem>>, vector<8x32xf32>
    %73 = arith.maximumf %71, %72 : vector<8x32xf32>
    %c126 = arith.constant 126 : index
    %c0_69 = arith.constant 0 : index
    %74 = tpu.strided_load %arg18[%c126, %c0_69] {strides = array<i32: 2, 1>} : memref<288x32xf32, #tpu.memory_space<vmem>>, vector<8x32xf32>
    %c127 = arith.constant 127 : index
    %c0_70 = arith.constant 0 : index
    %75 = tpu.strided_load %arg18[%c127, %c0_70] {strides = array<i32: 2, 1>} : memref<288x32xf32, #tpu.memory_space<vmem>>, vector<8x32xf32>
    %76 = arith.maximumf %74, %75 : vector<8x32xf32>
    %77 = arith.maximumf %73, %76 : vector<8x32xf32>
    %78 = arith.truncf %77 : vector<8x32xf32> to vector<8x32xbf16>
    %c41 = arith.constant 41 : index
    %c0_71 = arith.constant 0 : index
    %79 = vector.load %arg21[%c41, %c0_71] : memref<110x32xbf16, #tpu.memory_space<vmem>>, vector<8x32xbf16>
    tpu.vector_store %arg21[%c41, %c0_71], %78 {strides = array<i32>} : memref<110x32xbf16, #tpu.memory_space<vmem>>, vector<8x32xbf16>,
    %c144 = arith.constant 144 : index
    %c0_72 = arith.constant 0 : index
    %80 = tpu.strided_load %arg18[%c144, %c0_72] {strides = array<i32: 2, 1>} : memref<288x32xf32, #tpu.memory_space<vmem>>, vector<8x32xf32>
    %c145 = arith.constant 145 : index
    %c0_73 = arith.constant 0 : index
    %81 = tpu.strided_load %arg18[%c145, %c0_73] {strides = array<i32: 2, 1>} : memref<288x32xf32, #tpu.memory_space<vmem>>, vector<8x32xf32>
    %82 = arith.maximumf %80, %81 : vector<8x32xf32>
    %c162 = arith.constant 162 : index
    %c0_74 = arith.constant 0 : index
    %83 = tpu.strided_load %arg18[%c162, %c0_74] {strides = array<i32: 2, 1>} : memref<288x32xf32, #tpu.memory_space<vmem>>, vector<8x32xf32>
    %c163 = arith.constant 163 : index
    %c0_75 = arith.constant 0 : index
    %84 = tpu.strided_load %arg18[%c163, %c0_75] {strides = array<i32: 2, 1>} : memref<288x32xf32, #tpu.memory_space<vmem>>, vector<8x32xf32>
    %85 = arith.maximumf %83, %84 : vector<8x32xf32>
    %86 = arith.maximumf %82, %85 : vector<8x32xf32>
    %87 = arith.truncf %86 : vector<8x32xf32> to vector<8x32xbf16>
    %c51 = arith.constant 51 : index
    %c0_76 = arith.constant 0 : index
    %88 = vector.load %arg21[%c51, %c0_76] : memref<110x32xbf16, #tpu.memory_space<vmem>>, vector<8x32xbf16>
    tpu.vector_store %arg21[%c51, %c0_76], %87 {strides = array<i32>} : memref<110x32xbf16, #tpu.memory_space<vmem>>, vector<8x32xbf16>,
    %c180 = arith.constant 180 : index
    %c0_77 = arith.constant 0 : index
    %89 = tpu.strided_load %arg18[%c180, %c0_77] {strides = array<i32: 2, 1>} : memref<288x32xf32, #tpu.memory_space<vmem>>, vector<8x32xf32>
    %c181 = arith.constant 181 : index
    %c0_78 = arith.constant 0 : index
    %90 = tpu.strided_load %arg18[%c181, %c0_78] {strides = array<i32: 2, 1>} : memref<288x32xf32, #tpu.memory_space<vmem>>, vector<8x32xf32>
    %91 = arith.maximumf %89, %90 : vector<8x32xf32>
    %c198 = arith.constant 198 : index
    %c0_79 = arith.constant 0 : index
    %92 = tpu.strided_load %arg18[%c198, %c0_79] {strides = array<i32: 2, 1>} : memref<288x32xf32, #tpu.memory_space<vmem>>, vector<8x32xf32>
    %c199 = arith.constant 199 : index
    %c0_80 = arith.constant 0 : index
    %93 = tpu.strided_load %arg18[%c199, %c0_80] {strides = array<i32: 2, 1>} : memref<288x32xf32, #tpu.memory_space<vmem>>, vector<8x32xf32>
    %94 = arith.maximumf %92, %93 : vector<8x32xf32>
    %95 = arith.maximumf %91, %94 : vector<8x32xf32>
    %96 = arith.truncf %95 : vector<8x32xf32> to vector<8x32xbf16>
    %c61 = arith.constant 61 : index
    %c0_81 = arith.constant 0 : index
    %97 = vector.load %arg21[%c61, %c0_81] : memref<110x32xbf16, #tpu.memory_space<vmem>>, vector<8x32xbf16>
    tpu.vector_store %arg21[%c61, %c0_81], %96 {strides = array<i32>} : memref<110x32xbf16, #tpu.memory_space<vmem>>, vector<8x32xbf16>,
    %c216 = arith.constant 216 : index
    %c0_82 = arith.constant 0 : index
    %98 = tpu.strided_load %arg18[%c216, %c0_82] {strides = array<i32: 2, 1>} : memref<288x32xf32, #tpu.memory_space<vmem>>, vector<8x32xf32>
    %c217 = arith.constant 217 : index
    %c0_83 = arith.constant 0 : index
    %99 = tpu.strided_load %arg18[%c217, %c0_83] {strides = array<i32: 2, 1>} : memref<288x32xf32, #tpu.memory_space<vmem>>, vector<8x32xf32>
    %100 = arith.maximumf %98, %99 : vector<8x32xf32>
    %c234 = arith.constant 234 : index
    %c0_84 = arith.constant 0 : index
    %101 = tpu.strided_load %arg18[%c234, %c0_84] {strides = array<i32: 2, 1>} : memref<288x32xf32, #tpu.memory_space<vmem>>, vector<8x32xf32>
    %c235 = arith.constant 235 : index
    %c0_85 = arith.constant 0 : index
    %102 = tpu.strided_load %arg18[%c235, %c0_85] {strides = array<i32: 2, 1>} : memref<288x32xf32, #tpu.memory_space<vmem>>, vector<8x32xf32>
    %103 = arith.maximumf %101, %102 : vector<8x32xf32>
    %104 = arith.maximumf %100, %103 : vector<8x32xf32>
    %105 = arith.truncf %104 : vector<8x32xf32> to vector<8x32xbf16>
    %c71 = arith.constant 71 : index
    %c0_86 = arith.constant 0 : index
    %106 = vector.load %arg21[%c71, %c0_86] : memref<110x32xbf16, #tpu.memory_space<vmem>>, vector<8x32xbf16>
    tpu.vector_store %arg21[%c71, %c0_86], %105 {strides = array<i32>} : memref<110x32xbf16, #tpu.memory_space<vmem>>, vector<8x32xbf16>,
    %c252 = arith.constant 252 : index
    %c0_87 = arith.constant 0 : index
    %107 = tpu.strided_load %arg18[%c252, %c0_87] {strides = array<i32: 2, 1>} : memref<288x32xf32, #tpu.memory_space<vmem>>, vector<8x32xf32>
    %c253 = arith.constant 253 : index
    %c0_88 = arith.constant 0 : index
    %108 = tpu.strided_load %arg18[%c253, %c0_88] {strides = array<i32: 2, 1>} : memref<288x32xf32, #tpu.memory_space<vmem>>, vector<8x32xf32>
    %109 = arith.maximumf %107, %108 : vector<8x32xf32>
    %c270 = arith.constant 270 : index
    %c0_89 = arith.constant 0 : index
    %110 = tpu.strided_load %arg18[%c270, %c0_89] {strides = array<i32: 2, 1>} : memref<288x32xf32, #tpu.memory_space<vmem>>, vector<8x32xf32>
    %c271 = arith.constant 271 : index
    %c0_90 = arith.constant 0 : index
    %111 = tpu.strided_load %arg18[%c271, %c0_90] {strides = array<i32: 2, 1>} : memref<288x32xf32, #tpu.memory_space<vmem>>, vector<8x32xf32>
    %112 = arith.maximumf %110, %111 : vector<8x32xf32>
    %113 = arith.maximumf %109, %112 : vector<8x32xf32>
    %114 = arith.truncf %113 : vector<8x32xf32> to vector<8x32xbf16>
    %c81 = arith.constant 81 : index
    %c0_91 = arith.constant 0 : index
    %115 = vector.load %arg21[%c81, %c0_91] : memref<110x32xbf16, #tpu.memory_space<vmem>>, vector<8x32xbf16>
    tpu.vector_store %arg21[%c81, %c0_91], %114 {strides = array<i32>} : memref<110x32xbf16, #tpu.memory_space<vmem>>, vector<8x32xbf16>,
    %c0_92 = arith.constant 0 : index
    %c0_93 = arith.constant 0 : index
    %116 = vector.load %arg21[%c0_92, %c0_93] : memref<110x32xbf16, #tpu.memory_space<vmem>>, vector<80x32xbf16>
    %c0_94 = arith.constant 0 : index
    %c0_95 = arith.constant 0 : index
    %c0_96 = arith.constant 0 : index
    %117 = vector.load %arg5[%c0_94, %c0_95, %c0_96] : memref<9x32x64xbf16, #tpu.memory_space<vmem>>, vector<1x32x64xbf16>
    %118 = vector.shape_cast %117 : vector<1x32x64xbf16> to vector<32x64xbf16>
    %cst_97 = arith.constant dense<0.000000e+00> : vector<80x64xf32>
    %119 = tpu.matmul %116, %118, %cst_97 {dimension_numbers = #tpu.dot_dimension_numbers<[1], [0], [0], [1], [0, 0, 1, 1], [], []>} : vector<80x32xbf16>, vector<32x64xbf16>, vector<80x64xf32> -> vector<80x64xf32>
    %c1_98 = arith.constant 1 : index
    %c0_99 = arith.constant 0 : index
    %120 = vector.load %arg21[%c1_98, %c0_99] : memref<110x32xbf16, #tpu.memory_space<vmem>>, vector<80x32xbf16>
    %c1_100 = arith.constant 1 : index
    %c0_101 = arith.constant 0 : index
    %c0_102 = arith.constant 0 : index
    %121 = vector.load %arg5[%c1_100, %c0_101, %c0_102] : memref<9x32x64xbf16, #tpu.memory_space<vmem>>, vector<1x32x64xbf16>
    %122 = vector.shape_cast %121 : vector<1x32x64xbf16> to vector<32x64xbf16>
    %cst_103 = arith.constant dense<0.000000e+00> : vector<80x64xf32>
    %123 = tpu.matmul %120, %122, %cst_103 {dimension_numbers = #tpu.dot_dimension_numbers<[1], [0], [0], [1], [0, 0, 1, 1], [], []>} : vector<80x32xbf16>, vector<32x64xbf16>, vector<80x64xf32> -> vector<80x64xf32>
    %124 = arith.addf %119, %123 : vector<80x64xf32>
    %c2 = arith.constant 2 : index
    %c0_104 = arith.constant 0 : index
    %125 = vector.load %arg21[%c2, %c0_104] : memref<110x32xbf16, #tpu.memory_space<vmem>>, vector<80x32xbf16>
    %c2_105 = arith.constant 2 : index
    %c0_106 = arith.constant 0 : index
    %c0_107 = arith.constant 0 : index
    %126 = vector.load %arg5[%c2_105, %c0_106, %c0_107] : memref<9x32x64xbf16, #tpu.memory_space<vmem>>, vector<1x32x64xbf16>
    %127 = vector.shape_cast %126 : vector<1x32x64xbf16> to vector<32x64xbf16>
    %cst_108 = arith.constant dense<0.000000e+00> : vector<80x64xf32>
    %128 = tpu.matmul %125, %127, %cst_108 {dimension_numbers = #tpu.dot_dimension_numbers<[1], [0], [0], [1], [0, 0, 1, 1], [], []>} : vector<80x32xbf16>, vector<32x64xbf16>, vector<80x64xf32> -> vector<80x64xf32>
    %129 = arith.addf %124, %128 : vector<80x64xf32>
    %c10 = arith.constant 10 : index
    %c0_109 = arith.constant 0 : index
    %130 = vector.load %arg21[%c10, %c0_109] : memref<110x32xbf16, #tpu.memory_space<vmem>>, vector<80x32xbf16>
    %c3 = arith.constant 3 : index
    %c0_110 = arith.constant 0 : index
    %c0_111 = arith.constant 0 : index
    %131 = vector.load %arg5[%c3, %c0_110, %c0_111] : memref<9x32x64xbf16, #tpu.memory_space<vmem>>, vector<1x32x64xbf16>
    %132 = vector.shape_cast %131 : vector<1x32x64xbf16> to vector<32x64xbf16>
    %cst_112 = arith.constant dense<0.000000e+00> : vector<80x64xf32>
    %133 = tpu.matmul %130, %132, %cst_112 {dimension_numbers = #tpu.dot_dimension_numbers<[1], [0], [0], [1], [0, 0, 1, 1], [], []>} : vector<80x32xbf16>, vector<32x64xbf16>, vector<80x64xf32> -> vector<80x64xf32>
    %134 = arith.addf %129, %133 : vector<80x64xf32>
    %c11_113 = arith.constant 11 : index
    %c0_114 = arith.constant 0 : index
    %135 = vector.load %arg21[%c11_113, %c0_114] : memref<110x32xbf16, #tpu.memory_space<vmem>>, vector<80x32xbf16>
    %c4 = arith.constant 4 : index
    %c0_115 = arith.constant 0 : index
    %c0_116 = arith.constant 0 : index
    %136 = vector.load %arg5[%c4, %c0_115, %c0_116] : memref<9x32x64xbf16, #tpu.memory_space<vmem>>, vector<1x32x64xbf16>
    %137 = vector.shape_cast %136 : vector<1x32x64xbf16> to vector<32x64xbf16>
    %cst_117 = arith.constant dense<0.000000e+00> : vector<80x64xf32>
    %138 = tpu.matmul %135, %137, %cst_117 {dimension_numbers = #tpu.dot_dimension_numbers<[1], [0], [0], [1], [0, 0, 1, 1], [], []>} : vector<80x32xbf16>, vector<32x64xbf16>, vector<80x64xf32> -> vector<80x64xf32>
    %139 = arith.addf %134, %138 : vector<80x64xf32>
    %c12 = arith.constant 12 : index
    %c0_118 = arith.constant 0 : index
    %140 = vector.load %arg21[%c12, %c0_118] : memref<110x32xbf16, #tpu.memory_space<vmem>>, vector<80x32xbf16>
    %c5 = arith.constant 5 : index
    %c0_119 = arith.constant 0 : index
    %c0_120 = arith.constant 0 : index
    %141 = vector.load %arg5[%c5, %c0_119, %c0_120] : memref<9x32x64xbf16, #tpu.memory_space<vmem>>, vector<1x32x64xbf16>
    %142 = vector.shape_cast %141 : vector<1x32x64xbf16> to vector<32x64xbf16>
    %cst_121 = arith.constant dense<0.000000e+00> : vector<80x64xf32>
    %143 = tpu.matmul %140, %142, %cst_121 {dimension_numbers = #tpu.dot_dimension_numbers<[1], [0], [0], [1], [0, 0, 1, 1], [], []>} : vector<80x32xbf16>, vector<32x64xbf16>, vector<80x64xf32> -> vector<80x64xf32>
    %144 = arith.addf %139, %143 : vector<80x64xf32>
    %c20 = arith.constant 20 : index
    %c0_122 = arith.constant 0 : index
    %145 = vector.load %arg21[%c20, %c0_122] : memref<110x32xbf16, #tpu.memory_space<vmem>>, vector<80x32xbf16>
    %c6 = arith.constant 6 : index
    %c0_123 = arith.constant 0 : index
    %c0_124 = arith.constant 0 : index
    %146 = vector.load %arg5[%c6, %c0_123, %c0_124] : memref<9x32x64xbf16, #tpu.memory_space<vmem>>, vector<1x32x64xbf16>
    %147 = vector.shape_cast %146 : vector<1x32x64xbf16> to vector<32x64xbf16>
    %cst_125 = arith.constant dense<0.000000e+00> : vector<80x64xf32>
    %148 = tpu.matmul %145, %147, %cst_125 {dimension_numbers = #tpu.dot_dimension_numbers<[1], [0], [0], [1], [0, 0, 1, 1], [], []>} : vector<80x32xbf16>, vector<32x64xbf16>, vector<80x64xf32> -> vector<80x64xf32>
    %149 = arith.addf %144, %148 : vector<80x64xf32>
    %c21_126 = arith.constant 21 : index
    %c0_127 = arith.constant 0 : index
    %150 = vector.load %arg21[%c21_126, %c0_127] : memref<110x32xbf16, #tpu.memory_space<vmem>>, vector<80x32xbf16>
    %c7_128 = arith.constant 7 : index
    %c0_129 = arith.constant 0 : index
    %c0_130 = arith.constant 0 : index
    %151 = vector.load %arg5[%c7_128, %c0_129, %c0_130] : memref<9x32x64xbf16, #tpu.memory_space<vmem>>, vector<1x32x64xbf16>
    %152 = vector.shape_cast %151 : vector<1x32x64xbf16> to vector<32x64xbf16>
    %cst_131 = arith.constant dense<0.000000e+00> : vector<80x64xf32>
    %153 = tpu.matmul %150, %152, %cst_131 {dimension_numbers = #tpu.dot_dimension_numbers<[1], [0], [0], [1], [0, 0, 1, 1], [], []>} : vector<80x32xbf16>, vector<32x64xbf16>, vector<80x64xf32> -> vector<80x64xf32>
    %154 = arith.addf %149, %153 : vector<80x64xf32>
    %c22 = arith.constant 22 : index
    %c0_132 = arith.constant 0 : index
    %155 = vector.load %arg21[%c22, %c0_132] : memref<110x32xbf16, #tpu.memory_space<vmem>>, vector<80x32xbf16>
    %c8 = arith.constant 8 : index
    %c0_133 = arith.constant 0 : index
    %c0_134 = arith.constant 0 : index
    %156 = vector.load %arg5[%c8, %c0_133, %c0_134] : memref<9x32x64xbf16, #tpu.memory_space<vmem>>, vector<1x32x64xbf16>
    %157 = vector.shape_cast %156 : vector<1x32x64xbf16> to vector<32x64xbf16>
    %cst_135 = arith.constant dense<0.000000e+00> : vector<80x64xf32>
    %158 = tpu.matmul %155, %157, %cst_135 {dimension_numbers = #tpu.dot_dimension_numbers<[1], [0], [0], [1], [0, 0, 1, 1], [], []>} : vector<80x32xbf16>, vector<32x64xbf16>, vector<80x64xf32> -> vector<80x64xf32>
    %159 = arith.addf %154, %158 : vector<80x64xf32>
    %c0_136 = arith.constant 0 : index
    %c0_137 = arith.constant 0 : index
    %160 = vector.load %arg6[%c0_136, %c0_137] : memref<1x64xf32, #tpu.memory_space<vmem>>, vector<1x64xf32>
    %161 = vector.broadcast %160 : vector<1x64xf32> to vector<80x64xf32>
    %162 = arith.addf %159, %161 : vector<80x64xf32>
    %cst_138 = arith.constant 0.000000e+00 : f32
    %163 = vector.broadcast %cst_138 : f32 to vector<80x64xf32>
    %164 = arith.maximumf %162, %163 : vector<80x64xf32>
    %c0_139 = arith.constant 0 : index
    %c0_140 = arith.constant 0 : index
    %165 = vector.load %arg19[%c0_139, %c0_140] : memref<80x64xf32, #tpu.memory_space<vmem>>, vector<80x64xf32>
    tpu.vector_store %arg19[%c0_139, %c0_140], %164 {strides = array<i32>} : memref<80x64xf32, #tpu.memory_space<vmem>>, vector<80x64xf32>,
    %c0_141 = arith.constant 0 : index
    %c0_142 = arith.constant 0 : index
    %166 = tpu.strided_load %arg19[%c0_141, %c0_142] {strides = array<i32: 2, 1>} : memref<80x64xf32, #tpu.memory_space<vmem>>, vector<4x64xf32>
    %c1_143 = arith.constant 1 : index
    %c0_144 = arith.constant 0 : index
    %167 = tpu.strided_load %arg19[%c1_143, %c0_144] {strides = array<i32: 2, 1>} : memref<80x64xf32, #tpu.memory_space<vmem>>, vector<4x64xf32>
    %168 = arith.maximumf %166, %167 : vector<4x64xf32>
    %c10_145 = arith.constant 10 : index
    %c0_146 = arith.constant 0 : index
    %169 = tpu.strided_load %arg19[%c10_145, %c0_146] {strides = array<i32: 2, 1>} : memref<80x64xf32, #tpu.memory_space<vmem>>, vector<4x64xf32>
    %c11_147 = arith.constant 11 : index
    %c0_148 = arith.constant 0 : index
    %170 = tpu.strided_load %arg19[%c11_147, %c0_148] {strides = array<i32: 2, 1>} : memref<80x64xf32, #tpu.memory_space<vmem>>, vector<4x64xf32>
    %171 = arith.maximumf %169, %170 : vector<4x64xf32>
    %172 = arith.maximumf %168, %171 : vector<4x64xf32>
    %173 = arith.truncf %172 : vector<4x64xf32> to vector<4x64xbf16>
    %c7_149 = arith.constant 7 : index
    %c0_150 = arith.constant 0 : index
    %174 = vector.load %arg22[%c7_149, %c0_150] : memref<42x64xbf16, #tpu.memory_space<vmem>>, vector<4x64xbf16>
    tpu.vector_store %arg22[%c7_149, %c0_150], %173 {strides = array<i32>} : memref<42x64xbf16, #tpu.memory_space<vmem>>, vector<4x64xbf16>,
    %c20_151 = arith.constant 20 : index
    %c0_152 = arith.constant 0 : index
    %175 = tpu.strided_load %arg19[%c20_151, %c0_152] {strides = array<i32: 2, 1>} : memref<80x64xf32, #tpu.memory_space<vmem>>, vector<4x64xf32>
    %c21_153 = arith.constant 21 : index
    %c0_154 = arith.constant 0 : index
    %176 = tpu.strided_load %arg19[%c21_153, %c0_154] {strides = array<i32: 2, 1>} : memref<80x64xf32, #tpu.memory_space<vmem>>, vector<4x64xf32>
    %177 = arith.maximumf %175, %176 : vector<4x64xf32>
    %c30 = arith.constant 30 : index
    %c0_155 = arith.constant 0 : index
    %178 = tpu.strided_load %arg19[%c30, %c0_155] {strides = array<i32: 2, 1>} : memref<80x64xf32, #tpu.memory_space<vmem>>, vector<4x64xf32>
    %c31_156 = arith.constant 31 : index
    %c0_157 = arith.constant 0 : index
    %179 = tpu.strided_load %arg19[%c31_156, %c0_157] {strides = array<i32: 2, 1>} : memref<80x64xf32, #tpu.memory_space<vmem>>, vector<4x64xf32>
    %180 = arith.maximumf %178, %179 : vector<4x64xf32>
    %181 = arith.maximumf %177, %180 : vector<4x64xf32>
    %182 = arith.truncf %181 : vector<4x64xf32> to vector<4x64xbf16>
    %c13 = arith.constant 13 : index
    %c0_158 = arith.constant 0 : index
    %183 = vector.load %arg22[%c13, %c0_158] : memref<42x64xbf16, #tpu.memory_space<vmem>>, vector<4x64xbf16>
    tpu.vector_store %arg22[%c13, %c0_158], %182 {strides = array<i32>} : memref<42x64xbf16, #tpu.memory_space<vmem>>, vector<4x64xbf16>,
    %c40 = arith.constant 40 : index
    %c0_159 = arith.constant 0 : index
    %184 = tpu.strided_load %arg19[%c40, %c0_159] {strides = array<i32: 2, 1>} : memref<80x64xf32, #tpu.memory_space<vmem>>, vector<4x64xf32>
    %c41_160 = arith.constant 41 : index
    %c0_161 = arith.constant 0 : index
    %185 = tpu.strided_load %arg19[%c41_160, %c0_161] {strides = array<i32: 2, 1>} : memref<80x64xf32, #tpu.memory_space<vmem>>, vector<4x64xf32>
    %186 = arith.maximumf %184, %185 : vector<4x64xf32>
    %c50 = arith.constant 50 : index
    %c0_162 = arith.constant 0 : index
    %187 = tpu.strided_load %arg19[%c50, %c0_162] {strides = array<i32: 2, 1>} : memref<80x64xf32, #tpu.memory_space<vmem>>, vector<4x64xf32>
    %c51_163 = arith.constant 51 : index
    %c0_164 = arith.constant 0 : index
    %188 = tpu.strided_load %arg19[%c51_163, %c0_164] {strides = array<i32: 2, 1>} : memref<80x64xf32, #tpu.memory_space<vmem>>, vector<4x64xf32>
    %189 = arith.maximumf %187, %188 : vector<4x64xf32>
    %190 = arith.maximumf %186, %189 : vector<4x64xf32>
    %191 = arith.truncf %190 : vector<4x64xf32> to vector<4x64xbf16>
    %c19_165 = arith.constant 19 : index
    %c0_166 = arith.constant 0 : index
    %192 = vector.load %arg22[%c19_165, %c0_166] : memref<42x64xbf16, #tpu.memory_space<vmem>>, vector<4x64xbf16>
    tpu.vector_store %arg22[%c19_165, %c0_166], %191 {strides = array<i32>} : memref<42x64xbf16, #tpu.memory_space<vmem>>, vector<4x64xbf16>,
    %c60 = arith.constant 60 : index
    %c0_167 = arith.constant 0 : index
    %193 = tpu.strided_load %arg19[%c60, %c0_167] {strides = array<i32: 2, 1>} : memref<80x64xf32, #tpu.memory_space<vmem>>, vector<4x64xf32>
    %c61_168 = arith.constant 61 : index
    %c0_169 = arith.constant 0 : index
    %194 = tpu.strided_load %arg19[%c61_168, %c0_169] {strides = array<i32: 2, 1>} : memref<80x64xf32, #tpu.memory_space<vmem>>, vector<4x64xf32>
    %195 = arith.maximumf %193, %194 : vector<4x64xf32>
    %c70 = arith.constant 70 : index
    %c0_170 = arith.constant 0 : index
    %196 = tpu.strided_load %arg19[%c70, %c0_170] {strides = array<i32: 2, 1>} : memref<80x64xf32, #tpu.memory_space<vmem>>, vector<4x64xf32>
    %c71_171 = arith.constant 71 : index
    %c0_172 = arith.constant 0 : index
    %197 = tpu.strided_load %arg19[%c71_171, %c0_172] {strides = array<i32: 2, 1>} : memref<80x64xf32, #tpu.memory_space<vmem>>, vector<4x64xf32>
    %198 = arith.maximumf %196, %197 : vector<4x64xf32>
    %199 = arith.maximumf %195, %198 : vector<4x64xf32>
    %200 = arith.truncf %199 : vector<4x64xf32> to vector<4x64xbf16>
    %c25 = arith.constant 25 : index
    %c0_173 = arith.constant 0 : index
    %201 = vector.load %arg22[%c25, %c0_173] : memref<42x64xbf16, #tpu.memory_space<vmem>>, vector<4x64xbf16>
    tpu.vector_store %arg22[%c25, %c0_173], %200 {strides = array<i32>} : memref<42x64xbf16, #tpu.memory_space<vmem>>, vector<4x64xbf16>,
    %c0_174 = arith.constant 0 : index
    %c0_175 = arith.constant 0 : index
    %202 = vector.load %arg22[%c0_174, %c0_175] : memref<42x64xbf16, #tpu.memory_space<vmem>>, vector<24x64xbf16>
    %c0_176 = arith.constant 0 : index
    %c0_177 = arith.constant 0 : index
    %c0_178 = arith.constant 0 : index
    %203 = vector.load %arg7[%c0_176, %c0_177, %c0_178] : memref<9x64x128xbf16, #tpu.memory_space<vmem>>, vector<1x64x128xbf16>
    %204 = vector.shape_cast %203 : vector<1x64x128xbf16> to vector<64x128xbf16>
    %cst_179 = arith.constant dense<0.000000e+00> : vector<24x128xf32>
    %205 = tpu.matmul %202, %204, %cst_179 {dimension_numbers = #tpu.dot_dimension_numbers<[1], [0], [0], [1], [0, 0, 1, 1], [], []>} : vector<24x64xbf16>, vector<64x128xbf16>, vector<24x128xf32> -> vector<24x128xf32>
    %c1_180 = arith.constant 1 : index
    %c0_181 = arith.constant 0 : index
    %206 = vector.load %arg22[%c1_180, %c0_181] : memref<42x64xbf16, #tpu.memory_space<vmem>>, vector<24x64xbf16>
    %c1_182 = arith.constant 1 : index
    %c0_183 = arith.constant 0 : index
    %c0_184 = arith.constant 0 : index
    %207 = vector.load %arg7[%c1_182, %c0_183, %c0_184] : memref<9x64x128xbf16, #tpu.memory_space<vmem>>, vector<1x64x128xbf16>
    %208 = vector.shape_cast %207 : vector<1x64x128xbf16> to vector<64x128xbf16>
    %cst_185 = arith.constant dense<0.000000e+00> : vector<24x128xf32>
    %209 = tpu.matmul %206, %208, %cst_185 {dimension_numbers = #tpu.dot_dimension_numbers<[1], [0], [0], [1], [0, 0, 1, 1], [], []>} : vector<24x64xbf16>, vector<64x128xbf16>, vector<24x128xf32> -> vector<24x128xf32>
    %210 = arith.addf %205, %209 : vector<24x128xf32>
    %c2_186 = arith.constant 2 : index
    %c0_187 = arith.constant 0 : index
    %211 = vector.load %arg22[%c2_186, %c0_187] : memref<42x64xbf16, #tpu.memory_space<vmem>>, vector<24x64xbf16>
    %c2_188 = arith.constant 2 : index
    %c0_189 = arith.constant 0 : index
    %c0_190 = arith.constant 0 : index
    %212 = vector.load %arg7[%c2_188, %c0_189, %c0_190] : memref<9x64x128xbf16, #tpu.memory_space<vmem>>, vector<1x64x128xbf16>
    %213 = vector.shape_cast %212 : vector<1x64x128xbf16> to vector<64x128xbf16>
    %cst_191 = arith.constant dense<0.000000e+00> : vector<24x128xf32>
    %214 = tpu.matmul %211, %213, %cst_191 {dimension_numbers = #tpu.dot_dimension_numbers<[1], [0], [0], [1], [0, 0, 1, 1], [], []>} : vector<24x64xbf16>, vector<64x128xbf16>, vector<24x128xf32> -> vector<24x128xf32>
    %215 = arith.addf %210, %214 : vector<24x128xf32>
    %c6_192 = arith.constant 6 : index
    %c0_193 = arith.constant 0 : index
    %216 = vector.load %arg22[%c6_192, %c0_193] : memref<42x64xbf16, #tpu.memory_space<vmem>>, vector<24x64xbf16>
    %c3_194 = arith.constant 3 : index
    %c0_195 = arith.constant 0 : index
    %c0_196 = arith.constant 0 : index
    %217 = vector.load %arg7[%c3_194, %c0_195, %c0_196] : memref<9x64x128xbf16, #tpu.memory_space<vmem>>, vector<1x64x128xbf16>
    %218 = vector.shape_cast %217 : vector<1x64x128xbf16> to vector<64x128xbf16>
    %cst_197 = arith.constant dense<0.000000e+00> : vector<24x128xf32>
    %219 = tpu.matmul %216, %218, %cst_197 {dimension_numbers = #tpu.dot_dimension_numbers<[1], [0], [0], [1], [0, 0, 1, 1], [], []>} : vector<24x64xbf16>, vector<64x128xbf16>, vector<24x128xf32> -> vector<24x128xf32>
    %220 = arith.addf %215, %219 : vector<24x128xf32>
    %c7_198 = arith.constant 7 : index
    %c0_199 = arith.constant 0 : index
    %221 = vector.load %arg22[%c7_198, %c0_199] : memref<42x64xbf16, #tpu.memory_space<vmem>>, vector<24x64xbf16>
    %c4_200 = arith.constant 4 : index
    %c0_201 = arith.constant 0 : index
    %c0_202 = arith.constant 0 : index
    %222 = vector.load %arg7[%c4_200, %c0_201, %c0_202] : memref<9x64x128xbf16, #tpu.memory_space<vmem>>, vector<1x64x128xbf16>
    %223 = vector.shape_cast %222 : vector<1x64x128xbf16> to vector<64x128xbf16>
    %cst_203 = arith.constant dense<0.000000e+00> : vector<24x128xf32>
    %224 = tpu.matmul %221, %223, %cst_203 {dimension_numbers = #tpu.dot_dimension_numbers<[1], [0], [0], [1], [0, 0, 1, 1], [], []>} : vector<24x64xbf16>, vector<64x128xbf16>, vector<24x128xf32> -> vector<24x128xf32>
    %225 = arith.addf %220, %224 : vector<24x128xf32>
    %c8_204 = arith.constant 8 : index
    %c0_205 = arith.constant 0 : index
    %226 = vector.load %arg22[%c8_204, %c0_205] : memref<42x64xbf16, #tpu.memory_space<vmem>>, vector<24x64xbf16>
    %c5_206 = arith.constant 5 : index
    %c0_207 = arith.constant 0 : index
    %c0_208 = arith.constant 0 : index
    %227 = vector.load %arg7[%c5_206, %c0_207, %c0_208] : memref<9x64x128xbf16, #tpu.memory_space<vmem>>, vector<1x64x128xbf16>
    %228 = vector.shape_cast %227 : vector<1x64x128xbf16> to vector<64x128xbf16>
    %cst_209 = arith.constant dense<0.000000e+00> : vector<24x128xf32>
    %229 = tpu.matmul %226, %228, %cst_209 {dimension_numbers = #tpu.dot_dimension_numbers<[1], [0], [0], [1], [0, 0, 1, 1], [], []>} : vector<24x64xbf16>, vector<64x128xbf16>, vector<24x128xf32> -> vector<24x128xf32>
    %230 = arith.addf %225, %229 : vector<24x128xf32>
    %c12_210 = arith.constant 12 : index
    %c0_211 = arith.constant 0 : index
    %231 = vector.load %arg22[%c12_210, %c0_211] : memref<42x64xbf16, #tpu.memory_space<vmem>>, vector<24x64xbf16>
    %c6_212 = arith.constant 6 : index
    %c0_213 = arith.constant 0 : index
    %c0_214 = arith.constant 0 : index
    %232 = vector.load %arg7[%c6_212, %c0_213, %c0_214] : memref<9x64x128xbf16, #tpu.memory_space<vmem>>, vector<1x64x128xbf16>
    %233 = vector.shape_cast %232 : vector<1x64x128xbf16> to vector<64x128xbf16>
    %cst_215 = arith.constant dense<0.000000e+00> : vector<24x128xf32>
    %234 = tpu.matmul %231, %233, %cst_215 {dimension_numbers = #tpu.dot_dimension_numbers<[1], [0], [0], [1], [0, 0, 1, 1], [], []>} : vector<24x64xbf16>, vector<64x128xbf16>, vector<24x128xf32> -> vector<24x128xf32>
    %235 = arith.addf %230, %234 : vector<24x128xf32>
    %c13_216 = arith.constant 13 : index
    %c0_217 = arith.constant 0 : index
    %236 = vector.load %arg22[%c13_216, %c0_217] : memref<42x64xbf16, #tpu.memory_space<vmem>>, vector<24x64xbf16>
    %c7_218 = arith.constant 7 : index
    %c0_219 = arith.constant 0 : index
    %c0_220 = arith.constant 0 : index
    %237 = vector.load %arg7[%c7_218, %c0_219, %c0_220] : memref<9x64x128xbf16, #tpu.memory_space<vmem>>, vector<1x64x128xbf16>
    %238 = vector.shape_cast %237 : vector<1x64x128xbf16> to vector<64x128xbf16>
    %cst_221 = arith.constant dense<0.000000e+00> : vector<24x128xf32>
    %239 = tpu.matmul %236, %238, %cst_221 {dimension_numbers = #tpu.dot_dimension_numbers<[1], [0], [0], [1], [0, 0, 1, 1], [], []>} : vector<24x64xbf16>, vector<64x128xbf16>, vector<24x128xf32> -> vector<24x128xf32>
    %240 = arith.addf %235, %239 : vector<24x128xf32>
    %c14 = arith.constant 14 : index
    %c0_222 = arith.constant 0 : index
    %241 = vector.load %arg22[%c14, %c0_222] : memref<42x64xbf16, #tpu.memory_space<vmem>>, vector<24x64xbf16>
    %c8_223 = arith.constant 8 : index
    %c0_224 = arith.constant 0 : index
    %c0_225 = arith.constant 0 : index
    %242 = vector.load %arg7[%c8_223, %c0_224, %c0_225] : memref<9x64x128xbf16, #tpu.memory_space<vmem>>, vector<1x64x128xbf16>
    %243 = vector.shape_cast %242 : vector<1x64x128xbf16> to vector<64x128xbf16>
    %cst_226 = arith.constant dense<0.000000e+00> : vector<24x128xf32>
    %244 = tpu.matmul %241, %243, %cst_226 {dimension_numbers = #tpu.dot_dimension_numbers<[1], [0], [0], [1], [0, 0, 1, 1], [], []>} : vector<24x64xbf16>, vector<64x128xbf16>, vector<24x128xf32> -> vector<24x128xf32>
    %245 = arith.addf %240, %244 : vector<24x128xf32>
    %c0_227 = arith.constant 0 : index
    %c0_228 = arith.constant 0 : index
    %246 = vector.load %arg8[%c0_227, %c0_228] : memref<1x128xf32, #tpu.memory_space<vmem>>, vector<1x128xf32>
    %247 = vector.broadcast %246 : vector<1x128xf32> to vector<24x128xf32>
    %248 = arith.addf %245, %247 : vector<24x128xf32>
    %cst_229 = arith.constant 0.000000e+00 : f32
    %249 = vector.broadcast %cst_229 : f32 to vector<24x128xf32>
    %250 = arith.maximumf %248, %249 : vector<24x128xf32>
    %c0_230 = arith.constant 0 : index
    %c0_231 = arith.constant 0 : index
    %251 = vector.load %arg20[%c0_230, %c0_231] : memref<24x128xf32, #tpu.memory_space<vmem>>, vector<24x128xf32>
    tpu.vector_store %arg20[%c0_230, %c0_231], %250 {strides = array<i32>} : memref<24x128xf32, #tpu.memory_space<vmem>>, vector<24x128xf32>,
    %c0_232 = arith.constant 0 : index
    %c0_233 = arith.constant 0 : index
    %252 = tpu.strided_load %arg20[%c0_232, %c0_233] {strides = array<i32: 2, 1>} : memref<24x128xf32, #tpu.memory_space<vmem>>, vector<2x128xf32>
    %c1_234 = arith.constant 1 : index
    %c0_235 = arith.constant 0 : index
    %253 = tpu.strided_load %arg20[%c1_234, %c0_235] {strides = array<i32: 2, 1>} : memref<24x128xf32, #tpu.memory_space<vmem>>, vector<2x128xf32>
    %254 = arith.maximumf %252, %253 : vector<2x128xf32>
    %c6_236 = arith.constant 6 : index
    %c0_237 = arith.constant 0 : index
    %255 = tpu.strided_load %arg20[%c6_236, %c0_237] {strides = array<i32: 2, 1>} : memref<24x128xf32, #tpu.memory_space<vmem>>, vector<2x128xf32>
    %c7_238 = arith.constant 7 : index
    %c0_239 = arith.constant 0 : index
    %256 = tpu.strided_load %arg20[%c7_238, %c0_239] {strides = array<i32: 2, 1>} : memref<24x128xf32, #tpu.memory_space<vmem>>, vector<2x128xf32>
    %257 = arith.maximumf %255, %256 : vector<2x128xf32>
    %258 = arith.maximumf %254, %257 : vector<2x128xf32>
    %259 = arith.truncf %258 : vector<2x128xf32> to vector<2x128xbf16>
    %c5_240 = arith.constant 5 : index
    %c0_241 = arith.constant 0 : index
    %260 = vector.load %arg23[%c5_240, %c0_241] : memref<20x128xbf16, #tpu.memory_space<vmem>>, vector<2x128xbf16>
    tpu.vector_store %arg23[%c5_240, %c0_241], %259 {strides = array<i32>} : memref<20x128xbf16, #tpu.memory_space<vmem>>, vector<2x128xbf16>,
    %c12_242 = arith.constant 12 : index
    %c0_243 = arith.constant 0 : index
    %261 = tpu.strided_load %arg20[%c12_242, %c0_243] {strides = array<i32: 2, 1>} : memref<24x128xf32, #tpu.memory_space<vmem>>, vector<2x128xf32>
    %c13_244 = arith.constant 13 : index
    %c0_245 = arith.constant 0 : index
    %262 = tpu.strided_load %arg20[%c13_244, %c0_245] {strides = array<i32: 2, 1>} : memref<24x128xf32, #tpu.memory_space<vmem>>, vector<2x128xf32>
    %263 = arith.maximumf %261, %262 : vector<2x128xf32>
    %c18_246 = arith.constant 18 : index
    %c0_247 = arith.constant 0 : index
    %264 = tpu.strided_load %arg20[%c18_246, %c0_247] {strides = array<i32: 2, 1>} : memref<24x128xf32, #tpu.memory_space<vmem>>, vector<2x128xf32>
    %c19_248 = arith.constant 19 : index
    %c0_249 = arith.constant 0 : index
    %265 = tpu.strided_load %arg20[%c19_248, %c0_249] {strides = array<i32: 2, 1>} : memref<24x128xf32, #tpu.memory_space<vmem>>, vector<2x128xf32>
    %266 = arith.maximumf %264, %265 : vector<2x128xf32>
    %267 = arith.maximumf %263, %266 : vector<2x128xf32>
    %268 = arith.truncf %267 : vector<2x128xf32> to vector<2x128xbf16>
    %c9 = arith.constant 9 : index
    %c0_250 = arith.constant 0 : index
    %269 = vector.load %arg23[%c9, %c0_250] : memref<20x128xbf16, #tpu.memory_space<vmem>>, vector<2x128xbf16>
    tpu.vector_store %arg23[%c9, %c0_250], %268 {strides = array<i32>} : memref<20x128xbf16, #tpu.memory_space<vmem>>, vector<2x128xbf16>,
    %c0_251 = arith.constant 0 : index
    %c0_252 = arith.constant 0 : index
    %270 = vector.load %arg23[%c0_251, %c0_252] : memref<20x128xbf16, #tpu.memory_space<vmem>>, vector<8x128xbf16>
    %c0_253 = arith.constant 0 : index
    %c0_254 = arith.constant 0 : index
    %c0_255 = arith.constant 0 : index
    %271 = vector.load %arg9[%c0_253, %c0_254, %c0_255] : memref<9x128x256xbf16, #tpu.memory_space<vmem>>, vector<1x128x256xbf16>
    %272 = vector.shape_cast %271 : vector<1x128x256xbf16> to vector<128x256xbf16>
    %cst_256 = arith.constant dense<0.000000e+00> : vector<8x256xf32>
    %273 = tpu.matmul %270, %272, %cst_256 {dimension_numbers = #tpu.dot_dimension_numbers<[1], [0], [0], [1], [0, 0, 1, 1], [], []>} : vector<8x128xbf16>, vector<128x256xbf16>, vector<8x256xf32> -> vector<8x256xf32>
    %c1_257 = arith.constant 1 : index
    %c0_258 = arith.constant 0 : index
    %274 = vector.load %arg23[%c1_257, %c0_258] : memref<20x128xbf16, #tpu.memory_space<vmem>>, vector<8x128xbf16>
    %c1_259 = arith.constant 1 : index
    %c0_260 = arith.constant 0 : index
    %c0_261 = arith.constant 0 : index
    %275 = vector.load %arg9[%c1_259, %c0_260, %c0_261] : memref<9x128x256xbf16, #tpu.memory_space<vmem>>, vector<1x128x256xbf16>
    %276 = vector.shape_cast %275 : vector<1x128x256xbf16> to vector<128x256xbf16>
    %cst_262 = arith.constant dense<0.000000e+00> : vector<8x256xf32>
    %277 = tpu.matmul %274, %276, %cst_262 {dimension_numbers = #tpu.dot_dimension_numbers<[1], [0], [0], [1], [0, 0, 1, 1], [], []>} : vector<8x128xbf16>, vector<128x256xbf16>, vector<8x256xf32> -> vector<8x256xf32>
    %278 = arith.addf %273, %277 : vector<8x256xf32>
    %c2_263 = arith.constant 2 : index
    %c0_264 = arith.constant 0 : index
    %279 = vector.load %arg23[%c2_263, %c0_264] : memref<20x128xbf16, #tpu.memory_space<vmem>>, vector<8x128xbf16>
    %c2_265 = arith.constant 2 : index
    %c0_266 = arith.constant 0 : index
    %c0_267 = arith.constant 0 : index
    %280 = vector.load %arg9[%c2_265, %c0_266, %c0_267] : memref<9x128x256xbf16, #tpu.memory_space<vmem>>, vector<1x128x256xbf16>
    %281 = vector.shape_cast %280 : vector<1x128x256xbf16> to vector<128x256xbf16>
    %cst_268 = arith.constant dense<0.000000e+00> : vector<8x256xf32>
    %282 = tpu.matmul %279, %281, %cst_268 {dimension_numbers = #tpu.dot_dimension_numbers<[1], [0], [0], [1], [0, 0, 1, 1], [], []>} : vector<8x128xbf16>, vector<128x256xbf16>, vector<8x256xf32> -> vector<8x256xf32>
    %283 = arith.addf %278, %282 : vector<8x256xf32>
    %c4_269 = arith.constant 4 : index
    %c0_270 = arith.constant 0 : index
    %284 = vector.load %arg23[%c4_269, %c0_270] : memref<20x128xbf16, #tpu.memory_space<vmem>>, vector<8x128xbf16>
    %c3_271 = arith.constant 3 : index
    %c0_272 = arith.constant 0 : index
    %c0_273 = arith.constant 0 : index
    %285 = vector.load %arg9[%c3_271, %c0_272, %c0_273] : memref<9x128x256xbf16, #tpu.memory_space<vmem>>, vector<1x128x256xbf16>
    %286 = vector.shape_cast %285 : vector<1x128x256xbf16> to vector<128x256xbf16>
    %cst_274 = arith.constant dense<0.000000e+00> : vector<8x256xf32>
    %287 = tpu.matmul %284, %286, %cst_274 {dimension_numbers = #tpu.dot_dimension_numbers<[1], [0], [0], [1], [0, 0, 1, 1], [], []>} : vector<8x128xbf16>, vector<128x256xbf16>, vector<8x256xf32> -> vector<8x256xf32>
    %288 = arith.addf %283, %287 : vector<8x256xf32>
    %c5_275 = arith.constant 5 : index
    %c0_276 = arith.constant 0 : index
    %289 = vector.load %arg23[%c5_275, %c0_276] : memref<20x128xbf16, #tpu.memory_space<vmem>>, vector<8x128xbf16>
    %c4_277 = arith.constant 4 : index
    %c0_278 = arith.constant 0 : index
    %c0_279 = arith.constant 0 : index
    %290 = vector.load %arg9[%c4_277, %c0_278, %c0_279] : memref<9x128x256xbf16, #tpu.memory_space<vmem>>, vector<1x128x256xbf16>
    %291 = vector.shape_cast %290 : vector<1x128x256xbf16> to vector<128x256xbf16>
    %cst_280 = arith.constant dense<0.000000e+00> : vector<8x256xf32>
    %292 = tpu.matmul %289, %291, %cst_280 {dimension_numbers = #tpu.dot_dimension_numbers<[1], [0], [0], [1], [0, 0, 1, 1], [], []>} : vector<8x128xbf16>, vector<128x256xbf16>, vector<8x256xf32> -> vector<8x256xf32>
    %293 = arith.addf %288, %292 : vector<8x256xf32>
    %c6_281 = arith.constant 6 : index
    %c0_282 = arith.constant 0 : index
    %294 = vector.load %arg23[%c6_281, %c0_282] : memref<20x128xbf16, #tpu.memory_space<vmem>>, vector<8x128xbf16>
    %c5_283 = arith.constant 5 : index
    %c0_284 = arith.constant 0 : index
    %c0_285 = arith.constant 0 : index
    %295 = vector.load %arg9[%c5_283, %c0_284, %c0_285] : memref<9x128x256xbf16, #tpu.memory_space<vmem>>, vector<1x128x256xbf16>
    %296 = vector.shape_cast %295 : vector<1x128x256xbf16> to vector<128x256xbf16>
    %cst_286 = arith.constant dense<0.000000e+00> : vector<8x256xf32>
    %297 = tpu.matmul %294, %296, %cst_286 {dimension_numbers = #tpu.dot_dimension_numbers<[1], [0], [0], [1], [0, 0, 1, 1], [], []>} : vector<8x128xbf16>, vector<128x256xbf16>, vector<8x256xf32> -> vector<8x256xf32>
    %298 = arith.addf %293, %297 : vector<8x256xf32>
    %c8_287 = arith.constant 8 : index
    %c0_288 = arith.constant 0 : index
    %299 = vector.load %arg23[%c8_287, %c0_288] : memref<20x128xbf16, #tpu.memory_space<vmem>>, vector<8x128xbf16>
    %c6_289 = arith.constant 6 : index
    %c0_290 = arith.constant 0 : index
    %c0_291 = arith.constant 0 : index
    %300 = vector.load %arg9[%c6_289, %c0_290, %c0_291] : memref<9x128x256xbf16, #tpu.memory_space<vmem>>, vector<1x128x256xbf16>
    %301 = vector.shape_cast %300 : vector<1x128x256xbf16> to vector<128x256xbf16>
    %cst_292 = arith.constant dense<0.000000e+00> : vector<8x256xf32>
    %302 = tpu.matmul %299, %301, %cst_292 {dimension_numbers = #tpu.dot_dimension_numbers<[1], [0], [0], [1], [0, 0, 1, 1], [], []>} : vector<8x128xbf16>, vector<128x256xbf16>, vector<8x256xf32> -> vector<8x256xf32>
    %303 = arith.addf %298, %302 : vector<8x256xf32>
    %c9_293 = arith.constant 9 : index
    %c0_294 = arith.constant 0 : index
    %304 = vector.load %arg23[%c9_293, %c0_294] : memref<20x128xbf16, #tpu.memory_space<vmem>>, vector<8x128xbf16>
    %c7_295 = arith.constant 7 : index
    %c0_296 = arith.constant 0 : index
    %c0_297 = arith.constant 0 : index
    %305 = vector.load %arg9[%c7_295, %c0_296, %c0_297] : memref<9x128x256xbf16, #tpu.memory_space<vmem>>, vector<1x128x256xbf16>
    %306 = vector.shape_cast %305 : vector<1x128x256xbf16> to vector<128x256xbf16>
    %cst_298 = arith.constant dense<0.000000e+00> : vector<8x256xf32>
    %307 = tpu.matmul %304, %306, %cst_298 {dimension_numbers = #tpu.dot_dimension_numbers<[1], [0], [0], [1], [0, 0, 1, 1], [], []>} : vector<8x128xbf16>, vector<128x256xbf16>, vector<8x256xf32> -> vector<8x256xf32>
    %308 = arith.addf %303, %307 : vector<8x256xf32>
    %c10_299 = arith.constant 10 : index
    %c0_300 = arith.constant 0 : index
    %309 = vector.load %arg23[%c10_299, %c0_300] : memref<20x128xbf16, #tpu.memory_space<vmem>>, vector<8x128xbf16>
    %c8_301 = arith.constant 8 : index
    %c0_302 = arith.constant 0 : index
    %c0_303 = arith.constant 0 : index
    %310 = vector.load %arg9[%c8_301, %c0_302, %c0_303] : memref<9x128x256xbf16, #tpu.memory_space<vmem>>, vector<1x128x256xbf16>
    %311 = vector.shape_cast %310 : vector<1x128x256xbf16> to vector<128x256xbf16>
    %cst_304 = arith.constant dense<0.000000e+00> : vector<8x256xf32>
    %312 = tpu.matmul %309, %311, %cst_304 {dimension_numbers = #tpu.dot_dimension_numbers<[1], [0], [0], [1], [0, 0, 1, 1], [], []>} : vector<8x128xbf16>, vector<128x256xbf16>, vector<8x256xf32> -> vector<8x256xf32>
    %313 = arith.addf %308, %312 : vector<8x256xf32>
    %c0_305 = arith.constant 0 : index
    %c0_306 = arith.constant 0 : index
    %314 = vector.load %arg10[%c0_305, %c0_306] : memref<1x256xf32, #tpu.memory_space<vmem>>, vector<1x256xf32>
    %315 = vector.broadcast %314 : vector<1x256xf32> to vector<8x256xf32>
    %316 = arith.addf %313, %315 : vector<8x256xf32>
    %cst_307 = arith.constant 0.000000e+00 : f32
    %317 = vector.broadcast %cst_307 : f32 to vector<8x256xf32>
    %318 = arith.maximumf %316, %317 : vector<8x256xf32>
    %cst_308 = arith.constant 0.000000e+00 : f32
    %319 = vector.broadcast %cst_308 : f32 to vector<1x256xf32>
    %320 = vector.extract_strided_slice %318 {offsets = [0, 0], sizes = [2, 256], strides = [1, 1]} : vector<8x256xf32> to vector<2x256xf32>
    %cst_309 = arith.constant dense<0.000000e+00> : vector<256xf32>
    %321 = vector.multi_reduction <add>, %320, %cst_309 [0] : vector<2x256xf32> to vector<256xf32>
    %322 = vector.shape_cast %321 : vector<256xf32> to vector<1x256xf32>
    %323 = arith.addf %319, %322 : vector<1x256xf32>
    %324 = vector.extract_strided_slice %318 {offsets = [4, 0], sizes = [2, 256], strides = [1, 1]} : vector<8x256xf32> to vector<2x256xf32>
    %cst_310 = arith.constant dense<0.000000e+00> : vector<256xf32>
    %325 = vector.multi_reduction <add>, %324, %cst_310 [0] : vector<2x256xf32> to vector<256xf32>
    %326 = vector.shape_cast %325 : vector<256xf32> to vector<1x256xf32>
    %327 = arith.addf %323, %326 : vector<1x256xf32>
    %cst_311 = arith.constant 2.500000e-01 : f32
    %328 = vector.broadcast %cst_311 : f32 to vector<1x256xf32>
    %329 = arith.mulf %327, %328 : vector<1x256xf32>
    %c0_312 = arith.constant 0 : index
    %c0_313 = arith.constant 0 : index
    %330 = vector.load %arg24[%c0_312, %c0_313] : memref<2x256xf32, #tpu.memory_space<vmem>>, vector<1x256xf32>
    tpu.vector_store %arg24[%c0_312, %c0_313], %329 {strides = array<i32>} : memref<2x256xf32, #tpu.memory_space<vmem>>, vector<1x256xf32>,
    %c0_314 = arith.constant 0 : index
    %c1_315 = arith.constant 1 : index
    %c0_316 = arith.constant 0 : index
    %c0_317 = arith.constant 0 : index
    %331 = vector.load %arg1[%c0_314, %c1_315, %c0_316, %c0_317] : memref<1x2x288x32xbf16, #tpu.memory_space<vmem>>, vector<1x1x288x32xbf16>
    %332 = vector.shape_cast %331 : vector<1x1x288x32xbf16> to vector<288x32xbf16>
    %c0_318 = arith.constant 0 : index
    %c0_319 = arith.constant 0 : index
    %333 = vector.load %arg3[%c0_318, %c0_319] : memref<32x32xbf16, #tpu.memory_space<vmem>>, vector<32x32xbf16>
    %cst_320 = arith.constant dense<0.000000e+00> : vector<288x32xf32>
    %334 = tpu.matmul %332, %333, %cst_320 {dimension_numbers = #tpu.dot_dimension_numbers<[1], [0], [0], [1], [0, 0, 1, 1], [], []>} : vector<288x32xbf16>, vector<32x32xbf16>, vector<288x32xf32> -> vector<288x32xf32>
    %c0_321 = arith.constant 0 : index
    %c0_322 = arith.constant 0 : index
    %335 = vector.load %arg4[%c0_321, %c0_322] : memref<1x32xf32, #tpu.memory_space<vmem>>, vector<1x32xf32>
    %336 = vector.broadcast %335 : vector<1x32xf32> to vector<288x32xf32>
    %337 = arith.addf %334, %336 : vector<288x32xf32>
    %cst_323 = arith.constant 0.000000e+00 : f32
    %338 = vector.broadcast %cst_323 : f32 to vector<288x32xf32>
    %339 = arith.maximumf %337, %338 : vector<288x32xf32>
    %c0_324 = arith.constant 0 : index
    %c0_325 = arith.constant 0 : index
    %340 = vector.load %arg18[%c0_324, %c0_325] : memref<288x32xf32, #tpu.memory_space<vmem>>, vector<288x32xf32>
    tpu.vector_store %arg18[%c0_324, %c0_325], %339 {strides = array<i32>} : memref<288x32xf32, #tpu.memory_space<vmem>>, vector<288x32xf32>,
    %c0_326 = arith.constant 0 : index
    %c0_327 = arith.constant 0 : index
    %341 = tpu.strided_load %arg18[%c0_326, %c0_327] {strides = array<i32: 2, 1>} : memref<288x32xf32, #tpu.memory_space<vmem>>, vector<8x32xf32>
    %c1_328 = arith.constant 1 : index
    %c0_329 = arith.constant 0 : index
    %342 = tpu.strided_load %arg18[%c1_328, %c0_329] {strides = array<i32: 2, 1>} : memref<288x32xf32, #tpu.memory_space<vmem>>, vector<8x32xf32>
    %343 = arith.maximumf %341, %342 : vector<8x32xf32>
    %c18_330 = arith.constant 18 : index
    %c0_331 = arith.constant 0 : index
    %344 = tpu.strided_load %arg18[%c18_330, %c0_331] {strides = array<i32: 2, 1>} : memref<288x32xf32, #tpu.memory_space<vmem>>, vector<8x32xf32>
    %c19_332 = arith.constant 19 : index
    %c0_333 = arith.constant 0 : index
    %345 = tpu.strided_load %arg18[%c19_332, %c0_333] {strides = array<i32: 2, 1>} : memref<288x32xf32, #tpu.memory_space<vmem>>, vector<8x32xf32>
    %346 = arith.maximumf %344, %345 : vector<8x32xf32>
    %347 = arith.maximumf %343, %346 : vector<8x32xf32>
    %348 = arith.truncf %347 : vector<8x32xf32> to vector<8x32xbf16>
    %c11_334 = arith.constant 11 : index
    %c0_335 = arith.constant 0 : index
    %349 = vector.load %arg21[%c11_334, %c0_335] : memref<110x32xbf16, #tpu.memory_space<vmem>>, vector<8x32xbf16>
    tpu.vector_store %arg21[%c11_334, %c0_335], %348 {strides = array<i32>} : memref<110x32xbf16, #tpu.memory_space<vmem>>, vector<8x32xbf16>,
    %c36_336 = arith.constant 36 : index
    %c0_337 = arith.constant 0 : index
    %350 = tpu.strided_load %arg18[%c36_336, %c0_337] {strides = array<i32: 2, 1>} : memref<288x32xf32, #tpu.memory_space<vmem>>, vector<8x32xf32>
    %c37_338 = arith.constant 37 : index
    %c0_339 = arith.constant 0 : index
    %351 = tpu.strided_load %arg18[%c37_338, %c0_339] {strides = array<i32: 2, 1>} : memref<288x32xf32, #tpu.memory_space<vmem>>, vector<8x32xf32>
    %352 = arith.maximumf %350, %351 : vector<8x32xf32>
    %c54_340 = arith.constant 54 : index
    %c0_341 = arith.constant 0 : index
    %353 = tpu.strided_load %arg18[%c54_340, %c0_341] {strides = array<i32: 2, 1>} : memref<288x32xf32, #tpu.memory_space<vmem>>, vector<8x32xf32>
    %c55_342 = arith.constant 55 : index
    %c0_343 = arith.constant 0 : index
    %354 = tpu.strided_load %arg18[%c55_342, %c0_343] {strides = array<i32: 2, 1>} : memref<288x32xf32, #tpu.memory_space<vmem>>, vector<8x32xf32>
    %355 = arith.maximumf %353, %354 : vector<8x32xf32>
    %356 = arith.maximumf %352, %355 : vector<8x32xf32>
    %357 = arith.truncf %356 : vector<8x32xf32> to vector<8x32xbf16>
    %c21_344 = arith.constant 21 : index
    %c0_345 = arith.constant 0 : index
    %358 = vector.load %arg21[%c21_344, %c0_345] : memref<110x32xbf16, #tpu.memory_space<vmem>>, vector<8x32xbf16>
    tpu.vector_store %arg21[%c21_344, %c0_345], %357 {strides = array<i32>} : memref<110x32xbf16, #tpu.memory_space<vmem>>, vector<8x32xbf16>,
    %c72_346 = arith.constant 72 : index
    %c0_347 = arith.constant 0 : index
    %359 = tpu.strided_load %arg18[%c72_346, %c0_347] {strides = array<i32: 2, 1>} : memref<288x32xf32, #tpu.memory_space<vmem>>, vector<8x32xf32>
    %c73_348 = arith.constant 73 : index
    %c0_349 = arith.constant 0 : index
    %360 = tpu.strided_load %arg18[%c73_348, %c0_349] {strides = array<i32: 2, 1>} : memref<288x32xf32, #tpu.memory_space<vmem>>, vector<8x32xf32>
    %361 = arith.maximumf %359, %360 : vector<8x32xf32>
    %c90_350 = arith.constant 90 : index
    %c0_351 = arith.constant 0 : index
    %362 = tpu.strided_load %arg18[%c90_350, %c0_351] {strides = array<i32: 2, 1>} : memref<288x32xf32, #tpu.memory_space<vmem>>, vector<8x32xf32>
    %c91_352 = arith.constant 91 : index
    %c0_353 = arith.constant 0 : index
    %363 = tpu.strided_load %arg18[%c91_352, %c0_353] {strides = array<i32: 2, 1>} : memref<288x32xf32, #tpu.memory_space<vmem>>, vector<8x32xf32>
    %364 = arith.maximumf %362, %363 : vector<8x32xf32>
    %365 = arith.maximumf %361, %364 : vector<8x32xf32>
    %366 = arith.truncf %365 : vector<8x32xf32> to vector<8x32xbf16>
    %c31_354 = arith.constant 31 : index
    %c0_355 = arith.constant 0 : index
    %367 = vector.load %arg21[%c31_354, %c0_355] : memref<110x32xbf16, #tpu.memory_space<vmem>>, vector<8x32xbf16>
    tpu.vector_store %arg21[%c31_354, %c0_355], %366 {strides = array<i32>} : memref<110x32xbf16, #tpu.memory_space<vmem>>, vector<8x32xbf16>,
    %c108_356 = arith.constant 108 : index
    %c0_357 = arith.constant 0 : index
    %368 = tpu.strided_load %arg18[%c108_356, %c0_357] {strides = array<i32: 2, 1>} : memref<288x32xf32, #tpu.memory_space<vmem>>, vector<8x32xf32>
    %c109_358 = arith.constant 109 : index
    %c0_359 = arith.constant 0 : index
    %369 = tpu.strided_load %arg18[%c109_358, %c0_359] {strides = array<i32: 2, 1>} : memref<288x32xf32, #tpu.memory_space<vmem>>, vector<8x32xf32>
    %370 = arith.maximumf %368, %369 : vector<8x32xf32>
    %c126_360 = arith.constant 126 : index
    %c0_361 = arith.constant 0 : index
    %371 = tpu.strided_load %arg18[%c126_360, %c0_361] {strides = array<i32: 2, 1>} : memref<288x32xf32, #tpu.memory_space<vmem>>, vector<8x32xf32>
    %c127_362 = arith.constant 127 : index
    %c0_363 = arith.constant 0 : index
    %372 = tpu.strided_load %arg18[%c127_362, %c0_363] {strides = array<i32: 2, 1>} : memref<288x32xf32, #tpu.memory_space<vmem>>, vector<8x32xf32>
    %373 = arith.maximumf %371, %372 : vector<8x32xf32>
    %374 = arith.maximumf %370, %373 : vector<8x32xf32>
    %375 = arith.truncf %374 : vector<8x32xf32> to vector<8x32xbf16>
    %c41_364 = arith.constant 41 : index
    %c0_365 = arith.constant 0 : index
    %376 = vector.load %arg21[%c41_364, %c0_365] : memref<110x32xbf16, #tpu.memory_space<vmem>>, vector<8x32xbf16>
    tpu.vector_store %arg21[%c41_364, %c0_365], %375 {strides = array<i32>} : memref<110x32xbf16, #tpu.memory_space<vmem>>, vector<8x32xbf16>,
    %c144_366 = arith.constant 144 : index
    %c0_367 = arith.constant 0 : index
    %377 = tpu.strided_load %arg18[%c144_366, %c0_367] {strides = array<i32: 2, 1>} : memref<288x32xf32, #tpu.memory_space<vmem>>, vector<8x32xf32>
    %c145_368 = arith.constant 145 : index
    %c0_369 = arith.constant 0 : index
    %378 = tpu.strided_load %arg18[%c145_368, %c0_369] {strides = array<i32: 2, 1>} : memref<288x32xf32, #tpu.memory_space<vmem>>, vector<8x32xf32>
    %379 = arith.maximumf %377, %378 : vector<8x32xf32>
    %c162_370 = arith.constant 162 : index
    %c0_371 = arith.constant 0 : index
    %380 = tpu.strided_load %arg18[%c162_370, %c0_371] {strides = array<i32: 2, 1>} : memref<288x32xf32, #tpu.memory_space<vmem>>, vector<8x32xf32>
    %c163_372 = arith.constant 163 : index
    %c0_373 = arith.constant 0 : index
    %381 = tpu.strided_load %arg18[%c163_372, %c0_373] {strides = array<i32: 2, 1>} : memref<288x32xf32, #tpu.memory_space<vmem>>, vector<8x32xf32>
    %382 = arith.maximumf %380, %381 : vector<8x32xf32>
    %383 = arith.maximumf %379, %382 : vector<8x32xf32>
    %384 = arith.truncf %383 : vector<8x32xf32> to vector<8x32xbf16>
    %c51_374 = arith.constant 51 : index
    %c0_375 = arith.constant 0 : index
    %385 = vector.load %arg21[%c51_374, %c0_375] : memref<110x32xbf16, #tpu.memory_space<vmem>>, vector<8x32xbf16>
    tpu.vector_store %arg21[%c51_374, %c0_375], %384 {strides = array<i32>} : memref<110x32xbf16, #tpu.memory_space<vmem>>, vector<8x32xbf16>,
    %c180_376 = arith.constant 180 : index
    %c0_377 = arith.constant 0 : index
    %386 = tpu.strided_load %arg18[%c180_376, %c0_377] {strides = array<i32: 2, 1>} : memref<288x32xf32, #tpu.memory_space<vmem>>, vector<8x32xf32>
    %c181_378 = arith.constant 181 : index
    %c0_379 = arith.constant 0 : index
    %387 = tpu.strided_load %arg18[%c181_378, %c0_379] {strides = array<i32: 2, 1>} : memref<288x32xf32, #tpu.memory_space<vmem>>, vector<8x32xf32>
    %388 = arith.maximumf %386, %387 : vector<8x32xf32>
    %c198_380 = arith.constant 198 : index
    %c0_381 = arith.constant 0 : index
    %389 = tpu.strided_load %arg18[%c198_380, %c0_381] {strides = array<i32: 2, 1>} : memref<288x32xf32, #tpu.memory_space<vmem>>, vector<8x32xf32>
    %c199_382 = arith.constant 199 : index
    %c0_383 = arith.constant 0 : index
    %390 = tpu.strided_load %arg18[%c199_382, %c0_383] {strides = array<i32: 2, 1>} : memref<288x32xf32, #tpu.memory_space<vmem>>, vector<8x32xf32>
    %391 = arith.maximumf %389, %390 : vector<8x32xf32>
    %392 = arith.maximumf %388, %391 : vector<8x32xf32>
    %393 = arith.truncf %392 : vector<8x32xf32> to vector<8x32xbf16>
    %c61_384 = arith.constant 61 : index
    %c0_385 = arith.constant 0 : index
    %394 = vector.load %arg21[%c61_384, %c0_385] : memref<110x32xbf16, #tpu.memory_space<vmem>>, vector<8x32xbf16>
    tpu.vector_store %arg21[%c61_384, %c0_385], %393 {strides = array<i32>} : memref<110x32xbf16, #tpu.memory_space<vmem>>, vector<8x32xbf16>,
    %c216_386 = arith.constant 216 : index
    %c0_387 = arith.constant 0 : index
    %395 = tpu.strided_load %arg18[%c216_386, %c0_387] {strides = array<i32: 2, 1>} : memref<288x32xf32, #tpu.memory_space<vmem>>, vector<8x32xf32>
    %c217_388 = arith.constant 217 : index
    %c0_389 = arith.constant 0 : index
    %396 = tpu.strided_load %arg18[%c217_388, %c0_389] {strides = array<i32: 2, 1>} : memref<288x32xf32, #tpu.memory_space<vmem>>, vector<8x32xf32>
    %397 = arith.maximumf %395, %396 : vector<8x32xf32>
    %c234_390 = arith.constant 234 : index
    %c0_391 = arith.constant 0 : index
    %398 = tpu.strided_load %arg18[%c234_390, %c0_391] {strides = array<i32: 2, 1>} : memref<288x32xf32, #tpu.memory_space<vmem>>, vector<8x32xf32>
    %c235_392 = arith.constant 235 : index
    %c0_393 = arith.constant 0 : index
    %399 = tpu.strided_load %arg18[%c235_392, %c0_393] {strides = array<i32: 2, 1>} : memref<288x32xf32, #tpu.memory_space<vmem>>, vector<8x32xf32>
    %400 = arith.maximumf %398, %399 : vector<8x32xf32>
    %401 = arith.maximumf %397, %400 : vector<8x32xf32>
    %402 = arith.truncf %401 : vector<8x32xf32> to vector<8x32xbf16>
    %c71_394 = arith.constant 71 : index
    %c0_395 = arith.constant 0 : index
    %403 = vector.load %arg21[%c71_394, %c0_395] : memref<110x32xbf16, #tpu.memory_space<vmem>>, vector<8x32xbf16>
    tpu.vector_store %arg21[%c71_394, %c0_395], %402 {strides = array<i32>} : memref<110x32xbf16, #tpu.memory_space<vmem>>, vector<8x32xbf16>,
    %c252_396 = arith.constant 252 : index
    %c0_397 = arith.constant 0 : index
    %404 = tpu.strided_load %arg18[%c252_396, %c0_397] {strides = array<i32: 2, 1>} : memref<288x32xf32, #tpu.memory_space<vmem>>, vector<8x32xf32>
    %c253_398 = arith.constant 253 : index
    %c0_399 = arith.constant 0 : index
    %405 = tpu.strided_load %arg18[%c253_398, %c0_399] {strides = array<i32: 2, 1>} : memref<288x32xf32, #tpu.memory_space<vmem>>, vector<8x32xf32>
    %406 = arith.maximumf %404, %405 : vector<8x32xf32>
    %c270_400 = arith.constant 270 : index
    %c0_401 = arith.constant 0 : index
    %407 = tpu.strided_load %arg18[%c270_400, %c0_401] {strides = array<i32: 2, 1>} : memref<288x32xf32, #tpu.memory_space<vmem>>, vector<8x32xf32>
    %c271_402 = arith.constant 271 : index
    %c0_403 = arith.constant 0 : index
    %408 = tpu.strided_load %arg18[%c271_402, %c0_403] {strides = array<i32: 2, 1>} : memref<288x32xf32, #tpu.memory_space<vmem>>, vector<8x32xf32>
    %409 = arith.maximumf %407, %408 : vector<8x32xf32>
    %410 = arith.maximumf %406, %409 : vector<8x32xf32>
    %411 = arith.truncf %410 : vector<8x32xf32> to vector<8x32xbf16>
    %c81_404 = arith.constant 81 : index
    %c0_405 = arith.constant 0 : index
    %412 = vector.load %arg21[%c81_404, %c0_405] : memref<110x32xbf16, #tpu.memory_space<vmem>>, vector<8x32xbf16>
    tpu.vector_store %arg21[%c81_404, %c0_405], %411 {strides = array<i32>} : memref<110x32xbf16, #tpu.memory_space<vmem>>, vector<8x32xbf16>,
    %c0_406 = arith.constant 0 : index
    %c0_407 = arith.constant 0 : index
    %413 = vector.load %arg21[%c0_406, %c0_407] : memref<110x32xbf16, #tpu.memory_space<vmem>>, vector<80x32xbf16>
    %c0_408 = arith.constant 0 : index
    %c0_409 = arith.constant 0 : index
    %c0_410 = arith.constant 0 : index
    %414 = vector.load %arg5[%c0_408, %c0_409, %c0_410] : memref<9x32x64xbf16, #tpu.memory_space<vmem>>, vector<1x32x64xbf16>
    %415 = vector.shape_cast %414 : vector<1x32x64xbf16> to vector<32x64xbf16>
    %cst_411 = arith.constant dense<0.000000e+00> : vector<80x64xf32>
    %416 = tpu.matmul %413, %415, %cst_411 {dimension_numbers = #tpu.dot_dimension_numbers<[1], [0], [0], [1], [0, 0, 1, 1], [], []>} : vector<80x32xbf16>, vector<32x64xbf16>, vector<80x64xf32> -> vector<80x64xf32>
    %c1_412 = arith.constant 1 : index
    %c0_413 = arith.constant 0 : index
    %417 = vector.load %arg21[%c1_412, %c0_413] : memref<110x32xbf16, #tpu.memory_space<vmem>>, vector<80x32xbf16>
    %c1_414 = arith.constant 1 : index
    %c0_415 = arith.constant 0 : index
    %c0_416 = arith.constant 0 : index
    %418 = vector.load %arg5[%c1_414, %c0_415, %c0_416] : memref<9x32x64xbf16, #tpu.memory_space<vmem>>, vector<1x32x64xbf16>
    %419 = vector.shape_cast %418 : vector<1x32x64xbf16> to vector<32x64xbf16>
    %cst_417 = arith.constant dense<0.000000e+00> : vector<80x64xf32>
    %420 = tpu.matmul %417, %419, %cst_417 {dimension_numbers = #tpu.dot_dimension_numbers<[1], [0], [0], [1], [0, 0, 1, 1], [], []>} : vector<80x32xbf16>, vector<32x64xbf16>, vector<80x64xf32> -> vector<80x64xf32>
    %421 = arith.addf %416, %420 : vector<80x64xf32>
    %c2_418 = arith.constant 2 : index
    %c0_419 = arith.constant 0 : index
    %422 = vector.load %arg21[%c2_418, %c0_419] : memref<110x32xbf16, #tpu.memory_space<vmem>>, vector<80x32xbf16>
    %c2_420 = arith.constant 2 : index
    %c0_421 = arith.constant 0 : index
    %c0_422 = arith.constant 0 : index
    %423 = vector.load %arg5[%c2_420, %c0_421, %c0_422] : memref<9x32x64xbf16, #tpu.memory_space<vmem>>, vector<1x32x64xbf16>
    %424 = vector.shape_cast %423 : vector<1x32x64xbf16> to vector<32x64xbf16>
    %cst_423 = arith.constant dense<0.000000e+00> : vector<80x64xf32>
    %425 = tpu.matmul %422, %424, %cst_423 {dimension_numbers = #tpu.dot_dimension_numbers<[1], [0], [0], [1], [0, 0, 1, 1], [], []>} : vector<80x32xbf16>, vector<32x64xbf16>, vector<80x64xf32> -> vector<80x64xf32>
    %426 = arith.addf %421, %425 : vector<80x64xf32>
    %c10_424 = arith.constant 10 : index
    %c0_425 = arith.constant 0 : index
    %427 = vector.load %arg21[%c10_424, %c0_425] : memref<110x32xbf16, #tpu.memory_space<vmem>>, vector<80x32xbf16>
    %c3_426 = arith.constant 3 : index
    %c0_427 = arith.constant 0 : index
    %c0_428 = arith.constant 0 : index
    %428 = vector.load %arg5[%c3_426, %c0_427, %c0_428] : memref<9x32x64xbf16, #tpu.memory_space<vmem>>, vector<1x32x64xbf16>
    %429 = vector.shape_cast %428 : vector<1x32x64xbf16> to vector<32x64xbf16>
    %cst_429 = arith.constant dense<0.000000e+00> : vector<80x64xf32>
    %430 = tpu.matmul %427, %429, %cst_429 {dimension_numbers = #tpu.dot_dimension_numbers<[1], [0], [0], [1], [0, 0, 1, 1], [], []>} : vector<80x32xbf16>, vector<32x64xbf16>, vector<80x64xf32> -> vector<80x64xf32>
    %431 = arith.addf %426, %430 : vector<80x64xf32>
    %c11_430 = arith.constant 11 : index
    %c0_431 = arith.constant 0 : index
    %432 = vector.load %arg21[%c11_430, %c0_431] : memref<110x32xbf16, #tpu.memory_space<vmem>>, vector<80x32xbf16>
    %c4_432 = arith.constant 4 : index
    %c0_433 = arith.constant 0 : index
    %c0_434 = arith.constant 0 : index
    %433 = vector.load %arg5[%c4_432, %c0_433, %c0_434] : memref<9x32x64xbf16, #tpu.memory_space<vmem>>, vector<1x32x64xbf16>
    %434 = vector.shape_cast %433 : vector<1x32x64xbf16> to vector<32x64xbf16>
    %cst_435 = arith.constant dense<0.000000e+00> : vector<80x64xf32>
    %435 = tpu.matmul %432, %434, %cst_435 {dimension_numbers = #tpu.dot_dimension_numbers<[1], [0], [0], [1], [0, 0, 1, 1], [], []>} : vector<80x32xbf16>, vector<32x64xbf16>, vector<80x64xf32> -> vector<80x64xf32>
    %436 = arith.addf %431, %435 : vector<80x64xf32>
    %c12_436 = arith.constant 12 : index
    %c0_437 = arith.constant 0 : index
    %437 = vector.load %arg21[%c12_436, %c0_437] : memref<110x32xbf16, #tpu.memory_space<vmem>>, vector<80x32xbf16>
    %c5_438 = arith.constant 5 : index
    %c0_439 = arith.constant 0 : index
    %c0_440 = arith.constant 0 : index
    %438 = vector.load %arg5[%c5_438, %c0_439, %c0_440] : memref<9x32x64xbf16, #tpu.memory_space<vmem>>, vector<1x32x64xbf16>
    %439 = vector.shape_cast %438 : vector<1x32x64xbf16> to vector<32x64xbf16>
    %cst_441 = arith.constant dense<0.000000e+00> : vector<80x64xf32>
    %440 = tpu.matmul %437, %439, %cst_441 {dimension_numbers = #tpu.dot_dimension_numbers<[1], [0], [0], [1], [0, 0, 1, 1], [], []>} : vector<80x32xbf16>, vector<32x64xbf16>, vector<80x64xf32> -> vector<80x64xf32>
    %441 = arith.addf %436, %440 : vector<80x64xf32>
    %c20_442 = arith.constant 20 : index
    %c0_443 = arith.constant 0 : index
    %442 = vector.load %arg21[%c20_442, %c0_443] : memref<110x32xbf16, #tpu.memory_space<vmem>>, vector<80x32xbf16>
    %c6_444 = arith.constant 6 : index
    %c0_445 = arith.constant 0 : index
    %c0_446 = arith.constant 0 : index
    %443 = vector.load %arg5[%c6_444, %c0_445, %c0_446] : memref<9x32x64xbf16, #tpu.memory_space<vmem>>, vector<1x32x64xbf16>
    %444 = vector.shape_cast %443 : vector<1x32x64xbf16> to vector<32x64xbf16>
    %cst_447 = arith.constant dense<0.000000e+00> : vector<80x64xf32>
    %445 = tpu.matmul %442, %444, %cst_447 {dimension_numbers = #tpu.dot_dimension_numbers<[1], [0], [0], [1], [0, 0, 1, 1], [], []>} : vector<80x32xbf16>, vector<32x64xbf16>, vector<80x64xf32> -> vector<80x64xf32>
    %446 = arith.addf %441, %445 : vector<80x64xf32>
    %c21_448 = arith.constant 21 : index
    %c0_449 = arith.constant 0 : index
    %447 = vector.load %arg21[%c21_448, %c0_449] : memref<110x32xbf16, #tpu.memory_space<vmem>>, vector<80x32xbf16>
    %c7_450 = arith.constant 7 : index
    %c0_451 = arith.constant 0 : index
    %c0_452 = arith.constant 0 : index
    %448 = vector.load %arg5[%c7_450, %c0_451, %c0_452] : memref<9x32x64xbf16, #tpu.memory_space<vmem>>, vector<1x32x64xbf16>
    %449 = vector.shape_cast %448 : vector<1x32x64xbf16> to vector<32x64xbf16>
    %cst_453 = arith.constant dense<0.000000e+00> : vector<80x64xf32>
    %450 = tpu.matmul %447, %449, %cst_453 {dimension_numbers = #tpu.dot_dimension_numbers<[1], [0], [0], [1], [0, 0, 1, 1], [], []>} : vector<80x32xbf16>, vector<32x64xbf16>, vector<80x64xf32> -> vector<80x64xf32>
    %451 = arith.addf %446, %450 : vector<80x64xf32>
    %c22_454 = arith.constant 22 : index
    %c0_455 = arith.constant 0 : index
    %452 = vector.load %arg21[%c22_454, %c0_455] : memref<110x32xbf16, #tpu.memory_space<vmem>>, vector<80x32xbf16>
    %c8_456 = arith.constant 8 : index
    %c0_457 = arith.constant 0 : index
    %c0_458 = arith.constant 0 : index
    %453 = vector.load %arg5[%c8_456, %c0_457, %c0_458] : memref<9x32x64xbf16, #tpu.memory_space<vmem>>, vector<1x32x64xbf16>
    %454 = vector.shape_cast %453 : vector<1x32x64xbf16> to vector<32x64xbf16>
    %cst_459 = arith.constant dense<0.000000e+00> : vector<80x64xf32>
    %455 = tpu.matmul %452, %454, %cst_459 {dimension_numbers = #tpu.dot_dimension_numbers<[1], [0], [0], [1], [0, 0, 1, 1], [], []>} : vector<80x32xbf16>, vector<32x64xbf16>, vector<80x64xf32> -> vector<80x64xf32>
    %456 = arith.addf %451, %455 : vector<80x64xf32>
    %c0_460 = arith.constant 0 : index
    %c0_461 = arith.constant 0 : index
    %457 = vector.load %arg6[%c0_460, %c0_461] : memref<1x64xf32, #tpu.memory_space<vmem>>, vector<1x64xf32>
    %458 = vector.broadcast %457 : vector<1x64xf32> to vector<80x64xf32>
    %459 = arith.addf %456, %458 : vector<80x64xf32>
    %cst_462 = arith.constant 0.000000e+00 : f32
    %460 = vector.broadcast %cst_462 : f32 to vector<80x64xf32>
    %461 = arith.maximumf %459, %460 : vector<80x64xf32>
    %c0_463 = arith.constant 0 : index
    %c0_464 = arith.constant 0 : index
    %462 = vector.load %arg19[%c0_463, %c0_464] : memref<80x64xf32, #tpu.memory_space<vmem>>, vector<80x64xf32>
    tpu.vector_store %arg19[%c0_463, %c0_464], %461 {strides = array<i32>} : memref<80x64xf32, #tpu.memory_space<vmem>>, vector<80x64xf32>,
    %c0_465 = arith.constant 0 : index
    %c0_466 = arith.constant 0 : index
    %463 = tpu.strided_load %arg19[%c0_465, %c0_466] {strides = array<i32: 2, 1>} : memref<80x64xf32, #tpu.memory_space<vmem>>, vector<4x64xf32>
    %c1_467 = arith.constant 1 : index
    %c0_468 = arith.constant 0 : index
    %464 = tpu.strided_load %arg19[%c1_467, %c0_468] {strides = array<i32: 2, 1>} : memref<80x64xf32, #tpu.memory_space<vmem>>, vector<4x64xf32>
    %465 = arith.maximumf %463, %464 : vector<4x64xf32>
    %c10_469 = arith.constant 10 : index
    %c0_470 = arith.constant 0 : index
    %466 = tpu.strided_load %arg19[%c10_469, %c0_470] {strides = array<i32: 2, 1>} : memref<80x64xf32, #tpu.memory_space<vmem>>, vector<4x64xf32>
    %c11_471 = arith.constant 11 : index
    %c0_472 = arith.constant 0 : index
    %467 = tpu.strided_load %arg19[%c11_471, %c0_472] {strides = array<i32: 2, 1>} : memref<80x64xf32, #tpu.memory_space<vmem>>, vector<4x64xf32>
    %468 = arith.maximumf %466, %467 : vector<4x64xf32>
    %469 = arith.maximumf %465, %468 : vector<4x64xf32>
    %470 = arith.truncf %469 : vector<4x64xf32> to vector<4x64xbf16>
    %c7_473 = arith.constant 7 : index
    %c0_474 = arith.constant 0 : index
    %471 = vector.load %arg22[%c7_473, %c0_474] : memref<42x64xbf16, #tpu.memory_space<vmem>>, vector<4x64xbf16>
    tpu.vector_store %arg22[%c7_473, %c0_474], %470 {strides = array<i32>} : memref<42x64xbf16, #tpu.memory_space<vmem>>, vector<4x64xbf16>,
    %c20_475 = arith.constant 20 : index
    %c0_476 = arith.constant 0 : index
    %472 = tpu.strided_load %arg19[%c20_475, %c0_476] {strides = array<i32: 2, 1>} : memref<80x64xf32, #tpu.memory_space<vmem>>, vector<4x64xf32>
    %c21_477 = arith.constant 21 : index
    %c0_478 = arith.constant 0 : index
    %473 = tpu.strided_load %arg19[%c21_477, %c0_478] {strides = array<i32: 2, 1>} : memref<80x64xf32, #tpu.memory_space<vmem>>, vector<4x64xf32>
    %474 = arith.maximumf %472, %473 : vector<4x64xf32>
    %c30_479 = arith.constant 30 : index
    %c0_480 = arith.constant 0 : index
    %475 = tpu.strided_load %arg19[%c30_479, %c0_480] {strides = array<i32: 2, 1>} : memref<80x64xf32, #tpu.memory_space<vmem>>, vector<4x64xf32>
    %c31_481 = arith.constant 31 : index
    %c0_482 = arith.constant 0 : index
    %476 = tpu.strided_load %arg19[%c31_481, %c0_482] {strides = array<i32: 2, 1>} : memref<80x64xf32, #tpu.memory_space<vmem>>, vector<4x64xf32>
    %477 = arith.maximumf %475, %476 : vector<4x64xf32>
    %478 = arith.maximumf %474, %477 : vector<4x64xf32>
    %479 = arith.truncf %478 : vector<4x64xf32> to vector<4x64xbf16>
    %c13_483 = arith.constant 13 : index
    %c0_484 = arith.constant 0 : index
    %480 = vector.load %arg22[%c13_483, %c0_484] : memref<42x64xbf16, #tpu.memory_space<vmem>>, vector<4x64xbf16>
    tpu.vector_store %arg22[%c13_483, %c0_484], %479 {strides = array<i32>} : memref<42x64xbf16, #tpu.memory_space<vmem>>, vector<4x64xbf16>,
    %c40_485 = arith.constant 40 : index
    %c0_486 = arith.constant 0 : index
    %481 = tpu.strided_load %arg19[%c40_485, %c0_486] {strides = array<i32: 2, 1>} : memref<80x64xf32, #tpu.memory_space<vmem>>, vector<4x64xf32>
    %c41_487 = arith.constant 41 : index
    %c0_488 = arith.constant 0 : index
    %482 = tpu.strided_load %arg19[%c41_487, %c0_488] {strides = array<i32: 2, 1>} : memref<80x64xf32, #tpu.memory_space<vmem>>, vector<4x64xf32>
    %483 = arith.maximumf %481, %482 : vector<4x64xf32>
    %c50_489 = arith.constant 50 : index
    %c0_490 = arith.constant 0 : index
    %484 = tpu.strided_load %arg19[%c50_489, %c0_490] {strides = array<i32: 2, 1>} : memref<80x64xf32, #tpu.memory_space<vmem>>, vector<4x64xf32>
    %c51_491 = arith.constant 51 : index
    %c0_492 = arith.constant 0 : index
    %485 = tpu.strided_load %arg19[%c51_491, %c0_492] {strides = array<i32: 2, 1>} : memref<80x64xf32, #tpu.memory_space<vmem>>, vector<4x64xf32>
    %486 = arith.maximumf %484, %485 : vector<4x64xf32>
    %487 = arith.maximumf %483, %486 : vector<4x64xf32>
    %488 = arith.truncf %487 : vector<4x64xf32> to vector<4x64xbf16>
    %c19_493 = arith.constant 19 : index
    %c0_494 = arith.constant 0 : index
    %489 = vector.load %arg22[%c19_493, %c0_494] : memref<42x64xbf16, #tpu.memory_space<vmem>>, vector<4x64xbf16>
    tpu.vector_store %arg22[%c19_493, %c0_494], %488 {strides = array<i32>} : memref<42x64xbf16, #tpu.memory_space<vmem>>, vector<4x64xbf16>,
    %c60_495 = arith.constant 60 : index
    %c0_496 = arith.constant 0 : index
    %490 = tpu.strided_load %arg19[%c60_495, %c0_496] {strides = array<i32: 2, 1>} : memref<80x64xf32, #tpu.memory_space<vmem>>, vector<4x64xf32>
    %c61_497 = arith.constant 61 : index
    %c0_498 = arith.constant 0 : index
    %491 = tpu.strided_load %arg19[%c61_497, %c0_498] {strides = array<i32: 2, 1>} : memref<80x64xf32, #tpu.memory_space<vmem>>, vector<4x64xf32>
    %492 = arith.maximumf %490, %491 : vector<4x64xf32>
    %c70_499 = arith.constant 70 : index
    %c0_500 = arith.constant 0 : index
    %493 = tpu.strided_load %arg19[%c70_499, %c0_500] {strides = array<i32: 2, 1>} : memref<80x64xf32, #tpu.memory_space<vmem>>, vector<4x64xf32>
    %c71_501 = arith.constant 71 : index
    %c0_502 = arith.constant 0 : index
    %494 = tpu.strided_load %arg19[%c71_501, %c0_502] {strides = array<i32: 2, 1>} : memref<80x64xf32, #tpu.memory_space<vmem>>, vector<4x64xf32>
    %495 = arith.maximumf %493, %494 : vector<4x64xf32>
    %496 = arith.maximumf %492, %495 : vector<4x64xf32>
    %497 = arith.truncf %496 : vector<4x64xf32> to vector<4x64xbf16>
    %c25_503 = arith.constant 25 : index
    %c0_504 = arith.constant 0 : index
    %498 = vector.load %arg22[%c25_503, %c0_504] : memref<42x64xbf16, #tpu.memory_space<vmem>>, vector<4x64xbf16>
    tpu.vector_store %arg22[%c25_503, %c0_504], %497 {strides = array<i32>} : memref<42x64xbf16, #tpu.memory_space<vmem>>, vector<4x64xbf16>,
    %c0_505 = arith.constant 0 : index
    %c0_506 = arith.constant 0 : index
    %499 = vector.load %arg22[%c0_505, %c0_506] : memref<42x64xbf16, #tpu.memory_space<vmem>>, vector<24x64xbf16>
    %c0_507 = arith.constant 0 : index
    %c0_508 = arith.constant 0 : index
    %c0_509 = arith.constant 0 : index
    %500 = vector.load %arg7[%c0_507, %c0_508, %c0_509] : memref<9x64x128xbf16, #tpu.memory_space<vmem>>, vector<1x64x128xbf16>
    %501 = vector.shape_cast %500 : vector<1x64x128xbf16> to vector<64x128xbf16>
    %cst_510 = arith.constant dense<0.000000e+00> : vector<24x128xf32>
    %502 = tpu.matmul %499, %501, %cst_510 {dimension_numbers = #tpu.dot_dimension_numbers<[1], [0], [0], [1], [0, 0, 1, 1], [], []>} : vector<24x64xbf16>, vector<64x128xbf16>, vector<24x128xf32> -> vector<24x128xf32>
    %c1_511 = arith.constant 1 : index
    %c0_512 = arith.constant 0 : index
    %503 = vector.load %arg22[%c1_511, %c0_512] : memref<42x64xbf16, #tpu.memory_space<vmem>>, vector<24x64xbf16>
    %c1_513 = arith.constant 1 : index
    %c0_514 = arith.constant 0 : index
    %c0_515 = arith.constant 0 : index
    %504 = vector.load %arg7[%c1_513, %c0_514, %c0_515] : memref<9x64x128xbf16, #tpu.memory_space<vmem>>, vector<1x64x128xbf16>
    %505 = vector.shape_cast %504 : vector<1x64x128xbf16> to vector<64x128xbf16>
    %cst_516 = arith.constant dense<0.000000e+00> : vector<24x128xf32>
    %506 = tpu.matmul %503, %505, %cst_516 {dimension_numbers = #tpu.dot_dimension_numbers<[1], [0], [0], [1], [0, 0, 1, 1], [], []>} : vector<24x64xbf16>, vector<64x128xbf16>, vector<24x128xf32> -> vector<24x128xf32>
    %507 = arith.addf %502, %506 : vector<24x128xf32>
    %c2_517 = arith.constant 2 : index
    %c0_518 = arith.constant 0 : index
    %508 = vector.load %arg22[%c2_517, %c0_518] : memref<42x64xbf16, #tpu.memory_space<vmem>>, vector<24x64xbf16>
    %c2_519 = arith.constant 2 : index
    %c0_520 = arith.constant 0 : index
    %c0_521 = arith.constant 0 : index
    %509 = vector.load %arg7[%c2_519, %c0_520, %c0_521] : memref<9x64x128xbf16, #tpu.memory_space<vmem>>, vector<1x64x128xbf16>
    %510 = vector.shape_cast %509 : vector<1x64x128xbf16> to vector<64x128xbf16>
    %cst_522 = arith.constant dense<0.000000e+00> : vector<24x128xf32>
    %511 = tpu.matmul %508, %510, %cst_522 {dimension_numbers = #tpu.dot_dimension_numbers<[1], [0], [0], [1], [0, 0, 1, 1], [], []>} : vector<24x64xbf16>, vector<64x128xbf16>, vector<24x128xf32> -> vector<24x128xf32>
    %512 = arith.addf %507, %511 : vector<24x128xf32>
    %c6_523 = arith.constant 6 : index
    %c0_524 = arith.constant 0 : index
    %513 = vector.load %arg22[%c6_523, %c0_524] : memref<42x64xbf16, #tpu.memory_space<vmem>>, vector<24x64xbf16>
    %c3_525 = arith.constant 3 : index
    %c0_526 = arith.constant 0 : index
    %c0_527 = arith.constant 0 : index
    %514 = vector.load %arg7[%c3_525, %c0_526, %c0_527] : memref<9x64x128xbf16, #tpu.memory_space<vmem>>, vector<1x64x128xbf16>
    %515 = vector.shape_cast %514 : vector<1x64x128xbf16> to vector<64x128xbf16>
    %cst_528 = arith.constant dense<0.000000e+00> : vector<24x128xf32>
    %516 = tpu.matmul %513, %515, %cst_528 {dimension_numbers = #tpu.dot_dimension_numbers<[1], [0], [0], [1], [0, 0, 1, 1], [], []>} : vector<24x64xbf16>, vector<64x128xbf16>, vector<24x128xf32> -> vector<24x128xf32>
    %517 = arith.addf %512, %516 : vector<24x128xf32>
    %c7_529 = arith.constant 7 : index
    %c0_530 = arith.constant 0 : index
    %518 = vector.load %arg22[%c7_529, %c0_530] : memref<42x64xbf16, #tpu.memory_space<vmem>>, vector<24x64xbf16>
    %c4_531 = arith.constant 4 : index
    %c0_532 = arith.constant 0 : index
    %c0_533 = arith.constant 0 : index
    %519 = vector.load %arg7[%c4_531, %c0_532, %c0_533] : memref<9x64x128xbf16, #tpu.memory_space<vmem>>, vector<1x64x128xbf16>
    %520 = vector.shape_cast %519 : vector<1x64x128xbf16> to vector<64x128xbf16>
    %cst_534 = arith.constant dense<0.000000e+00> : vector<24x128xf32>
    %521 = tpu.matmul %518, %520, %cst_534 {dimension_numbers = #tpu.dot_dimension_numbers<[1], [0], [0], [1], [0, 0, 1, 1], [], []>} : vector<24x64xbf16>, vector<64x128xbf16>, vector<24x128xf32> -> vector<24x128xf32>
    %522 = arith.addf %517, %521 : vector<24x128xf32>
    %c8_535 = arith.constant 8 : index
    %c0_536 = arith.constant 0 : index
    %523 = vector.load %arg22[%c8_535, %c0_536] : memref<42x64xbf16, #tpu.memory_space<vmem>>, vector<24x64xbf16>
    %c5_537 = arith.constant 5 : index
    %c0_538 = arith.constant 0 : index
    %c0_539 = arith.constant 0 : index
    %524 = vector.load %arg7[%c5_537, %c0_538, %c0_539] : memref<9x64x128xbf16, #tpu.memory_space<vmem>>, vector<1x64x128xbf16>
    %525 = vector.shape_cast %524 : vector<1x64x128xbf16> to vector<64x128xbf16>
    %cst_540 = arith.constant dense<0.000000e+00> : vector<24x128xf32>
    %526 = tpu.matmul %523, %525, %cst_540 {dimension_numbers = #tpu.dot_dimension_numbers<[1], [0], [0], [1], [0, 0, 1, 1], [], []>} : vector<24x64xbf16>, vector<64x128xbf16>, vector<24x128xf32> -> vector<24x128xf32>
    %527 = arith.addf %522, %526 : vector<24x128xf32>
    %c12_541 = arith.constant 12 : index
    %c0_542 = arith.constant 0 : index
    %528 = vector.load %arg22[%c12_541, %c0_542] : memref<42x64xbf16, #tpu.memory_space<vmem>>, vector<24x64xbf16>
    %c6_543 = arith.constant 6 : index
    %c0_544 = arith.constant 0 : index
    %c0_545 = arith.constant 0 : index
    %529 = vector.load %arg7[%c6_543, %c0_544, %c0_545] : memref<9x64x128xbf16, #tpu.memory_space<vmem>>, vector<1x64x128xbf16>
    %530 = vector.shape_cast %529 : vector<1x64x128xbf16> to vector<64x128xbf16>
    %cst_546 = arith.constant dense<0.000000e+00> : vector<24x128xf32>
    %531 = tpu.matmul %528, %530, %cst_546 {dimension_numbers = #tpu.dot_dimension_numbers<[1], [0], [0], [1], [0, 0, 1, 1], [], []>} : vector<24x64xbf16>, vector<64x128xbf16>, vector<24x128xf32> -> vector<24x128xf32>
    %532 = arith.addf %527, %531 : vector<24x128xf32>
    %c13_547 = arith.constant 13 : index
    %c0_548 = arith.constant 0 : index
    %533 = vector.load %arg22[%c13_547, %c0_548] : memref<42x64xbf16, #tpu.memory_space<vmem>>, vector<24x64xbf16>
    %c7_549 = arith.constant 7 : index
    %c0_550 = arith.constant 0 : index
    %c0_551 = arith.constant 0 : index
    %534 = vector.load %arg7[%c7_549, %c0_550, %c0_551] : memref<9x64x128xbf16, #tpu.memory_space<vmem>>, vector<1x64x128xbf16>
    %535 = vector.shape_cast %534 : vector<1x64x128xbf16> to vector<64x128xbf16>
    %cst_552 = arith.constant dense<0.000000e+00> : vector<24x128xf32>
    %536 = tpu.matmul %533, %535, %cst_552 {dimension_numbers = #tpu.dot_dimension_numbers<[1], [0], [0], [1], [0, 0, 1, 1], [], []>} : vector<24x64xbf16>, vector<64x128xbf16>, vector<24x128xf32> -> vector<24x128xf32>
    %537 = arith.addf %532, %536 : vector<24x128xf32>
    %c14_553 = arith.constant 14 : index
    %c0_554 = arith.constant 0 : index
    %538 = vector.load %arg22[%c14_553, %c0_554] : memref<42x64xbf16, #tpu.memory_space<vmem>>, vector<24x64xbf16>
    %c8_555 = arith.constant 8 : index
    %c0_556 = arith.constant 0 : index
    %c0_557 = arith.constant 0 : index
    %539 = vector.load %arg7[%c8_555, %c0_556, %c0_557] : memref<9x64x128xbf16, #tpu.memory_space<vmem>>, vector<1x64x128xbf16>
    %540 = vector.shape_cast %539 : vector<1x64x128xbf16> to vector<64x128xbf16>
    %cst_558 = arith.constant dense<0.000000e+00> : vector<24x128xf32>
    %541 = tpu.matmul %538, %540, %cst_558 {dimension_numbers = #tpu.dot_dimension_numbers<[1], [0], [0], [1], [0, 0, 1, 1], [], []>} : vector<24x64xbf16>, vector<64x128xbf16>, vector<24x128xf32> -> vector<24x128xf32>
    %542 = arith.addf %537, %541 : vector<24x128xf32>
    %c0_559 = arith.constant 0 : index
    %c0_560 = arith.constant 0 : index
    %543 = vector.load %arg8[%c0_559, %c0_560] : memref<1x128xf32, #tpu.memory_space<vmem>>, vector<1x128xf32>
    %544 = vector.broadcast %543 : vector<1x128xf32> to vector<24x128xf32>
    %545 = arith.addf %542, %544 : vector<24x128xf32>
    %cst_561 = arith.constant 0.000000e+00 : f32
    %546 = vector.broadcast %cst_561 : f32 to vector<24x128xf32>
    %547 = arith.maximumf %545, %546 : vector<24x128xf32>
    %c0_562 = arith.constant 0 : index
    %c0_563 = arith.constant 0 : index
    %548 = vector.load %arg20[%c0_562, %c0_563] : memref<24x128xf32, #tpu.memory_space<vmem>>, vector<24x128xf32>
    tpu.vector_store %arg20[%c0_562, %c0_563], %547 {strides = array<i32>} : memref<24x128xf32, #tpu.memory_space<vmem>>, vector<24x128xf32>,
    %c0_564 = arith.constant 0 : index
    %c0_565 = arith.constant 0 : index
    %549 = tpu.strided_load %arg20[%c0_564, %c0_565] {strides = array<i32: 2, 1>} : memref<24x128xf32, #tpu.memory_space<vmem>>, vector<2x128xf32>
    %c1_566 = arith.constant 1 : index
    %c0_567 = arith.constant 0 : index
    %550 = tpu.strided_load %arg20[%c1_566, %c0_567] {strides = array<i32: 2, 1>} : memref<24x128xf32, #tpu.memory_space<vmem>>, vector<2x128xf32>
    %551 = arith.maximumf %549, %550 : vector<2x128xf32>
    %c6_568 = arith.constant 6 : index
    %c0_569 = arith.constant 0 : index
    %552 = tpu.strided_load %arg20[%c6_568, %c0_569] {strides = array<i32: 2, 1>} : memref<24x128xf32, #tpu.memory_space<vmem>>, vector<2x128xf32>
    %c7_570 = arith.constant 7 : index
    %c0_571 = arith.constant 0 : index
    %553 = tpu.strided_load %arg20[%c7_570, %c0_571] {strides = array<i32: 2, 1>} : memref<24x128xf32, #tpu.memory_space<vmem>>, vector<2x128xf32>
    %554 = arith.maximumf %552, %553 : vector<2x128xf32>
    %555 = arith.maximumf %551, %554 : vector<2x128xf32>
    %556 = arith.truncf %555 : vector<2x128xf32> to vector<2x128xbf16>
    %c5_572 = arith.constant 5 : index
    %c0_573 = arith.constant 0 : index
    %557 = vector.load %arg23[%c5_572, %c0_573] : memref<20x128xbf16, #tpu.memory_space<vmem>>, vector<2x128xbf16>
    tpu.vector_store %arg23[%c5_572, %c0_573], %556 {strides = array<i32>} : memref<20x128xbf16, #tpu.memory_space<vmem>>, vector<2x128xbf16>,
    %c12_574 = arith.constant 12 : index
    %c0_575 = arith.constant 0 : index
    %558 = tpu.strided_load %arg20[%c12_574, %c0_575] {strides = array<i32: 2, 1>} : memref<24x128xf32, #tpu.memory_space<vmem>>, vector<2x128xf32>
    %c13_576 = arith.constant 13 : index
    %c0_577 = arith.constant 0 : index
    %559 = tpu.strided_load %arg20[%c13_576, %c0_577] {strides = array<i32: 2, 1>} : memref<24x128xf32, #tpu.memory_space<vmem>>, vector<2x128xf32>
    %560 = arith.maximumf %558, %559 : vector<2x128xf32>
    %c18_578 = arith.constant 18 : index
    %c0_579 = arith.constant 0 : index
    %561 = tpu.strided_load %arg20[%c18_578, %c0_579] {strides = array<i32: 2, 1>} : memref<24x128xf32, #tpu.memory_space<vmem>>, vector<2x128xf32>
    %c19_580 = arith.constant 19 : index
    %c0_581 = arith.constant 0 : index
    %562 = tpu.strided_load %arg20[%c19_580, %c0_581] {strides = array<i32: 2, 1>} : memref<24x128xf32, #tpu.memory_space<vmem>>, vector<2x128xf32>
    %563 = arith.maximumf %561, %562 : vector<2x128xf32>
    %564 = arith.maximumf %560, %563 : vector<2x128xf32>
    %565 = arith.truncf %564 : vector<2x128xf32> to vector<2x128xbf16>
    %c9_582 = arith.constant 9 : index
    %c0_583 = arith.constant 0 : index
    %566 = vector.load %arg23[%c9_582, %c0_583] : memref<20x128xbf16, #tpu.memory_space<vmem>>, vector<2x128xbf16>
    tpu.vector_store %arg23[%c9_582, %c0_583], %565 {strides = array<i32>} : memref<20x128xbf16, #tpu.memory_space<vmem>>, vector<2x128xbf16>,
    %c0_584 = arith.constant 0 : index
    %c0_585 = arith.constant 0 : index
    %567 = vector.load %arg23[%c0_584, %c0_585] : memref<20x128xbf16, #tpu.memory_space<vmem>>, vector<8x128xbf16>
    %c0_586 = arith.constant 0 : index
    %c0_587 = arith.constant 0 : index
    %c0_588 = arith.constant 0 : index
    %568 = vector.load %arg9[%c0_586, %c0_587, %c0_588] : memref<9x128x256xbf16, #tpu.memory_space<vmem>>, vector<1x128x256xbf16>
    %569 = vector.shape_cast %568 : vector<1x128x256xbf16> to vector<128x256xbf16>
    %cst_589 = arith.constant dense<0.000000e+00> : vector<8x256xf32>
    %570 = tpu.matmul %567, %569, %cst_589 {dimension_numbers = #tpu.dot_dimension_numbers<[1], [0], [0], [1], [0, 0, 1, 1], [], []>} : vector<8x128xbf16>, vector<128x256xbf16>, vector<8x256xf32> -> vector<8x256xf32>
    %c1_590 = arith.constant 1 : index
    %c0_591 = arith.constant 0 : index
    %571 = vector.load %arg23[%c1_590, %c0_591] : memref<20x128xbf16, #tpu.memory_space<vmem>>, vector<8x128xbf16>
    %c1_592 = arith.constant 1 : index
    %c0_593 = arith.constant 0 : index
    %c0_594 = arith.constant 0 : index
    %572 = vector.load %arg9[%c1_592, %c0_593, %c0_594] : memref<9x128x256xbf16, #tpu.memory_space<vmem>>, vector<1x128x256xbf16>
    %573 = vector.shape_cast %572 : vector<1x128x256xbf16> to vector<128x256xbf16>
    %cst_595 = arith.constant dense<0.000000e+00> : vector<8x256xf32>
    %574 = tpu.matmul %571, %573, %cst_595 {dimension_numbers = #tpu.dot_dimension_numbers<[1], [0], [0], [1], [0, 0, 1, 1], [], []>} : vector<8x128xbf16>, vector<128x256xbf16>, vector<8x256xf32> -> vector<8x256xf32>
    %575 = arith.addf %570, %574 : vector<8x256xf32>
    %c2_596 = arith.constant 2 : index
    %c0_597 = arith.constant 0 : index
    %576 = vector.load %arg23[%c2_596, %c0_597] : memref<20x128xbf16, #tpu.memory_space<vmem>>, vector<8x128xbf16>
    %c2_598 = arith.constant 2 : index
    %c0_599 = arith.constant 0 : index
    %c0_600 = arith.constant 0 : index
    %577 = vector.load %arg9[%c2_598, %c0_599, %c0_600] : memref<9x128x256xbf16, #tpu.memory_space<vmem>>, vector<1x128x256xbf16>
    %578 = vector.shape_cast %577 : vector<1x128x256xbf16> to vector<128x256xbf16>
    %cst_601 = arith.constant dense<0.000000e+00> : vector<8x256xf32>
    %579 = tpu.matmul %576, %578, %cst_601 {dimension_numbers = #tpu.dot_dimension_numbers<[1], [0], [0], [1], [0, 0, 1, 1], [], []>} : vector<8x128xbf16>, vector<128x256xbf16>, vector<8x256xf32> -> vector<8x256xf32>
    %580 = arith.addf %575, %579 : vector<8x256xf32>
    %c4_602 = arith.constant 4 : index
    %c0_603 = arith.constant 0 : index
    %581 = vector.load %arg23[%c4_602, %c0_603] : memref<20x128xbf16, #tpu.memory_space<vmem>>, vector<8x128xbf16>
    %c3_604 = arith.constant 3 : index
    %c0_605 = arith.constant 0 : index
    %c0_606 = arith.constant 0 : index
    %582 = vector.load %arg9[%c3_604, %c0_605, %c0_606] : memref<9x128x256xbf16, #tpu.memory_space<vmem>>, vector<1x128x256xbf16>
    %583 = vector.shape_cast %582 : vector<1x128x256xbf16> to vector<128x256xbf16>
    %cst_607 = arith.constant dense<0.000000e+00> : vector<8x256xf32>
    %584 = tpu.matmul %581, %583, %cst_607 {dimension_numbers = #tpu.dot_dimension_numbers<[1], [0], [0], [1], [0, 0, 1, 1], [], []>} : vector<8x128xbf16>, vector<128x256xbf16>, vector<8x256xf32> -> vector<8x256xf32>
    %585 = arith.addf %580, %584 : vector<8x256xf32>
    %c5_608 = arith.constant 5 : index
    %c0_609 = arith.constant 0 : index
    %586 = vector.load %arg23[%c5_608, %c0_609] : memref<20x128xbf16, #tpu.memory_space<vmem>>, vector<8x128xbf16>
    %c4_610 = arith.constant 4 : index
    %c0_611 = arith.constant 0 : index
    %c0_612 = arith.constant 0 : index
    %587 = vector.load %arg9[%c4_610, %c0_611, %c0_612] : memref<9x128x256xbf16, #tpu.memory_space<vmem>>, vector<1x128x256xbf16>
    %588 = vector.shape_cast %587 : vector<1x128x256xbf16> to vector<128x256xbf16>
    %cst_613 = arith.constant dense<0.000000e+00> : vector<8x256xf32>
    %589 = tpu.matmul %586, %588, %cst_613 {dimension_numbers = #tpu.dot_dimension_numbers<[1], [0], [0], [1], [0, 0, 1, 1], [], []>} : vector<8x128xbf16>, vector<128x256xbf16>, vector<8x256xf32> -> vector<8x256xf32>
    %590 = arith.addf %585, %589 : vector<8x256xf32>
    %c6_614 = arith.constant 6 : index
    %c0_615 = arith.constant 0 : index
    %591 = vector.load %arg23[%c6_614, %c0_615] : memref<20x128xbf16, #tpu.memory_space<vmem>>, vector<8x128xbf16>
    %c5_616 = arith.constant 5 : index
    %c0_617 = arith.constant 0 : index
    %c0_618 = arith.constant 0 : index
    %592 = vector.load %arg9[%c5_616, %c0_617, %c0_618] : memref<9x128x256xbf16, #tpu.memory_space<vmem>>, vector<1x128x256xbf16>
    %593 = vector.shape_cast %592 : vector<1x128x256xbf16> to vector<128x256xbf16>
    %cst_619 = arith.constant dense<0.000000e+00> : vector<8x256xf32>
    %594 = tpu.matmul %591, %593, %cst_619 {dimension_numbers = #tpu.dot_dimension_numbers<[1], [0], [0], [1], [0, 0, 1, 1], [], []>} : vector<8x128xbf16>, vector<128x256xbf16>, vector<8x256xf32> -> vector<8x256xf32>
    %595 = arith.addf %590, %594 : vector<8x256xf32>
    %c8_620 = arith.constant 8 : index
    %c0_621 = arith.constant 0 : index
    %596 = vector.load %arg23[%c8_620, %c0_621] : memref<20x128xbf16, #tpu.memory_space<vmem>>, vector<8x128xbf16>
    %c6_622 = arith.constant 6 : index
    %c0_623 = arith.constant 0 : index
    %c0_624 = arith.constant 0 : index
    %597 = vector.load %arg9[%c6_622, %c0_623, %c0_624] : memref<9x128x256xbf16, #tpu.memory_space<vmem>>, vector<1x128x256xbf16>
    %598 = vector.shape_cast %597 : vector<1x128x256xbf16> to vector<128x256xbf16>
    %cst_625 = arith.constant dense<0.000000e+00> : vector<8x256xf32>
    %599 = tpu.matmul %596, %598, %cst_625 {dimension_numbers = #tpu.dot_dimension_numbers<[1], [0], [0], [1], [0, 0, 1, 1], [], []>} : vector<8x128xbf16>, vector<128x256xbf16>, vector<8x256xf32> -> vector<8x256xf32>
    %600 = arith.addf %595, %599 : vector<8x256xf32>
    %c9_626 = arith.constant 9 : index
    %c0_627 = arith.constant 0 : index
    %601 = vector.load %arg23[%c9_626, %c0_627] : memref<20x128xbf16, #tpu.memory_space<vmem>>, vector<8x128xbf16>
    %c7_628 = arith.constant 7 : index
    %c0_629 = arith.constant 0 : index
    %c0_630 = arith.constant 0 : index
    %602 = vector.load %arg9[%c7_628, %c0_629, %c0_630] : memref<9x128x256xbf16, #tpu.memory_space<vmem>>, vector<1x128x256xbf16>
    %603 = vector.shape_cast %602 : vector<1x128x256xbf16> to vector<128x256xbf16>
    %cst_631 = arith.constant dense<0.000000e+00> : vector<8x256xf32>
    %604 = tpu.matmul %601, %603, %cst_631 {dimension_numbers = #tpu.dot_dimension_numbers<[1], [0], [0], [1], [0, 0, 1, 1], [], []>} : vector<8x128xbf16>, vector<128x256xbf16>, vector<8x256xf32> -> vector<8x256xf32>
    %605 = arith.addf %600, %604 : vector<8x256xf32>
    %c10_632 = arith.constant 10 : index
    %c0_633 = arith.constant 0 : index
    %606 = vector.load %arg23[%c10_632, %c0_633] : memref<20x128xbf16, #tpu.memory_space<vmem>>, vector<8x128xbf16>
    %c8_634 = arith.constant 8 : index
    %c0_635 = arith.constant 0 : index
    %c0_636 = arith.constant 0 : index
    %607 = vector.load %arg9[%c8_634, %c0_635, %c0_636] : memref<9x128x256xbf16, #tpu.memory_space<vmem>>, vector<1x128x256xbf16>
    %608 = vector.shape_cast %607 : vector<1x128x256xbf16> to vector<128x256xbf16>
    %cst_637 = arith.constant dense<0.000000e+00> : vector<8x256xf32>
    %609 = tpu.matmul %606, %608, %cst_637 {dimension_numbers = #tpu.dot_dimension_numbers<[1], [0], [0], [1], [0, 0, 1, 1], [], []>} : vector<8x128xbf16>, vector<128x256xbf16>, vector<8x256xf32> -> vector<8x256xf32>
    %610 = arith.addf %605, %609 : vector<8x256xf32>
    %c0_638 = arith.constant 0 : index
    %c0_639 = arith.constant 0 : index
    %611 = vector.load %arg10[%c0_638, %c0_639] : memref<1x256xf32, #tpu.memory_space<vmem>>, vector<1x256xf32>
    %612 = vector.broadcast %611 : vector<1x256xf32> to vector<8x256xf32>
    %613 = arith.addf %610, %612 : vector<8x256xf32>
    %cst_640 = arith.constant 0.000000e+00 : f32
    %614 = vector.broadcast %cst_640 : f32 to vector<8x256xf32>
    %615 = arith.maximumf %613, %614 : vector<8x256xf32>
    %cst_641 = arith.constant 0.000000e+00 : f32
    %616 = vector.broadcast %cst_641 : f32 to vector<1x256xf32>
    %617 = vector.extract_strided_slice %615 {offsets = [0, 0], sizes = [2, 256], strides = [1, 1]} : vector<8x256xf32> to vector<2x256xf32>
    %cst_642 = arith.constant dense<0.000000e+00> : vector<256xf32>
    %618 = vector.multi_reduction <add>, %617, %cst_642 [0] : vector<2x256xf32> to vector<256xf32>
    %619 = vector.shape_cast %618 : vector<256xf32> to vector<1x256xf32>
    %620 = arith.addf %616, %619 : vector<1x256xf32>
    %621 = vector.extract_strided_slice %615 {offsets = [4, 0], sizes = [2, 256], strides = [1, 1]} : vector<8x256xf32> to vector<2x256xf32>
    %cst_643 = arith.constant dense<0.000000e+00> : vector<256xf32>
    %622 = vector.multi_reduction <add>, %621, %cst_643 [0] : vector<2x256xf32> to vector<256xf32>
    %623 = vector.shape_cast %622 : vector<256xf32> to vector<1x256xf32>
    %624 = arith.addf %620, %623 : vector<1x256xf32>
    %cst_644 = arith.constant 2.500000e-01 : f32
    %625 = vector.broadcast %cst_644 : f32 to vector<1x256xf32>
    %626 = arith.mulf %624, %625 : vector<1x256xf32>
    %c1_645 = arith.constant 1 : index
    %c0_646 = arith.constant 0 : index
    %627 = vector.load %arg24[%c1_645, %c0_646] : memref<2x256xf32, #tpu.memory_space<vmem>>, vector<1x256xf32>
    tpu.vector_store %arg24[%c1_645, %c0_646], %626 {strides = array<i32>} : memref<2x256xf32, #tpu.memory_space<vmem>>, vector<1x256xf32>,
    %c0_647 = arith.constant 0 : index
    %c0_648 = arith.constant 0 : index
    %628 = vector.load %arg24[%c0_647, %c0_648] : memref<2x256xf32, #tpu.memory_space<vmem>>, vector<2x256xf32>
    %629 = arith.truncf %628 : vector<2x256xf32> to vector<2x256xbf16>
    %c0_649 = arith.constant 0 : index
    %c0_650 = arith.constant 0 : index
    %630 = vector.load %arg11[%c0_649, %c0_650] : memref<256x128xbf16, #tpu.memory_space<vmem>>, vector<256x128xbf16>
    %cst_651 = arith.constant dense<0.000000e+00> : vector<2x128xf32>
    %631 = tpu.matmul %629, %630, %cst_651 {dimension_numbers = #tpu.dot_dimension_numbers<[1], [0], [0], [1], [0, 0, 1, 1], [], []>} : vector<2x256xbf16>, vector<256x128xbf16>, vector<2x128xf32> -> vector<2x128xf32>
    %c0_652 = arith.constant 0 : index
    %c0_653 = arith.constant 0 : index
    %632 = vector.load %arg12[%c0_652, %c0_653] : memref<1x128xf32, #tpu.memory_space<vmem>>, vector<1x128xf32>
    %633 = vector.broadcast %632 : vector<1x128xf32> to vector<2x128xf32>
    %634 = arith.addf %631, %633 : vector<2x128xf32>
    %c0_654 = arith.constant 0 : index
    %c0_655 = arith.constant 0 : index
    %c0_656 = arith.constant 0 : index
    %635 = vector.load %arg2[%c0_654, %c0_655, %c0_656] : memref<1x2x6xf32, #tpu.memory_space<vmem>>, vector<1x2x6xf32>
    %636 = vector.shape_cast %635 : vector<1x2x6xf32> to vector<2x6xf32>
    %637 = arith.truncf %636 : vector<2x6xf32> to vector<2x6xbf16>
    %c0_657 = arith.constant 0 : index
    %c0_658 = arith.constant 0 : index
    %638 = vector.load %arg13[%c0_657, %c0_658] : memref<6x32xbf16, #tpu.memory_space<vmem>>, vector<6x32xbf16>
    %cst_659 = arith.constant dense<0.000000e+00> : vector<2x32xf32>
    %639 = tpu.matmul %637, %638, %cst_659 {dimension_numbers = #tpu.dot_dimension_numbers<[1], [0], [0], [1], [0, 0, 1, 1], [], []>} : vector<2x6xbf16>, vector<6x32xbf16>, vector<2x32xf32> -> vector<2x32xf32>
    %c0_660 = arith.constant 0 : index
    %c0_661 = arith.constant 0 : index
    %640 = vector.load %arg14[%c0_660, %c0_661] : memref<1x32xf32, #tpu.memory_space<vmem>>, vector<1x32xf32>
    %641 = vector.broadcast %640 : vector<1x32xf32> to vector<2x32xf32>
    %642 = arith.addf %639, %641 : vector<2x32xf32>
    %cst_662 = arith.constant 0.000000e+00 : f32
    %643 = vector.broadcast %cst_662 : f32 to vector<2x32xf32>
    %644 = arith.maximumf %642, %643 : vector<2x32xf32>
    %645 = arith.truncf %644 : vector<2x32xf32> to vector<2x32xbf16>
    %c0_663 = arith.constant 0 : index
    %c0_664 = arith.constant 0 : index
    %646 = vector.load %arg15[%c0_663, %c0_664] : memref<32x128xbf16, #tpu.memory_space<vmem>>, vector<32x128xbf16>
    %cst_665 = arith.constant dense<0.000000e+00> : vector<2x128xf32>
    %647 = tpu.matmul %645, %646, %cst_665 {dimension_numbers = #tpu.dot_dimension_numbers<[1], [0], [0], [1], [0, 0, 1, 1], [], []>} : vector<2x32xbf16>, vector<32x128xbf16>, vector<2x128xf32> -> vector<2x128xf32>
    %c0_666 = arith.constant 0 : index
    %c0_667 = arith.constant 0 : index
    %648 = vector.load %arg16[%c0_666, %c0_667] : memref<1x128xf32, #tpu.memory_space<vmem>>, vector<1x128xf32>
    %649 = vector.broadcast %648 : vector<1x128xf32> to vector<2x128xf32>
    %650 = arith.addf %647, %649 : vector<2x128xf32>
    %cst_668 = arith.constant 2.000000e-01 : f32
    %651 = vector.broadcast %cst_668 : f32 to vector<2x128xf32>
    %652 = arith.mulf %651, %650 : vector<2x128xf32>
    %653 = arith.addf %634, %652 : vector<2x128xf32>
    %654 = arith.mulf %653, %653 : vector<2x128xf32>
    %cst_669 = arith.constant dense<0.000000e+00> : vector<2xf32>
    %655 = vector.multi_reduction <add>, %654, %cst_669 [1] : vector<2x128xf32> to vector<2xf32>
    %656 = vector.shape_cast %655 : vector<2xf32> to vector<2x1xf32>
    %cst_670 = arith.constant 1.000000e-24 : f32
    %657 = vector.broadcast %cst_670 : f32 to vector<2x1xf32>
    %658 = arith.maximumf %656, %657 : vector<2x1xf32>
    %659 = math.rsqrt %658 : vector<2x1xf32>
    %660 = vector.broadcast %659 : vector<2x1xf32> to vector<2x128xf32>
    %661 = arith.mulf %653, %660 : vector<2x128xf32>
    %c0_671 = arith.constant 0 : index
    %c0_672 = arith.constant 0 : index
    %c0_673 = arith.constant 0 : index
    %662 = vector.load %arg17[%c0_671, %c0_672, %c0_673] : memref<1x2x128xf32, #tpu.memory_space<vmem>>, vector<1x2x128xf32>
    %663 = vector.shape_cast %662 : vector<1x2x128xf32> to vector<2x128xf32>
    %664 = vector.shape_cast %661 : vector<2x128xf32> to vector<1x2x128xf32>
    tpu.vector_store %arg17[%c0_671, %c0_672, %c0_673], %664 {strides = array<i32>} : memref<1x2x128xf32, #tpu.memory_space<vmem>>, vector<1x2x128xf32>,
    return
  }
  func.func @transform_0(%arg0: i32) -> (i32, i32, i32, i32) {
    %c0_i32 = arith.constant 0 : i32
    %c0_i32_0 = arith.constant 0 : i32
    %c0_i32_1 = arith.constant 0 : i32
    %c0_i32_2 = arith.constant 0 : i32
    return %arg0, %c0_i32, %c0_i32_0, %c0_i32_1 : i32, i32, i32, i32
  }
  func.func @transform_1(%arg0: i32) -> (i32, i32, i32) {
    %c0_i32 = arith.constant 0 : i32
    %c0_i32_0 = arith.constant 0 : i32
    %c0_i32_1 = arith.constant 0 : i32
    return %arg0, %c0_i32, %c0_i32_0 : i32, i32, i32
  }
  func.func @transform_2(%arg0: i32) -> (i32, i32) {
    %c0_i32 = arith.constant 0 : i32
    %c0_i32_0 = arith.constant 0 : i32
    %c0_i32_1 = arith.constant 0 : i32
    return %c0_i32, %c0_i32_0 : i32, i32
  }
  func.func @transform_3(%arg0: i32) -> (i32, i32) {
    %c0_i32 = arith.constant 0 : i32
    %c0_i32_0 = arith.constant 0 : i32
    %c0_i32_1 = arith.constant 0 : i32
    return %c0_i32, %c0_i32_0 : i32, i32
  }
  func.func @transform_4(%arg0: i32) -> (i32, i32, i32) {
    %c0_i32 = arith.constant 0 : i32
    %c0_i32_0 = arith.constant 0 : i32
    %c0_i32_1 = arith.constant 0 : i32
    %c0_i32_2 = arith.constant 0 : i32
    return %c0_i32, %c0_i32_0, %c0_i32_1 : i32, i32, i32
  }
  func.func @transform_5(%arg0: i32) -> (i32, i32) {
    %c0_i32 = arith.constant 0 : i32
    %c0_i32_0 = arith.constant 0 : i32
    %c0_i32_1 = arith.constant 0 : i32
    return %c0_i32, %c0_i32_0 : i32, i32
  }
  func.func @transform_6(%arg0: i32) -> (i32, i32, i32) {
    %c0_i32 = arith.constant 0 : i32
    %c0_i32_0 = arith.constant 0 : i32
    %c0_i32_1 = arith.constant 0 : i32
    %c0_i32_2 = arith.constant 0 : i32
    return %c0_i32, %c0_i32_0, %c0_i32_1 : i32, i32, i32
  }
  func.func @transform_7(%arg0: i32) -> (i32, i32) {
    %c0_i32 = arith.constant 0 : i32
    %c0_i32_0 = arith.constant 0 : i32
    %c0_i32_1 = arith.constant 0 : i32
    return %c0_i32, %c0_i32_0 : i32, i32
  }
  func.func @transform_8(%arg0: i32) -> (i32, i32, i32) {
    %c0_i32 = arith.constant 0 : i32
    %c0_i32_0 = arith.constant 0 : i32
    %c0_i32_1 = arith.constant 0 : i32
    %c0_i32_2 = arith.constant 0 : i32
    return %c0_i32, %c0_i32_0, %c0_i32_1 : i32, i32, i32
  }
  func.func @transform_9(%arg0: i32) -> (i32, i32) {
    %c0_i32 = arith.constant 0 : i32
    %c0_i32_0 = arith.constant 0 : i32
    %c0_i32_1 = arith.constant 0 : i32
    return %c0_i32, %c0_i32_0 : i32, i32
  }
  func.func @transform_10(%arg0: i32) -> (i32, i32) {
    %c0_i32 = arith.constant 0 : i32
    %c0_i32_0 = arith.constant 0 : i32
    %c0_i32_1 = arith.constant 0 : i32
    return %c0_i32, %c0_i32_0 : i32, i32
  }
  func.func @transform_11(%arg0: i32) -> (i32, i32) {
    %c0_i32 = arith.constant 0 : i32
    %c0_i32_0 = arith.constant 0 : i32
    %c0_i32_1 = arith.constant 0 : i32
    return %c0_i32, %c0_i32_0 : i32, i32
  }
  func.func @transform_12(%arg0: i32) -> (i32, i32) {
    %c0_i32 = arith.constant 0 : i32
    %c0_i32_0 = arith.constant 0 : i32
    %c0_i32_1 = arith.constant 0 : i32
    return %c0_i32, %c0_i32_0 : i32, i32
  }
  func.func @transform_13(%arg0: i32) -> (i32, i32) {
    %c0_i32 = arith.constant 0 : i32
    %c0_i32_0 = arith.constant 0 : i32
    %c0_i32_1 = arith.constant 0 : i32
    return %c0_i32, %c0_i32_0 : i32, i32
  }
  func.func @transform_14(%arg0: i32) -> (i32, i32) {
    %c0_i32 = arith.constant 0 : i32
    %c0_i32_0 = arith.constant 0 : i32
    %c0_i32_1 = arith.constant 0 : i32
    return %c0_i32, %c0_i32_0 : i32, i32
  }
  func.func @transform_15(%arg0: i32) -> (i32, i32) {
    %c0_i32 = arith.constant 0 : i32
    %c0_i32_0 = arith.constant 0 : i32
    %c0_i32_1 = arith.constant 0 : i32
    return %c0_i32, %c0_i32_0 : i32, i32
  }
  func.func @transform_16(%arg0: i32) -> (i32, i32, i32) {
    %c0_i32 = arith.constant 0 : i32
    %c0_i32_0 = arith.constant 0 : i32
    %c0_i32_1 = arith.constant 0 : i32
    return %arg0, %c0_i32, %c0_i32_0 : i32, i32, i32
  }
}

</mosaic_0001>

<llo_original>
// kernel: shuttlecock_forward.1
$region0: #{shuttlecock_forward.1}
  #allocation0 [shape = 'u32[]', space=smem, size = 0x4, offset = 0x4, fixed_abs, tag = 'smem constant byte address 0x4 - core index']
  #allocation1 [shape = 'u32[72,128]{1,0:T(1,128)}', space=vmem, size = 0x9000, scoped, tag = 'internal scratch']
  #allocation2 [shape = 'f32[288,32]{1,0:T(8,128)}', space=vmem, size = 0x24000, scoped, tag = 'scratch operand']
  #allocation3 [shape = 'f32[80,64]{1,0:T(8,128)}', space=vmem, size = 0xa000, scoped, tag = 'scratch operand']
  #allocation4 [shape = 'f32[24,128]{1,0:T(8,128)}', space=vmem, size = 0x3000, scoped, tag = 'scratch operand']
  #allocation5 [shape = 'bf16[110,32]{1,0:T(8,128)(2,1)}', space=vmem, size = 0x7000, scoped, tag = 'scratch operand']
  #allocation6 [shape = 'bf16[42,64]{1,0:T(8,128)(2,1)}', space=vmem, size = 0x3000, scoped, tag = 'scratch operand']
  #allocation7 [shape = 'bf16[20,128]{1,0:T(8,128)(2,1)}', space=vmem, size = 0x1800, scoped, tag = 'scratch operand']
  #allocation8 [shape = 'f32[2,256]{1,0:T(2,128)}', space=vmem, size = 0x800, scoped, tag = 'scratch operand']
  %s0 = inlined_call_operand.vmem [shape: bf16[2,2,288,32], index: 0, kind: input, shape index: {}]
  %s1 = inlined_call_operand.vmem [shape: f32[2,2,6], index: 1, kind: input, shape index: {}]
  %s2 = inlined_call_operand.vmem [shape: bf16[32,32], index: 2, kind: input, shape index: {}]
  %s3 = inlined_call_operand.vmem [shape: f32[1,32], index: 3, kind: input, shape index: {}]
  %s4 = inlined_call_operand.vmem [shape: bf16[9,32,64], index: 4, kind: input, shape index: {}]
  %s5 = inlined_call_operand.vmem [shape: f32[1,64], index: 5, kind: input, shape index: {}]
  %s6 = inlined_call_operand.vmem [shape: bf16[9,64,128], index: 6, kind: input, shape index: {}]
  %s7 = inlined_call_operand.vmem [shape: f32[1,128], index: 7, kind: input, shape index: {}]
  %s8 = inlined_call_operand.vmem [shape: bf16[9,128,256], index: 8, kind: input, shape index: {}]
  %s9 = inlined_call_operand.vmem [shape: f32[1,256], index: 9, kind: input, shape index: {}]
  %s10 = inlined_call_operand.vmem [shape: bf16[256,128], index: 10, kind: input, shape index: {}]
  %s11 = inlined_call_operand.vmem [shape: f32[1,128], index: 11, kind: input, shape index: {}]
  %s12 = inlined_call_operand.vmem [shape: bf16[6,32], index: 12, kind: input, shape index: {}]
  %s13 = inlined_call_operand.vmem [shape: f32[1,32], index: 13, kind: input, shape index: {}]
  %s14 = inlined_call_operand.vmem [shape: bf16[32,128], index: 14, kind: input, shape index: {}]
  %s15 = inlined_call_operand.vmem [shape: f32[1,128], index: 15, kind: input, shape index: {}]
  %s16 = inlined_call_operand.hbm [shape: f32[2,2,128], index: 16, kind: output, shape index: {}]
  %s17 = sld [smem:[#allocation0]]
  $region97: #{shuttlecock_forward.1} parent=0
    _
  %s19 = ssub.s32 1, %s17
  %s20 = scalar_select 0, %s19, %s17
  $region1: #{shuttlecock_forward.1} parent=0
    #allocation9 [shape = 'u8[2048]{0}', space=vmem, size = 0x800, scoped, tag = 'output window, operand 0']
    #allocation10 [shape = 's32[2]{0}', space=sflag, size = 0x8, scoped, tag = 'scoped memory for shuttlecock_forward.1']
    %21 = vsyncpa [#allocation10], 0
    %s22 = scalar_lea.sflag [#allocation10], 1
    %23 = vsyncpa %s22, 0
    loop: start=0, step=1, limit=4
    $region2: #{shuttlecock_forward.1} parent=1 // loop_pre_header
      _
    $region3: #{shuttlecock_forward.1} parent=1 // loop_header
      %s25 = sphi 0, %s29
      %p26 = scmp.ge.s32.totalorder %s25, 4
      %s35 = sphi 0, %s37
      %s38 = sphi 0, %s35
      %s39 = sphi 0, %s38
      %s55 = sphi 0, %s39
      %s61 = sphi 0, %s63
      %s64 = sphi 0, %s61
      %s65 = sphi 0, %s64
      %s81 = sphi 0, %s65
      %s85 = sphi 0, %s85
      %s87 = sphi 0, %s85
      %s88 = sphi 0, %s87
      %s102 = sphi 0, %s88
      %s106 = sphi 0, %s106
      %s108 = sphi 0, %s106
      %s109 = sphi 0, %s108
      %s123 = sphi 0, %s109
      %s127 = sphi 0, %s127
      %s129 = sphi 0, %s127
      %s130 = sphi 0, %s129
      %s144 = sphi 0, %s130
      %s148 = sphi 0, %s148
      %s150 = sphi 0, %s148
      %s151 = sphi 0, %s150
      %s165 = sphi 0, %s151
      %s169 = sphi 0, %s169
      %s171 = sphi 0, %s169
      %s172 = sphi 0, %s171
      %s186 = sphi 0, %s172
      %s190 = sphi 0, %s190
      %s192 = sphi 0, %s190
      %s193 = sphi 0, %s192
      %s207 = sphi 0, %s193
      %s211 = sphi 0, %s211
      %s213 = sphi 0, %s211
      %s214 = sphi 0, %s213
      %s228 = sphi 0, %s214
      %s232 = sphi 0, %s232
      %s234 = sphi 0, %s232
      %s235 = sphi 0, %s234
      %s249 = sphi 0, %s235
      %s253 = sphi 0, %s253
      %s255 = sphi 0, %s253
      %s256 = sphi 0, %s255
      %s270 = sphi 0, %s256
      %s274 = sphi 0, %s274
      %s276 = sphi 0, %s274
      %s277 = sphi 0, %s276
      %s291 = sphi 0, %s277
      %s295 = sphi 0, %s295
      %s297 = sphi 0, %s295
      %s298 = sphi 0, %s297
      %s312 = sphi 0, %s298
      %s316 = sphi 0, %s316
      %s318 = sphi 0, %s316
      %s319 = sphi 0, %s318
      %s333 = sphi 0, %s319
      %s337 = sphi 0, %s337
      %s339 = sphi 0, %s337
      %s340 = sphi 0, %s339
      %s354 = sphi 0, %s340
      %s358 = sphi 0, %s358
      %s360 = sphi 0, %s358
      %s361 = sphi 0, %s360
      %s375 = sphi 0, %s361
      %s381 = sphi 0, %s383
      %s384 = sphi 0, %s381
      %s385 = sphi 0, %s384
      %s401 = sphi 0, %s385
    $region4: #{shuttlecock_forward.1} parent=1 // loop_header_branch
      %28 = sbr.rel (%p26) target = $region8
    $region5: #{shuttlecock_forward.1} parent=1 // loop_body
      %s30 = ssub.s32 %s25, 1
      %s31 = ssub.s32 %s25, 2
      %s32 = sadd.s32 %s25, 1
      %s33 = ssub.s32 %s25, %s32
      %p34 = scmp.eq.s32.totalorder %s33, 0
      %s36 = sadd.s32 %s35, 1
      %s37 = scalar_select %p34, %s35, %s36
      %p40 = pneg %p34
      %p41 = scmp.eq.s32.totalorder %s25, 1
      %p42 = por %p40, %p41
      %p43 = scmp.ne.s32.totalorder %s35, %s38
      %p44 = scmp.eq.s32.totalorder %s25, 0
      %p45 = por %p43, %p44
      %p46 = scmp.ne.s32.totalorder %s35, %s38
      %p47 = scmp.eq.s32.totalorder %s30, 1
      %p48 = por %p46, %p47
      %p49 = scmp.ne.s32.totalorder %s38, %s39
      %p50 = scmp.eq.s32.totalorder %s30, 0
      %p51 = por %p49, %p50
      %p52 = scmp.ne.s32.totalorder %s38, %s39
      %p53 = scmp.eq.s32.totalorder %s31, 1
      %p54 = por %p52, %p53
      %p56 = scmp.ne.s32.totalorder %s39, %s55
      %p57 = scmp.eq.s32.totalorder %s31, 0
      %p58 = por %p56, %p57
      %s59 = ssub.s32 %s25, %s32
      %p60 = scmp.eq.s32.totalorder %s59, 0
      %s62 = sadd.s32 %s61, 1
      %s63 = scalar_select %p60, %s61, %s62
      %p66 = pneg %p60
      %p67 = scmp.eq.s32.totalorder %s25, 1
      %p68 = por %p66, %p67
      %p69 = scmp.ne.s32.totalorder %s61, %s64
      %p70 = scmp.eq.s32.totalorder %s25, 0
      %p71 = por %p69, %p70
      %p72 = scmp.ne.s32.totalorder %s61, %s64
      %p73 = scmp.eq.s32.totalorder %s30, 1
      %p74 = por %p72, %p73
      %p75 = scmp.ne.s32.totalorder %s64, %s65
      %p76 = scmp.eq.s32.totalorder %s30, 0
      %p77 = por %p75, %p76
      %p78 = scmp.ne.s32.totalorder %s64, %s65
      %p79 = scmp.eq.s32.totalorder %s31, 1
      %p80 = por %p78, %p79
      %p82 = scmp.ne.s32.totalorder %s65, %s81
      %p83 = scmp.eq.s32.totalorder %s31, 0
      %p84 = por %p82, %p83
      %s86 = sadd.s32 %s85, 1
      %p89 = scmp.eq.s32.totalorder %s25, 1
      %p90 = scmp.ne.s32.totalorder %s85, %s87
      %p91 = scmp.eq.s32.totalorder %s25, 0
      %p92 = por %p90, %p91
      %p93 = scmp.ne.s32.totalorder %s85, %s87
      %p94 = scmp.eq.s32.totalorder %s30, 1
      %p95 = por %p93, %p94
      %p96 = scmp.ne.s32.totalorder %s87, %s88
      %p97 = scmp.eq.s32.totalorder %s30, 0
      %p98 = por %p96, %p97
      %p99 = scmp.ne.s32.totalorder %s87, %s88
      %p100 = scmp.eq.s32.totalorder %s31, 1
      %p101 = por %p99, %p100
      %p103 = scmp.ne.s32.totalorder %s88, %s102
      %p104 = scmp.eq.s32.totalorder %s31, 0
      %p105 = por %p103, %p104
      %s107 = sadd.s32 %s106, 1
      %p110 = scmp.eq.s32.totalorder %s25, 1
      %p111 = scmp.ne.s32.totalorder %s106, %s108
      %p112 = scmp.eq.s32.totalorder %s25, 0
      %p113 = por %p111, %p112
      %p114 = scmp.ne.s32.totalorder %s106, %s108
      %p115 = scmp.eq.s32.totalorder %s30, 1
      %p116 = por %p114, %p115
      %p117 = scmp.ne.s32.totalorder %s108, %s109
      %p118 = scmp.eq.s32.totalorder %s30, 0
      %p119 = por %p117, %p118
      %p120 = scmp.ne.s32.totalorder %s108, %s109
      %p121 = scmp.eq.s32.totalorder %s31, 1
      %p122 = por %p120, %p121
      %p124 = scmp.ne.s32.totalorder %s109, %s123
      %p125 = scmp.eq.s32.totalorder %s31, 0
      %p126 = por %p124, %p125
      %s128 = sadd.s32 %s127, 1
      %p131 = scmp.eq.s32.totalorder %s25, 1
      %p132 = scmp.ne.s32.totalorder %s127, %s129
      %p133 = scmp.eq.s32.totalorder %s25, 0
      %p134 = por %p132, %p133
      %p135 = scmp.ne.s32.totalorder %s127, %s129
      %p136 = scmp.eq.s32.totalorder %s30, 1
      %p137 = por %p135, %p136
      %p138 = scmp.ne.s32.totalorder %s129, %s130
      %p139 = scmp.eq.s32.totalorder %s30, 0
      %p140 = por %p138, %p139
      %p141 = scmp.ne.s32.totalorder %s129, %s130
      %p142 = scmp.eq.s32.totalorder %s31, 1
      %p143 = por %p141, %p142
      %p145 = scmp.ne.s32.totalorder %s130, %s144
      %p146 = scmp.eq.s32.totalorder %s31, 0
      %p147 = por %p145, %p146
      %s149 = sadd.s32 %s148, 1
      %p152 = scmp.eq.s32.totalorder %s25, 1
      %p153 = scmp.ne.s32.totalorder %s148, %s150
      %p154 = scmp.eq.s32.totalorder %s25, 0
      %p155 = por %p153, %p154
      %p156 = scmp.ne.s32.totalorder %s148, %s150
      %p157 = scmp.eq.s32.totalorder %s30, 1
      %p158 = por %p156, %p157
      %p159 = scmp.ne.s32.totalorder %s150, %s151
      %p160 = scmp.eq.s32.totalorder %s30, 0
      %p161 = por %p159, %p160
      %p162 = scmp.ne.s32.totalorder %s150, %s151
      %p163 = scmp.eq.s32.totalorder %s31, 1
      %p164 = por %p162, %p163
      %p166 = scmp.ne.s32.totalorder %s151, %s165
      %p167 = scmp.eq.s32.totalorder %s31, 0
      %p168 = por %p166, %p167
      %s170 = sadd.s32 %s169, 1
      %p173 = scmp.eq.s32.totalorder %s25, 1
      %p174 = scmp.ne.s32.totalorder %s169, %s171
      %p175 = scmp.eq.s32.totalorder %s25, 0
      %p176 = por %p174, %p175
      %p177 = scmp.ne.s32.totalorder %s169, %s171
      %p178 = scmp.eq.s32.totalorder %s30, 1
      %p179 = por %p177, %p178
      %p180 = scmp.ne.s32.totalorder %s171, %s172
      %p181 = scmp.eq.s32.totalorder %s30, 0
      %p182 = por %p180, %p181
      %p183 = scmp.ne.s32.totalorder %s171, %s172
      %p184 = scmp.eq.s32.totalorder %s31, 1
      %p185 = por %p183, %p184
      %p187 = scmp.ne.s32.totalorder %s172, %s186
      %p188 = scmp.eq.s32.totalorder %s31, 0
      %p189 = por %p187, %p188
      %s191 = sadd.s32 %s190, 1
      %p194 = scmp.eq.s32.totalorder %s25, 1
      %p195 = scmp.ne.s32.totalorder %s190, %s192
      %p196 = scmp.eq.s32.totalorder %s25, 0
      %p197 = por %p195, %p196
      %p198 = scmp.ne.s32.totalorder %s190, %s192
      %p199 = scmp.eq.s32.totalorder %s30, 1
      %p200 = por %p198, %p199
      %p201 = scmp.ne.s32.totalorder %s192, %s193
      %p202 = scmp.eq.s32.totalorder %s30, 0
      %p203 = por %p201, %p202
      %p204 = scmp.ne.s32.totalorder %s192, %s193
      %p205 = scmp.eq.s32.totalorder %s31, 1
      %p206 = por %p204, %p205
      %p208 = scmp.ne.s32.totalorder %s193, %s207
      %p209 = scmp.eq.s32.totalorder %s31, 0
      %p210 = por %p208, %p209
      %s212 = sadd.s32 %s211, 1
      %p215 = scmp.eq.s32.totalorder %s25, 1
      %p216 = scmp.ne.s32.totalorder %s211, %s213
      %p217 = scmp.eq.s32.totalorder %s25, 0
      %p218 = por %p216, %p217
      %p219 = scmp.ne.s32.totalorder %s211, %s213
      %p220 = scmp.eq.s32.totalorder %s30, 1
      %p221 = por %p219, %p220
      %p222 = scmp.ne.s32.totalorder %s213, %s214
      %p223 = scmp.eq.s32.totalorder %s30, 0
      %p224 = por %p222, %p223
      %p225 = scmp.ne.s32.totalorder %s213, %s214
      %p226 = scmp.eq.s32.totalorder %s31, 1
      %p227 = por %p225, %p226
      %p229 = scmp.ne.s32.totalorder %s214, %s228
      %p230 = scmp.eq.s32.totalorder %s31, 0
      %p231 = por %p229, %p230
      %s233 = sadd.s32 %s232, 1
      %p236 = scmp.eq.s32.totalorder %s25, 1
      %p237 = scmp.ne.s32.totalorder %s232, %s234
      %p238 = scmp.eq.s32.totalorder %s25, 0
      %p239 = por %p237, %p238
      %p240 = scmp.ne.s32.totalorder %s232, %s234
      %p241 = scmp.eq.s32.totalorder %s30, 1
      %p242 = por %p240, %p241
      %p243 = scmp.ne.s32.totalorder %s234, %s235
      %p244 = scmp.eq.s32.totalorder %s30, 0
      %p245 = por %p243, %p244
      %p246 = scmp.ne.s32.totalorder %s234, %s235
      %p247 = scmp.eq.s32.totalorder %s31, 1
      %p248 = por %p246, %p247
      %p250 = scmp.ne.s32.totalorder %s235, %s249
      %p251 = scmp.eq.s32.totalorder %s31, 0
      %p252 = por %p250, %p251
      %s254 = sadd.s32 %s253, 1
      %p257 = scmp.eq.s32.totalorder %s25, 1
      %p258 = scmp.ne.s32.totalorder %s253, %s255
      %p259 = scmp.eq.s32.totalorder %s25, 0
      %p260 = por %p258, %p259
      %p261 = scmp.ne.s32.totalorder %s253, %s255
      %p262 = scmp.eq.s32.totalorder %s30, 1
      %p263 = por %p261, %p262
      %p264 = scmp.ne.s32.totalorder %s255, %s256
      %p265 = scmp.eq.s32.totalorder %s30, 0
      %p266 = por %p264, %p265
      %p267 = scmp.ne.s32.totalorder %s255, %s256
      %p268 = scmp.eq.s32.totalorder %s31, 1
      %p269 = por %p267, %p268
      %p271 = scmp.ne.s32.totalorder %s256, %s270
      %p272 = scmp.eq.s32.totalorder %s31, 0
      %p273 = por %p271, %p272
      %s275 = sadd.s32 %s274, 1
      %p278 = scmp.eq.s32.totalorder %s25, 1
      %p279 = scmp.ne.s32.totalorder %s274, %s276
      %p280 = scmp.eq.s32.totalorder %s25, 0
      %p281 = por %p279, %p280
      %p282 = scmp.ne.s32.totalorder %s274, %s276
      %p283 = scmp.eq.s32.totalorder %s30, 1
      %p284 = por %p282, %p283
      %p285 = scmp.ne.s32.totalorder %s276, %s277
      %p286 = scmp.eq.s32.totalorder %s30, 0
      %p287 = por %p285, %p286
      %p288 = scmp.ne.s32.totalorder %s276, %s277
      %p289 = scmp.eq.s32.totalorder %s31, 1
      %p290 = por %p288, %p289
      %p292 = scmp.ne.s32.totalorder %s277, %s291
      %p293 = scmp.eq.s32.totalorder %s31, 0
      %p294 = por %p292, %p293
      %s296 = sadd.s32 %s295, 1
      %p299 = scmp.eq.s32.totalorder %s25, 1
      %p300 = scmp.ne.s32.totalorder %s295, %s297
      %p301 = scmp.eq.s32.totalorder %s25, 0
      %p302 = por %p300, %p301
      %p303 = scmp.ne.s32.totalorder %s295, %s297
      %p304 = scmp.eq.s32.totalorder %s30, 1
      %p305 = por %p303, %p304
      %p306 = scmp.ne.s32.totalorder %s297, %s298
      %p307 = scmp.eq.s32.totalorder %s30, 0
      %p308 = por %p306, %p307
      %p309 = scmp.ne.s32.totalorder %s297, %s298
      %p310 = scmp.eq.s32.totalorder %s31, 1
      %p311 = por %p309, %p310
      %p313 = scmp.ne.s32.totalorder %s298, %s312
      %p314 = scmp.eq.s32.totalorder %s31, 0
      %p315 = por %p313, %p314
      %s317 = sadd.s32 %s316, 1
      %p320 = scmp.eq.s32.totalorder %s25, 1
      %p321 = scmp.ne.s32.totalorder %s316, %s318
      %p322 = scmp.eq.s32.totalorder %s25, 0
      %p323 = por %p321, %p322
      %p324 = scmp.ne.s32.totalorder %s316, %s318
      %p325 = scmp.eq.s32.totalorder %s30, 1
      %p326 = por %p324, %p325
      %p327 = scmp.ne.s32.totalorder %s318, %s319
      %p328 = scmp.eq.s32.totalorder %s30, 0
      %p329 = por %p327, %p328
      %p330 = scmp.ne.s32.totalorder %s318, %s319
      %p331 = scmp.eq.s32.totalorder %s31, 1
      %p332 = por %p330, %p331
      %p334 = scmp.ne.s32.totalorder %s319, %s333
      %p335 = scmp.eq.s32.totalorder %s31, 0
      %p336 = por %p334, %p335
      %s338 = sadd.s32 %s337, 1
      %p341 = scmp.eq.s32.totalorder %s25, 1
      %p342 = scmp.ne.s32.totalorder %s337, %s339
      %p343 = scmp.eq.s32.totalorder %s25, 0
      %p344 = por %p342, %p343
      %p345 = scmp.ne.s32.totalorder %s337, %s339
      %p346 = scmp.eq.s32.totalorder %s30, 1
      %p347 = por %p345, %p346
      %p348 = scmp.ne.s32.totalorder %s339, %s340
      %p349 = scmp.eq.s32.totalorder %s30, 0
      %p350 = por %p348, %p349
      %p351 = scmp.ne.s32.totalorder %s339, %s340
      %p352 = scmp.eq.s32.totalorder %s31, 1
      %p353 = por %p351, %p352
      %p355 = scmp.ne.s32.totalorder %s340, %s354
      %p356 = scmp.eq.s32.totalorder %s31, 0
      %p357 = por %p355, %p356
      %s359 = sadd.s32 %s358, 1
      %p362 = scmp.eq.s32.totalorder %s25, 1
      %p363 = scmp.ne.s32.totalorder %s358, %s360
      %p364 = scmp.eq.s32.totalorder %s25, 0
      %p365 = por %p363, %p364
      %p366 = scmp.ne.s32.totalorder %s358, %s360
      %p367 = scmp.eq.s32.totalorder %s30, 1
      %p368 = por %p366, %p367
      %p369 = scmp.ne.s32.totalorder %s360, %s361
      %p370 = scmp.eq.s32.totalorder %s30, 0
      %p371 = por %p369, %p370
      %p372 = scmp.ne.s32.totalorder %s360, %s361
      %p373 = scmp.eq.s32.totalorder %s31, 1
      %p374 = por %p372, %p373
      %p376 = scmp.ne.s32.totalorder %s361, %s375
      %p377 = scmp.eq.s32.totalorder %s31, 0
      %p378 = por %p376, %p377
      %s379 = ssub.s32 %s25, %s32
      %p380 = scmp.eq.s32.totalorder %s379, 0
      %s382 = sadd.s32 %s381, 1
      %s383 = scalar_select %p380, %s381, %s382
      %p386 = pneg %p380
      %p387 = scmp.eq.s32.totalorder %s25, 1
      %p388 = por %p386, %p387
      %p389 = scmp.ne.s32.totalorder %s381, %s384
      %p390 = scmp.eq.s32.totalorder %s25, 0
      %p391 = por %p389, %p390
      %p392 = scmp.ne.s32.totalorder %s381, %s384
      %p393 = scmp.eq.s32.totalorder %s30, 1
      %p394 = por %p392, %p393
      %p395 = scmp.ne.s32.totalorder %s384, %s385
      %p396 = scmp.eq.s32.totalorder %s30, 0
      %p397 = por %p395, %p396
      %p398 = scmp.ne.s32.totalorder %s384, %s385
      %p399 = scmp.eq.s32.totalorder %s31, 1
      %p400 = por %p398, %p399
      %p402 = scmp.ne.s32.totalorder %s385, %s401
      %p403 = scmp.eq.s32.totalorder %s31, 0
      %p404 = por %p402, %p403
      %p405 = scmp.le.s32.totalorder 1, %s25
      %p406 = scmp.lt.s32.totalorder %s25, 3
      %p407 = pnand %p405, %p406
      %p408 = pneg %p407
      // Predicated region
      $region9: #{shuttlecock_forward.1} parent=5 // pred_check
        _
      $region10: #{shuttlecock_forward.1} parent=5 // pred_check_branch
        %410 = sbr.rel (%p407) target = $region12
      $region11: #{shuttlecock_forward.1} parent=5 // pred_region
        %s411 = ssub.s32 %s25, 1
        // Predicated region
        $region13: #{shuttlecock_forward.1} parent=11 // pred_check
          %p412 = pneg %p98
        $region14: #{shuttlecock_forward.1} parent=11 // pred_check_branch
          %414 = sbr.rel (%p412) target = $region16
        $region15: #{shuttlecock_forward.1} parent=11 // pred_region
          _
        $region16: #{shuttlecock_forward.1} parent=11 // pred_fallthru
          _
        // Predicated region
        $region17: #{shuttlecock_forward.1} parent=11 // pred_check
          %p415 = pneg %p119
        $region18: #{shuttlecock_forward.1} parent=11 // pred_check_branch
          %417 = sbr.rel (%p415) target = $region20
        $region19: #{shuttlecock_forward.1} parent=11 // pred_region
          _
        $region20: #{shuttlecock_forward.1} parent=11 // pred_fallthru
          _
        // Predicated region
        $region21: #{shuttlecock_forward.1} parent=11 // pred_check
          %p418 = pneg %p140
        $region22: #{shuttlecock_forward.1} parent=11 // pred_check_branch
          %420 = sbr.rel (%p418) target = $region24
        $region23: #{shuttlecock_forward.1} parent=11 // pred_region
          _
        $region24: #{shuttlecock_forward.1} parent=11 // pred_fallthru
          _
        // Predicated region
        $region25: #{shuttlecock_forward.1} parent=11 // pred_check
          %p421 = pneg %p161
        $region26: #{shuttlecock_forward.1} parent=11 // pred_check_branch
          %423 = sbr.rel (%p421) target = $region28
        $region27: #{shuttlecock_forward.1} parent=11 // pred_region
          _
        $region28: #{shuttlecock_forward.1} parent=11 // pred_fallthru
          _
        // Predicated region
        $region29: #{shuttlecock_forward.1} parent=11 // pred_check
          %p424 = pneg %p182
        $region30: #{shuttlecock_forward.1} parent=11 // pred_check_branch
          %426 = sbr.rel (%p424) target = $region32
        $region31: #{shuttlecock_forward.1} parent=11 // pred_region
          _
        $region32: #{shuttlecock_forward.1} parent=11 // pred_fallthru
          _
        // Predicated region
        $region33: #{shuttlecock_forward.1} parent=11 // pred_check
          %p427 = pneg %p203
        $region34: #{shuttlecock_forward.1} parent=11 // pred_check_branch
          %429 = sbr.rel (%p427) target = $region36
        $region35: #{shuttlecock_forward.1} parent=11 // pred_region
          _
        $region36: #{shuttlecock_forward.1} parent=11 // pred_fallthru
          _
        // Predicated region
        $region37: #{shuttlecock_forward.1} parent=11 // pred_check
          %p430 = pneg %p224
        $region38: #{shuttlecock_forward.1} parent=11 // pred_check_branch
          %432 = sbr.rel (%p430) target = $region40
        $region39: #{shuttlecock_forward.1} parent=11 // pred_region
          _
        $region40: #{shuttlecock_forward.1} parent=11 // pred_fallthru
          _
        // Predicated region
        $region41: #{shuttlecock_forward.1} parent=11 // pred_check
          %p433 = pneg %p245
        $region42: #{shuttlecock_forward.1} parent=11 // pred_check_branch
          %435 = sbr.rel (%p433) target = $region44
        $region43: #{shuttlecock_forward.1} parent=11 // pred_region
          _
        $region44: #{shuttlecock_forward.1} parent=11 // pred_fallthru
          _
        // Predicated region
        $region45: #{shuttlecock_forward.1} parent=11 // pred_check
          %p436 = pneg %p266
        $region46: #{shuttlecock_forward.1} parent=11 // pred_check_branch
          %438 = sbr.rel (%p436) target = $region48
        $region47: #{shuttlecock_forward.1} parent=11 // pred_region
          _
        $region48: #{shuttlecock_forward.1} parent=11 // pred_fallthru
          _
        // Predicated region
        $region49: #{shuttlecock_forward.1} parent=11 // pred_check
          %p439 = pneg %p287
        $region50: #{shuttlecock_forward.1} parent=11 // pred_check_branch
          %441 = sbr.rel (%p439) target = $region52
        $region51: #{shuttlecock_forward.1} parent=11 // pred_region
          _
        $region52: #{shuttlecock_forward.1} parent=11 // pred_fallthru
          _
        // Predicated region
        $region53: #{shuttlecock_forward.1} parent=11 // pred_check
          %p442 = pneg %p308
        $region54: #{shuttlecock_forward.1} parent=11 // pred_check_branch
          %444 = sbr.rel (%p442) target = $region56
        $region55: #{shuttlecock_forward.1} parent=11 // pred_region
          _
        $region56: #{shuttlecock_forward.1} parent=11 // pred_fallthru
          _
        // Predicated region
        $region57: #{shuttlecock_forward.1} parent=11 // pred_check
          %p445 = pneg %p329
        $region58: #{shuttlecock_forward.1} parent=11 // pred_check_branch
          %447 = sbr.rel (%p445) target = $region60
        $region59: #{shuttlecock_forward.1} parent=11 // pred_region
          _
        $region60: #{shuttlecock_forward.1} parent=11 // pred_fallthru
          _
        // Predicated region
        $region61: #{shuttlecock_forward.1} parent=11 // pred_check
          %p448 = pneg %p350
        $region62: #{shuttlecock_forward.1} parent=11 // pred_check_branch
          %450 = sbr.rel (%p448) target = $region64
        $region63: #{shuttlecock_forward.1} parent=11 // pred_region
          _
        $region64: #{shuttlecock_forward.1} parent=11 // pred_fallthru
          _
        // Predicated region
        $region65: #{shuttlecock_forward.1} parent=11 // pred_check
          %p451 = pneg %p371
        $region66: #{shuttlecock_forward.1} parent=11 // pred_check_branch
          %453 = sbr.rel (%p451) target = $region68
        $region67: #{shuttlecock_forward.1} parent=11 // pred_region
          _
        $region68: #{shuttlecock_forward.1} parent=11 // pred_fallthru
          _
      $region12: #{shuttlecock_forward.1} parent=5 // pred_fallthru
        _
      %p454 = scmp.lt.s32.totalorder %s25, 2
      // Predicated region
      $region69: #{shuttlecock_forward.1} parent=5 // pred_check
        %p455 = pneg %p454
      $region70: #{shuttlecock_forward.1} parent=5 // pred_check_branch
        %457 = sbr.rel (%p455) target = $region72
      $region71: #{shuttlecock_forward.1} parent=5 // pred_region
        // Predicated region
        $region73: #{shuttlecock_forward.1} parent=71 // pred_check
          %p458 = pneg %p45
        $region74: #{shuttlecock_forward.1} parent=71 // pred_check_branch
          %460 = sbr.rel (%p458) target = $region76
        $region75: #{shuttlecock_forward.1} parent=71 // pred_region
          %p461 = scmp.lt.s32.totalorder %s25, 1
          %s462 = scalar_select %p461, %s25, 1
          %s463 = smul.addr %s462, 72
          %s464 = smul.addr %s463, 4
          %s465 = scalar_lea.vmem %s0, %s464
        $region76: #{shuttlecock_forward.1} parent=71 // pred_fallthru
          _
        // Predicated region
        $region77: #{shuttlecock_forward.1} parent=71 // pred_check
          %p466 = pneg %p71
        $region78: #{shuttlecock_forward.1} parent=71 // pred_check_branch
          %468 = sbr.rel (%p466) target = $region80
        $region79: #{shuttlecock_forward.1} parent=71 // pred_region
          %p469 = scmp.lt.s32.totalorder %s25, 1
          %s470 = scalar_select %p469, %s25, 1
          %s471 = smul.addr %s470, 2
          %s472 = scalar_lea.vmem %s1, %s471
        $region80: #{shuttlecock_forward.1} parent=71 // pred_fallthru
          _
      $region72: #{shuttlecock_forward.1} parent=5 // pred_fallthru
        _
      %p473 = scmp.le.s32.totalorder 1, %s25
      %p474 = scmp.lt.s32.totalorder %s25, 3
      %p475 = pnand %p473, %p474
      %p476 = pneg %p475
      // Predicated region
      $region81: #{shuttlecock_forward.1} parent=5 // pred_check
        _
      $region82: #{shuttlecock_forward.1} parent=5 // pred_check_branch
        %478 = sbr.rel (%p475) target = $region84
      $region83: #{shuttlecock_forward.1} parent=5 // pred_region
        %s479 = ssub.s32 %s25, 1
        %p480 = scmp.lt.s32.totalorder %s30, 1
        %s481 = scalar_select %p480, %s30, 1
        %s482 = smul.addr %s481, 72
        %s483 = smul.addr %s482, 4
        %s484 = scalar_lea.vmem %s0, %s483
        %p485 = pneg %p51
        %p486 = pneg %p48
        %p487 = scmp.lt.s32.totalorder %s30, 1
        %s488 = scalar_select %p487, %s30, 1
        %s489 = smul.addr %s488, 2
        %s490 = scalar_lea.vmem %s1, %s489
        %p491 = pneg %p77
        %p492 = pneg %p74
        %p493 = pneg %p98
        %p494 = pneg %p95
        %p495 = pneg %p119
        %p496 = pneg %p116
        %p497 = pneg %p140
        %p498 = pneg %p137
        %p499 = pneg %p161
        %p500 = pneg %p158
        %p501 = pneg %p182
        %p502 = pneg %p179
        %p503 = pneg %p203
        %p504 = pneg %p200
        %p505 = pneg %p224
        %p506 = pneg %p221
        %p507 = pneg %p245
        %p508 = pneg %p242
        %p509 = pneg %p266
        %p510 = pneg %p263
        %p511 = pneg %p287
        %p512 = pneg %p284
        %p513 = pneg %p308
        %p514 = pneg %p305
        %p515 = pneg %p329
        %p516 = pneg %p326
        %p517 = pneg %p350
        %p518 = pneg %p347
        %p519 = pneg %p371
        %p520 = pneg %p368
        %p521 = pneg %p397
        %p522 = pneg %p394
        %s523 = sand.u32 %s384, 1
        %s524 = scalar_lea.sflag [#allocation10], %s523
        %s525 = sand.u32 %s384, 1
        %s526 = smul.addr %s525, 2
        %s527 = scalar_lea.vmem [#allocation9], %s526
        %p528 = scmp.lt.s32.totalorder %s30, 1
        %s529 = scalar_select %p528, %s30, 1
        %s530 = smul.addr %s529, 72
        %s531 = smul.addr %s530, 4
        %s532 = scalar_lea.vmem %s0, %s531
        %p533 = scmp.lt.s32.totalorder %s30, 1
        %s534 = scalar_select %p533, %s30, 1
        %s535 = smul.addr %s534, 2
        %s536 = scalar_lea.vmem %s1, %s535
        %vm538 = vcmask 257024
        %539 = vst.msk [vmem:[#allocation5] sm:$0xf] %vm538, 0
        %vm540 = vcmask 254976
        %vm541 = vsmask.f32 1280
        %vm542 = vmand %vm540, %vm541
        %v543 = vld [vmem:[#allocation5 + $0x4] sm:$0x3]
        %v544 = vsel %vm542, 0, %v543
        %545 = vst [vmem:[#allocation5 + $0x4] sm:$0x3] %v544
        %vm546 = vcmask 256001
        %vm547 = vsmask.f32 2310
        %vm548 = vmand %vm546, %vm547
        %v549 = vld [vmem:[#allocation5 + $0x8] sm:$0x6]
        %v550 = vsel %vm548, 0, %v549
        %551 = vst [vmem:[#allocation5 + $0x8] sm:$0x6] %v550
        %vm552 = vcmask 257026
        %vm553 = vsmask.f32 3338
        %vm554 = vmand %vm552, %vm553
        %v555 = vld [vmem:[#allocation5 + $0xc] sm:$0xc]
        %v556 = vsel %vm554, 0, %v555
        %557 = vst [vmem:[#allocation5 + $0xc] sm:$0xc] %v556
        %vm558 = vcmask 257027
        %vm559 = vsmask.f32 7950
        %vm560 = vmand %vm558, %vm559
        %v561 = vld [vmem:[#allocation5 + $0x10] sm:$0x8]
        %v562 = vsel %vm560, 0, %v561
        %563 = vst [vmem:[#allocation5 + $0x10] sm:$0x8] %v562
        %vm564 = vcmask 253952
        %vm565 = vsmask.f32 256
        %vm566 = vmand %vm564, %vm565
        %v567 = vld [vmem:[#allocation5 + $0x14] sm:$0x1]
        %v568 = vsel %vm566, 0, %v567
        %569 = vst [vmem:[#allocation5 + $0x14] sm:$0x1] %v568
        %vm570 = vsmask.f32 1282
        %vm571 = vmand %vm540, %vm570
        %v572 = vld [vmem:[#allocation5 + $0x18] sm:$0x3]
        %v573 = vsel %vm571, 0, %v572
        %574 = vst [vmem:[#allocation5 + $0x18] sm:$0x3] %v573
        %v575 = vld [vmem:[#allocation5 + $0x1c] sm:$0x6]
        %v576 = vsel %vm548, 0, %v575
        %577 = vst [vmem:[#allocation5 + $0x1c] sm:$0x6] %v576
        %v578 = vld [vmem:[#allocation5 + $0x20] sm:$0xc]
        %v579 = vsel %vm554, 0, %v578
        %580 = vst [vmem:[#allocation5 + $0x20] sm:$0xc] %v579
        %v581 = vld [vmem:[#allocation5 + $0x24] sm:$0x8]
        %v582 = vsel %vm560, 0, %v581
        %583 = vst [vmem:[#allocation5 + $0x24] sm:$0x8] %v582
        %v584 = vld [vmem:[#allocation5 + $0x28] sm:$0x1]
        %v585 = vsel %vm566, 0, %v584
        %586 = vst [vmem:[#allocation5 + $0x28] sm:$0x1] %v585
        %vm587 = vcmask 257024
        %vm588 = vsmask.f32 7938
        %vm589 = vmand %vm587, %vm588
        %v590 = vld [vmem:[#allocation5 + $0x2c] sm:$0xf]
        %v591 = vsel %vm589, 0, %v590
        %592 = vst [vmem:[#allocation5 + $0x2c] sm:$0xf] %v591
        %593 = vst.msk [vmem:[#allocation5 + $0x30] sm:$0xf] %vm538, 0
        %vm594 = vcmask 256000
        %595 = vst.msk [vmem:[#allocation5 + $0x34] sm:$0x7] %vm594, 0
        %vm596 = vcmask 519168
        %vm597 = vsmask.f32 3328
        %vm598 = vmand %vm596, %vm597
        %v599 = vld [vmem:[#allocation6] sm:$0xf]
        %v600 = vsel %vm598, 0, %v599
        %601 = vst [vmem:[#allocation6] sm:$0xf] %v600
        %vm602 = vcmask 518145
        %vm603 = vmand %vm602, %vm547
        %v604 = vld [vmem:[#allocation6 + $0x4] sm:$0x6]
        %v605 = vsel %vm603, 0, %v604
        %606 = vst [vmem:[#allocation6 + $0x4] sm:$0x6] %v605
        %vm607 = vcmask 517120
        %vm608 = vmand %vm607, %vm570
        %v609 = vld [vmem:[#allocation6 + $0x8] sm:$0x3]
        %v610 = vsel %vm608, 0, %v609
        %611 = vst [vmem:[#allocation6 + $0x8] sm:$0x3] %v610
        %vm612 = vcmask 519171
        %vm613 = vmand %vm612, %vm559
        %v614 = vld [vmem:[#allocation6 + $0x8] sm:$0x8]
        %v615 = vsel %vm613, 0, %v614
        %616 = vst [vmem:[#allocation6 + $0x8] sm:$0x8] %v615
        %vm617 = vcmask 516096
        %vm618 = vmand %vm617, %vm565
        %v619 = vld [vmem:[#allocation6 + $0xc] sm:$0x1]
        %v620 = vsel %vm618, 0, %v619
        %621 = vst [vmem:[#allocation6 + $0xc] sm:$0x1] %v620
        %vm622 = vcmask 519170
        %vm623 = vsmask.f32 7946
        %vm624 = vmand %vm622, %vm623
        %v625 = vld [vmem:[#allocation6 + $0xc] sm:$0xc]
        %v626 = vsel %vm624, 0, %v625
        %627 = vst [vmem:[#allocation6 + $0xc] sm:$0xc] %v626
        %vm628 = vcmask 519168
        %629 = vst.msk [vmem:[#allocation6 + $0x10] sm:$0xf] %vm628, 0
        %vm630 = vcmask 516096
        %631 = vst.msk [vmem:[#allocation6 + $0x14] sm:$0x1] %vm630, 0
        %vm632 = vcmask 1042432
        %vm633 = vsmask.f32 2304
        %vm634 = vmand %vm632, %vm633
        %v635 = vld [vmem:[#allocation7] sm:$0x7]
        %v636 = vsel %vm634, 0, %v635
        %637 = vst [vmem:[#allocation7] sm:$0x7] %v636
        %vm638 = vcmask 1043459
        %vm639 = vmand %vm638, %vm559
        %v640 = vld [vmem:[#allocation7] sm:$0x8]
        %v641 = vsel %vm639, 0, %v640
        %642 = vst [vmem:[#allocation7] sm:$0x8] %v641
        %vm643 = vcmask 1040384
        %vm644 = vmand %vm643, %vm565
        %v645 = vld [vmem:[#allocation7 + $0x4] sm:$0x1]
        %v646 = vsel %vm644, 0, %v645
        %647 = vst [vmem:[#allocation7 + $0x4] sm:$0x1] %v646
        %vm648 = vcmask 1043457
        %vm649 = vsmask.f32 7942
        %vm650 = vmand %vm648, %vm649
        %v651 = vld [vmem:[#allocation7 + $0x4] sm:$0xe]
        %v652 = vsel %vm650, 0, %v651
        %653 = vst [vmem:[#allocation7 + $0x4] sm:$0xe] %v652
        %654 = vst [vmem:[#allocation7 + $0x8] sm:$0x3] 0
        %v655 = vld [vmem:[%s532] sm:$0xf]
        %v656 = vld [vmem:[%s532 + $0x4] sm:$0xf]
        %v657 = vld [vmem:[%s532 + $0x8] sm:$0xf]
        %v658 = vld [vmem:[%s532 + $0xc] sm:$0xf]
        %v659 = vld [vmem:[%s532 + $0x10] sm:$0xf]
        %v660 = vld [vmem:[%s532 + $0x14] sm:$0xf]
        %v661 = vld [vmem:[%s532 + $0x18] sm:$0xf]
        %v662 = vld [vmem:[%s532 + $0x1c] sm:$0xf]
        %v663 = vld [vmem:[%s532 + $0x20] sm:$0xf]
        %v664 = vld [vmem:[%s532 + $0x24] sm:$0xf]
        %v665 = vld [vmem:[%s532 + $0x28] sm:$0xf]
        %v666 = vld [vmem:[%s532 + $0x2c] sm:$0xf]
        %v667 = vld [vmem:[%s532 + $0x30] sm:$0xf]
        %v668 = vld [vmem:[%s532 + $0x34] sm:$0xf]
        %v669 = vld [vmem:[%s532 + $0x38] sm:$0xf]
        %v670 = vld [vmem:[%s532 + $0x3c] sm:$0xf]
        %v671 = vld [vmem:[%s532 + $0x40] sm:$0xf]
        %v672 = vld [vmem:[%s532 + $0x44] sm:$0xf]
        %v673 = vld [vmem:[%s532 + $0x48] sm:$0xf]
        %v674 = vld [vmem:[%s532 + $0x4c] sm:$0xf]
        %v675 = vld [vmem:[%s532 + $0x50] sm:$0xf]
        %v676 = vld [vmem:[%s532 + $0x54] sm:$0xf]
        %v677 = vld [vmem:[%s532 + $0x58] sm:$0xf]
        %v678 = vld [vmem:[%s532 + $0x5c] sm:$0xf]
        %v679 = vld [vmem:[%s532 + $0x60] sm:$0xf]
        %v680 = vld [vmem:[%s532 + $0x64] sm:$0xf]
        %v681 = vld [vmem:[%s532 + $0x68] sm:$0xf]
        %v682 = vld [vmem:[%s532 + $0x6c] sm:$0xf]
        %v683 = vld [vmem:[%s532 + $0x70] sm:$0xf]
        %v684 = vld [vmem:[%s532 + $0x74] sm:$0xf]
        %v685 = vld [vmem:[%s532 + $0x78] sm:$0xf]
        %v686 = vld [vmem:[%s532 + $0x7c] sm:$0xf]
        %v687 = vld [vmem:[%s532 + $0x80] sm:$0xf]
        %v688 = vld [vmem:[%s532 + $0x84] sm:$0xf]
        %v689 = vld [vmem:[%s532 + $0x88] sm:$0xf]
        %v690 = vld [vmem:[%s532 + $0x8c] sm:$0xf]
        %v691 = vld [vmem:[%s2] sm:$0xf]
        %v692 = vld [vmem:[%s2 + $0x4] sm:$0xf]
        %v693 = vld [vmem:[%s2 + $0x8] sm:$0xf]
        %v694 = vld [vmem:[%s2 + $0xc] sm:$0xf]
        %v695 = vld [vmem:[%s3] sm:$0x1]
        %v697 = vperm.slane %v695, 0
        %v735 = vunpack.c.l.b16 %v655
        %v736 = vunpack.c.l.b16 %v656
        %v737 = vunpack.c.l.b16 %v657
        %v738 = vunpack.c.l.b16 %v658
        %v739 = vunpack.c.l.b16 %v659
        %v740 = vunpack.c.l.b16 %v660
        %v741 = vunpack.c.l.b16 %v661
        %v742 = vunpack.c.l.b16 %v662
        %v743 = vunpack.c.l.b16 %v663
        %v744 = vunpack.c.l.b16 %v664
        %v745 = vunpack.c.l.b16 %v665
        %v746 = vunpack.c.l.b16 %v666
        %v747 = vunpack.c.l.b16 %v667
        %v748 = vunpack.c.l.b16 %v668
        %v749 = vunpack.c.l.b16 %v669
        %v750 = vunpack.c.l.b16 %v670
        %v751 = vunpack.c.l.b16 %v671
        %v752 = vunpack.c.l.b16 %v672
        %v753 = vunpack.c.l.b16 %v673
        %v754 = vunpack.c.l.b16 %v674
        %v755 = vunpack.c.l.b16 %v675
        %v756 = vunpack.c.l.b16 %v676
        %v757 = vunpack.c.l.b16 %v677
        %v758 = vunpack.c.l.b16 %v678
        %v759 = vunpack.c.l.b16 %v679
        %v760 = vunpack.c.l.b16 %v680
        %v761 = vunpack.c.l.b16 %v681
        %v762 = vunpack.c.l.b16 %v682
        %v763 = vunpack.c.l.b16 %v683
        %v764 = vunpack.c.l.b16 %v684
        %v765 = vunpack.c.l.b16 %v685
        %v766 = vunpack.c.l.b16 %v686
        %v767 = vunpack.c.l.b16 %v687
        %v768 = vunpack.c.l.b16 %v688
        %v769 = vunpack.c.l.b16 %v689
        %v770 = vunpack.c.l.b16 %v690
        %v771 = vpack.c.b16 %v736, %v735
        %v772 = vpack.c.b16 %v738, %v737
        %v773 = vpack.c.b16 %v740, %v739
        %v774 = vpack.c.b16 %v742, %v741
        %v775 = vpack.c.b16 %v744, %v743
        %v776 = vpack.c.b16 %v746, %v745
        %v777 = vpack.c.b16 %v748, %v747
        %v778 = vpack.c.b16 %v750, %v749
        %v779 = vpack.c.b16 %v752, %v751
        %v780 = vpack.c.b16 %v754, %v753
        %v781 = vpack.c.b16 %v756, %v755
        %v782 = vpack.c.b16 %v758, %v757
        %v783 = vpack.c.b16 %v760, %v759
        %v784 = vpack.c.b16 %v762, %v761
        %v785 = vpack.c.b16 %v764, %v763
        %v786 = vpack.c.b16 %v766, %v765
        %v787 = vpack.c.b16 %v768, %v767
        %v788 = vpack.c.b16 %v770, %v769
        %v793 = vunpack.c.l.b16 %v691
        %v794 = vunpack.c.l.b16 %v692
        %v795 = vunpack.c.l.b16 %v693
        %v796 = vunpack.c.l.b16 %v694
        %v797 = vpack.c.b16 %v794, %v793
        %v798 = vpack.c.b16 %v796, %v795
        %vm801 = vcmask 261120
        %v803 = vsel %vm801, %v771, 0
        %v806 = vsel %vm801, %v772, 0
        %v809 = vsel %vm801, %v773, 0
        %v812 = vsel %vm801, %v774, 0
        %v815 = vsel %vm801, %v775, 0
        %v818 = vsel %vm801, %v776, 0
        %v821 = vsel %vm801, %v777, 0
        %v824 = vsel %vm801, %v778, 0
        %v827 = vsel %vm801, %v779, 0
        %v830 = vsel %vm801, %v780, 0
        %v833 = vsel %vm801, %v781, 0
        %v836 = vsel %vm801, %v782, 0
        %v839 = vsel %vm801, %v783, 0
        %v842 = vsel %vm801, %v784, 0
        %v845 = vsel %vm801, %v785, 0
        %v848 = vsel %vm801, %v786, 0
        %v851 = vsel %vm801, %v787, 0
        %v854 = vsel %vm801, %v788, 0
        %856 = vmatpush.bf16.msra.mxu0 0
        %857 = vmatpush.bf16.msra.mxu0 0
        %858 = vmatpush.bf16.msra.mxu0 0
        %859 = vmatpush.bf16.msra.mxu0 0
        %860 = vmatpush.bf16.msra.mxu0 0
        %861 = vmatpush.bf16.msra.mxu0 0
        %862 = vmatpush.bf16.msra.mxu0 %v798
        %863 = vmatpush.bf16.msra.mxu0 %v797
        %864 = vmatmul.bf16.gmra.mxu0 %v803
        %v865 = vpop.f32.mrf.mxu0
        %v866 = vadd.f32 %v697, %v865
        %v867 = vpop.f32.mrf.mxu0
        %v868 = vadd.f32 %v697, %v867
        %869 = vmatmul.bf16.gmra.mxu0 %v806
        %v870 = vpop.f32.mrf.mxu0
        %v871 = vadd.f32 %v697, %v870
        %v872 = vpop.f32.mrf.mxu0
        %v873 = vadd.f32 %v697, %v872
        %874 = vmatmul.bf16.gmra.mxu0 %v809
        %v875 = vpop.f32.mrf.mxu0
        %v876 = vadd.f32 %v697, %v875
        %v877 = vpop.f32.mrf.mxu0
        %v878 = vadd.f32 %v697, %v877
        %879 = vmatmul.bf16.gmra.mxu0 %v812
        %v880 = vpop.f32.mrf.mxu0
        %v881 = vadd.f32 %v697, %v880
        %v882 = vpop.f32.mrf.mxu0
        %v883 = vadd.f32 %v697, %v882
        %884 = vmatmul.bf16.gmra.mxu0 %v815
        %v885 = vpop.f32.mrf.mxu0
        %v886 = vadd.f32 %v697, %v885
        %v887 = vpop.f32.mrf.mxu0
        %v888 = vadd.f32 %v697, %v887
        %889 = vmatmul.bf16.gmra.mxu0 %v818
        %v890 = vpop.f32.mrf.mxu0
        %v891 = vadd.f32 %v697, %v890
        %v892 = vpop.f32.mrf.mxu0
        %v893 = vadd.f32 %v697, %v892
        %894 = vmatmul.bf16.gmra.mxu0 %v821
        %v895 = vpop.f32.mrf.mxu0
        %v896 = vadd.f32 %v697, %v895
        %v897 = vpop.f32.mrf.mxu0
        %v898 = vadd.f32 %v697, %v897
        %899 = vmatmul.bf16.gmra.mxu0 %v824
        %v900 = vpop.f32.mrf.mxu0
        %v901 = vadd.f32 %v697, %v900
        %v902 = vpop.f32.mrf.mxu0
        %v903 = vadd.f32 %v697, %v902
        %904 = vmatmul.bf16.gmra.mxu0 %v827
        %v905 = vpop.f32.mrf.mxu0
        %v906 = vadd.f32 %v697, %v905
        %v907 = vpop.f32.mrf.mxu0
        %v908 = vadd.f32 %v697, %v907
        %909 = vmatmul.bf16.gmra.mxu0 %v830
        %v910 = vpop.f32.mrf.mxu0
        %v911 = vadd.f32 %v697, %v910
        %v912 = vpop.f32.mrf.mxu0
        %v913 = vadd.f32 %v697, %v912
        %914 = vmatmul.bf16.gmra.mxu0 %v833
        %v915 = vpop.f32.mrf.mxu0
        %v916 = vadd.f32 %v697, %v915
        %v917 = vpop.f32.mrf.mxu0
        %v918 = vadd.f32 %v697, %v917
        %919 = vmatmul.bf16.gmra.mxu0 %v836
        %v920 = vpop.f32.mrf.mxu0
        %v921 = vadd.f32 %v697, %v920
        %v922 = vpop.f32.mrf.mxu0
        %v923 = vadd.f32 %v697, %v922
        %924 = vmatmul.bf16.gmra.mxu0 %v839
        %v925 = vpop.f32.mrf.mxu0
        %v926 = vadd.f32 %v697, %v925
        %v927 = vpop.f32.mrf.mxu0
        %v928 = vadd.f32 %v697, %v927
        %929 = vmatmul.bf16.gmra.mxu0 %v842
        %v930 = vpop.f32.mrf.mxu0
        %v931 = vadd.f32 %v697, %v930
        %v932 = vpop.f32.mrf.mxu0
        %v933 = vadd.f32 %v697, %v932
        %934 = vmatmul.bf16.gmra.mxu0 %v845
        %v935 = vpop.f32.mrf.mxu0
        %v936 = vadd.f32 %v697, %v935
        %v937 = vpop.f32.mrf.mxu0
        %v938 = vadd.f32 %v697, %v937
        %939 = vmatmul.bf16.gmra.mxu0 %v848
        %v940 = vpop.f32.mrf.mxu0
        %v941 = vadd.f32 %v697, %v940
        %v942 = vpop.f32.mrf.mxu0
        %v943 = vadd.f32 %v697, %v942
        %944 = vmatmul.bf16.gmra.mxu0 %v851
        %v945 = vpop.f32.mrf.mxu0
        %v946 = vadd.f32 %v697, %v945
        %v947 = vpop.f32.mrf.mxu0
        %v948 = vadd.f32 %v697, %v947
        %949 = vmatmul.bf16.gmra.mxu0 %v854
        %v950 = vpop.f32.mrf.mxu0
        %v951 = vadd.f32 %v697, %v950
        %v952 = vpop.f32.mrf.mxu0
        %v953 = vadd.f32 %v697, %v952
        %954 = vdwg.mxu0
        %v955 = vmax.f32 %v866, 0.0
        %v956 = vmax.f32 %v868, 0.0
        %v957 = vmax.f32 %v871, 0.0
        %v958 = vmax.f32 %v873, 0.0
        %v959 = vmax.f32 %v876, 0.0
        %v960 = vmax.f32 %v878, 0.0
        %v961 = vmax.f32 %v881, 0.0
        %v962 = vmax.f32 %v883, 0.0
        %v963 = vmax.f32 %v886, 0.0
        %v964 = vmax.f32 %v888, 0.0
        %v965 = vmax.f32 %v891, 0.0
        %v966 = vmax.f32 %v893, 0.0
        %v967 = vmax.f32 %v896, 0.0
        %v968 = vmax.f32 %v898, 0.0
        %v969 = vmax.f32 %v901, 0.0
        %v970 = vmax.f32 %v903, 0.0
        %v971 = vmax.f32 %v906, 0.0
        %v972 = vmax.f32 %v908, 0.0
        %v973 = vmax.f32 %v911, 0.0
        %v974 = vmax.f32 %v913, 0.0
        %v975 = vmax.f32 %v916, 0.0
        %v976 = vmax.f32 %v918, 0.0
        %v977 = vmax.f32 %v921, 0.0
        %v978 = vmax.f32 %v923, 0.0
        %v979 = vmax.f32 %v926, 0.0
        %v980 = vmax.f32 %v928, 0.0
        %v981 = vmax.f32 %v931, 0.0
        %v982 = vmax.f32 %v933, 0.0
        %v983 = vmax.f32 %v936, 0.0
        %v984 = vmax.f32 %v938, 0.0
        %v985 = vmax.f32 %v941, 0.0
        %v986 = vmax.f32 %v943, 0.0
        %v987 = vmax.f32 %v946, 0.0
        %v988 = vmax.f32 %v948, 0.0
        %v989 = vmax.f32 %v951, 0.0
        %v990 = vmax.f32 %v953, 0.0
        %991 = vst.msk [vmem:[#allocation2] sm:$0xff] %vm801, %v955
        %992 = vst.msk [vmem:[#allocation2 + $0x8] sm:$0xff] %vm801, %v956
        %993 = vst.msk [vmem:[#allocation2 + $0x10] sm:$0xff] %vm801, %v957
        %994 = vst.msk [vmem:[#allocation2 + $0x18] sm:$0xff] %vm801, %v958
        %995 = vst.msk [vmem:[#allocation2 + $0x20] sm:$0xff] %vm801, %v959
        %996 = vst.msk [vmem:[#allocation2 + $0x28] sm:$0xff] %vm801, %v960
        %997 = vst.msk [vmem:[#allocation2 + $0x30] sm:$0xff] %vm801, %v961
        %998 = vst.msk [vmem:[#allocation2 + $0x38] sm:$0xff] %vm801, %v962
        %999 = vst.msk [vmem:[#allocation2 + $0x40] sm:$0xff] %vm801, %v963
        %1000 = vst.msk [vmem:[#allocation2 + $0x48] sm:$0xff] %vm801, %v964
        %1001 = vst.msk [vmem:[#allocation2 + $0x50] sm:$0xff] %vm801, %v965
        %1002 = vst.msk [vmem:[#allocation2 + $0x58] sm:$0xff] %vm801, %v966
        %1003 = vst.msk [vmem:[#allocation2 + $0x60] sm:$0xff] %vm801, %v967
        %1004 = vst.msk [vmem:[#allocation2 + $0x68] sm:$0xff] %vm801, %v968
        %1005 = vst.msk [vmem:[#allocation2 + $0x70] sm:$0xff] %vm801, %v969
        %1006 = vst.msk [vmem:[#allocation2 + $0x78] sm:$0xff] %vm801, %v970
        %1007 = vst.msk [vmem:[#allocation2 + $0x80] sm:$0xff] %vm801, %v971
        %1008 = vst.msk [vmem:[#allocation2 + $0x88] sm:$0xff] %vm801, %v972
        %1009 = vst.msk [vmem:[#allocation2 + $0x90] sm:$0xff] %vm801, %v973
        %1010 = vst.msk [vmem:[#allocation2 + $0x98] sm:$0xff] %vm801, %v974
        %1011 = vst.msk [vmem:[#allocation2 + $0xa0] sm:$0xff] %vm801, %v975
        %1012 = vst.msk [vmem:[#allocation2 + $0xa8] sm:$0xff] %vm801, %v976
        %1013 = vst.msk [vmem:[#allocation2 + $0xb0] sm:$0xff] %vm801, %v977
        %1014 = vst.msk [vmem:[#allocation2 + $0xb8] sm:$0xff] %vm801, %v978
        %1015 = vst.msk [vmem:[#allocation2 + $0xc0] sm:$0xff] %vm801, %v979
        %1016 = vst.msk [vmem:[#allocation2 + $0xc8] sm:$0xff] %vm801, %v980
        %1017 = vst.msk [vmem:[#allocation2 + $0xd0] sm:$0xff] %vm801, %v981
        %1018 = vst.msk [vmem:[#allocation2 + $0xd8] sm:$0xff] %vm801, %v982
        %1019 = vst.msk [vmem:[#allocation2 + $0xe0] sm:$0xff] %vm801, %v983
        %1020 = vst.msk [vmem:[#allocation2 + $0xe8] sm:$0xff] %vm801, %v984
        %1021 = vst.msk [vmem:[#allocation2 + $0xf0] sm:$0xff] %vm801, %v985
        %1022 = vst.msk [vmem:[#allocation2 + $0xf8] sm:$0xff] %vm801, %v986
        %1023 = vst.msk [vmem:[#allocation2 + $0x100] sm:$0xff] %vm801, %v987
        %1024 = vst.msk [vmem:[#allocation2 + $0x108] sm:$0xff] %vm801, %v988
        %1025 = vst.msk [vmem:[#allocation2 + $0x110] sm:$0xff] %vm801, %v989
        %1026 = vst.msk [vmem:[#allocation2 + $0x118] sm:$0xff] %vm801, %v990
        %v1027 = vld [vmem:[#allocation2] ss:$2 sm:$0xff]
        %s1028 = scalar_lea.vmem [#allocation2], 1
        %v1029 = vld [vmem:[%s1028] ss:$2 sm:$0xff]
        %v1030 = vmax.f32 %v1027, %v1029
        %s1031 = scalar_lea.vmem [#allocation2], 18
        %v1032 = vld [vmem:[%s1031] ss:$2 sm:$0xff]
        %s1033 = scalar_lea.vmem [#allocation2], 19
        %v1034 = vld [vmem:[%s1033] ss:$2 sm:$0xff]
        %v1035 = vmax.f32 %v1032, %v1034
        %v1036 = vmax.f32 %v1030, %v1035
        %v1037 = vpack.c.bf16 %v1036, %v1036
        %v1039 = vshrl.u32 %v1037, 16
        %v1041 = vrot.slane %v1039, 6
        %v1042 = vshll.u32 %v1037, 16
        %v1044 = vrot.slane %v1042, 7
        %v1045 = vor.u32 %v1041, %v1044
        %v1046 = vrot.slane %v1045, 4
        %vm1049 = vcmask 257025
        %vm1050 = vmand %vm1049, %vm649
        %v1051 = vld [vmem:[#allocation5 + $0x4] sm:$0xe]
        %v1052 = vsel %vm1050, %v1045, %v1051
        %1053 = vst [vmem:[#allocation5 + $0x4] sm:$0xe] %v1052
        %v1054 = vld [vmem:[#allocation5 + $0x8] sm:$0x3]
        %v1055 = vsel %vm542, %v1046, %v1054
        %1056 = vst [vmem:[#allocation5 + $0x8] sm:$0x3] %v1055
        %s1057 = scalar_lea.vmem [#allocation2], 36
        %v1058 = vld [vmem:[%s1057] ss:$2 sm:$0xff]
        %s1059 = scalar_lea.vmem [#allocation2], 37
        %v1060 = vld [vmem:[%s1059] ss:$2 sm:$0xff]
        %v1061 = vmax.f32 %v1058, %v1060
        %s1062 = scalar_lea.vmem [#allocation2], 54
        %v1063 = vld [vmem:[%s1062] ss:$2 sm:$0xff]
        %s1064 = scalar_lea.vmem [#allocation2], 55
        %v1065 = vld [vmem:[%s1064] ss:$2 sm:$0xff]
        %v1066 = vmax.f32 %v1063, %v1065
        %v1067 = vmax.f32 %v1061, %v1066
        %v1068 = vpack.c.bf16 %v1067, %v1067
        %v1070 = vshrl.u32 %v1068, 16
        %v1072 = vrot.slane %v1070, 5
        %v1073 = vshll.u32 %v1068, 16
        %v1075 = vrot.slane %v1073, 6
        %v1076 = vor.u32 %v1072, %v1075
        %v1077 = vrot.slane %v1076, 4
        %vm1080 = vmand %vm552, %vm623
        %v1081 = vld [vmem:[#allocation5 + $0x8] sm:$0xc]
        %v1082 = vsel %vm1080, %v1076, %v1081
        %1083 = vst [vmem:[#allocation5 + $0x8] sm:$0xc] %v1082
        %vm1084 = vcmask 256000
        %vm1085 = vmand %vm1084, %vm633
        %v1086 = vld [vmem:[#allocation5 + $0xc] sm:$0x7]
        %v1087 = vsel %vm1085, %v1077, %v1086
        %1088 = vst [vmem:[#allocation5 + $0xc] sm:$0x7] %v1087
        %s1089 = scalar_lea.vmem [#allocation2], 72
        %v1090 = vld [vmem:[%s1089] ss:$2 sm:$0xff]
        %s1091 = scalar_lea.vmem [#allocation2], 73
        %v1092 = vld [vmem:[%s1091] ss:$2 sm:$0xff]
        %v1093 = vmax.f32 %v1090, %v1092
        %s1094 = scalar_lea.vmem [#allocation2], 90
        %v1095 = vld [vmem:[%s1094] ss:$2 sm:$0xff]
        %s1096 = scalar_lea.vmem [#allocation2], 91
        %v1097 = vld [vmem:[%s1096] ss:$2 sm:$0xff]
        %v1098 = vmax.f32 %v1095, %v1097
        %v1099 = vmax.f32 %v1093, %v1098
        %v1100 = vpack.c.bf16 %v1099, %v1099
        %v1102 = vshll.u32 %v1100, 16
        %v1104 = vrot.slane %v1102, 5
        %v1105 = vshrl.u32 %v1100, 16
        %v1107 = vrot.slane %v1105, 4
        %v1108 = vor.u32 %v1107, %v1104
        %v1109 = vrot.slane %v1108, 4
        %v1112 = vld [vmem:[#allocation5 + $0xc] sm:$0x8]
        %v1113 = vsel %vm560, %v1104, %v1112
        %1114 = vst [vmem:[#allocation5 + $0xc] sm:$0x8] %v1113
        %vm1115 = vmand %vm587, %vm597
        %v1116 = vld [vmem:[#allocation5 + $0x10] sm:$0xf]
        %v1117 = vsel %vm1115, %v1109, %v1116
        %1118 = vst [vmem:[#allocation5 + $0x10] sm:$0xf] %v1117
        %s1119 = scalar_lea.vmem [#allocation2], 108
        %v1120 = vld [vmem:[%s1119] ss:$2 sm:$0xff]
        %s1121 = scalar_lea.vmem [#allocation2], 109
        %v1122 = vld [vmem:[%s1121] ss:$2 sm:$0xff]
        %v1123 = vmax.f32 %v1120, %v1122
        %s1124 = scalar_lea.vmem [#allocation2], 126
        %v1125 = vld [vmem:[%s1124] ss:$2 sm:$0xff]
        %s1126 = scalar_lea.vmem [#allocation2], 127
        %v1127 = vld [vmem:[%s1126] ss:$2 sm:$0xff]
        %v1128 = vmax.f32 %v1125, %v1127
        %v1129 = vmax.f32 %v1123, %v1128
        %v1130 = vpack.c.bf16 %v1129, %v1129
        %v1132 = vshrl.u32 %v1130, 16
        %v1134 = vrot.slane %v1132, 7
        %v1135 = vshll.u32 %v1130, 16
        %v1137 = vor.u32 %v1134, %v1135
        %v1138 = vrot.slane %v1134, 4
        %v1141 = vld [vmem:[#allocation5 + $0x14] sm:$0xf]
        %v1142 = vsel %vm589, %v1137, %v1141
        %1143 = vst [vmem:[#allocation5 + $0x14] sm:$0xf] %v1142
        %v1144 = vld [vmem:[#allocation5 + $0x18] sm:$0x1]
        %v1145 = vsel %vm566, %v1138, %v1144
        %1146 = vst [vmem:[#allocation5 + $0x18] sm:$0x1] %v1145
        %s1147 = scalar_lea.vmem [#allocation2], 144
        %v1148 = vld [vmem:[%s1147] ss:$2 sm:$0xff]
        %s1149 = scalar_lea.vmem [#allocation2], 145
        %v1150 = vld [vmem:[%s1149] ss:$2 sm:$0xff]
        %v1151 = vmax.f32 %v1148, %v1150
        %s1152 = scalar_lea.vmem [#allocation2], 162
        %v1153 = vld [vmem:[%s1152] ss:$2 sm:$0xff]
        %s1154 = scalar_lea.vmem [#allocation2], 163
        %v1155 = vld [vmem:[%s1154] ss:$2 sm:$0xff]
        %v1156 = vmax.f32 %v1153, %v1155
        %v1157 = vmax.f32 %v1151, %v1156
        %v1158 = vpack.c.bf16 %v1157, %v1157
        %v1160 = vshrl.u32 %v1158, 16
        %v1162 = vrot.slane %v1160, 6
        %v1163 = vshll.u32 %v1158, 16
        %v1165 = vrot.slane %v1163, 7
        %v1166 = vor.u32 %v1162, %v1165
        %v1167 = vrot.slane %v1166, 4
        %v1170 = vld [vmem:[#allocation5 + $0x18] sm:$0xe]
        %v1171 = vsel %vm1050, %v1166, %v1170
        %1172 = vst [vmem:[#allocation5 + $0x18] sm:$0xe] %v1171
        %v1173 = vld [vmem:[#allocation5 + $0x1c] sm:$0x3]
        %v1174 = vsel %vm542, %v1167, %v1173
        %1175 = vst [vmem:[#allocation5 + $0x1c] sm:$0x3] %v1174
        %s1176 = scalar_lea.vmem [#allocation2], 180
        %v1177 = vld [vmem:[%s1176] ss:$2 sm:$0xff]
        %s1178 = scalar_lea.vmem [#allocation2], 181
        %v1179 = vld [vmem:[%s1178] ss:$2 sm:$0xff]
        %v1180 = vmax.f32 %v1177, %v1179
        %s1181 = scalar_lea.vmem [#allocation2], 198
        %v1182 = vld [vmem:[%s1181] ss:$2 sm:$0xff]
        %s1183 = scalar_lea.vmem [#allocation2], 199
        %v1184 = vld [vmem:[%s1183] ss:$2 sm:$0xff]
        %v1185 = vmax.f32 %v1182, %v1184
        %v1186 = vmax.f32 %v1180, %v1185
        %v1187 = vpack.c.bf16 %v1186, %v1186
        %v1189 = vshrl.u32 %v1187, 16
        %v1191 = vrot.slane %v1189, 5
        %v1192 = vshll.u32 %v1187, 16
        %v1194 = vrot.slane %v1192, 6
        %v1195 = vor.u32 %v1191, %v1194
        %v1196 = vrot.slane %v1195, 4
        %v1199 = vld [vmem:[#allocation5 + $0x1c] sm:$0xc]
        %v1200 = vsel %vm1080, %v1195, %v1199
        %1201 = vst [vmem:[#allocation5 + $0x1c] sm:$0xc] %v1200
        %v1202 = vld [vmem:[#allocation5 + $0x20] sm:$0x7]
        %v1203 = vsel %vm1085, %v1196, %v1202
        %1204 = vst [vmem:[#allocation5 + $0x20] sm:$0x7] %v1203
        %s1205 = scalar_lea.vmem [#allocation2], 216
        %v1206 = vld [vmem:[%s1205] ss:$2 sm:$0xff]
        %s1207 = scalar_lea.vmem [#allocation2], 217
        %v1208 = vld [vmem:[%s1207] ss:$2 sm:$0xff]
        %v1209 = vmax.f32 %v1206, %v1208
        %s1210 = scalar_lea.vmem [#allocation2], 234
        %v1211 = vld [vmem:[%s1210] ss:$2 sm:$0xff]
        %s1212 = scalar_lea.vmem [#allocation2], 235
        %v1213 = vld [vmem:[%s1212] ss:$2 sm:$0xff]
        %v1214 = vmax.f32 %v1211, %v1213
        %v1215 = vmax.f32 %v1209, %v1214
        %v1216 = vpack.c.bf16 %v1215, %v1215
        %v1218 = vshll.u32 %v1216, 16
        %v1220 = vrot.slane %v1218, 5
        %v1221 = vshrl.u32 %v1216, 16
        %v1223 = vrot.slane %v1221, 4
        %v1224 = vor.u32 %v1223, %v1220
        %v1225 = vrot.slane %v1224, 4
        %v1228 = vld [vmem:[#allocation5 + $0x20] sm:$0x8]
        %v1229 = vsel %vm560, %v1220, %v1228
        %1230 = vst [vmem:[#allocation5 + $0x20] sm:$0x8] %v1229
        %v1231 = vld [vmem:[#allocation5 + $0x24] sm:$0xf]
        %v1232 = vsel %vm1115, %v1225, %v1231
        %1233 = vst [vmem:[#allocation5 + $0x24] sm:$0xf] %v1232
        %s1234 = scalar_lea.vmem [#allocation2], 252
        %v1235 = vld [vmem:[%s1234] ss:$2 sm:$0xff]
        %s1236 = scalar_lea.vmem [#allocation2], 253
        %v1237 = vld [vmem:[%s1236] ss:$2 sm:$0xff]
        %v1238 = vmax.f32 %v1235, %v1237
        %s1239 = scalar_lea.vmem [#allocation2], 270
        %v1240 = vld [vmem:[%s1239] ss:$2 sm:$0xff]
        %s1241 = scalar_lea.vmem [#allocation2], 271
        %v1242 = vld [vmem:[%s1241] ss:$2 sm:$0xff]
        %v1243 = vmax.f32 %v1240, %v1242
        %v1244 = vmax.f32 %v1238, %v1243
        %v1245 = vpack.c.bf16 %v1244, %v1244
        %v1247 = vshrl.u32 %v1245, 16
        %v1249 = vrot.slane %v1247, 7
        %v1250 = vshll.u32 %v1245, 16
        %v1252 = vor.u32 %v1249, %v1250
        %v1253 = vrot.slane %v1249, 4
        %v1256 = vld [vmem:[#allocation5 + $0x28] sm:$0xf]
        %v1257 = vsel %vm589, %v1252, %v1256
        %1258 = vst [vmem:[#allocation5 + $0x28] sm:$0xf] %v1257
        %v1259 = vld [vmem:[#allocation5 + $0x2c] sm:$0x1]
        %v1260 = vsel %vm566, %v1253, %v1259
        %1261 = vst [vmem:[#allocation5 + $0x2c] sm:$0x1] %v1260
        %v1262 = vld [vmem:[#allocation5] sm:$0xf]
        %v1263 = vld [vmem:[#allocation5 + $0x4] sm:$0xf]
        %v1264 = vld [vmem:[#allocation5 + $0x8] sm:$0xf]
        %v1265 = vld [vmem:[#allocation5 + $0xc] sm:$0xf]
        %v1266 = vld [vmem:[#allocation5 + $0x10] sm:$0xf]
        %v1267 = vld [vmem:[#allocation5 + $0x14] sm:$0xf]
        %v1268 = vld [vmem:[#allocation5 + $0x18] sm:$0xf]
        %v1269 = vld [vmem:[#allocation5 + $0x1c] sm:$0xf]
        %v1270 = vld [vmem:[#allocation5 + $0x20] sm:$0xf]
        %v1271 = vld [vmem:[#allocation5 + $0x24] sm:$0xf]
        %v1272 = vld [vmem:[%s4] sm:$0xf]
        %v1273 = vld [vmem:[%s4 + $0x4] sm:$0xf]
        %v1274 = vld [vmem:[%s4 + $0x8] sm:$0xf]
        %v1275 = vld [vmem:[%s4 + $0xc] sm:$0xf]
        %v1276 = vld [vmem:[#allocation5 + $0x28] sm:$0x1]
        %s1277 = scalar_lea.vmem %s4, 16
        %v1278 = vld [vmem:[%s1277] sm:$0xf]
        %v1279 = vld [vmem:[%s1277 + $0x4] sm:$0xf]
        %v1280 = vld [vmem:[%s1277 + $0x8] sm:$0xf]
        %v1281 = vld [vmem:[%s1277 + $0xc] sm:$0xf]
        %v1293 = vunpack.c.l.b16 %v1262
        %v1294 = vunpack.c.l.b16 %v1263
        %v1295 = vunpack.c.l.b16 %v1264
        %v1296 = vunpack.c.l.b16 %v1265
        %v1297 = vunpack.c.l.b16 %v1266
        %v1298 = vunpack.c.l.b16 %v1267
        %v1299 = vunpack.c.l.b16 %v1268
        %v1300 = vunpack.c.l.b16 %v1269
        %v1301 = vunpack.c.l.b16 %v1270
        %v1302 = vunpack.c.l.b16 %v1271
        %v1303 = vunpack.c.l.b16 %v1276
        %v1304 = vpack.c.b16 %v1294, %v1293
        %v1305 = vpack.c.b16 %v1296, %v1295
        %v1306 = vpack.c.b16 %v1298, %v1297
        %v1307 = vpack.c.b16 %v1300, %v1299
        %v1308 = vpack.c.b16 %v1302, %v1301
        %v1309 = vpack.c.b16 %v1303, %v1303
        %vm1310 = vsmask.f32 7424
        %v1312 = vshrl.u32 %v1304, 16
        %v1314 = vshll.u32 %v1304, 16
        %v1316 = vrot.slane %v1314, 1
        %v1317 = vor.u32 %v1312, %v1316
        %v1319 = vshll.u32 %v1305, 16
        %v1321 = vrot.slane %v1319, 1
        %v1322 = vsel %vm1310, %v1317, %v1321
        %v1323 = vshrl.u32 %v1305, 16
        %v1325 = vor.u32 %v1323, %v1321
        %v1327 = vshll.u32 %v1306, 16
        %v1329 = vrot.slane %v1327, 1
        %v1330 = vsel %vm1310, %v1325, %v1329
        %v1331 = vshrl.u32 %v1306, 16
        %v1333 = vor.u32 %v1331, %v1329
        %v1335 = vshll.u32 %v1307, 16
        %v1337 = vrot.slane %v1335, 1
        %v1338 = vsel %vm1310, %v1333, %v1337
        %v1339 = vshrl.u32 %v1307, 16
        %v1341 = vor.u32 %v1339, %v1337
        %v1343 = vshll.u32 %v1308, 16
        %v1345 = vrot.slane %v1343, 1
        %v1346 = vsel %vm1310, %v1341, %v1345
        %v1347 = vshrl.u32 %v1308, 16
        %v1349 = vor.u32 %v1347, %v1345
        %v1351 = vshll.u32 %v1309, 16
        %v1353 = vrot.slane %v1351, 1
        %v1354 = vsel %vm1310, %v1349, %v1353
        %v1359 = vunpack.c.l.b16 %v1278
        %v1360 = vunpack.c.l.b16 %v1279
        %v1361 = vunpack.c.l.b16 %v1280
        %v1362 = vunpack.c.l.b16 %v1281
        %v1363 = vpack.c.b16 %v1360, %v1359
        %v1364 = vpack.c.b16 %v1362, %v1361
        %v1368 = vsel %vm801, %v1322, 0
        %v1371 = vsel %vm801, %v1330, 0
        %v1374 = vsel %vm801, %v1338, 0
        %v1377 = vsel %vm801, %v1346, 0
        %v1380 = vsel %vm801, %v1354, 0
        %1382 = vmatpush.bf16.msra.mxu0 0
        %1383 = vmatpush.bf16.msra.mxu0 0
        %1384 = vmatpush.bf16.msra.mxu0 0
        %1385 = vmatpush.bf16.msra.mxu0 0
        %1386 = vmatpush.bf16.msra.mxu0 0
        %1387 = vmatpush.bf16.msra.mxu0 0
        %1388 = vmatpush.bf16.msra.mxu0 %v1364
        %1389 = vmatpush.bf16.msra.mxu0 %v1363
        %1390 = vmatmul.bf16.gmra.mxu0 %v1368
        %v1391 = vpop.f32.mrf.mxu0
        %v1392 = vadd.f32 0.0, %v1391
        %v1393 = vpop.f32.mrf.mxu0
        %v1394 = vadd.f32 0.0, %v1393
        %1395 = vmatmul.bf16.gmra.mxu0 %v1371
        %v1396 = vpop.f32.mrf.mxu0
        %v1397 = vadd.f32 0.0, %v1396
        %v1398 = vpop.f32.mrf.mxu0
        %v1399 = vadd.f32 0.0, %v1398
        %1400 = vmatmul.bf16.gmra.mxu0 %v1374
        %v1401 = vpop.f32.mrf.mxu0
        %v1402 = vadd.f32 0.0, %v1401
        %v1403 = vpop.f32.mrf.mxu0
        %v1404 = vadd.f32 0.0, %v1403
        %1405 = vmatmul.bf16.gmra.mxu0 %v1377
        %v1406 = vpop.f32.mrf.mxu0
        %v1407 = vadd.f32 0.0, %v1406
        %v1408 = vpop.f32.mrf.mxu0
        %v1409 = vadd.f32 0.0, %v1408
        %1410 = vmatmul.bf16.gmra.mxu0 %v1380
        %v1411 = vpop.f32.mrf.mxu0
        %v1412 = vadd.f32 0.0, %v1411
        %v1413 = vpop.f32.mrf.mxu0
        %v1414 = vadd.f32 0.0, %v1413
        %1415 = vdwg.mxu0
        %v1420 = vunpack.c.l.b16 %v1272
        %v1421 = vunpack.c.l.b16 %v1273
        %v1422 = vunpack.c.l.b16 %v1274
        %v1423 = vunpack.c.l.b16 %v1275
        %v1424 = vpack.c.b16 %v1421, %v1420
        %v1425 = vpack.c.b16 %v1423, %v1422
        %v1428 = vsel %vm801, %v1304, 0
        %v1430 = vsel %vm801, %v1305, 0
        %v1432 = vsel %vm801, %v1306, 0
        %v1434 = vsel %vm801, %v1307, 0
        %v1436 = vsel %vm801, %v1308, 0
        %1438 = vmatpush.bf16.msra.mxu0 0
        %1439 = vmatpush.bf16.msra.mxu0 0
        %1440 = vmatpush.bf16.msra.mxu0 0
        %1441 = vmatpush.bf16.msra.mxu0 0
        %1442 = vmatpush.bf16.msra.mxu0 0
        %1443 = vmatpush.bf16.msra.mxu0 0
        %1444 = vmatpush.bf16.msra.mxu0 %v1425
        %1445 = vmatpush.bf16.msra.mxu0 %v1424
        %1446 = vmatmul.bf16.gmra.mxu0 %v1428
        %v1447 = vpop.f32.mrf.mxu0
        %v1448 = vadd.f32 %v1392, %v1447
        %v1449 = vpop.f32.mrf.mxu0
        %v1450 = vadd.f32 %v1394, %v1449
        %1451 = vmatmul.bf16.gmra.mxu0 %v1430
        %v1452 = vpop.f32.mrf.mxu0
        %v1453 = vadd.f32 %v1397, %v1452
        %v1454 = vpop.f32.mrf.mxu0
        %v1455 = vadd.f32 %v1399, %v1454
        %1456 = vmatmul.bf16.gmra.mxu0 %v1432
        %v1457 = vpop.f32.mrf.mxu0
        %v1458 = vadd.f32 %v1402, %v1457
        %v1459 = vpop.f32.mrf.mxu0
        %v1460 = vadd.f32 %v1404, %v1459
        %1461 = vmatmul.bf16.gmra.mxu0 %v1434
        %v1462 = vpop.f32.mrf.mxu0
        %v1463 = vadd.f32 %v1407, %v1462
        %v1464 = vpop.f32.mrf.mxu0
        %v1465 = vadd.f32 %v1409, %v1464
        %1466 = vmatmul.bf16.gmra.mxu0 %v1436
        %v1467 = vpop.f32.mrf.mxu0
        %v1468 = vadd.f32 %v1412, %v1467
        %v1469 = vpop.f32.mrf.mxu0
        %v1470 = vadd.f32 %v1414, %v1469
        %1471 = vdwg.mxu0
        %v1472 = vld [vmem:[#allocation5] sm:$0xe]
        %s1473 = scalar_lea.vmem %s4, 32
        %v1474 = vld [vmem:[%s1473] sm:$0xf]
        %v1475 = vld [vmem:[%s1473 + $0x4] sm:$0xf]
        %v1476 = vld [vmem:[%s1473 + $0x8] sm:$0xf]
        %v1477 = vld [vmem:[%s1473 + $0xc] sm:$0xf]
        %v1479 = vunpack.c.l.b16 %v1472
        %v1480 = vpack.c.b16 %v1294, %v1479
        %vm1481 = vcmask 1046528
        %v1482 = vrot.slane %v1480, 1
        %v1483 = vrot.slane %v1305, 1
        %v1484 = vsel %vm1481, %v1482, %v1483
        %v1485 = vrot.slane %v1306, 1
        %v1486 = vsel %vm1481, %v1483, %v1485
        %v1487 = vrot.slane %v1307, 1
        %v1488 = vsel %vm1481, %v1485, %v1487
        %v1489 = vrot.slane %v1308, 1
        %v1490 = vsel %vm1481, %v1487, %v1489
        %v1491 = vrot.slane %v1309, 1
        %v1492 = vsel %vm1481, %v1489, %v1491
        %v1497 = vunpack.c.l.b16 %v1474
        %v1498 = vunpack.c.l.b16 %v1475
        %v1499 = vunpack.c.l.b16 %v1476
        %v1500 = vunpack.c.l.b16 %v1477
        %v1501 = vpack.c.b16 %v1498, %v1497
        %v1502 = vpack.c.b16 %v1500, %v1499
        %v1506 = vsel %vm801, %v1484, 0
        %v1509 = vsel %vm801, %v1486, 0
        %v1512 = vsel %vm801, %v1488, 0
        %v1515 = vsel %vm801, %v1490, 0
        %v1518 = vsel %vm801, %v1492, 0
        %1520 = vmatpush.bf16.msra.mxu0 0
        %1521 = vmatpush.bf16.msra.mxu0 0
        %1522 = vmatpush.bf16.msra.mxu0 0
        %1523 = vmatpush.bf16.msra.mxu0 0
        %1524 = vmatpush.bf16.msra.mxu0 0
        %1525 = vmatpush.bf16.msra.mxu0 0
        %1526 = vmatpush.bf16.msra.mxu0 %v1502
        %1527 = vmatpush.bf16.msra.mxu0 %v1501
        %1528 = vmatmul.bf16.gmra.mxu0 %v1506
        %v1529 = vpop.f32.mrf.mxu0
        %v1530 = vadd.f32 0.0, %v1529
        %v1531 = vpop.f32.mrf.mxu0
        %v1532 = vadd.f32 0.0, %v1531
        %1533 = vmatmul.bf16.gmra.mxu0 %v1509
        %v1534 = vpop.f32.mrf.mxu0
        %v1535 = vadd.f32 0.0, %v1534
        %v1536 = vpop.f32.mrf.mxu0
        %v1537 = vadd.f32 0.0, %v1536
        %1538 = vmatmul.bf16.gmra.mxu0 %v1512
        %v1539 = vpop.f32.mrf.mxu0
        %v1540 = vadd.f32 0.0, %v1539
        %v1541 = vpop.f32.mrf.mxu0
        %v1542 = vadd.f32 0.0, %v1541
        %1543 = vmatmul.bf16.gmra.mxu0 %v1515
        %v1544 = vpop.f32.mrf.mxu0
        %v1545 = vadd.f32 0.0, %v1544
        %v1546 = vpop.f32.mrf.mxu0
        %v1547 = vadd.f32 0.0, %v1546
        %1548 = vmatmul.bf16.gmra.mxu0 %v1518
        %v1549 = vpop.f32.mrf.mxu0
        %v1550 = vadd.f32 0.0, %v1549
        %v1551 = vpop.f32.mrf.mxu0
        %v1552 = vadd.f32 0.0, %v1551
        %1553 = vdwg.mxu0
        %v1554 = vadd.f32 %v1448, %v1530
        %v1555 = vadd.f32 %v1450, %v1532
        %v1556 = vadd.f32 %v1453, %v1535
        %v1557 = vadd.f32 %v1455, %v1537
        %v1558 = vadd.f32 %v1458, %v1540
        %v1559 = vadd.f32 %v1460, %v1542
        %v1560 = vadd.f32 %v1463, %v1545
        %v1561 = vadd.f32 %v1465, %v1547
        %v1562 = vadd.f32 %v1468, %v1550
        %v1563 = vadd.f32 %v1470, %v1552
        %v1564 = vld [vmem:[#allocation5 + $0x4] sm:$0xe]
        %v1565 = vld [vmem:[#allocation5 + $0x8] sm:$0xf]
        %v1566 = vld [vmem:[#allocation5 + $0xc] sm:$0xf]
        %v1567 = vld [vmem:[#allocation5 + $0x10] sm:$0xf]
        %v1568 = vld [vmem:[#allocation5 + $0x14] sm:$0xf]
        %v1569 = vld [vmem:[#allocation5 + $0x18] sm:$0xf]
        %v1570 = vld [vmem:[#allocation5 + $0x1c] sm:$0xf]
        %v1571 = vld [vmem:[#allocation5 + $0x20] sm:$0xf]
        %v1572 = vld [vmem:[#allocation5 + $0x24] sm:$0xf]
        %v1573 = vld [vmem:[#allocation5 + $0x28] sm:$0xf]
        %v1574 = vld [vmem:[#allocation5 + $0x2c] sm:$0x1]
        %s1575 = scalar_lea.vmem %s4, 48
        %v1576 = vld [vmem:[%s1575] sm:$0xf]
        %v1577 = vld [vmem:[%s1575 + $0x4] sm:$0xf]
        %v1578 = vld [vmem:[%s1575 + $0x8] sm:$0xf]
        %v1579 = vld [vmem:[%s1575 + $0xc] sm:$0xf]
        %v1591 = vunpack.c.l.b16 %v1564
        %v1592 = vunpack.c.l.b16 %v1565
        %v1593 = vunpack.c.l.b16 %v1566
        %v1594 = vunpack.c.l.b16 %v1567
        %v1595 = vunpack.c.l.b16 %v1568
        %v1596 = vunpack.c.l.b16 %v1569
        %v1597 = vunpack.c.l.b16 %v1570
        %v1598 = vunpack.c.l.b16 %v1571
        %v1599 = vunpack.c.l.b16 %v1572
        %v1600 = vunpack.c.l.b16 %v1573
        %v1601 = vunpack.c.l.b16 %v1574
        %v1602 = vpack.c.b16 %v1592, %v1591
        %v1603 = vpack.c.b16 %v1594, %v1593
        %v1604 = vpack.c.b16 %v1596, %v1595
        %v1605 = vpack.c.b16 %v1598, %v1597
        %v1606 = vpack.c.b16 %v1600, %v1599
        %v1607 = vpack.c.b16 %v1601, %v1601
        %v1608 = vrot.slane %v1602, 1
        %v1609 = vrot.slane %v1603, 1
        %v1610 = vsel %vm1481, %v1608, %v1609
        %v1611 = vrot.slane %v1604, 1
        %v1612 = vsel %vm1481, %v1609, %v1611
        %v1613 = vrot.slane %v1605, 1
        %v1614 = vsel %vm1481, %v1611, %v1613
        %v1615 = vrot.slane %v1606, 1
        %v1616 = vsel %vm1481, %v1613, %v1615
        %v1617 = vrot.slane %v1607, 1
        %v1618 = vsel %vm1481, %v1615, %v1617
        %v1623 = vunpack.c.l.b16 %v1576
        %v1624 = vunpack.c.l.b16 %v1577
        %v1625 = vunpack.c.l.b16 %v1578
        %v1626 = vunpack.c.l.b16 %v1579
        %v1627 = vpack.c.b16 %v1624, %v1623
        %v1628 = vpack.c.b16 %v1626, %v1625
        %v1632 = vsel %vm801, %v1610, 0
        %v1635 = vsel %vm801, %v1612, 0
        %v1638 = vsel %vm801, %v1614, 0
        %v1641 = vsel %vm801, %v1616, 0
        %v1644 = vsel %vm801, %v1618, 0
        %1646 = vmatpush.bf16.msra.mxu0 0
        %1647 = vmatpush.bf16.msra.mxu0 0
        %1648 = vmatpush.bf16.msra.mxu0 0
        %1649 = vmatpush.bf16.msra.mxu0 0
        %1650 = vmatpush.bf16.msra.mxu0 0
        %1651 = vmatpush.bf16.msra.mxu0 0
        %1652 = vmatpush.bf16.msra.mxu0 %v1628
        %1653 = vmatpush.bf16.msra.mxu0 %v1627
        %1654 = vmatmul.bf16.gmra.mxu0 %v1632
        %v1655 = vpop.f32.mrf.mxu0
        %v1656 = vadd.f32 0.0, %v1655
        %v1657 = vpop.f32.mrf.mxu0
        %v1658 = vadd.f32 0.0, %v1657
        %1659 = vmatmul.bf16.gmra.mxu0 %v1635
        %v1660 = vpop.f32.mrf.mxu0
        %v1661 = vadd.f32 0.0, %v1660
        %v1662 = vpop.f32.mrf.mxu0
        %v1663 = vadd.f32 0.0, %v1662
        %1664 = vmatmul.bf16.gmra.mxu0 %v1638
        %v1665 = vpop.f32.mrf.mxu0
        %v1666 = vadd.f32 0.0, %v1665
        %v1667 = vpop.f32.mrf.mxu0
        %v1668 = vadd.f32 0.0, %v1667
        %1669 = vmatmul.bf16.gmra.mxu0 %v1641
        %v1670 = vpop.f32.mrf.mxu0
        %v1671 = vadd.f32 0.0, %v1670
        %v1672 = vpop.f32.mrf.mxu0
        %v1673 = vadd.f32 0.0, %v1672
        %1674 = vmatmul.bf16.gmra.mxu0 %v1644
        %v1675 = vpop.f32.mrf.mxu0
        %v1676 = vadd.f32 0.0, %v1675
        %v1677 = vpop.f32.mrf.mxu0
        %v1678 = vadd.f32 0.0, %v1677
        %1679 = vdwg.mxu0
        %v1680 = vadd.f32 %v1554, %v1656
        %v1681 = vadd.f32 %v1555, %v1658
        %v1682 = vadd.f32 %v1556, %v1661
        %v1683 = vadd.f32 %v1557, %v1663
        %v1684 = vadd.f32 %v1558, %v1666
        %v1685 = vadd.f32 %v1559, %v1668
        %v1686 = vadd.f32 %v1560, %v1671
        %v1687 = vadd.f32 %v1561, %v1673
        %v1688 = vadd.f32 %v1562, %v1676
        %v1689 = vadd.f32 %v1563, %v1678
        %v1690 = vld [vmem:[#allocation5 + $0x2c] sm:$0x3]
        %s1691 = scalar_lea.vmem %s4, 64
        %v1692 = vld [vmem:[%s1691] sm:$0xf]
        %v1693 = vld [vmem:[%s1691 + $0x4] sm:$0xf]
        %v1694 = vld [vmem:[%s1691 + $0x8] sm:$0xf]
        %v1695 = vld [vmem:[%s1691 + $0xc] sm:$0xf]
        %v1697 = vunpack.c.l.b16 %v1690
        %v1698 = vpack.c.b16 %v1697, %v1697
        %vm1699 = vsmask.f32 6400
        %v1701 = vshrl.u32 %v1602, 16
        %v1703 = vrot.slane %v1701, 1
        %v1704 = vshll.u32 %v1602, 16
        %v1706 = vrot.slane %v1704, 2
        %v1707 = vor.u32 %v1703, %v1706
        %v1709 = vshrl.u32 %v1603, 16
        %v1711 = vrot.slane %v1709, 1
        %v1712 = vshll.u32 %v1603, 16
        %v1714 = vrot.slane %v1712, 2
        %v1715 = vor.u32 %v1711, %v1714
        %v1716 = vsel %vm1699, %v1707, %v1715
        %v1718 = vshrl.u32 %v1604, 16
        %v1720 = vrot.slane %v1718, 1
        %v1721 = vshll.u32 %v1604, 16
        %v1723 = vrot.slane %v1721, 2
        %v1724 = vor.u32 %v1720, %v1723
        %v1725 = vsel %vm1699, %v1715, %v1724
        %v1727 = vshrl.u32 %v1605, 16
        %v1729 = vrot.slane %v1727, 1
        %v1730 = vshll.u32 %v1605, 16
        %v1732 = vrot.slane %v1730, 2
        %v1733 = vor.u32 %v1729, %v1732
        %v1734 = vsel %vm1699, %v1724, %v1733
        %v1736 = vshrl.u32 %v1606, 16
        %v1738 = vrot.slane %v1736, 1
        %v1739 = vshll.u32 %v1606, 16
        %v1741 = vrot.slane %v1739, 2
        %v1742 = vor.u32 %v1738, %v1741
        %v1743 = vsel %vm1699, %v1733, %v1742
        %v1745 = vshrl.u32 %v1698, 16
        %v1747 = vrot.slane %v1745, 1
        %v1748 = vshll.u32 %v1698, 16
        %v1750 = vrot.slane %v1748, 2
        %v1751 = vor.u32 %v1747, %v1750
        %v1752 = vsel %vm1699, %v1742, %v1751
        %v1757 = vunpack.c.l.b16 %v1692
        %v1758 = vunpack.c.l.b16 %v1693
        %v1759 = vunpack.c.l.b16 %v1694
        %v1760 = vunpack.c.l.b16 %v1695
        %v1761 = vpack.c.b16 %v1758, %v1757
        %v1762 = vpack.c.b16 %v1760, %v1759
        %v1766 = vsel %vm801, %v1716, 0
        %v1769 = vsel %vm801, %v1725, 0
        %v1772 = vsel %vm801, %v1734, 0
        %v1775 = vsel %vm801, %v1743, 0
        %v1778 = vsel %vm801, %v1752, 0
        %1780 = vmatpush.bf16.msra.mxu0 0
        %1781 = vmatpush.bf16.msra.mxu0 0
        %1782 = vmatpush.bf16.msra.mxu0 0
        %1783 = vmatpush.bf16.msra.mxu0 0
        %1784 = vmatpush.bf16.msra.mxu0 0
        %1785 = vmatpush.bf16.msra.mxu0 0
        %1786 = vmatpush.bf16.msra.mxu0 %v1762
        %1787 = vmatpush.bf16.msra.mxu0 %v1761
        %1788 = vmatmul.bf16.gmra.mxu0 %v1766
        %v1789 = vpop.f32.mrf.mxu0
        %v1790 = vadd.f32 0.0, %v1789
        %v1791 = vpop.f32.mrf.mxu0
        %v1792 = vadd.f32 0.0, %v1791
        %1793 = vmatmul.bf16.gmra.mxu0 %v1769
        %v1794 = vpop.f32.mrf.mxu0
        %v1795 = vadd.f32 0.0, %v1794
        %v1796 = vpop.f32.mrf.mxu0
        %v1797 = vadd.f32 0.0, %v1796
        %1798 = vmatmul.bf16.gmra.mxu0 %v1772
        %v1799 = vpop.f32.mrf.mxu0
        %v1800 = vadd.f32 0.0, %v1799
        %v1801 = vpop.f32.mrf.mxu0
        %v1802 = vadd.f32 0.0, %v1801
        %1803 = vmatmul.bf16.gmra.mxu0 %v1775
        %v1804 = vpop.f32.mrf.mxu0
        %v1805 = vadd.f32 0.0, %v1804
        %v1806 = vpop.f32.mrf.mxu0
        %v1807 = vadd.f32 0.0, %v1806
        %1808 = vmatmul.bf16.gmra.mxu0 %v1778
        %v1809 = vpop.f32.mrf.mxu0
        %v1810 = vadd.f32 0.0, %v1809
        %v1811 = vpop.f32.mrf.mxu0
        %v1812 = vadd.f32 0.0, %v1811
        %1813 = vdwg.mxu0
        %v1814 = vadd.f32 %v1680, %v1790
        %v1815 = vadd.f32 %v1681, %v1792
        %v1816 = vadd.f32 %v1682, %v1795
        %v1817 = vadd.f32 %v1683, %v1797
        %v1818 = vadd.f32 %v1684, %v1800
        %v1819 = vadd.f32 %v1685, %v1802
        %v1820 = vadd.f32 %v1686, %v1805
        %v1821 = vadd.f32 %v1687, %v1807
        %v1822 = vadd.f32 %v1688, %v1810
        %v1823 = vadd.f32 %v1689, %v1812
        %v1824 = vld [vmem:[#allocation5 + $0x4] sm:$0xc]
        %s1825 = scalar_lea.vmem %s4, 80
        %v1826 = vld [vmem:[%s1825] sm:$0xf]
        %v1827 = vld [vmem:[%s1825 + $0x4] sm:$0xf]
        %v1828 = vld [vmem:[%s1825 + $0x8] sm:$0xf]
        %v1829 = vld [vmem:[%s1825 + $0xc] sm:$0xf]
        %v1831 = vunpack.c.l.b16 %v1824
        %v1832 = vpack.c.b16 %v1592, %v1831
        %vm1833 = vcmask 1045504
        %v1834 = vrot.slane %v1832, 2
        %v1835 = vrot.slane %v1603, 2
        %v1836 = vsel %vm1833, %v1834, %v1835
        %v1837 = vrot.slane %v1604, 2
        %v1838 = vsel %vm1833, %v1835, %v1837
        %v1839 = vrot.slane %v1605, 2
        %v1840 = vsel %vm1833, %v1837, %v1839
        %v1841 = vrot.slane %v1606, 2
        %v1842 = vsel %vm1833, %v1839, %v1841
        %v1843 = vrot.slane %v1698, 2
        %v1844 = vsel %vm1833, %v1841, %v1843
        %v1849 = vunpack.c.l.b16 %v1826
        %v1850 = vunpack.c.l.b16 %v1827
        %v1851 = vunpack.c.l.b16 %v1828
        %v1852 = vunpack.c.l.b16 %v1829
        %v1853 = vpack.c.b16 %v1850, %v1849
        %v1854 = vpack.c.b16 %v1852, %v1851
        %v1858 = vsel %vm801, %v1836, 0
        %v1861 = vsel %vm801, %v1838, 0
        %v1864 = vsel %vm801, %v1840, 0
        %v1867 = vsel %vm801, %v1842, 0
        %v1870 = vsel %vm801, %v1844, 0
        %1872 = vmatpush.bf16.msra.mxu0 0
        %1873 = vmatpush.bf16.msra.mxu0 0
        %1874 = vmatpush.bf16.msra.mxu0 0
        %1875 = vmatpush.bf16.msra.mxu0 0
        %1876 = vmatpush.bf16.msra.mxu0 0
        %1877 = vmatpush.bf16.msra.mxu0 0
        %1878 = vmatpush.bf16.msra.mxu0 %v1854
        %1879 = vmatpush.bf16.msra.mxu0 %v1853
        %1880 = vmatmul.bf16.gmra.mxu0 %v1858
        %v1881 = vpop.f32.mrf.mxu0
        %v1882 = vadd.f32 0.0, %v1881
        %v1883 = vpop.f32.mrf.mxu0
        %v1884 = vadd.f32 0.0, %v1883
        %1885 = vmatmul.bf16.gmra.mxu0 %v1861
        %v1886 = vpop.f32.mrf.mxu0
        %v1887 = vadd.f32 0.0, %v1886
        %v1888 = vpop.f32.mrf.mxu0
        %v1889 = vadd.f32 0.0, %v1888
        %1890 = vmatmul.bf16.gmra.mxu0 %v1864
        %v1891 = vpop.f32.mrf.mxu0
        %v1892 = vadd.f32 0.0, %v1891
        %v1893 = vpop.f32.mrf.mxu0
        %v1894 = vadd.f32 0.0, %v1893
        %1895 = vmatmul.bf16.gmra.mxu0 %v1867
        %v1896 = vpop.f32.mrf.mxu0
        %v1897 = vadd.f32 0.0, %v1896
        %v1898 = vpop.f32.mrf.mxu0
        %v1899 = vadd.f32 0.0, %v1898
        %1900 = vmatmul.bf16.gmra.mxu0 %v1870
        %v1901 = vpop.f32.mrf.mxu0
        %v1902 = vadd.f32 0.0, %v1901
        %v1903 = vpop.f32.mrf.mxu0
        %v1904 = vadd.f32 0.0, %v1903
        %1905 = vdwg.mxu0
        %v1906 = vadd.f32 %v1814, %v1882
        %v1907 = vadd.f32 %v1815, %v1884
        %v1908 = vadd.f32 %v1816, %v1887
        %v1909 = vadd.f32 %v1817, %v1889
        %v1910 = vadd.f32 %v1818, %v1892
        %v1911 = vadd.f32 %v1819, %v1894
        %v1912 = vadd.f32 %v1820, %v1897
        %v1913 = vadd.f32 %v1821, %v1899
        %v1914 = vadd.f32 %v1822, %v1902
        %v1915 = vadd.f32 %v1823, %v1904
        %v1916 = vld [vmem:[#allocation5 + $0x8] sm:$0xc]
        %v1917 = vld [vmem:[#allocation5 + $0xc] sm:$0xf]
        %v1918 = vld [vmem:[#allocation5 + $0x10] sm:$0xf]
        %v1919 = vld [vmem:[#allocation5 + $0x14] sm:$0xf]
        %v1920 = vld [vmem:[#allocation5 + $0x18] sm:$0xf]
        %v1921 = vld [vmem:[#allocation5 + $0x1c] sm:$0xf]
        %v1922 = vld [vmem:[#allocation5 + $0x20] sm:$0xf]
        %v1923 = vld [vmem:[#allocation5 + $0x24] sm:$0xf]
        %v1924 = vld [vmem:[#allocation5 + $0x28] sm:$0xf]
        %v1925 = vld [vmem:[#allocation5 + $0x2c] sm:$0xf]
        %v1926 = vld [vmem:[#allocation5 + $0x30] sm:$0x3]
        %s1927 = scalar_lea.vmem %s4, 96
        %v1928 = vld [vmem:[%s1927] sm:$0xf]
        %v1929 = vld [vmem:[%s1927 + $0x4] sm:$0xf]
        %v1930 = vld [vmem:[%s1927 + $0x8] sm:$0xf]
        %v1931 = vld [vmem:[%s1927 + $0xc] sm:$0xf]
        %v1943 = vunpack.c.l.b16 %v1916
        %v1944 = vunpack.c.l.b16 %v1917
        %v1945 = vunpack.c.l.b16 %v1918
        %v1946 = vunpack.c.l.b16 %v1919
        %v1947 = vunpack.c.l.b16 %v1920
        %v1948 = vunpack.c.l.b16 %v1921
        %v1949 = vunpack.c.l.b16 %v1922
        %v1950 = vunpack.c.l.b16 %v1923
        %v1951 = vunpack.c.l.b16 %v1924
        %v1952 = vunpack.c.l.b16 %v1925
        %v1953 = vunpack.c.l.b16 %v1926
        %v1954 = vpack.c.b16 %v1944, %v1943
        %v1955 = vpack.c.b16 %v1946, %v1945
        %v1956 = vpack.c.b16 %v1948, %v1947
        %v1957 = vpack.c.b16 %v1950, %v1949
        %v1958 = vpack.c.b16 %v1952, %v1951
        %v1959 = vpack.c.b16 %v1953, %v1953
        %v1960 = vrot.slane %v1954, 2
        %v1961 = vrot.slane %v1955, 2
        %v1962 = vsel %vm1833, %v1960, %v1961
        %v1963 = vrot.slane %v1956, 2
        %v1964 = vsel %vm1833, %v1961, %v1963
        %v1965 = vrot.slane %v1957, 2
        %v1966 = vsel %vm1833, %v1963, %v1965
        %v1967 = vrot.slane %v1958, 2
        %v1968 = vsel %vm1833, %v1965, %v1967
        %v1969 = vrot.slane %v1959, 2
        %v1970 = vsel %vm1833, %v1967, %v1969
        %v1975 = vunpack.c.l.b16 %v1928
        %v1976 = vunpack.c.l.b16 %v1929
        %v1977 = vunpack.c.l.b16 %v1930
        %v1978 = vunpack.c.l.b16 %v1931
        %v1979 = vpack.c.b16 %v1976, %v1975
        %v1980 = vpack.c.b16 %v1978, %v1977
        %v1984 = vsel %vm801, %v1962, 0
        %v1987 = vsel %vm801, %v1964, 0
        %v1990 = vsel %vm801, %v1966, 0
        %v1993 = vsel %vm801, %v1968, 0
        %v1996 = vsel %vm801, %v1970, 0
        %1998 = vmatpush.bf16.msra.mxu0 0
        %1999 = vmatpush.bf16.msra.mxu0 0
        %2000 = vmatpush.bf16.msra.mxu0 0
        %2001 = vmatpush.bf16.msra.mxu0 0
        %2002 = vmatpush.bf16.msra.mxu0 0
        %2003 = vmatpush.bf16.msra.mxu0 0
        %2004 = vmatpush.bf16.msra.mxu0 %v1980
        %2005 = vmatpush.bf16.msra.mxu0 %v1979
        %2006 = vmatmul.bf16.gmra.mxu0 %v1984
        %v2007 = vpop.f32.mrf.mxu0
        %v2008 = vadd.f32 0.0, %v2007
        %v2009 = vpop.f32.mrf.mxu0
        %v2010 = vadd.f32 0.0, %v2009
        %2011 = vmatmul.bf16.gmra.mxu0 %v1987
        %v2012 = vpop.f32.mrf.mxu0
        %v2013 = vadd.f32 0.0, %v2012
        %v2014 = vpop.f32.mrf.mxu0
        %v2015 = vadd.f32 0.0, %v2014
        %2016 = vmatmul.bf16.gmra.mxu0 %v1990
        %v2017 = vpop.f32.mrf.mxu0
        %v2018 = vadd.f32 0.0, %v2017
        %v2019 = vpop.f32.mrf.mxu0
        %v2020 = vadd.f32 0.0, %v2019
        %2021 = vmatmul.bf16.gmra.mxu0 %v1993
        %v2022 = vpop.f32.mrf.mxu0
        %v2023 = vadd.f32 0.0, %v2022
        %v2024 = vpop.f32.mrf.mxu0
        %v2025 = vadd.f32 0.0, %v2024
        %2026 = vmatmul.bf16.gmra.mxu0 %v1996
        %v2027 = vpop.f32.mrf.mxu0
        %v2028 = vadd.f32 0.0, %v2027
        %v2029 = vpop.f32.mrf.mxu0
        %v2030 = vadd.f32 0.0, %v2029
        %2031 = vdwg.mxu0
        %v2032 = vadd.f32 %v1906, %v2008
        %v2033 = vadd.f32 %v1907, %v2010
        %v2034 = vadd.f32 %v1908, %v2013
        %v2035 = vadd.f32 %v1909, %v2015
        %v2036 = vadd.f32 %v1910, %v2018
        %v2037 = vadd.f32 %v1911, %v2020
        %v2038 = vadd.f32 %v1912, %v2023
        %v2039 = vadd.f32 %v1913, %v2025
        %v2040 = vadd.f32 %v1914, %v2028
        %v2041 = vadd.f32 %v1915, %v2030
        %v2042 = vld [vmem:[#allocation5 + $0x30] sm:$0x7]
        %s2043 = scalar_lea.vmem %s4, 112
        %v2044 = vld [vmem:[%s2043] sm:$0xf]
        %v2045 = vld [vmem:[%s2043 + $0x4] sm:$0xf]
        %v2046 = vld [vmem:[%s2043 + $0x8] sm:$0xf]
        %v2047 = vld [vmem:[%s2043 + $0xc] sm:$0xf]
        %v2049 = vunpack.c.l.b16 %v2042
        %v2050 = vpack.c.b16 %v2049, %v2049
        %vm2051 = vsmask.f32 5376
        %v2053 = vshrl.u32 %v1954, 16
        %v2055 = vrot.slane %v2053, 2
        %v2056 = vshll.u32 %v1954, 16
        %v2058 = vrot.slane %v2056, 3
        %v2059 = vor.u32 %v2055, %v2058
        %v2061 = vshrl.u32 %v1955, 16
        %v2063 = vrot.slane %v2061, 2
        %v2064 = vshll.u32 %v1955, 16
        %v2066 = vrot.slane %v2064, 3
        %v2067 = vor.u32 %v2063, %v2066
        %v2068 = vsel %vm2051, %v2059, %v2067
        %v2070 = vshrl.u32 %v1956, 16
        %v2072 = vrot.slane %v2070, 2
        %v2073 = vshll.u32 %v1956, 16
        %v2075 = vrot.slane %v2073, 3
        %v2076 = vor.u32 %v2072, %v2075
        %v2077 = vsel %vm2051, %v2067, %v2076
        %v2079 = vshrl.u32 %v1957, 16
        %v2081 = vrot.slane %v2079, 2
        %v2082 = vshll.u32 %v1957, 16
        %v2084 = vrot.slane %v2082, 3
        %v2085 = vor.u32 %v2081, %v2084
        %v2086 = vsel %vm2051, %v2076, %v2085
        %v2088 = vshrl.u32 %v1958, 16
        %v2090 = vrot.slane %v2088, 2
        %v2091 = vshll.u32 %v1958, 16
        %v2093 = vrot.slane %v2091, 3
        %v2094 = vor.u32 %v2090, %v2093
        %v2095 = vsel %vm2051, %v2085, %v2094
        %v2097 = vshrl.u32 %v2050, 16
        %v2099 = vrot.slane %v2097, 2
        %v2100 = vshll.u32 %v2050, 16
        %v2102 = vrot.slane %v2100, 3
        %v2103 = vor.u32 %v2099, %v2102
        %v2104 = vsel %vm2051, %v2094, %v2103
        %v2109 = vunpack.c.l.b16 %v2044
        %v2110 = vunpack.c.l.b16 %v2045
        %v2111 = vunpack.c.l.b16 %v2046
        %v2112 = vunpack.c.l.b16 %v2047
        %v2113 = vpack.c.b16 %v2110, %v2109
        %v2114 = vpack.c.b16 %v2112, %v2111
        %v2118 = vsel %vm801, %v2068, 0
        %v2121 = vsel %vm801, %v2077, 0
        %v2124 = vsel %vm801, %v2086, 0
        %v2127 = vsel %vm801, %v2095, 0
        %v2130 = vsel %vm801, %v2104, 0
        %2132 = vmatpush.bf16.msra.mxu0 0
        %2133 = vmatpush.bf16.msra.mxu0 0
        %2134 = vmatpush.bf16.msra.mxu0 0
        %2135 = vmatpush.bf16.msra.mxu0 0
        %2136 = vmatpush.bf16.msra.mxu0 0
        %2137 = vmatpush.bf16.msra.mxu0 0
        %2138 = vmatpush.bf16.msra.mxu0 %v2114
        %2139 = vmatpush.bf16.msra.mxu0 %v2113
        %2140 = vmatmul.bf16.gmra.mxu0 %v2118
        %v2141 = vpop.f32.mrf.mxu0
        %v2142 = vadd.f32 0.0, %v2141
        %v2143 = vpop.f32.mrf.mxu0
        %v2144 = vadd.f32 0.0, %v2143
        %2145 = vmatmul.bf16.gmra.mxu0 %v2121
        %v2146 = vpop.f32.mrf.mxu0
        %v2147 = vadd.f32 0.0, %v2146
        %v2148 = vpop.f32.mrf.mxu0
        %v2149 = vadd.f32 0.0, %v2148
        %2150 = vmatmul.bf16.gmra.mxu0 %v2124
        %v2151 = vpop.f32.mrf.mxu0
        %v2152 = vadd.f32 0.0, %v2151
        %v2153 = vpop.f32.mrf.mxu0
        %v2154 = vadd.f32 0.0, %v2153
        %2155 = vmatmul.bf16.gmra.mxu0 %v2127
        %v2156 = vpop.f32.mrf.mxu0
        %v2157 = vadd.f32 0.0, %v2156
        %v2158 = vpop.f32.mrf.mxu0
        %v2159 = vadd.f32 0.0, %v2158
        %2160 = vmatmul.bf16.gmra.mxu0 %v2130
        %v2161 = vpop.f32.mrf.mxu0
        %v2162 = vadd.f32 0.0, %v2161
        %v2163 = vpop.f32.mrf.mxu0
        %v2164 = vadd.f32 0.0, %v2163
        %2165 = vdwg.mxu0
        %v2166 = vadd.f32 %v2032, %v2142
        %v2167 = vadd.f32 %v2033, %v2144
        %v2168 = vadd.f32 %v2034, %v2147
        %v2169 = vadd.f32 %v2035, %v2149
        %v2170 = vadd.f32 %v2036, %v2152
        %v2171 = vadd.f32 %v2037, %v2154
        %v2172 = vadd.f32 %v2038, %v2157
        %v2173 = vadd.f32 %v2039, %v2159
        %v2174 = vadd.f32 %v2040, %v2162
        %v2175 = vadd.f32 %v2041, %v2164
        %v2176 = vld [vmem:[#allocation5 + $0x8] sm:$0x8]
        %s2177 = scalar_lea.vmem %s4, 128
        %v2178 = vld [vmem:[%s2177] sm:$0xf]
        %v2179 = vld [vmem:[%s2177 + $0x4] sm:$0xf]
        %v2180 = vld [vmem:[%s2177 + $0x8] sm:$0xf]
        %v2181 = vld [vmem:[%s2177 + $0xc] sm:$0xf]
        %v2183 = vunpack.c.l.b16 %v2176
        %v2184 = vpack.c.b16 %v1944, %v2183
        %vm2185 = vcmask 1044480
        %v2186 = vrot.slane %v2184, 3
        %v2187 = vrot.slane %v1955, 3
        %v2188 = vsel %vm2185, %v2186, %v2187
        %v2189 = vrot.slane %v1956, 3
        %v2190 = vsel %vm2185, %v2187, %v2189
        %v2191 = vrot.slane %v1957, 3
        %v2192 = vsel %vm2185, %v2189, %v2191
        %v2193 = vrot.slane %v1958, 3
        %v2194 = vsel %vm2185, %v2191, %v2193
        %v2195 = vrot.slane %v2050, 3
        %v2196 = vsel %vm2185, %v2193, %v2195
        %v2201 = vunpack.c.l.b16 %v2178
        %v2202 = vunpack.c.l.b16 %v2179
        %v2203 = vunpack.c.l.b16 %v2180
        %v2204 = vunpack.c.l.b16 %v2181
        %v2205 = vpack.c.b16 %v2202, %v2201
        %v2206 = vpack.c.b16 %v2204, %v2203
        %v2210 = vsel %vm801, %v2188, 0
        %v2213 = vsel %vm801, %v2190, 0
        %v2216 = vsel %vm801, %v2192, 0
        %v2219 = vsel %vm801, %v2194, 0
        %v2222 = vsel %vm801, %v2196, 0
        %2224 = vmatpush.bf16.msra.mxu0 0
        %2225 = vmatpush.bf16.msra.mxu0 0
        %2226 = vmatpush.bf16.msra.mxu0 0
        %2227 = vmatpush.bf16.msra.mxu0 0
        %2228 = vmatpush.bf16.msra.mxu0 0
        %2229 = vmatpush.bf16.msra.mxu0 0
        %2230 = vmatpush.bf16.msra.mxu0 %v2206
        %2231 = vmatpush.bf16.msra.mxu0 %v2205
        %2232 = vmatmul.bf16.gmra.mxu0 %v2210
        %v2233 = vpop.f32.mrf.mxu0
        %v2234 = vadd.f32 0.0, %v2233
        %v2235 = vpop.f32.mrf.mxu0
        %v2236 = vadd.f32 0.0, %v2235
        %2237 = vmatmul.bf16.gmra.mxu0 %v2213
        %v2238 = vpop.f32.mrf.mxu0
        %v2239 = vadd.f32 0.0, %v2238
        %v2240 = vpop.f32.mrf.mxu0
        %v2241 = vadd.f32 0.0, %v2240
        %2242 = vmatmul.bf16.gmra.mxu0 %v2216
        %v2243 = vpop.f32.mrf.mxu0
        %v2244 = vadd.f32 0.0, %v2243
        %v2245 = vpop.f32.mrf.mxu0
        %v2246 = vadd.f32 0.0, %v2245
        %2247 = vmatmul.bf16.gmra.mxu0 %v2219
        %v2248 = vpop.f32.mrf.mxu0
        %v2249 = vadd.f32 0.0, %v2248
        %v2250 = vpop.f32.mrf.mxu0
        %v2251 = vadd.f32 0.0, %v2250
        %2252 = vmatmul.bf16.gmra.mxu0 %v2222
        %v2253 = vpop.f32.mrf.mxu0
        %v2254 = vadd.f32 0.0, %v2253
        %v2255 = vpop.f32.mrf.mxu0
        %v2256 = vadd.f32 0.0, %v2255
        %2257 = vdwg.mxu0
        %v2258 = vadd.f32 %v2166, %v2234
        %v2259 = vadd.f32 %v2167, %v2236
        %v2260 = vadd.f32 %v2168, %v2239
        %v2261 = vadd.f32 %v2169, %v2241
        %v2262 = vadd.f32 %v2170, %v2244
        %v2263 = vadd.f32 %v2171, %v2246
        %v2264 = vadd.f32 %v2172, %v2249
        %v2265 = vadd.f32 %v2173, %v2251
        %v2266 = vadd.f32 %v2174, %v2254
        %v2267 = vadd.f32 %v2175, %v2256
        %v2268 = vld [vmem:[%s5] sm:$0x1]
        %v2270 = vperm.slane %v2268, 0
        %v2272 = vadd.f32 %v2258, %v2270
        %v2273 = vadd.f32 %v2259, %v2270
        %v2274 = vadd.f32 %v2260, %v2270
        %v2275 = vadd.f32 %v2261, %v2270
        %v2276 = vadd.f32 %v2262, %v2270
        %v2277 = vadd.f32 %v2263, %v2270
        %v2278 = vadd.f32 %v2264, %v2270
        %v2279 = vadd.f32 %v2265, %v2270
        %v2280 = vadd.f32 %v2266, %v2270
        %v2281 = vadd.f32 %v2267, %v2270
        %v2282 = vmax.f32 %v2272, 0.0
        %v2283 = vmax.f32 %v2273, 0.0
        %v2284 = vmax.f32 %v2274, 0.0
        %v2285 = vmax.f32 %v2275, 0.0
        %v2286 = vmax.f32 %v2276, 0.0
        %v2287 = vmax.f32 %v2277, 0.0
        %v2288 = vmax.f32 %v2278, 0.0
        %v2289 = vmax.f32 %v2279, 0.0
        %v2290 = vmax.f32 %v2280, 0.0
        %v2291 = vmax.f32 %v2281, 0.0
        %vm2292 = vcmask 523264
        %2293 = vst.msk [vmem:[#allocation3] sm:$0xff] %vm2292, %v2282
        %2294 = vst.msk [vmem:[#allocation3 + $0x8] sm:$0xff] %vm2292, %v2283
        %2295 = vst.msk [vmem:[#allocation3 + $0x10] sm:$0xff] %vm2292, %v2284
        %2296 = vst.msk [vmem:[#allocation3 + $0x18] sm:$0xff] %vm2292, %v2285
        %2297 = vst.msk [vmem:[#allocation3 + $0x20] sm:$0xff] %vm2292, %v2286
        %2298 = vst.msk [vmem:[#allocation3 + $0x28] sm:$0xff] %vm2292, %v2287
        %2299 = vst.msk [vmem:[#allocation3 + $0x30] sm:$0xff] %vm2292, %v2288
        %2300 = vst.msk [vmem:[#allocation3 + $0x38] sm:$0xff] %vm2292, %v2289
        %2301 = vst.msk [vmem:[#allocation3 + $0x40] sm:$0xff] %vm2292, %v2290
        %2302 = vst.msk [vmem:[#allocation3 + $0x48] sm:$0xff] %vm2292, %v2291
        %v2303 = vld [vmem:[#allocation3] ss:$2 sm:$0xf]
        %s2304 = scalar_lea.vmem [#allocation3], 1
        %v2305 = vld [vmem:[%s2304] ss:$2 sm:$0xf]
        %v2306 = vmax.f32 %v2303, %v2305
        %s2307 = scalar_lea.vmem [#allocation3], 10
        %v2308 = vld [vmem:[%s2307] ss:$2 sm:$0xf]
        %s2309 = scalar_lea.vmem [#allocation3], 11
        %v2310 = vld [vmem:[%s2309] ss:$2 sm:$0xf]
        %v2311 = vmax.f32 %v2308, %v2310
        %v2312 = vmax.f32 %v2306, %v2311
        %v2313 = vpack.c.bf16 %v2312, %v2312
        %v2315 = vshll.u32 %v2313, 16
        %v2317 = vrot.slane %v2315, 5
        %v2318 = vshrl.u32 %v2313, 16
        %v2320 = vrot.slane %v2318, 4
        %v2321 = vor.u32 %v2320, %v2317
        %v2322 = vrot.slane %v2321, 4
        %v2325 = vld [vmem:[#allocation6] sm:$0x8]
        %v2326 = vsel %vm613, %v2317, %v2325
        %2327 = vst [vmem:[#allocation6] sm:$0x8] %v2326
        %vm2328 = vmand %vm607, %vm541
        %v2329 = vld [vmem:[#allocation6 + $0x4] sm:$0x3]
        %v2330 = vsel %vm2328, %v2322, %v2329
        %2331 = vst [vmem:[#allocation6 + $0x4] sm:$0x3] %v2330
        %s2332 = scalar_lea.vmem [#allocation3], 20
        %v2333 = vld [vmem:[%s2332] ss:$2 sm:$0xf]
        %s2334 = scalar_lea.vmem [#allocation3], 21
        %v2335 = vld [vmem:[%s2334] ss:$2 sm:$0xf]
        %v2336 = vmax.f32 %v2333, %v2335
        %s2337 = scalar_lea.vmem [#allocation3], 30
        %v2338 = vld [vmem:[%s2337] ss:$2 sm:$0xf]
        %s2339 = scalar_lea.vmem [#allocation3], 31
        %v2340 = vld [vmem:[%s2339] ss:$2 sm:$0xf]
        %v2341 = vmax.f32 %v2338, %v2340
        %v2342 = vmax.f32 %v2336, %v2341
        %v2343 = vpack.c.bf16 %v2342, %v2342
        %v2345 = vshrl.u32 %v2343, 16
        %v2347 = vrot.slane %v2345, 5
        %v2348 = vshll.u32 %v2343, 16
        %v2350 = vrot.slane %v2348, 6
        %v2351 = vor.u32 %v2347, %v2350
        %v2352 = vrot.slane %v2347, 4
        %v2355 = vld [vmem:[#allocation6 + $0x4] sm:$0xc]
        %v2356 = vsel %vm624, %v2351, %v2355
        %2357 = vst [vmem:[#allocation6 + $0x4] sm:$0xc] %v2356
        %v2358 = vld [vmem:[#allocation6 + $0x8] sm:$0x1]
        %v2359 = vsel %vm618, %v2352, %v2358
        %2360 = vst [vmem:[#allocation6 + $0x8] sm:$0x1] %v2359
        %s2361 = scalar_lea.vmem [#allocation3], 40
        %v2362 = vld [vmem:[%s2361] ss:$2 sm:$0xf]
        %s2363 = scalar_lea.vmem [#allocation3], 41
        %v2364 = vld [vmem:[%s2363] ss:$2 sm:$0xf]
        %v2365 = vmax.f32 %v2362, %v2364
        %s2366 = scalar_lea.vmem [#allocation3], 50
        %v2367 = vld [vmem:[%s2366] ss:$2 sm:$0xf]
        %s2368 = scalar_lea.vmem [#allocation3], 51
        %v2369 = vld [vmem:[%s2368] ss:$2 sm:$0xf]
        %v2370 = vmax.f32 %v2367, %v2369
        %v2371 = vmax.f32 %v2365, %v2370
        %v2372 = vpack.c.bf16 %v2371, %v2371
        %v2374 = vshrl.u32 %v2372, 16
        %v2376 = vrot.slane %v2374, 6
        %v2377 = vshll.u32 %v2372, 16
        %v2379 = vrot.slane %v2377, 7
        %v2380 = vor.u32 %v2376, %v2379
        %vm2382 = vcmask 519169
        %vm2383 = vsmask.f32 3334
        %vm2384 = vmand %vm2382, %vm2383
        %v2385 = vld [vmem:[#allocation6 + $0x8] sm:$0xe]
        %v2386 = vsel %vm2384, %v2380, %v2385
        %2387 = vst [vmem:[#allocation6 + $0x8] sm:$0xe] %v2386
        %s2388 = scalar_lea.vmem [#allocation3], 60
        %v2389 = vld [vmem:[%s2388] ss:$2 sm:$0xf]
        %s2390 = scalar_lea.vmem [#allocation3], 61
        %v2391 = vld [vmem:[%s2390] ss:$2 sm:$0xf]
        %v2392 = vmax.f32 %v2389, %v2391
        %s2393 = scalar_lea.vmem [#allocation3], 70
        %v2394 = vld [vmem:[%s2393] ss:$2 sm:$0xf]
        %s2395 = scalar_lea.vmem [#allocation3], 71
        %v2396 = vld [vmem:[%s2395] ss:$2 sm:$0xf]
        %v2397 = vmax.f32 %v2394, %v2396
        %v2398 = vmax.f32 %v2392, %v2397
        %v2399 = vpack.c.bf16 %v2398, %v2398
        %v2401 = vshrl.u32 %v2399, 16
        %v2403 = vrot.slane %v2401, 7
        %v2404 = vshll.u32 %v2399, 16
        %v2406 = vor.u32 %v2403, %v2404
        %vm2408 = vcmask 518144
        %vm2409 = vsmask.f32 2306
        %vm2410 = vmand %vm2408, %vm2409
        %v2411 = vld [vmem:[#allocation6 + $0xc] sm:$0x7]
        %v2412 = vsel %vm2410, %v2406, %v2411
        %2413 = vst [vmem:[#allocation6 + $0xc] sm:$0x7] %v2412
        %v2414 = vld [vmem:[#allocation6] sm:$0xf]
        %v2415 = vld [vmem:[#allocation6 + $0x4] sm:$0xf]
        %v2416 = vld [vmem:[#allocation6 + $0x8] sm:$0xf]
        %v2417 = vld [vmem:[%s6] sm:$0xf]
        %v2418 = vld [vmem:[%s6 + $0x4] sm:$0xf]
        %v2419 = vld [vmem:[%s6 + $0x8] sm:$0xf]
        %v2420 = vld [vmem:[%s6 + $0xc] sm:$0xf]
        %v2421 = vld [vmem:[%s6 + $0x10] sm:$0xf]
        %v2422 = vld [vmem:[%s6 + $0x14] sm:$0xf]
        %v2423 = vld [vmem:[%s6 + $0x18] sm:$0xf]
        %v2424 = vld [vmem:[%s6 + $0x1c] sm:$0xf]
        %v2425 = vld [vmem:[#allocation6 + $0xc] sm:$0x1]
        %s2426 = scalar_lea.vmem %s6, 32
        %v2427 = vld [vmem:[%s2426] sm:$0xf]
        %v2428 = vld [vmem:[%s2426 + $0x4] sm:$0xf]
        %v2429 = vld [vmem:[%s2426 + $0x8] sm:$0xf]
        %v2430 = vld [vmem:[%s2426 + $0xc] sm:$0xf]
        %v2431 = vld [vmem:[%s2426 + $0x10] sm:$0xf]
        %v2432 = vld [vmem:[%s2426 + $0x14] sm:$0xf]
        %v2433 = vld [vmem:[%s2426 + $0x18] sm:$0xf]
        %v2434 = vld [vmem:[%s2426 + $0x1c] sm:$0xf]
        %v2439 = vunpack.c.l.b16 %v2414
        %v2440 = vunpack.c.l.b16 %v2415
        %v2441 = vunpack.c.l.b16 %v2416
        %v2442 = vunpack.c.l.b16 %v2425
        %v2443 = vpack.c.b16 %v2440, %v2439
        %v2444 = vpack.c.b16 %v2442, %v2441
        %v2446 = vshrl.u32 %v2443, 16
        %v2448 = vshll.u32 %v2443, 16
        %v2450 = vrot.slane %v2448, 1
        %v2451 = vor.u32 %v2446, %v2450
        %v2453 = vshll.u32 %v2444, 16
        %v2455 = vrot.slane %v2453, 1
        %v2456 = vsel %vm1310, %v2451, %v2455
        %v2457 = vshrl.u32 %v2444, 16
        %v2459 = vor.u32 %v2457, %v2455
        %v2468 = vunpack.c.l.b16 %v2427
        %v2469 = vunpack.c.l.b16 %v2428
        %v2470 = vunpack.c.l.b16 %v2429
        %v2471 = vunpack.c.l.b16 %v2430
        %v2472 = vunpack.c.l.b16 %v2431
        %v2473 = vunpack.c.l.b16 %v2432
        %v2474 = vunpack.c.l.b16 %v2433
        %v2475 = vunpack.c.l.b16 %v2434
        %v2476 = vpack.c.b16 %v2469, %v2468
        %v2477 = vpack.c.b16 %v2471, %v2470
        %v2478 = vpack.c.b16 %v2473, %v2472
        %v2479 = vpack.c.b16 %v2475, %v2474
        %v2485 = vsel %vm2292, %v2456, 0
        %v2488 = vsel %vm2292, %v2459, 0
        %2490 = vmatpush.bf16.msra.mxu0 0
        %2491 = vmatpush.bf16.msra.mxu0 0
        %2492 = vmatpush.bf16.msra.mxu0 0
        %2493 = vmatpush.bf16.msra.mxu0 0
        %2494 = vmatpush.bf16.msra.mxu0 %v2479
        %2495 = vmatpush.bf16.msra.mxu0 %v2478
        %2496 = vmatpush.bf16.msra.mxu0 %v2477
        %2497 = vmatpush.bf16.msra.mxu0 %v2476
        %2498 = vmatmul.bf16.gmra.mxu0 %v2485
        %v2499 = vpop.f32.mrf.mxu0
        %v2500 = vadd.f32 0.0, %v2499
        %v2501 = vpop.f32.mrf.mxu0
        %v2502 = vadd.f32 0.0, %v2501
        %2503 = vmatmul.bf16.gmra.mxu0 %v2488
        %v2504 = vpop.f32.mrf.mxu0
        %v2505 = vadd.f32 0.0, %v2504
        %v2506 = vpop.f32.mrf.mxu0
        %2507 = vdwg.mxu0
        %v2508 = vpack.c.b16 %v2441, %v2441
        %v2517 = vunpack.c.l.b16 %v2417
        %v2518 = vunpack.c.l.b16 %v2418
        %v2519 = vunpack.c.l.b16 %v2419
        %v2520 = vunpack.c.l.b16 %v2420
        %v2521 = vunpack.c.l.b16 %v2421
        %v2522 = vunpack.c.l.b16 %v2422
        %v2523 = vunpack.c.l.b16 %v2423
        %v2524 = vunpack.c.l.b16 %v2424
        %v2525 = vpack.c.b16 %v2518, %v2517
        %v2526 = vpack.c.b16 %v2520, %v2519
        %v2527 = vpack.c.b16 %v2522, %v2521
        %v2528 = vpack.c.b16 %v2524, %v2523
        %v2533 = vsel %vm2292, %v2443, 0
        %v2536 = vsel %vm2292, %v2508, 0
        %2538 = vmatpush.bf16.msra.mxu0 0
        %2539 = vmatpush.bf16.msra.mxu0 0
        %2540 = vmatpush.bf16.msra.mxu0 0
        %2541 = vmatpush.bf16.msra.mxu0 0
        %2542 = vmatpush.bf16.msra.mxu0 %v2528
        %2543 = vmatpush.bf16.msra.mxu0 %v2527
        %2544 = vmatpush.bf16.msra.mxu0 %v2526
        %2545 = vmatpush.bf16.msra.mxu0 %v2525
        %2546 = vmatmul.bf16.gmra.mxu0 %v2533
        %v2547 = vpop.f32.mrf.mxu0
        %v2548 = vadd.f32 %v2500, %v2547
        %v2549 = vpop.f32.mrf.mxu0
        %v2550 = vadd.f32 %v2502, %v2549
        %2551 = vmatmul.bf16.gmra.mxu0 %v2536
        %v2552 = vpop.f32.mrf.mxu0
        %v2553 = vadd.f32 %v2505, %v2552
        %v2554 = vpop.f32.mrf.mxu0
        %2555 = vdwg.mxu0
        %v2556 = vld [vmem:[#allocation6] sm:$0xe]
        %s2557 = scalar_lea.vmem %s6, 64
        %v2558 = vld [vmem:[%s2557] sm:$0xf]
        %v2559 = vld [vmem:[%s2557 + $0x4] sm:$0xf]
        %v2560 = vld [vmem:[%s2557 + $0x8] sm:$0xf]
        %v2561 = vld [vmem:[%s2557 + $0xc] sm:$0xf]
        %v2562 = vld [vmem:[%s2557 + $0x10] sm:$0xf]
        %v2563 = vld [vmem:[%s2557 + $0x14] sm:$0xf]
        %v2564 = vld [vmem:[%s2557 + $0x18] sm:$0xf]
        %v2565 = vld [vmem:[%s2557 + $0x1c] sm:$0xf]
        %v2567 = vunpack.c.l.b16 %v2556
        %v2568 = vpack.c.b16 %v2440, %v2567
        %v2569 = vrot.slane %v2568, 1
        %v2570 = vrot.slane %v2444, 1
        %v2571 = vsel %vm1481, %v2569, %v2570
        %v2580 = vunpack.c.l.b16 %v2558
        %v2581 = vunpack.c.l.b16 %v2559
        %v2582 = vunpack.c.l.b16 %v2560
        %v2583 = vunpack.c.l.b16 %v2561
        %v2584 = vunpack.c.l.b16 %v2562
        %v2585 = vunpack.c.l.b16 %v2563
        %v2586 = vunpack.c.l.b16 %v2564
        %v2587 = vunpack.c.l.b16 %v2565
        %v2588 = vpack.c.b16 %v2581, %v2580
        %v2589 = vpack.c.b16 %v2583, %v2582
        %v2590 = vpack.c.b16 %v2585, %v2584
        %v2591 = vpack.c.b16 %v2587, %v2586
        %v2597 = vsel %vm2292, %v2571, 0
        %v2600 = vsel %vm2292, %v2570, 0
        %2602 = vmatpush.bf16.msra.mxu0 0
        %2603 = vmatpush.bf16.msra.mxu0 0
        %2604 = vmatpush.bf16.msra.mxu0 0
        %2605 = vmatpush.bf16.msra.mxu0 0
        %2606 = vmatpush.bf16.msra.mxu0 %v2591
        %2607 = vmatpush.bf16.msra.mxu0 %v2590
        %2608 = vmatpush.bf16.msra.mxu0 %v2589
        %2609 = vmatpush.bf16.msra.mxu0 %v2588
        %2610 = vmatmul.bf16.gmra.mxu0 %v2597
        %v2611 = vpop.f32.mrf.mxu0
        %v2612 = vadd.f32 0.0, %v2611
        %v2613 = vpop.f32.mrf.mxu0
        %v2614 = vadd.f32 0.0, %v2613
        %2615 = vmatmul.bf16.gmra.mxu0 %v2600
        %v2616 = vpop.f32.mrf.mxu0
        %v2617 = vadd.f32 0.0, %v2616
        %v2618 = vpop.f32.mrf.mxu0
        %2619 = vdwg.mxu0
        %v2620 = vadd.f32 %v2548, %v2612
        %v2621 = vadd.f32 %v2550, %v2614
        %v2622 = vadd.f32 %v2553, %v2617
        %v2623 = vld [vmem:[#allocation6] sm:$0x8]
        %v2624 = vld [vmem:[#allocation6 + $0xc] sm:$0x7]
        %s2625 = scalar_lea.vmem %s6, 96
        %v2626 = vld [vmem:[%s2625] sm:$0xf]
        %v2627 = vld [vmem:[%s2625 + $0x4] sm:$0xf]
        %v2628 = vld [vmem:[%s2625 + $0x8] sm:$0xf]
        %v2629 = vld [vmem:[%s2625 + $0xc] sm:$0xf]
        %v2630 = vld [vmem:[%s2625 + $0x10] sm:$0xf]
        %v2631 = vld [vmem:[%s2625 + $0x14] sm:$0xf]
        %v2632 = vld [vmem:[%s2625 + $0x18] sm:$0xf]
        %v2633 = vld [vmem:[%s2625 + $0x1c] sm:$0xf]
        %v2636 = vunpack.c.l.b16 %v2623
        %v2637 = vunpack.c.l.b16 %v2624
        %v2638 = vpack.c.b16 %v2440, %v2636
        %v2639 = vpack.c.b16 %v2637, %v2441
        %v2640 = vrot.slane %v2638, 3
        %v2641 = vrot.slane %v2639, 3
        %v2642 = vsel %vm2185, %v2640, %v2641
        %v2651 = vunpack.c.l.b16 %v2626
        %v2652 = vunpack.c.l.b16 %v2627
        %v2653 = vunpack.c.l.b16 %v2628
        %v2654 = vunpack.c.l.b16 %v2629
        %v2655 = vunpack.c.l.b16 %v2630
        %v2656 = vunpack.c.l.b16 %v2631
        %v2657 = vunpack.c.l.b16 %v2632
        %v2658 = vunpack.c.l.b16 %v2633
        %v2659 = vpack.c.b16 %v2652, %v2651
        %v2660 = vpack.c.b16 %v2654, %v2653
        %v2661 = vpack.c.b16 %v2656, %v2655
        %v2662 = vpack.c.b16 %v2658, %v2657
        %v2668 = vsel %vm2292, %v2642, 0
        %v2671 = vsel %vm2292, %v2641, 0
        %2673 = vmatpush.bf16.msra.mxu0 0
        %2674 = vmatpush.bf16.msra.mxu0 0
        %2675 = vmatpush.bf16.msra.mxu0 0
        %2676 = vmatpush.bf16.msra.mxu0 0
        %2677 = vmatpush.bf16.msra.mxu0 %v2662
        %2678 = vmatpush.bf16.msra.mxu0 %v2661
        %2679 = vmatpush.bf16.msra.mxu0 %v2660
        %2680 = vmatpush.bf16.msra.mxu0 %v2659
        %2681 = vmatmul.bf16.gmra.mxu0 %v2668
        %v2682 = vpop.f32.mrf.mxu0
        %v2683 = vadd.f32 0.0, %v2682
        %v2684 = vpop.f32.mrf.mxu0
        %v2685 = vadd.f32 0.0, %v2684
        %2686 = vmatmul.bf16.gmra.mxu0 %v2671
        %v2687 = vpop.f32.mrf.mxu0
        %v2688 = vadd.f32 0.0, %v2687
        %v2689 = vpop.f32.mrf.mxu0
        %2690 = vdwg.mxu0
        %v2691 = vadd.f32 %v2620, %v2683
        %v2692 = vadd.f32 %v2621, %v2685
        %v2693 = vadd.f32 %v2622, %v2688
        %v2694 = vld [vmem:[#allocation6 + $0xc] sm:$0xf]
        %s2695 = scalar_lea.vmem %s6, 128
        %v2696 = vld [vmem:[%s2695] sm:$0xf]
        %v2697 = vld [vmem:[%s2695 + $0x4] sm:$0xf]
        %v2698 = vld [vmem:[%s2695 + $0x8] sm:$0xf]
        %v2699 = vld [vmem:[%s2695 + $0xc] sm:$0xf]
        %v2700 = vld [vmem:[%s2695 + $0x10] sm:$0xf]
        %v2701 = vld [vmem:[%s2695 + $0x14] sm:$0xf]
        %v2702 = vld [vmem:[%s2695 + $0x18] sm:$0xf]
        %v2703 = vld [vmem:[%s2695 + $0x1c] sm:$0xf]
        %v2705 = vunpack.c.l.b16 %v2694
        %v2706 = vpack.c.b16 %v2705, %v2441
        %vm2707 = vsmask.f32 4352
        %v2709 = vshrl.u32 %v2638, 16
        %v2711 = vrot.slane %v2709, 3
        %v2712 = vshll.u32 %v2638, 16
        %v2714 = vrot.slane %v2712, 4
        %v2715 = vor.u32 %v2711, %v2714
        %v2717 = vshrl.u32 %v2706, 16
        %v2719 = vrot.slane %v2717, 3
        %v2720 = vshll.u32 %v2706, 16
        %v2722 = vrot.slane %v2720, 4
        %v2723 = vor.u32 %v2719, %v2722
        %v2724 = vsel %vm2707, %v2715, %v2723
        %v2733 = vunpack.c.l.b16 %v2696
        %v2734 = vunpack.c.l.b16 %v2697
        %v2735 = vunpack.c.l.b16 %v2698
        %v2736 = vunpack.c.l.b16 %v2699
        %v2737 = vunpack.c.l.b16 %v2700
        %v2738 = vunpack.c.l.b16 %v2701
        %v2739 = vunpack.c.l.b16 %v2702
        %v2740 = vunpack.c.l.b16 %v2703
        %v2741 = vpack.c.b16 %v2734, %v2733
        %v2742 = vpack.c.b16 %v2736, %v2735
        %v2743 = vpack.c.b16 %v2738, %v2737
        %v2744 = vpack.c.b16 %v2740, %v2739
        %v2750 = vsel %vm2292, %v2724, 0
        %v2753 = vsel %vm2292, %v2723, 0
        %2755 = vmatpush.bf16.msra.mxu0 0
        %2756 = vmatpush.bf16.msra.mxu0 0
        %2757 = vmatpush.bf16.msra.mxu0 0
        %2758 = vmatpush.bf16.msra.mxu0 0
        %2759 = vmatpush.bf16.msra.mxu0 %v2744
        %2760 = vmatpush.bf16.msra.mxu0 %v2743
        %2761 = vmatpush.bf16.msra.mxu0 %v2742
        %2762 = vmatpush.bf16.msra.mxu0 %v2741
        %2763 = vmatmul.bf16.gmra.mxu0 %v2750
        %v2764 = vpop.f32.mrf.mxu0
        %v2765 = vadd.f32 0.0, %v2764
        %v2766 = vpop.f32.mrf.mxu0
        %v2767 = vadd.f32 0.0, %v2766
        %2768 = vmatmul.bf16.gmra.mxu0 %v2753
        %v2769 = vpop.f32.mrf.mxu0
        %v2770 = vadd.f32 0.0, %v2769
        %v2771 = vpop.f32.mrf.mxu0
        %2772 = vdwg.mxu0
        %v2773 = vadd.f32 %v2691, %v2765
        %v2774 = vadd.f32 %v2692, %v2767
        %v2775 = vadd.f32 %v2693, %v2770
        %s2776 = scalar_lea.vmem %s6, 160
        %v2777 = vld [vmem:[%s2776] sm:$0xf]
        %v2778 = vld [vmem:[%s2776 + $0x4] sm:$0xf]
        %v2779 = vld [vmem:[%s2776 + $0x8] sm:$0xf]
        %v2780 = vld [vmem:[%s2776 + $0xc] sm:$0xf]
        %v2781 = vld [vmem:[%s2776 + $0x10] sm:$0xf]
        %v2782 = vld [vmem:[%s2776 + $0x14] sm:$0xf]
        %v2783 = vld [vmem:[%s2776 + $0x18] sm:$0xf]
        %v2784 = vld [vmem:[%s2776 + $0x1c] sm:$0xf]
        %v2785 = vpack.c.b16 %v2441, %v2440
        %v2786 = vpack.c.b16 %v2705, %v2705
        %v2795 = vunpack.c.l.b16 %v2777
        %v2796 = vunpack.c.l.b16 %v2778
        %v2797 = vunpack.c.l.b16 %v2779
        %v2798 = vunpack.c.l.b16 %v2780
        %v2799 = vunpack.c.l.b16 %v2781
        %v2800 = vunpack.c.l.b16 %v2782
        %v2801 = vunpack.c.l.b16 %v2783
        %v2802 = vunpack.c.l.b16 %v2784
        %v2803 = vpack.c.b16 %v2796, %v2795
        %v2804 = vpack.c.b16 %v2798, %v2797
        %v2805 = vpack.c.b16 %v2800, %v2799
        %v2806 = vpack.c.b16 %v2802, %v2801
        %v2812 = vsel %vm2292, %v2785, 0
        %v2815 = vsel %vm2292, %v2786, 0
        %2817 = vmatpush.bf16.msra.mxu0 0
        %2818 = vmatpush.bf16.msra.mxu0 0
        %2819 = vmatpush.bf16.msra.mxu0 0
        %2820 = vmatpush.bf16.msra.mxu0 0
        %2821 = vmatpush.bf16.msra.mxu0 %v2806
        %2822 = vmatpush.bf16.msra.mxu0 %v2805
        %2823 = vmatpush.bf16.msra.mxu0 %v2804
        %2824 = vmatpush.bf16.msra.mxu0 %v2803
        %2825 = vmatmul.bf16.gmra.mxu0 %v2812
        %v2826 = vpop.f32.mrf.mxu0
        %v2827 = vadd.f32 0.0, %v2826
        %v2828 = vpop.f32.mrf.mxu0
        %v2829 = vadd.f32 0.0, %v2828
        %2830 = vmatmul.bf16.gmra.mxu0 %v2815
        %v2831 = vpop.f32.mrf.mxu0
        %v2832 = vadd.f32 0.0, %v2831
        %v2833 = vpop.f32.mrf.mxu0
        %2834 = vdwg.mxu0
        %v2835 = vadd.f32 %v2773, %v2827
        %v2836 = vadd.f32 %v2774, %v2829
        %v2837 = vadd.f32 %v2775, %v2832
        %v2838 = vld [vmem:[#allocation6 + $0x4] sm:$0xc]
        %v2839 = vld [vmem:[#allocation6 + $0x8] sm:$0xf]
        %v2840 = vld [vmem:[#allocation6 + $0xc] sm:$0xf]
        %v2841 = vld [vmem:[#allocation6 + $0x10] sm:$0x3]
        %s2842 = scalar_lea.vmem %s6, 192
        %v2843 = vld [vmem:[%s2842] sm:$0xf]
        %v2844 = vld [vmem:[%s2842 + $0x4] sm:$0xf]
        %v2845 = vld [vmem:[%s2842 + $0x8] sm:$0xf]
        %v2846 = vld [vmem:[%s2842 + $0xc] sm:$0xf]
        %v2847 = vld [vmem:[%s2842 + $0x10] sm:$0xf]
        %v2848 = vld [vmem:[%s2842 + $0x14] sm:$0xf]
        %v2849 = vld [vmem:[%s2842 + $0x18] sm:$0xf]
        %v2850 = vld [vmem:[%s2842 + $0x1c] sm:$0xf]
        %v2855 = vunpack.c.l.b16 %v2838
        %v2856 = vunpack.c.l.b16 %v2839
        %v2857 = vunpack.c.l.b16 %v2840
        %v2858 = vunpack.c.l.b16 %v2841
        %v2859 = vpack.c.b16 %v2856, %v2855
        %v2860 = vpack.c.b16 %v2858, %v2857
        %v2861 = vrot.slane %v2859, 2
        %v2862 = vrot.slane %v2860, 2
        %v2863 = vsel %vm1833, %v2861, %v2862
        %v2872 = vunpack.c.l.b16 %v2843
        %v2873 = vunpack.c.l.b16 %v2844
        %v2874 = vunpack.c.l.b16 %v2845
        %v2875 = vunpack.c.l.b16 %v2846
        %v2876 = vunpack.c.l.b16 %v2847
        %v2877 = vunpack.c.l.b16 %v2848
        %v2878 = vunpack.c.l.b16 %v2849
        %v2879 = vunpack.c.l.b16 %v2850
        %v2880 = vpack.c.b16 %v2873, %v2872
        %v2881 = vpack.c.b16 %v2875, %v2874
        %v2882 = vpack.c.b16 %v2877, %v2876
        %v2883 = vpack.c.b16 %v2879, %v2878
        %v2889 = vsel %vm2292, %v2863, 0
        %v2892 = vsel %vm2292, %v2862, 0
        %2894 = vmatpush.bf16.msra.mxu0 0
        %2895 = vmatpush.bf16.msra.mxu0 0
        %2896 = vmatpush.bf16.msra.mxu0 0
        %2897 = vmatpush.bf16.msra.mxu0 0
        %2898 = vmatpush.bf16.msra.mxu0 %v2883
        %2899 = vmatpush.bf16.msra.mxu0 %v2882
        %2900 = vmatpush.bf16.msra.mxu0 %v2881
        %2901 = vmatpush.bf16.msra.mxu0 %v2880
        %2902 = vmatmul.bf16.gmra.mxu0 %v2889
        %v2903 = vpop.f32.mrf.mxu0
        %v2904 = vadd.f32 0.0, %v2903
        %v2905 = vpop.f32.mrf.mxu0
        %v2906 = vadd.f32 0.0, %v2905
        %2907 = vmatmul.bf16.gmra.mxu0 %v2892
        %v2908 = vpop.f32.mrf.mxu0
        %v2909 = vadd.f32 0.0, %v2908
        %v2910 = vpop.f32.mrf.mxu0
        %2911 = vdwg.mxu0
        %v2912 = vadd.f32 %v2835, %v2904
        %v2913 = vadd.f32 %v2836, %v2906
        %v2914 = vadd.f32 %v2837, %v2909
        %v2915 = vld [vmem:[#allocation6 + $0x10] sm:$0x7]
        %s2916 = scalar_lea.vmem %s6, 224
        %v2917 = vld [vmem:[%s2916] sm:$0xf]
        %v2918 = vld [vmem:[%s2916 + $0x4] sm:$0xf]
        %v2919 = vld [vmem:[%s2916 + $0x8] sm:$0xf]
        %v2920 = vld [vmem:[%s2916 + $0xc] sm:$0xf]
        %v2921 = vld [vmem:[%s2916 + $0x10] sm:$0xf]
        %v2922 = vld [vmem:[%s2916 + $0x14] sm:$0xf]
        %v2923 = vld [vmem:[%s2916 + $0x18] sm:$0xf]
        %v2924 = vld [vmem:[%s2916 + $0x1c] sm:$0xf]
        %v2926 = vunpack.c.l.b16 %v2915
        %v2927 = vpack.c.b16 %v2926, %v2857
        %v2929 = vshrl.u32 %v2859, 16
        %v2931 = vrot.slane %v2929, 2
        %v2932 = vshll.u32 %v2859, 16
        %v2934 = vrot.slane %v2932, 3
        %v2935 = vor.u32 %v2931, %v2934
        %v2937 = vshrl.u32 %v2927, 16
        %v2939 = vrot.slane %v2937, 2
        %v2940 = vshll.u32 %v2927, 16
        %v2942 = vrot.slane %v2940, 3
        %v2943 = vor.u32 %v2939, %v2942
        %v2944 = vsel %vm2051, %v2935, %v2943
        %v2953 = vunpack.c.l.b16 %v2917
        %v2954 = vunpack.c.l.b16 %v2918
        %v2955 = vunpack.c.l.b16 %v2919
        %v2956 = vunpack.c.l.b16 %v2920
        %v2957 = vunpack.c.l.b16 %v2921
        %v2958 = vunpack.c.l.b16 %v2922
        %v2959 = vunpack.c.l.b16 %v2923
        %v2960 = vunpack.c.l.b16 %v2924
        %v2961 = vpack.c.b16 %v2954, %v2953
        %v2962 = vpack.c.b16 %v2956, %v2955
        %v2963 = vpack.c.b16 %v2958, %v2957
        %v2964 = vpack.c.b16 %v2960, %v2959
        %v2970 = vsel %vm2292, %v2944, 0
        %v2973 = vsel %vm2292, %v2943, 0
        %2975 = vmatpush.bf16.msra.mxu0 0
        %2976 = vmatpush.bf16.msra.mxu0 0
        %2977 = vmatpush.bf16.msra.mxu0 0
        %2978 = vmatpush.bf16.msra.mxu0 0
        %2979 = vmatpush.bf16.msra.mxu0 %v2964
        %2980 = vmatpush.bf16.msra.mxu0 %v2963
        %2981 = vmatpush.bf16.msra.mxu0 %v2962
        %2982 = vmatpush.bf16.msra.mxu0 %v2961
        %2983 = vmatmul.bf16.gmra.mxu0 %v2970
        %v2984 = vpop.f32.mrf.mxu0
        %v2985 = vadd.f32 0.0, %v2984
        %v2986 = vpop.f32.mrf.mxu0
        %v2987 = vadd.f32 0.0, %v2986
        %2988 = vmatmul.bf16.gmra.mxu0 %v2973
        %v2989 = vpop.f32.mrf.mxu0
        %v2990 = vadd.f32 0.0, %v2989
        %v2991 = vpop.f32.mrf.mxu0
        %2992 = vdwg.mxu0
        %v2993 = vadd.f32 %v2912, %v2985
        %v2994 = vadd.f32 %v2913, %v2987
        %v2995 = vadd.f32 %v2914, %v2990
        %v2996 = vld [vmem:[#allocation6 + $0x4] sm:$0x8]
        %s2997 = scalar_lea.vmem %s6, 256
        %v2998 = vld [vmem:[%s2997] sm:$0xf]
        %v2999 = vld [vmem:[%s2997 + $0x4] sm:$0xf]
        %v3000 = vld [vmem:[%s2997 + $0x8] sm:$0xf]
        %v3001 = vld [vmem:[%s2997 + $0xc] sm:$0xf]
        %v3002 = vld [vmem:[%s2997 + $0x10] sm:$0xf]
        %v3003 = vld [vmem:[%s2997 + $0x14] sm:$0xf]
        %v3004 = vld [vmem:[%s2997 + $0x18] sm:$0xf]
        %v3005 = vld [vmem:[%s2997 + $0x1c] sm:$0xf]
        %v3007 = vunpack.c.l.b16 %v2996
        %v3008 = vpack.c.b16 %v2856, %v3007
        %v3009 = vrot.slane %v3008, 3
        %v3010 = vrot.slane %v2927, 3
        %v3011 = vsel %vm2185, %v3009, %v3010
        %v3020 = vunpack.c.l.b16 %v2998
        %v3021 = vunpack.c.l.b16 %v2999
        %v3022 = vunpack.c.l.b16 %v3000
        %v3023 = vunpack.c.l.b16 %v3001
        %v3024 = vunpack.c.l.b16 %v3002
        %v3025 = vunpack.c.l.b16 %v3003
        %v3026 = vunpack.c.l.b16 %v3004
        %v3027 = vunpack.c.l.b16 %v3005
        %v3028 = vpack.c.b16 %v3021, %v3020
        %v3029 = vpack.c.b16 %v3023, %v3022
        %v3030 = vpack.c.b16 %v3025, %v3024
        %v3031 = vpack.c.b16 %v3027, %v3026
        %v3037 = vsel %vm2292, %v3011, 0
        %v3040 = vsel %vm2292, %v3010, 0
        %3042 = vmatpush.bf16.msra.mxu0 0
        %3043 = vmatpush.bf16.msra.mxu0 0
        %3044 = vmatpush.bf16.msra.mxu0 0
        %3045 = vmatpush.bf16.msra.mxu0 0
        %3046 = vmatpush.bf16.msra.mxu0 %v3031
        %3047 = vmatpush.bf16.msra.mxu0 %v3030
        %3048 = vmatpush.bf16.msra.mxu0 %v3029
        %3049 = vmatpush.bf16.msra.mxu0 %v3028
        %3050 = vmatmul.bf16.gmra.mxu0 %v3037
        %v3051 = vpop.f32.mrf.mxu0
        %v3052 = vadd.f32 0.0, %v3051
        %v3053 = vpop.f32.mrf.mxu0
        %v3054 = vadd.f32 0.0, %v3053
        %3055 = vmatmul.bf16.gmra.mxu0 %v3040
        %v3056 = vpop.f32.mrf.mxu0
        %v3057 = vadd.f32 0.0, %v3056
        %v3058 = vpop.f32.mrf.mxu0
        %3059 = vdwg.mxu0
        %v3060 = vadd.f32 %v2993, %v3052
        %v3061 = vadd.f32 %v2994, %v3054
        %v3062 = vadd.f32 %v2995, %v3057
        %v3063 = vld [vmem:[%s7] sm:$0x1]
        %v3065 = vperm.slane %v3063, 0
        %v3067 = vadd.f32 %v3060, %v3065
        %v3068 = vadd.f32 %v3061, %v3065
        %v3069 = vadd.f32 %v3062, %v3065
        %v3070 = vmax.f32 %v3067, 0.0
        %v3071 = vmax.f32 %v3068, 0.0
        %v3072 = vmax.f32 %v3069, 0.0
        %3073 = vst [vmem:[#allocation4] sm:$0xff] %v3070
        %3074 = vst [vmem:[#allocation4 + $0x8] sm:$0xff] %v3071
        %3075 = vst [vmem:[#allocation4 + $0x10] sm:$0xff] %v3072
        %v3076 = vld [vmem:[#allocation4] ss:$2 sm:$0x3]
        %s3077 = scalar_lea.vmem [#allocation4], 1
        %v3078 = vld [vmem:[%s3077] ss:$2 sm:$0x3]
        %v3079 = vmax.f32 %v3076, %v3078
        %s3080 = scalar_lea.vmem [#allocation4], 6
        %v3081 = vld [vmem:[%s3080] ss:$2 sm:$0x3]
        %s3082 = scalar_lea.vmem [#allocation4], 7
        %v3083 = vld [vmem:[%s3082] ss:$2 sm:$0x3]
        %v3084 = vmax.f32 %v3081, %v3083
        %v3085 = vmax.f32 %v3079, %v3084
        %v3086 = vpack.c.bf16 %v3085, %v3085
        %v3088 = vshrl.u32 %v3086, 16
        %v3090 = vrot.slane %v3088, 5
        %v3091 = vshll.u32 %v3086, 16
        %v3093 = vrot.slane %v3091, 6
        %v3094 = vor.u32 %v3090, %v3093
        %vm3096 = vcmask 1043458
        %vm3097 = vmand %vm3096, %vm553
        %v3098 = vld [vmem:[#allocation7] sm:$0xc]
        %v3099 = vsel %vm3097, %v3094, %v3098
        %3100 = vst [vmem:[#allocation7] sm:$0xc] %v3099
        %s3101 = scalar_lea.vmem [#allocation4], 12
        %v3102 = vld [vmem:[%s3101] ss:$2 sm:$0x3]
        %s3103 = scalar_lea.vmem [#allocation4], 13
        %v3104 = vld [vmem:[%s3103] ss:$2 sm:$0x3]
        %v3105 = vmax.f32 %v3102, %v3104
        %s3106 = scalar_lea.vmem [#allocation4], 18
        %v3107 = vld [vmem:[%s3106] ss:$2 sm:$0x3]
        %s3108 = scalar_lea.vmem [#allocation4], 19
        %v3109 = vld [vmem:[%s3108] ss:$2 sm:$0x3]
        %v3110 = vmax.f32 %v3107, %v3109
        %v3111 = vmax.f32 %v3105, %v3110
        %v3112 = vpack.c.bf16 %v3111, %v3111
        %v3114 = vshrl.u32 %v3112, 16
        %v3116 = vrot.slane %v3114, 7
        %v3117 = vshll.u32 %v3112, 16
        %v3119 = vor.u32 %v3116, %v3117
        %vm3121 = vcmask 1041408
        %vm3122 = vmand %vm3121, %vm570
        %v3123 = vld [vmem:[#allocation7 + $0x4] sm:$0x3]
        %v3124 = vsel %vm3122, %v3119, %v3123
        %3125 = vst [vmem:[#allocation7 + $0x4] sm:$0x3] %v3124
        %v3126 = vld [vmem:[#allocation7] sm:$0xf]
        %v3127 = vld [vmem:[%s8] sm:$0xff]
        %v3128 = vld [vmem:[%s8 + $0x8] sm:$0xff]
        %v3129 = vld [vmem:[%s8 + $0x10] sm:$0xff]
        %v3130 = vld [vmem:[%s8 + $0x18] sm:$0xff]
        %v3131 = vld [vmem:[%s8 + $0x20] sm:$0xff]
        %v3132 = vld [vmem:[%s8 + $0x28] sm:$0xff]
        %v3133 = vld [vmem:[%s8 + $0x30] sm:$0xff]
        %v3134 = vld [vmem:[%s8 + $0x38] sm:$0xff]
        %v3135 = vld [vmem:[%s8 + $0x40] sm:$0xff]
        %v3136 = vld [vmem:[%s8 + $0x48] sm:$0xff]
        %v3137 = vld [vmem:[%s8 + $0x50] sm:$0xff]
        %v3138 = vld [vmem:[%s8 + $0x58] sm:$0xff]
        %v3139 = vld [vmem:[%s8 + $0x60] sm:$0xff]
        %v3140 = vld [vmem:[%s8 + $0x68] sm:$0xff]
        %v3141 = vld [vmem:[%s8 + $0x70] sm:$0xff]
        %v3142 = vld [vmem:[%s8 + $0x78] sm:$0xff]
        %v3143 = vld [vmem:[#allocation7 + $0x4] sm:$0x1]
        %s3144 = scalar_lea.vmem %s8, 128
        %v3145 = vld [vmem:[%s3144] sm:$0xff]
        %v3146 = vld [vmem:[%s3144 + $0x8] sm:$0xff]
        %v3147 = vld [vmem:[%s3144 + $0x10] sm:$0xff]
        %v3148 = vld [vmem:[%s3144 + $0x18] sm:$0xff]
        %v3149 = vld [vmem:[%s3144 + $0x20] sm:$0xff]
        %v3150 = vld [vmem:[%s3144 + $0x28] sm:$0xff]
        %v3151 = vld [vmem:[%s3144 + $0x30] sm:$0xff]
        %v3152 = vld [vmem:[%s3144 + $0x38] sm:$0xff]
        %v3153 = vld [vmem:[%s3144 + $0x40] sm:$0xff]
        %v3154 = vld [vmem:[%s3144 + $0x48] sm:$0xff]
        %v3155 = vld [vmem:[%s3144 + $0x50] sm:$0xff]
        %v3156 = vld [vmem:[%s3144 + $0x58] sm:$0xff]
        %v3157 = vld [vmem:[%s3144 + $0x60] sm:$0xff]
        %v3158 = vld [vmem:[%s3144 + $0x68] sm:$0xff]
        %v3159 = vld [vmem:[%s3144 + $0x70] sm:$0xff]
        %v3160 = vld [vmem:[%s3144 + $0x78] sm:$0xff]
        %v3163 = vunpack.c.l.b16 %v3126
        %v3164 = vunpack.c.l.b16 %v3143
        %v3165 = vpack.c.b16 %v3164, %v3163
        %v3167 = vshrl.u32 %v3165, 16
        %v3169 = vshll.u32 %v3165, 16
        %v3171 = vrot.slane %v3169, 1
        %v3172 = vor.u32 %v3167, %v3171
        %v3190 = vunpack.c.l.b16 %v3145
        %v3191 = vunpack.c.h.b16 %v3145
        %v3192 = vunpack.c.l.b16 %v3146
        %v3193 = vunpack.c.h.b16 %v3146
        %v3194 = vunpack.c.l.b16 %v3147
        %v3195 = vunpack.c.h.b16 %v3147
        %v3196 = vunpack.c.l.b16 %v3148
        %v3197 = vunpack.c.h.b16 %v3148
        %v3198 = vunpack.c.l.b16 %v3149
        %v3199 = vunpack.c.h.b16 %v3149
        %v3200 = vunpack.c.l.b16 %v3150
        %v3201 = vunpack.c.h.b16 %v3150
        %v3202 = vunpack.c.l.b16 %v3151
        %v3203 = vunpack.c.h.b16 %v3151
        %v3204 = vunpack.c.l.b16 %v3152
        %v3205 = vunpack.c.h.b16 %v3152
        %v3206 = vunpack.c.l.b16 %v3153
        %v3207 = vunpack.c.h.b16 %v3153
        %v3208 = vunpack.c.l.b16 %v3154
        %v3209 = vunpack.c.h.b16 %v3154
        %v3210 = vunpack.c.l.b16 %v3155
        %v3211 = vunpack.c.h.b16 %v3155
        %v3212 = vunpack.c.l.b16 %v3156
        %v3213 = vunpack.c.h.b16 %v3156
        %v3214 = vunpack.c.l.b16 %v3157
        %v3215 = vunpack.c.h.b16 %v3157
        %v3216 = vunpack.c.l.b16 %v3158
        %v3217 = vunpack.c.h.b16 %v3158
        %v3218 = vunpack.c.l.b16 %v3159
        %v3219 = vunpack.c.h.b16 %v3159
        %v3220 = vunpack.c.l.b16 %v3160
        %v3221 = vunpack.c.h.b16 %v3160
        %v3222 = vpack.c.b16 %v3192, %v3190
        %v3223 = vpack.c.b16 %v3193, %v3191
        %v3224 = vpack.c.b16 %v3196, %v3194
        %v3225 = vpack.c.b16 %v3197, %v3195
        %v3226 = vpack.c.b16 %v3200, %v3198
        %v3227 = vpack.c.b16 %v3201, %v3199
        %v3228 = vpack.c.b16 %v3204, %v3202
        %v3229 = vpack.c.b16 %v3205, %v3203
        %v3230 = vpack.c.b16 %v3208, %v3206
        %v3231 = vpack.c.b16 %v3209, %v3207
        %v3232 = vpack.c.b16 %v3212, %v3210
        %v3233 = vpack.c.b16 %v3213, %v3211
        %v3234 = vpack.c.b16 %v3216, %v3214
        %v3235 = vpack.c.b16 %v3217, %v3215
        %v3236 = vpack.c.b16 %v3220, %v3218
        %v3237 = vpack.c.b16 %v3221, %v3219
        %3254 = vmatpush.bf16.msra.mxu0 %v3236
        %3255 = vmatpush.bf16.msra.mxu0 %v3234
        %3256 = vmatpush.bf16.msra.mxu0 %v3232
        %3257 = vmatpush.bf16.msra.mxu0 %v3230
        %3258 = vmatpush.bf16.msra.mxu0 %v3228
        %3259 = vmatpush.bf16.msra.mxu0 %v3226
        %3260 = vmatpush.bf16.msra.mxu0 %v3224
        %3261 = vmatpush.bf16.msra.mxu0 %v3222
        %3262 = vmatmul.bf16.gmra.mxu0 %v3172
        %v3263 = vpop.f32.mrf.mxu0
        %v3264 = vadd.f32 0.0, %v3263
        %v3265 = vpop.f32.mrf.mxu0
        %3266 = vdwg.mxu0
        %3267 = vmatpush.bf16.msra.mxu0 %v3237
        %3268 = vmatpush.bf16.msra.mxu0 %v3235
        %3269 = vmatpush.bf16.msra.mxu0 %v3233
        %3270 = vmatpush.bf16.msra.mxu0 %v3231
        %3271 = vmatpush.bf16.msra.mxu0 %v3229
        %3272 = vmatpush.bf16.msra.mxu0 %v3227
        %3273 = vmatpush.bf16.msra.mxu0 %v3225
        %3274 = vmatpush.bf16.msra.mxu0 %v3223
        %3275 = vmatmul.bf16.gmra.mxu0 %v3172
        %v3276 = vpop.f32.mrf.mxu0
        %v3277 = vadd.f32 0.0, %v3276
        %v3278 = vpop.f32.mrf.mxu0
        %3279 = vdwg.mxu0
        %v3296 = vunpack.c.l.b16 %v3127
        %v3297 = vunpack.c.h.b16 %v3127
        %v3298 = vunpack.c.l.b16 %v3128
        %v3299 = vunpack.c.h.b16 %v3128
        %v3300 = vunpack.c.l.b16 %v3129
        %v3301 = vunpack.c.h.b16 %v3129
        %v3302 = vunpack.c.l.b16 %v3130
        %v3303 = vunpack.c.h.b16 %v3130
        %v3304 = vunpack.c.l.b16 %v3131
        %v3305 = vunpack.c.h.b16 %v3131
        %v3306 = vunpack.c.l.b16 %v3132
        %v3307 = vunpack.c.h.b16 %v3132
        %v3308 = vunpack.c.l.b16 %v3133
        %v3309 = vunpack.c.h.b16 %v3133
        %v3310 = vunpack.c.l.b16 %v3134
        %v3311 = vunpack.c.h.b16 %v3134
        %v3312 = vunpack.c.l.b16 %v3135
        %v3313 = vunpack.c.h.b16 %v3135
        %v3314 = vunpack.c.l.b16 %v3136
        %v3315 = vunpack.c.h.b16 %v3136
        %v3316 = vunpack.c.l.b16 %v3137
        %v3317 = vunpack.c.h.b16 %v3137
        %v3318 = vunpack.c.l.b16 %v3138
        %v3319 = vunpack.c.h.b16 %v3138
        %v3320 = vunpack.c.l.b16 %v3139
        %v3321 = vunpack.c.h.b16 %v3139
        %v3322 = vunpack.c.l.b16 %v3140
        %v3323 = vunpack.c.h.b16 %v3140
        %v3324 = vunpack.c.l.b16 %v3141
        %v3325 = vunpack.c.h.b16 %v3141
        %v3326 = vunpack.c.l.b16 %v3142
        %v3327 = vunpack.c.h.b16 %v3142
        %v3328 = vpack.c.b16 %v3298, %v3296
        %v3329 = vpack.c.b16 %v3299, %v3297
        %v3330 = vpack.c.b16 %v3302, %v3300
        %v3331 = vpack.c.b16 %v3303, %v3301
        %v3332 = vpack.c.b16 %v3306, %v3304
        %v3333 = vpack.c.b16 %v3307, %v3305
        %v3334 = vpack.c.b16 %v3310, %v3308
        %v3335 = vpack.c.b16 %v3311, %v3309
        %v3336 = vpack.c.b16 %v3314, %v3312
        %v3337 = vpack.c.b16 %v3315, %v3313
        %v3338 = vpack.c.b16 %v3318, %v3316
        %v3339 = vpack.c.b16 %v3319, %v3317
        %v3340 = vpack.c.b16 %v3322, %v3320
        %v3341 = vpack.c.b16 %v3323, %v3321
        %v3342 = vpack.c.b16 %v3326, %v3324
        %v3343 = vpack.c.b16 %v3327, %v3325
        %3360 = vmatpush.bf16.msra.mxu0 %v3342
        %3361 = vmatpush.bf16.msra.mxu0 %v3340
        %3362 = vmatpush.bf16.msra.mxu0 %v3338
        %3363 = vmatpush.bf16.msra.mxu0 %v3336
        %3364 = vmatpush.bf16.msra.mxu0 %v3334
        %3365 = vmatpush.bf16.msra.mxu0 %v3332
        %3366 = vmatpush.bf16.msra.mxu0 %v3330
        %3367 = vmatpush.bf16.msra.mxu0 %v3328
        %3368 = vmatmul.bf16.gmra.mxu0 %v3126
        %v3369 = vpop.f32.mrf.mxu0
        %v3370 = vadd.f32 %v3264, %v3369
        %v3371 = vpop.f32.mrf.mxu0
        %3372 = vdwg.mxu0
        %3373 = vmatpush.bf16.msra.mxu0 %v3343
        %3374 = vmatpush.bf16.msra.mxu0 %v3341
        %3375 = vmatpush.bf16.msra.mxu0 %v3339
        %3376 = vmatpush.bf16.msra.mxu0 %v3337
        %3377 = vmatpush.bf16.msra.mxu0 %v3335
        %3378 = vmatpush.bf16.msra.mxu0 %v3333
        %3379 = vmatpush.bf16.msra.mxu0 %v3331
        %3380 = vmatpush.bf16.msra.mxu0 %v3329
        %3381 = vmatmul.bf16.gmra.mxu0 %v3126
        %v3382 = vpop.f32.mrf.mxu0
        %v3383 = vadd.f32 %v3277, %v3382
        %v3384 = vpop.f32.mrf.mxu0
        %3385 = vdwg.mxu0
        %v3386 = vld [vmem:[#allocation7] sm:$0xe]
        %s3387 = scalar_lea.vmem %s8, 256
        %v3388 = vld [vmem:[%s3387] sm:$0xff]
        %v3389 = vld [vmem:[%s3387 + $0x8] sm:$0xff]
        %v3390 = vld [vmem:[%s3387 + $0x10] sm:$0xff]
        %v3391 = vld [vmem:[%s3387 + $0x18] sm:$0xff]
        %v3392 = vld [vmem:[%s3387 + $0x20] sm:$0xff]
        %v3393 = vld [vmem:[%s3387 + $0x28] sm:$0xff]
        %v3394 = vld [vmem:[%s3387 + $0x30] sm:$0xff]
        %v3395 = vld [vmem:[%s3387 + $0x38] sm:$0xff]
        %v3396 = vld [vmem:[%s3387 + $0x40] sm:$0xff]
        %v3397 = vld [vmem:[%s3387 + $0x48] sm:$0xff]
        %v3398 = vld [vmem:[%s3387 + $0x50] sm:$0xff]
        %v3399 = vld [vmem:[%s3387 + $0x58] sm:$0xff]
        %v3400 = vld [vmem:[%s3387 + $0x60] sm:$0xff]
        %v3401 = vld [vmem:[%s3387 + $0x68] sm:$0xff]
        %v3402 = vld [vmem:[%s3387 + $0x70] sm:$0xff]
        %v3403 = vld [vmem:[%s3387 + $0x78] sm:$0xff]
        %v3405 = vunpack.c.l.b16 %v3386
        %v3406 = vpack.c.b16 %v3164, %v3405
        %v3407 = vrot.slane %v3406, 1
        %v3425 = vunpack.c.l.b16 %v3388
        %v3426 = vunpack.c.h.b16 %v3388
        %v3427 = vunpack.c.l.b16 %v3389
        %v3428 = vunpack.c.h.b16 %v3389
        %v3429 = vunpack.c.l.b16 %v3390
        %v3430 = vunpack.c.h.b16 %v3390
        %v3431 = vunpack.c.l.b16 %v3391
        %v3432 = vunpack.c.h.b16 %v3391
        %v3433 = vunpack.c.l.b16 %v3392
        %v3434 = vunpack.c.h.b16 %v3392
        %v3435 = vunpack.c.l.b16 %v3393
        %v3436 = vunpack.c.h.b16 %v3393
        %v3437 = vunpack.c.l.b16 %v3394
        %v3438 = vunpack.c.h.b16 %v3394
        %v3439 = vunpack.c.l.b16 %v3395
        %v3440 = vunpack.c.h.b16 %v3395
        %v3441 = vunpack.c.l.b16 %v3396
        %v3442 = vunpack.c.h.b16 %v3396
        %v3443 = vunpack.c.l.b16 %v3397
        %v3444 = vunpack.c.h.b16 %v3397
        %v3445 = vunpack.c.l.b16 %v3398
        %v3446 = vunpack.c.h.b16 %v3398
        %v3447 = vunpack.c.l.b16 %v3399
        %v3448 = vunpack.c.h.b16 %v3399
        %v3449 = vunpack.c.l.b16 %v3400
        %v3450 = vunpack.c.h.b16 %v3400
        %v3451 = vunpack.c.l.b16 %v3401
        %v3452 = vunpack.c.h.b16 %v3401
        %v3453 = vunpack.c.l.b16 %v3402
        %v3454 = vunpack.c.h.b16 %v3402
        %v3455 = vunpack.c.l.b16 %v3403
        %v3456 = vunpack.c.h.b16 %v3403
        %v3457 = vpack.c.b16 %v3427, %v3425
        %v3458 = vpack.c.b16 %v3428, %v3426
        %v3459 = vpack.c.b16 %v3431, %v3429
        %v3460 = vpack.c.b16 %v3432, %v3430
        %v3461 = vpack.c.b16 %v3435, %v3433
        %v3462 = vpack.c.b16 %v3436, %v3434
        %v3463 = vpack.c.b16 %v3439, %v3437
        %v3464 = vpack.c.b16 %v3440, %v3438
        %v3465 = vpack.c.b16 %v3443, %v3441
        %v3466 = vpack.c.b16 %v3444, %v3442
        %v3467 = vpack.c.b16 %v3447, %v3445
        %v3468 = vpack.c.b16 %v3448, %v3446
        %v3469 = vpack.c.b16 %v3451, %v3449
        %v3470 = vpack.c.b16 %v3452, %v3450
        %v3471 = vpack.c.b16 %v3455, %v3453
        %v3472 = vpack.c.b16 %v3456, %v3454
        %3489 = vmatpush.bf16.msra.mxu0 %v3471
        %3490 = vmatpush.bf16.msra.mxu0 %v3469
        %3491 = vmatpush.bf16.msra.mxu0 %v3467
        %3492 = vmatpush.bf16.msra.mxu0 %v3465
        %3493 = vmatpush.bf16.msra.mxu0 %v3463
        %3494 = vmatpush.bf16.msra.mxu0 %v3461
        %3495 = vmatpush.bf16.msra.mxu0 %v3459
        %3496 = vmatpush.bf16.msra.mxu0 %v3457
        %3497 = vmatmul.bf16.gmra.mxu0 %v3407
        %v3498 = vpop.f32.mrf.mxu0
        %v3499 = vadd.f32 0.0, %v3498
        %v3500 = vpop.f32.mrf.mxu0
        %3501 = vdwg.mxu0
        %3502 = vmatpush.bf16.msra.mxu0 %v3472
        %3503 = vmatpush.bf16.msra.mxu0 %v3470
        %3504 = vmatpush.bf16.msra.mxu0 %v3468
        %3505 = vmatpush.bf16.msra.mxu0 %v3466
        %3506 = vmatpush.bf16.msra.mxu0 %v3464
        %3507 = vmatpush.bf16.msra.mxu0 %v3462
        %3508 = vmatpush.bf16.msra.mxu0 %v3460
        %3509 = vmatpush.bf16.msra.mxu0 %v3458
        %3510 = vmatmul.bf16.gmra.mxu0 %v3407
        %v3511 = vpop.f32.mrf.mxu0
        %v3512 = vadd.f32 0.0, %v3511
        %v3513 = vpop.f32.mrf.mxu0
        %3514 = vdwg.mxu0
        %v3515 = vadd.f32 %v3370, %v3499
        %v3516 = vadd.f32 %v3383, %v3512
        %v3517 = vld [vmem:[#allocation7] sm:$0xc]
        %v3518 = vld [vmem:[#allocation7 + $0x4] sm:$0x3]
        %s3519 = scalar_lea.vmem %s8, 384
        %v3520 = vld [vmem:[%s3519] sm:$0xff]
        %v3521 = vld [vmem:[%s3519 + $0x8] sm:$0xff]
        %v3522 = vld [vmem:[%s3519 + $0x10] sm:$0xff]
        %v3523 = vld [vmem:[%s3519 + $0x18] sm:$0xff]
        %v3524 = vld [vmem:[%s3519 + $0x20] sm:$0xff]
        %v3525 = vld [vmem:[%s3519 + $0x28] sm:$0xff]
        %v3526 = vld [vmem:[%s3519 + $0x30] sm:$0xff]
        %v3527 = vld [vmem:[%s3519 + $0x38] sm:$0xff]
        %v3528 = vld [vmem:[%s3519 + $0x40] sm:$0xff]
        %v3529 = vld [vmem:[%s3519 + $0x48] sm:$0xff]
        %v3530 = vld [vmem:[%s3519 + $0x50] sm:$0xff]
        %v3531 = vld [vmem:[%s3519 + $0x58] sm:$0xff]
        %v3532 = vld [vmem:[%s3519 + $0x60] sm:$0xff]
        %v3533 = vld [vmem:[%s3519 + $0x68] sm:$0xff]
        %v3534 = vld [vmem:[%s3519 + $0x70] sm:$0xff]
        %v3535 = vld [vmem:[%s3519 + $0x78] sm:$0xff]
        %v3538 = vunpack.c.l.b16 %v3517
        %v3539 = vunpack.c.l.b16 %v3518
        %v3540 = vpack.c.b16 %v3539, %v3538
        %v3541 = vrot.slane %v3540, 2
        %v3559 = vunpack.c.l.b16 %v3520
        %v3560 = vunpack.c.h.b16 %v3520
        %v3561 = vunpack.c.l.b16 %v3521
        %v3562 = vunpack.c.h.b16 %v3521
        %v3563 = vunpack.c.l.b16 %v3522
        %v3564 = vunpack.c.h.b16 %v3522
        %v3565 = vunpack.c.l.b16 %v3523
        %v3566 = vunpack.c.h.b16 %v3523
        %v3567 = vunpack.c.l.b16 %v3524
        %v3568 = vunpack.c.h.b16 %v3524
        %v3569 = vunpack.c.l.b16 %v3525
        %v3570 = vunpack.c.h.b16 %v3525
        %v3571 = vunpack.c.l.b16 %v3526
        %v3572 = vunpack.c.h.b16 %v3526
        %v3573 = vunpack.c.l.b16 %v3527
        %v3574 = vunpack.c.h.b16 %v3527
        %v3575 = vunpack.c.l.b16 %v3528
        %v3576 = vunpack.c.h.b16 %v3528
        %v3577 = vunpack.c.l.b16 %v3529
        %v3578 = vunpack.c.h.b16 %v3529
        %v3579 = vunpack.c.l.b16 %v3530
        %v3580 = vunpack.c.h.b16 %v3530
        %v3581 = vunpack.c.l.b16 %v3531
        %v3582 = vunpack.c.h.b16 %v3531
        %v3583 = vunpack.c.l.b16 %v3532
        %v3584 = vunpack.c.h.b16 %v3532
        %v3585 = vunpack.c.l.b16 %v3533
        %v3586 = vunpack.c.h.b16 %v3533
        %v3587 = vunpack.c.l.b16 %v3534
        %v3588 = vunpack.c.h.b16 %v3534
        %v3589 = vunpack.c.l.b16 %v3535
        %v3590 = vunpack.c.h.b16 %v3535
        %v3591 = vpack.c.b16 %v3561, %v3559
        %v3592 = vpack.c.b16 %v3562, %v3560
        %v3593 = vpack.c.b16 %v3565, %v3563
        %v3594 = vpack.c.b16 %v3566, %v3564
        %v3595 = vpack.c.b16 %v3569, %v3567
        %v3596 = vpack.c.b16 %v3570, %v3568
        %v3597 = vpack.c.b16 %v3573, %v3571
        %v3598 = vpack.c.b16 %v3574, %v3572
        %v3599 = vpack.c.b16 %v3577, %v3575
        %v3600 = vpack.c.b16 %v3578, %v3576
        %v3601 = vpack.c.b16 %v3581, %v3579
        %v3602 = vpack.c.b16 %v3582, %v3580
        %v3603 = vpack.c.b16 %v3585, %v3583
        %v3604 = vpack.c.b16 %v3586, %v3584
        %v3605 = vpack.c.b16 %v3589, %v3587
        %v3606 = vpack.c.b16 %v3590, %v3588
        %3623 = vmatpush.bf16.msra.mxu0 %v3605
        %3624 = vmatpush.bf16.msra.mxu0 %v3603
        %3625 = vmatpush.bf16.msra.mxu0 %v3601
        %3626 = vmatpush.bf16.msra.mxu0 %v3599
        %3627 = vmatpush.bf16.msra.mxu0 %v3597
        %3628 = vmatpush.bf16.msra.mxu0 %v3595
        %3629 = vmatpush.bf16.msra.mxu0 %v3593
        %3630 = vmatpush.bf16.msra.mxu0 %v3591
        %3631 = vmatmul.bf16.gmra.mxu0 %v3541
        %v3632 = vpop.f32.mrf.mxu0
        %v3633 = vadd.f32 0.0, %v3632
        %v3634 = vpop.f32.mrf.mxu0
        %3635 = vdwg.mxu0
        %3636 = vmatpush.bf16.msra.mxu0 %v3606
        %3637 = vmatpush.bf16.msra.mxu0 %v3604
        %3638 = vmatpush.bf16.msra.mxu0 %v3602
        %3639 = vmatpush.bf16.msra.mxu0 %v3600
        %3640 = vmatpush.bf16.msra.mxu0 %v3598
        %3641 = vmatpush.bf16.msra.mxu0 %v3596
        %3642 = vmatpush.bf16.msra.mxu0 %v3594
        %3643 = vmatpush.bf16.msra.mxu0 %v3592
        %3644 = vmatmul.bf16.gmra.mxu0 %v3541
        %v3645 = vpop.f32.mrf.mxu0
        %v3646 = vadd.f32 0.0, %v3645
        %v3647 = vpop.f32.mrf.mxu0
        %3648 = vdwg.mxu0
        %v3649 = vadd.f32 %v3515, %v3633
        %v3650 = vadd.f32 %v3516, %v3646
        %v3651 = vld [vmem:[#allocation7 + $0x4] sm:$0x7]
        %s3652 = scalar_lea.vmem %s8, 512
        %v3653 = vld [vmem:[%s3652] sm:$0xff]
        %v3654 = vld [vmem:[%s3652 + $0x8] sm:$0xff]
        %v3655 = vld [vmem:[%s3652 + $0x10] sm:$0xff]
        %v3656 = vld [vmem:[%s3652 + $0x18] sm:$0xff]
        %v3657 = vld [vmem:[%s3652 + $0x20] sm:$0xff]
        %v3658 = vld [vmem:[%s3652 + $0x28] sm:$0xff]
        %v3659 = vld [vmem:[%s3652 + $0x30] sm:$0xff]
        %v3660 = vld [vmem:[%s3652 + $0x38] sm:$0xff]
        %v3661 = vld [vmem:[%s3652 + $0x40] sm:$0xff]
        %v3662 = vld [vmem:[%s3652 + $0x48] sm:$0xff]
        %v3663 = vld [vmem:[%s3652 + $0x50] sm:$0xff]
        %v3664 = vld [vmem:[%s3652 + $0x58] sm:$0xff]
        %v3665 = vld [vmem:[%s3652 + $0x60] sm:$0xff]
        %v3666 = vld [vmem:[%s3652 + $0x68] sm:$0xff]
        %v3667 = vld [vmem:[%s3652 + $0x70] sm:$0xff]
        %v3668 = vld [vmem:[%s3652 + $0x78] sm:$0xff]
        %v3670 = vunpack.c.l.b16 %v3651
        %v3671 = vpack.c.b16 %v3670, %v3538
        %v3673 = vshrl.u32 %v3671, 16
        %v3675 = vrot.slane %v3673, 2
        %v3676 = vshll.u32 %v3671, 16
        %v3678 = vrot.slane %v3676, 3
        %v3679 = vor.u32 %v3675, %v3678
        %v3697 = vunpack.c.l.b16 %v3653
        %v3698 = vunpack.c.h.b16 %v3653
        %v3699 = vunpack.c.l.b16 %v3654
        %v3700 = vunpack.c.h.b16 %v3654
        %v3701 = vunpack.c.l.b16 %v3655
        %v3702 = vunpack.c.h.b16 %v3655
        %v3703 = vunpack.c.l.b16 %v3656
        %v3704 = vunpack.c.h.b16 %v3656
        %v3705 = vunpack.c.l.b16 %v3657
        %v3706 = vunpack.c.h.b16 %v3657
        %v3707 = vunpack.c.l.b16 %v3658
        %v3708 = vunpack.c.h.b16 %v3658
        %v3709 = vunpack.c.l.b16 %v3659
        %v3710 = vunpack.c.h.b16 %v3659
        %v3711 = vunpack.c.l.b16 %v3660
        %v3712 = vunpack.c.h.b16 %v3660
        %v3713 = vunpack.c.l.b16 %v3661
        %v3714 = vunpack.c.h.b16 %v3661
        %v3715 = vunpack.c.l.b16 %v3662
        %v3716 = vunpack.c.h.b16 %v3662
        %v3717 = vunpack.c.l.b16 %v3663
        %v3718 = vunpack.c.h.b16 %v3663
        %v3719 = vunpack.c.l.b16 %v3664
        %v3720 = vunpack.c.h.b16 %v3664
        %v3721 = vunpack.c.l.b16 %v3665
        %v3722 = vunpack.c.h.b16 %v3665
        %v3723 = vunpack.c.l.b16 %v3666
        %v3724 = vunpack.c.h.b16 %v3666
        %v3725 = vunpack.c.l.b16 %v3667
        %v3726 = vunpack.c.h.b16 %v3667
        %v3727 = vunpack.c.l.b16 %v3668
        %v3728 = vunpack.c.h.b16 %v3668
        %v3729 = vpack.c.b16 %v3699, %v3697
        %v3730 = vpack.c.b16 %v3700, %v3698
        %v3731 = vpack.c.b16 %v3703, %v3701
        %v3732 = vpack.c.b16 %v3704, %v3702
        %v3733 = vpack.c.b16 %v3707, %v3705
        %v3734 = vpack.c.b16 %v3708, %v3706
        %v3735 = vpack.c.b16 %v3711, %v3709
        %v3736 = vpack.c.b16 %v3712, %v3710
        %v3737 = vpack.c.b16 %v3715, %v3713
        %v3738 = vpack.c.b16 %v3716, %v3714
        %v3739 = vpack.c.b16 %v3719, %v3717
        %v3740 = vpack.c.b16 %v3720, %v3718
        %v3741 = vpack.c.b16 %v3723, %v3721
        %v3742 = vpack.c.b16 %v3724, %v3722
        %v3743 = vpack.c.b16 %v3727, %v3725
        %v3744 = vpack.c.b16 %v3728, %v3726
        %3761 = vmatpush.bf16.msra.mxu0 %v3743
        %3762 = vmatpush.bf16.msra.mxu0 %v3741
        %3763 = vmatpush.bf16.msra.mxu0 %v3739
        %3764 = vmatpush.bf16.msra.mxu0 %v3737
        %3765 = vmatpush.bf16.msra.mxu0 %v3735
        %3766 = vmatpush.bf16.msra.mxu0 %v3733
        %3767 = vmatpush.bf16.msra.mxu0 %v3731
        %3768 = vmatpush.bf16.msra.mxu0 %v3729
        %3769 = vmatmul.bf16.gmra.mxu0 %v3679
        %v3770 = vpop.f32.mrf.mxu0
        %v3771 = vadd.f32 0.0, %v3770
        %v3772 = vpop.f32.mrf.mxu0
        %3773 = vdwg.mxu0
        %3774 = vmatpush.bf16.msra.mxu0 %v3744
        %3775 = vmatpush.bf16.msra.mxu0 %v3742
        %3776 = vmatpush.bf16.msra.mxu0 %v3740
        %3777 = vmatpush.bf16.msra.mxu0 %v3738
        %3778 = vmatpush.bf16.msra.mxu0 %v3736
        %3779 = vmatpush.bf16.msra.mxu0 %v3734
        %3780 = vmatpush.bf16.msra.mxu0 %v3732
        %3781 = vmatpush.bf16.msra.mxu0 %v3730
        %3782 = vmatmul.bf16.gmra.mxu0 %v3679
        %v3783 = vpop.f32.mrf.mxu0
        %v3784 = vadd.f32 0.0, %v3783
        %v3785 = vpop.f32.mrf.mxu0
        %3786 = vdwg.mxu0
        %v3787 = vadd.f32 %v3649, %v3771
        %v3788 = vadd.f32 %v3650, %v3784
        %v3789 = vld [vmem:[#allocation7] sm:$0x8]
        %s3790 = scalar_lea.vmem %s8, 640
        %v3791 = vld [vmem:[%s3790] sm:$0xff]
        %v3792 = vld [vmem:[%s3790 + $0x8] sm:$0xff]
        %v3793 = vld [vmem:[%s3790 + $0x10] sm:$0xff]
        %v3794 = vld [vmem:[%s3790 + $0x18] sm:$0xff]
        %v3795 = vld [vmem:[%s3790 + $0x20] sm:$0xff]
        %v3796 = vld [vmem:[%s3790 + $0x28] sm:$0xff]
        %v3797 = vld [vmem:[%s3790 + $0x30] sm:$0xff]
        %v3798 = vld [vmem:[%s3790 + $0x38] sm:$0xff]
        %v3799 = vld [vmem:[%s3790 + $0x40] sm:$0xff]
        %v3800 = vld [vmem:[%s3790 + $0x48] sm:$0xff]
        %v3801 = vld [vmem:[%s3790 + $0x50] sm:$0xff]
        %v3802 = vld [vmem:[%s3790 + $0x58] sm:$0xff]
        %v3803 = vld [vmem:[%s3790 + $0x60] sm:$0xff]
        %v3804 = vld [vmem:[%s3790 + $0x68] sm:$0xff]
        %v3805 = vld [vmem:[%s3790 + $0x70] sm:$0xff]
        %v3806 = vld [vmem:[%s3790 + $0x78] sm:$0xff]
        %v3808 = vunpack.c.l.b16 %v3789
        %v3809 = vpack.c.b16 %v3670, %v3808
        %v3810 = vrot.slane %v3809, 3
        %v3828 = vunpack.c.l.b16 %v3791
        %v3829 = vunpack.c.h.b16 %v3791
        %v3830 = vunpack.c.l.b16 %v3792
        %v3831 = vunpack.c.h.b16 %v3792
        %v3832 = vunpack.c.l.b16 %v3793
        %v3833 = vunpack.c.h.b16 %v3793
        %v3834 = vunpack.c.l.b16 %v3794
        %v3835 = vunpack.c.h.b16 %v3794
        %v3836 = vunpack.c.l.b16 %v3795
        %v3837 = vunpack.c.h.b16 %v3795
        %v3838 = vunpack.c.l.b16 %v3796
        %v3839 = vunpack.c.h.b16 %v3796
        %v3840 = vunpack.c.l.b16 %v3797
        %v3841 = vunpack.c.h.b16 %v3797
        %v3842 = vunpack.c.l.b16 %v3798
        %v3843 = vunpack.c.h.b16 %v3798
        %v3844 = vunpack.c.l.b16 %v3799
        %v3845 = vunpack.c.h.b16 %v3799
        %v3846 = vunpack.c.l.b16 %v3800
        %v3847 = vunpack.c.h.b16 %v3800
        %v3848 = vunpack.c.l.b16 %v3801
        %v3849 = vunpack.c.h.b16 %v3801
        %v3850 = vunpack.c.l.b16 %v3802
        %v3851 = vunpack.c.h.b16 %v3802
        %v3852 = vunpack.c.l.b16 %v3803
        %v3853 = vunpack.c.h.b16 %v3803
        %v3854 = vunpack.c.l.b16 %v3804
        %v3855 = vunpack.c.h.b16 %v3804
        %v3856 = vunpack.c.l.b16 %v3805
        %v3857 = vunpack.c.h.b16 %v3805
        %v3858 = vunpack.c.l.b16 %v3806
        %v3859 = vunpack.c.h.b16 %v3806
        %v3860 = vpack.c.b16 %v3830, %v3828
        %v3861 = vpack.c.b16 %v3831, %v3829
        %v3862 = vpack.c.b16 %v3834, %v3832
        %v3863 = vpack.c.b16 %v3835, %v3833
        %v3864 = vpack.c.b16 %v3838, %v3836
        %v3865 = vpack.c.b16 %v3839, %v3837
        %v3866 = vpack.c.b16 %v3842, %v3840
        %v3867 = vpack.c.b16 %v3843, %v3841
        %v3868 = vpack.c.b16 %v3846, %v3844
        %v3869 = vpack.c.b16 %v3847, %v3845
        %v3870 = vpack.c.b16 %v3850, %v3848
        %v3871 = vpack.c.b16 %v3851, %v3849
        %v3872 = vpack.c.b16 %v3854, %v3852
        %v3873 = vpack.c.b16 %v3855, %v3853
        %v3874 = vpack.c.b16 %v3858, %v3856
        %v3875 = vpack.c.b16 %v3859, %v3857
        %3892 = vmatpush.bf16.msra.mxu0 %v3874
        %3893 = vmatpush.bf16.msra.mxu0 %v3872
        %3894 = vmatpush.bf16.msra.mxu0 %v3870
        %3895 = vmatpush.bf16.msra.mxu0 %v3868
        %3896 = vmatpush.bf16.msra.mxu0 %v3866
        %3897 = vmatpush.bf16.msra.mxu0 %v3864
        %3898 = vmatpush.bf16.msra.mxu0 %v3862
        %3899 = vmatpush.bf16.msra.mxu0 %v3860
        %3900 = vmatmul.bf16.gmra.mxu0 %v3810
        %v3901 = vpop.f32.mrf.mxu0
        %v3902 = vadd.f32 0.0, %v3901
        %v3903 = vpop.f32.mrf.mxu0
        %3904 = vdwg.mxu0
        %3905 = vmatpush.bf16.msra.mxu0 %v3875
        %3906 = vmatpush.bf16.msra.mxu0 %v3873
        %3907 = vmatpush.bf16.msra.mxu0 %v3871
        %3908 = vmatpush.bf16.msra.mxu0 %v3869
        %3909 = vmatpush.bf16.msra.mxu0 %v3867
        %3910 = vmatpush.bf16.msra.mxu0 %v3865
        %3911 = vmatpush.bf16.msra.mxu0 %v3863
        %3912 = vmatpush.bf16.msra.mxu0 %v3861
        %3913 = vmatmul.bf16.gmra.mxu0 %v3810
        %v3914 = vpop.f32.mrf.mxu0
        %v3915 = vadd.f32 0.0, %v3914
        %v3916 = vpop.f32.mrf.mxu0
        %3917 = vdwg.mxu0
        %v3918 = vadd.f32 %v3787, %v3902
        %v3919 = vadd.f32 %v3788, %v3915
        %v3920 = vld [vmem:[#allocation7 + $0x4] sm:$0xf]
        %s3921 = scalar_lea.vmem %s8, 768
        %v3922 = vld [vmem:[%s3921] sm:$0xff]
        %v3923 = vld [vmem:[%s3921 + $0x8] sm:$0xff]
        %v3924 = vld [vmem:[%s3921 + $0x10] sm:$0xff]
        %v3925 = vld [vmem:[%s3921 + $0x18] sm:$0xff]
        %v3926 = vld [vmem:[%s3921 + $0x20] sm:$0xff]
        %v3927 = vld [vmem:[%s3921 + $0x28] sm:$0xff]
        %v3928 = vld [vmem:[%s3921 + $0x30] sm:$0xff]
        %v3929 = vld [vmem:[%s3921 + $0x38] sm:$0xff]
        %v3930 = vld [vmem:[%s3921 + $0x40] sm:$0xff]
        %v3931 = vld [vmem:[%s3921 + $0x48] sm:$0xff]
        %v3932 = vld [vmem:[%s3921 + $0x50] sm:$0xff]
        %v3933 = vld [vmem:[%s3921 + $0x58] sm:$0xff]
        %v3934 = vld [vmem:[%s3921 + $0x60] sm:$0xff]
        %v3935 = vld [vmem:[%s3921 + $0x68] sm:$0xff]
        %v3936 = vld [vmem:[%s3921 + $0x70] sm:$0xff]
        %v3937 = vld [vmem:[%s3921 + $0x78] sm:$0xff]
        %v3954 = vunpack.c.l.b16 %v3922
        %v3955 = vunpack.c.h.b16 %v3922
        %v3956 = vunpack.c.l.b16 %v3923
        %v3957 = vunpack.c.h.b16 %v3923
        %v3958 = vunpack.c.l.b16 %v3924
        %v3959 = vunpack.c.h.b16 %v3924
        %v3960 = vunpack.c.l.b16 %v3925
        %v3961 = vunpack.c.h.b16 %v3925
        %v3962 = vunpack.c.l.b16 %v3926
        %v3963 = vunpack.c.h.b16 %v3926
        %v3964 = vunpack.c.l.b16 %v3927
        %v3965 = vunpack.c.h.b16 %v3927
        %v3966 = vunpack.c.l.b16 %v3928
        %v3967 = vunpack.c.h.b16 %v3928
        %v3968 = vunpack.c.l.b16 %v3929
        %v3969 = vunpack.c.h.b16 %v3929
        %v3970 = vunpack.c.l.b16 %v3930
        %v3971 = vunpack.c.h.b16 %v3930
        %v3972 = vunpack.c.l.b16 %v3931
        %v3973 = vunpack.c.h.b16 %v3931
        %v3974 = vunpack.c.l.b16 %v3932
        %v3975 = vunpack.c.h.b16 %v3932
        %v3976 = vunpack.c.l.b16 %v3933
        %v3977 = vunpack.c.h.b16 %v3933
        %v3978 = vunpack.c.l.b16 %v3934
        %v3979 = vunpack.c.h.b16 %v3934
        %v3980 = vunpack.c.l.b16 %v3935
        %v3981 = vunpack.c.h.b16 %v3935
        %v3982 = vunpack.c.l.b16 %v3936
        %v3983 = vunpack.c.h.b16 %v3936
        %v3984 = vunpack.c.l.b16 %v3937
        %v3985 = vunpack.c.h.b16 %v3937
        %v3986 = vpack.c.b16 %v3956, %v3954
        %v3987 = vpack.c.b16 %v3957, %v3955
        %v3988 = vpack.c.b16 %v3960, %v3958
        %v3989 = vpack.c.b16 %v3961, %v3959
        %v3990 = vpack.c.b16 %v3964, %v3962
        %v3991 = vpack.c.b16 %v3965, %v3963
        %v3992 = vpack.c.b16 %v3968, %v3966
        %v3993 = vpack.c.b16 %v3969, %v3967
        %v3994 = vpack.c.b16 %v3972, %v3970
        %v3995 = vpack.c.b16 %v3973, %v3971
        %v3996 = vpack.c.b16 %v3976, %v3974
        %v3997 = vpack.c.b16 %v3977, %v3975
        %v3998 = vpack.c.b16 %v3980, %v3978
        %v3999 = vpack.c.b16 %v3981, %v3979
        %v4000 = vpack.c.b16 %v3984, %v3982
        %v4001 = vpack.c.b16 %v3985, %v3983
        %4018 = vmatpush.bf16.msra.mxu0 %v4000
        %4019 = vmatpush.bf16.msra.mxu0 %v3998
        %4020 = vmatpush.bf16.msra.mxu0 %v3996
        %4021 = vmatpush.bf16.msra.mxu0 %v3994
        %4022 = vmatpush.bf16.msra.mxu0 %v3992
        %4023 = vmatpush.bf16.msra.mxu0 %v3990
        %4024 = vmatpush.bf16.msra.mxu0 %v3988
        %4025 = vmatpush.bf16.msra.mxu0 %v3986
        %4026 = vmatmul.bf16.gmra.mxu0 %v3920
        %v4027 = vpop.f32.mrf.mxu0
        %v4028 = vadd.f32 0.0, %v4027
        %v4029 = vpop.f32.mrf.mxu0
        %4030 = vdwg.mxu0
        %4031 = vmatpush.bf16.msra.mxu0 %v4001
        %4032 = vmatpush.bf16.msra.mxu0 %v3999
        %4033 = vmatpush.bf16.msra.mxu0 %v3997
        %4034 = vmatpush.bf16.msra.mxu0 %v3995
        %4035 = vmatpush.bf16.msra.mxu0 %v3993
        %4036 = vmatpush.bf16.msra.mxu0 %v3991
        %4037 = vmatpush.bf16.msra.mxu0 %v3989
        %4038 = vmatpush.bf16.msra.mxu0 %v3987
        %4039 = vmatmul.bf16.gmra.mxu0 %v3920
        %v4040 = vpop.f32.mrf.mxu0
        %v4041 = vadd.f32 0.0, %v4040
        %v4042 = vpop.f32.mrf.mxu0
        %4043 = vdwg.mxu0
        %v4044 = vadd.f32 %v3918, %v4028
        %v4045 = vadd.f32 %v3919, %v4041
        %v4046 = vld [vmem:[#allocation7 + $0x4] sm:$0xf]
        %v4047 = vld [vmem:[#allocation7 + $0x8] sm:$0x1]
        %s4048 = scalar_lea.vmem %s8, 896
        %v4049 = vld [vmem:[%s4048] sm:$0xff]
        %v4050 = vld [vmem:[%s4048 + $0x8] sm:$0xff]
        %v4051 = vld [vmem:[%s4048 + $0x10] sm:$0xff]
        %v4052 = vld [vmem:[%s4048 + $0x18] sm:$0xff]
        %v4053 = vld [vmem:[%s4048 + $0x20] sm:$0xff]
        %v4054 = vld [vmem:[%s4048 + $0x28] sm:$0xff]
        %v4055 = vld [vmem:[%s4048 + $0x30] sm:$0xff]
        %v4056 = vld [vmem:[%s4048 + $0x38] sm:$0xff]
        %v4057 = vld [vmem:[%s4048 + $0x40] sm:$0xff]
        %v4058 = vld [vmem:[%s4048 + $0x48] sm:$0xff]
        %v4059 = vld [vmem:[%s4048 + $0x50] sm:$0xff]
        %v4060 = vld [vmem:[%s4048 + $0x58] sm:$0xff]
        %v4061 = vld [vmem:[%s4048 + $0x60] sm:$0xff]
        %v4062 = vld [vmem:[%s4048 + $0x68] sm:$0xff]
        %v4063 = vld [vmem:[%s4048 + $0x70] sm:$0xff]
        %v4064 = vld [vmem:[%s4048 + $0x78] sm:$0xff]
        %v4067 = vunpack.c.l.b16 %v4046
        %v4068 = vunpack.c.l.b16 %v4047
        %v4069 = vpack.c.b16 %v4068, %v4067
        %v4071 = vshrl.u32 %v4069, 16
        %v4073 = vshll.u32 %v4069, 16
        %v4075 = vrot.slane %v4073, 1
        %v4076 = vor.u32 %v4071, %v4075
        %v4094 = vunpack.c.l.b16 %v4049
        %v4095 = vunpack.c.h.b16 %v4049
        %v4096 = vunpack.c.l.b16 %v4050
        %v4097 = vunpack.c.h.b16 %v4050
        %v4098 = vunpack.c.l.b16 %v4051
        %v4099 = vunpack.c.h.b16 %v4051
        %v4100 = vunpack.c.l.b16 %v4052
        %v4101 = vunpack.c.h.b16 %v4052
        %v4102 = vunpack.c.l.b16 %v4053
        %v4103 = vunpack.c.h.b16 %v4053
        %v4104 = vunpack.c.l.b16 %v4054
        %v4105 = vunpack.c.h.b16 %v4054
        %v4106 = vunpack.c.l.b16 %v4055
        %v4107 = vunpack.c.h.b16 %v4055
        %v4108 = vunpack.c.l.b16 %v4056
        %v4109 = vunpack.c.h.b16 %v4056
        %v4110 = vunpack.c.l.b16 %v4057
        %v4111 = vunpack.c.h.b16 %v4057
        %v4112 = vunpack.c.l.b16 %v4058
        %v4113 = vunpack.c.h.b16 %v4058
        %v4114 = vunpack.c.l.b16 %v4059
        %v4115 = vunpack.c.h.b16 %v4059
        %v4116 = vunpack.c.l.b16 %v4060
        %v4117 = vunpack.c.h.b16 %v4060
        %v4118 = vunpack.c.l.b16 %v4061
        %v4119 = vunpack.c.h.b16 %v4061
        %v4120 = vunpack.c.l.b16 %v4062
        %v4121 = vunpack.c.h.b16 %v4062
        %v4122 = vunpack.c.l.b16 %v4063
        %v4123 = vunpack.c.h.b16 %v4063
        %v4124 = vunpack.c.l.b16 %v4064
        %v4125 = vunpack.c.h.b16 %v4064
        %v4126 = vpack.c.b16 %v4096, %v4094
        %v4127 = vpack.c.b16 %v4097, %v4095
        %v4128 = vpack.c.b16 %v4100, %v4098
        %v4129 = vpack.c.b16 %v4101, %v4099
        %v4130 = vpack.c.b16 %v4104, %v4102
        %v4131 = vpack.c.b16 %v4105, %v4103
        %v4132 = vpack.c.b16 %v4108, %v4106
        %v4133 = vpack.c.b16 %v4109, %v4107
        %v4134 = vpack.c.b16 %v4112, %v4110
        %v4135 = vpack.c.b16 %v4113, %v4111
        %v4136 = vpack.c.b16 %v4116, %v4114
        %v4137 = vpack.c.b16 %v4117, %v4115
        %v4138 = vpack.c.b16 %v4120, %v4118
        %v4139 = vpack.c.b16 %v4121, %v4119
        %v4140 = vpack.c.b16 %v4124, %v4122
        %v4141 = vpack.c.b16 %v4125, %v4123
        %4158 = vmatpush.bf16.msra.mxu0 %v4140
        %4159 = vmatpush.bf16.msra.mxu0 %v4138
        %4160 = vmatpush.bf16.msra.mxu0 %v4136
        %4161 = vmatpush.bf16.msra.mxu0 %v4134
        %4162 = vmatpush.bf16.msra.mxu0 %v4132
        %4163 = vmatpush.bf16.msra.mxu0 %v4130
        %4164 = vmatpush.bf16.msra.mxu0 %v4128
        %4165 = vmatpush.bf16.msra.mxu0 %v4126
        %4166 = vmatmul.bf16.gmra.mxu0 %v4076
        %v4167 = vpop.f32.mrf.mxu0
        %v4168 = vadd.f32 0.0, %v4167
        %v4169 = vpop.f32.mrf.mxu0
        %4170 = vdwg.mxu0
        %4171 = vmatpush.bf16.msra.mxu0 %v4141
        %4172 = vmatpush.bf16.msra.mxu0 %v4139
        %4173 = vmatpush.bf16.msra.mxu0 %v4137
        %4174 = vmatpush.bf16.msra.mxu0 %v4135
        %4175 = vmatpush.bf16.msra.mxu0 %v4133
        %4176 = vmatpush.bf16.msra.mxu0 %v4131
        %4177 = vmatpush.bf16.msra.mxu0 %v4129
        %4178 = vmatpush.bf16.msra.mxu0 %v4127
        %4179 = vmatmul.bf16.gmra.mxu0 %v4076
        %v4180 = vpop.f32.mrf.mxu0
        %v4181 = vadd.f32 0.0, %v4180
        %v4182 = vpop.f32.mrf.mxu0
        %4183 = vdwg.mxu0
        %v4184 = vadd.f32 %v4044, %v4168
        %v4185 = vadd.f32 %v4045, %v4181
        %v4186 = vld [vmem:[#allocation7 + $0x4] sm:$0xe]
        %s4187 = scalar_lea.vmem %s8, 1024
        %v4188 = vld [vmem:[%s4187] sm:$0xff]
        %v4189 = vld [vmem:[%s4187 + $0x8] sm:$0xff]
        %v4190 = vld [vmem:[%s4187 + $0x10] sm:$0xff]
        %v4191 = vld [vmem:[%s4187 + $0x18] sm:$0xff]
        %v4192 = vld [vmem:[%s4187 + $0x20] sm:$0xff]
        %v4193 = vld [vmem:[%s4187 + $0x28] sm:$0xff]
        %v4194 = vld [vmem:[%s4187 + $0x30] sm:$0xff]
        %v4195 = vld [vmem:[%s4187 + $0x38] sm:$0xff]
        %v4196 = vld [vmem:[%s4187 + $0x40] sm:$0xff]
        %v4197 = vld [vmem:[%s4187 + $0x48] sm:$0xff]
        %v4198 = vld [vmem:[%s4187 + $0x50] sm:$0xff]
        %v4199 = vld [vmem:[%s4187 + $0x58] sm:$0xff]
        %v4200 = vld [vmem:[%s4187 + $0x60] sm:$0xff]
        %v4201 = vld [vmem:[%s4187 + $0x68] sm:$0xff]
        %v4202 = vld [vmem:[%s4187 + $0x70] sm:$0xff]
        %v4203 = vld [vmem:[%s4187 + $0x78] sm:$0xff]
        %v4205 = vunpack.c.l.b16 %v4186
        %v4206 = vpack.c.b16 %v4068, %v4205
        %v4207 = vrot.slane %v4206, 1
        %v4225 = vunpack.c.l.b16 %v4188
        %v4226 = vunpack.c.h.b16 %v4188
        %v4227 = vunpack.c.l.b16 %v4189
        %v4228 = vunpack.c.h.b16 %v4189
        %v4229 = vunpack.c.l.b16 %v4190
        %v4230 = vunpack.c.h.b16 %v4190
        %v4231 = vunpack.c.l.b16 %v4191
        %v4232 = vunpack.c.h.b16 %v4191
        %v4233 = vunpack.c.l.b16 %v4192
        %v4234 = vunpack.c.h.b16 %v4192
        %v4235 = vunpack.c.l.b16 %v4193
        %v4236 = vunpack.c.h.b16 %v4193
        %v4237 = vunpack.c.l.b16 %v4194
        %v4238 = vunpack.c.h.b16 %v4194
        %v4239 = vunpack.c.l.b16 %v4195
        %v4240 = vunpack.c.h.b16 %v4195
        %v4241 = vunpack.c.l.b16 %v4196
        %v4242 = vunpack.c.h.b16 %v4196
        %v4243 = vunpack.c.l.b16 %v4197
        %v4244 = vunpack.c.h.b16 %v4197
        %v4245 = vunpack.c.l.b16 %v4198
        %v4246 = vunpack.c.h.b16 %v4198
        %v4247 = vunpack.c.l.b16 %v4199
        %v4248 = vunpack.c.h.b16 %v4199
        %v4249 = vunpack.c.l.b16 %v4200
        %v4250 = vunpack.c.h.b16 %v4200
        %v4251 = vunpack.c.l.b16 %v4201
        %v4252 = vunpack.c.h.b16 %v4201
        %v4253 = vunpack.c.l.b16 %v4202
        %v4254 = vunpack.c.h.b16 %v4202
        %v4255 = vunpack.c.l.b16 %v4203
        %v4256 = vunpack.c.h.b16 %v4203
        %v4257 = vpack.c.b16 %v4227, %v4225
        %v4258 = vpack.c.b16 %v4228, %v4226
        %v4259 = vpack.c.b16 %v4231, %v4229
        %v4260 = vpack.c.b16 %v4232, %v4230
        %v4261 = vpack.c.b16 %v4235, %v4233
        %v4262 = vpack.c.b16 %v4236, %v4234
        %v4263 = vpack.c.b16 %v4239, %v4237
        %v4264 = vpack.c.b16 %v4240, %v4238
        %v4265 = vpack.c.b16 %v4243, %v4241
        %v4266 = vpack.c.b16 %v4244, %v4242
        %v4267 = vpack.c.b16 %v4247, %v4245
        %v4268 = vpack.c.b16 %v4248, %v4246
        %v4269 = vpack.c.b16 %v4251, %v4249
        %v4270 = vpack.c.b16 %v4252, %v4250
        %v4271 = vpack.c.b16 %v4255, %v4253
        %v4272 = vpack.c.b16 %v4256, %v4254
        %4289 = vmatpush.bf16.msra.mxu0 %v4271
        %4290 = vmatpush.bf16.msra.mxu0 %v4269
        %4291 = vmatpush.bf16.msra.mxu0 %v4267
        %4292 = vmatpush.bf16.msra.mxu0 %v4265
        %4293 = vmatpush.bf16.msra.mxu0 %v4263
        %4294 = vmatpush.bf16.msra.mxu0 %v4261
        %4295 = vmatpush.bf16.msra.mxu0 %v4259
        %4296 = vmatpush.bf16.msra.mxu0 %v4257
        %4297 = vmatmul.bf16.gmra.mxu0 %v4207
        %v4298 = vpop.f32.mrf.mxu0
        %v4299 = vadd.f32 0.0, %v4298
        %v4300 = vpop.f32.mrf.mxu0
        %4301 = vdwg.mxu0
        %4302 = vmatpush.bf16.msra.mxu0 %v4272
        %4303 = vmatpush.bf16.msra.mxu0 %v4270
        %4304 = vmatpush.bf16.msra.mxu0 %v4268
        %4305 = vmatpush.bf16.msra.mxu0 %v4266
        %4306 = vmatpush.bf16.msra.mxu0 %v4264
        %4307 = vmatpush.bf16.msra.mxu0 %v4262
        %4308 = vmatpush.bf16.msra.mxu0 %v4260
        %4309 = vmatpush.bf16.msra.mxu0 %v4258
        %4310 = vmatmul.bf16.gmra.mxu0 %v4207
        %v4311 = vpop.f32.mrf.mxu0
        %v4312 = vadd.f32 0.0, %v4311
        %v4313 = vpop.f32.mrf.mxu0
        %4314 = vdwg.mxu0
        %v4315 = vadd.f32 %v4184, %v4299
        %v4316 = vadd.f32 %v4185, %v4312
        %v4317 = vld [vmem:[%s9] sm:$0x3]
        %v4319 = vperm.slane %v4317, 0
        %v4320 = vperm.slane %v4317, 1
        %v4323 = vadd.f32 %v4315, %v4319
        %v4324 = vadd.f32 %v4316, %v4320
        %v4325 = vmax.f32 %v4323, 0.0
        %v4326 = vmax.f32 %v4324, 0.0
        %vm4327 = vcmask 1041408
        %v4328 = vsel %vm4327, %v4325, 0.0
        %v4329 = vrot.slane %v4328, 4
        %v4330 = vadd.f32 %v4328, %v4329
        %v4331 = vrot.slane %v4330, 2
        %v4332 = vadd.f32 %v4330, %v4331
        %v4333 = vrot.slane %v4332, 1
        %v4334 = vadd.f32 %v4332, %v4333
        %v4335 = vsel %vm4327, %v4326, 0.0
        %v4336 = vrot.slane %v4335, 4
        %v4337 = vadd.f32 %v4335, %v4336
        %v4338 = vrot.slane %v4337, 2
        %v4339 = vadd.f32 %v4337, %v4338
        %v4340 = vrot.slane %v4339, 1
        %v4341 = vadd.f32 %v4339, %v4340
        %v4342 = vadd.f32 %v4334, 0.0
        %v4343 = vadd.f32 %v4341, 0.0
        %v4346 = vrot.slane %v4325, 4
        %v4347 = vrot.slane %v4326, 4
        %v4350 = vsel %vm4327, %v4346, 0.0
        %v4351 = vrot.slane %v4350, 4
        %v4352 = vadd.f32 %v4350, %v4351
        %v4353 = vrot.slane %v4352, 2
        %v4354 = vadd.f32 %v4352, %v4353
        %v4355 = vrot.slane %v4354, 1
        %v4356 = vadd.f32 %v4354, %v4355
        %v4357 = vsel %vm4327, %v4347, 0.0
        %v4358 = vrot.slane %v4357, 4
        %v4359 = vadd.f32 %v4357, %v4358
        %v4360 = vrot.slane %v4359, 2
        %v4361 = vadd.f32 %v4359, %v4360
        %v4362 = vrot.slane %v4361, 1
        %v4363 = vadd.f32 %v4361, %v4362
        %v4364 = vadd.f32 %v4342, %v4356
        %v4365 = vadd.f32 %v4343, %v4363
        %v4366 = vmul.f32 %v4364, 0.25
        %v4367 = vmul.f32 %v4365, 0.25
        %v4370 = vrot.slane %v4367, 7
        %vm4371 = vcmask 1040384
        %v4372 = vsel %vm4371, %v4366, %v4370
        %v4374 = vlaneseq
        %vm4375 = vcmp.ge.s32.totalorder %v4374, 0
        %vm4376 = vcmp.lt.s32.totalorder %v4374, 256
        %vm4377 = vmand %vm4375, %vm4376
        %4378 = vst.msk [vmem:[#allocation8] ss:$2 sm:$0x3] %vm4377, %v4372
        %s4379 = scalar_lea.vmem %s532, 144
        %v4380 = vld [vmem:[%s4379] sm:$0xf]
        %v4381 = vld [vmem:[%s4379 + $0x4] sm:$0xf]
        %v4382 = vld [vmem:[%s4379 + $0x8] sm:$0xf]
        %v4383 = vld [vmem:[%s4379 + $0xc] sm:$0xf]
        %v4384 = vld [vmem:[%s4379 + $0x10] sm:$0xf]
        %v4385 = vld [vmem:[%s4379 + $0x14] sm:$0xf]
        %v4386 = vld [vmem:[%s4379 + $0x18] sm:$0xf]
        %v4387 = vld [vmem:[%s4379 + $0x1c] sm:$0xf]
        %v4388 = vld [vmem:[%s4379 + $0x20] sm:$0xf]
        %v4389 = vld [vmem:[%s4379 + $0x24] sm:$0xf]
        %v4390 = vld [vmem:[%s4379 + $0x28] sm:$0xf]
        %v4391 = vld [vmem:[%s4379 + $0x2c] sm:$0xf]
        %v4392 = vld [vmem:[%s4379 + $0x30] sm:$0xf]
        %v4393 = vld [vmem:[%s4379 + $0x34] sm:$0xf]
        %v4394 = vld [vmem:[%s4379 + $0x38] sm:$0xf]
        %v4395 = vld [vmem:[%s4379 + $0x3c] sm:$0xf]
        %v4396 = vld [vmem:[%s4379 + $0x40] sm:$0xf]
        %v4397 = vld [vmem:[%s4379 + $0x44] sm:$0xf]
        %v4398 = vld [vmem:[%s4379 + $0x48] sm:$0xf]
        %v4399 = vld [vmem:[%s4379 + $0x4c] sm:$0xf]
        %v4400 = vld [vmem:[%s4379 + $0x50] sm:$0xf]
        %v4401 = vld [vmem:[%s4379 + $0x54] sm:$0xf]
        %v4402 = vld [vmem:[%s4379 + $0x58] sm:$0xf]
        %v4403 = vld [vmem:[%s4379 + $0x5c] sm:$0xf]
        %v4404 = vld [vmem:[%s4379 + $0x60] sm:$0xf]
        %v4405 = vld [vmem:[%s4379 + $0x64] sm:$0xf]
        %v4406 = vld [vmem:[%s4379 + $0x68] sm:$0xf]
        %v4407 = vld [vmem:[%s4379 + $0x6c] sm:$0xf]
        %v4408 = vld [vmem:[%s4379 + $0x70] sm:$0xf]
        %v4409 = vld [vmem:[%s4379 + $0x74] sm:$0xf]
        %v4410 = vld [vmem:[%s4379 + $0x78] sm:$0xf]
        %v4411 = vld [vmem:[%s4379 + $0x7c] sm:$0xf]
        %v4412 = vld [vmem:[%s4379 + $0x80] sm:$0xf]
        %v4413 = vld [vmem:[%s4379 + $0x84] sm:$0xf]
        %v4414 = vld [vmem:[%s4379 + $0x88] sm:$0xf]
        %v4415 = vld [vmem:[%s4379 + $0x8c] sm:$0xf]
        %v4416 = vld [vmem:[%s2] sm:$0xf]
        %v4417 = vld [vmem:[%s2 + $0x4] sm:$0xf]
        %v4418 = vld [vmem:[%s2 + $0x8] sm:$0xf]
        %v4419 = vld [vmem:[%s2 + $0xc] sm:$0xf]
        %v4420 = vld [vmem:[%s3] sm:$0x1]
        %v4422 = vperm.slane %v4420, 0
        %v4460 = vunpack.c.l.b16 %v4380
        %v4461 = vunpack.c.l.b16 %v4381
        %v4462 = vunpack.c.l.b16 %v4382
        %v4463 = vunpack.c.l.b16 %v4383
        %v4464 = vunpack.c.l.b16 %v4384
        %v4465 = vunpack.c.l.b16 %v4385
        %v4466 = vunpack.c.l.b16 %v4386
        %v4467 = vunpack.c.l.b16 %v4387
        %v4468 = vunpack.c.l.b16 %v4388
        %v4469 = vunpack.c.l.b16 %v4389
        %v4470 = vunpack.c.l.b16 %v4390
        %v4471 = vunpack.c.l.b16 %v4391
        %v4472 = vunpack.c.l.b16 %v4392
        %v4473 = vunpack.c.l.b16 %v4393
        %v4474 = vunpack.c.l.b16 %v4394
        %v4475 = vunpack.c.l.b16 %v4395
        %v4476 = vunpack.c.l.b16 %v4396
        %v4477 = vunpack.c.l.b16 %v4397
        %v4478 = vunpack.c.l.b16 %v4398
        %v4479 = vunpack.c.l.b16 %v4399
        %v4480 = vunpack.c.l.b16 %v4400
        %v4481 = vunpack.c.l.b16 %v4401
        %v4482 = vunpack.c.l.b16 %v4402
        %v4483 = vunpack.c.l.b16 %v4403
        %v4484 = vunpack.c.l.b16 %v4404
        %v4485 = vunpack.c.l.b16 %v4405
        %v4486 = vunpack.c.l.b16 %v4406
        %v4487 = vunpack.c.l.b16 %v4407
        %v4488 = vunpack.c.l.b16 %v4408
        %v4489 = vunpack.c.l.b16 %v4409
        %v4490 = vunpack.c.l.b16 %v4410
        %v4491 = vunpack.c.l.b16 %v4411
        %v4492 = vunpack.c.l.b16 %v4412
        %v4493 = vunpack.c.l.b16 %v4413
        %v4494 = vunpack.c.l.b16 %v4414
        %v4495 = vunpack.c.l.b16 %v4415
        %v4496 = vpack.c.b16 %v4461, %v4460
        %v4497 = vpack.c.b16 %v4463, %v4462
        %v4498 = vpack.c.b16 %v4465, %v4464
        %v4499 = vpack.c.b16 %v4467, %v4466
        %v4500 = vpack.c.b16 %v4469, %v4468
        %v4501 = vpack.c.b16 %v4471, %v4470
        %v4502 = vpack.c.b16 %v4473, %v4472
        %v4503 = vpack.c.b16 %v4475, %v4474
        %v4504 = vpack.c.b16 %v4477, %v4476
        %v4505 = vpack.c.b16 %v4479, %v4478
        %v4506 = vpack.c.b16 %v4481, %v4480
        %v4507 = vpack.c.b16 %v4483, %v4482
        %v4508 = vpack.c.b16 %v4485, %v4484
        %v4509 = vpack.c.b16 %v4487, %v4486
        %v4510 = vpack.c.b16 %v4489, %v4488
        %v4511 = vpack.c.b16 %v4491, %v4490
        %v4512 = vpack.c.b16 %v4493, %v4492
        %v4513 = vpack.c.b16 %v4495, %v4494
        %v4518 = vunpack.c.l.b16 %v4416
        %v4519 = vunpack.c.l.b16 %v4417
        %v4520 = vunpack.c.l.b16 %v4418
        %v4521 = vunpack.c.l.b16 %v4419
        %v4522 = vpack.c.b16 %v4519, %v4518
        %v4523 = vpack.c.b16 %v4521, %v4520
        %v4527 = vsel %vm801, %v4496, 0
        %v4530 = vsel %vm801, %v4497, 0
        %v4533 = vsel %vm801, %v4498, 0
        %v4536 = vsel %vm801, %v4499, 0
        %v4539 = vsel %vm801, %v4500, 0
        %v4542 = vsel %vm801, %v4501, 0
        %v4545 = vsel %vm801, %v4502, 0
        %v4548 = vsel %vm801, %v4503, 0
        %v4551 = vsel %vm801, %v4504, 0
        %v4554 = vsel %vm801, %v4505, 0
        %v4557 = vsel %vm801, %v4506, 0
        %v4560 = vsel %vm801, %v4507, 0
        %v4563 = vsel %vm801, %v4508, 0
        %v4566 = vsel %vm801, %v4509, 0
        %v4569 = vsel %vm801, %v4510, 0
        %v4572 = vsel %vm801, %v4511, 0
        %v4575 = vsel %vm801, %v4512, 0
        %v4578 = vsel %vm801, %v4513, 0
        %4580 = vmatpush.bf16.msra.mxu0 0
        %4581 = vmatpush.bf16.msra.mxu0 0
        %4582 = vmatpush.bf16.msra.mxu0 0
        %4583 = vmatpush.bf16.msra.mxu0 0
        %4584 = vmatpush.bf16.msra.mxu0 0
        %4585 = vmatpush.bf16.msra.mxu0 0
        %4586 = vmatpush.bf16.msra.mxu0 %v4523
        %4587 = vmatpush.bf16.msra.mxu0 %v4522
        %4588 = vmatmul.bf16.gmra.mxu0 %v4527
        %v4589 = vpop.f32.mrf.mxu0
        %v4590 = vadd.f32 %v4422, %v4589
        %v4591 = vpop.f32.mrf.mxu0
        %v4592 = vadd.f32 %v4422, %v4591
        %4593 = vmatmul.bf16.gmra.mxu0 %v4530
        %v4594 = vpop.f32.mrf.mxu0
        %v4595 = vadd.f32 %v4422, %v4594
        %v4596 = vpop.f32.mrf.mxu0
        %v4597 = vadd.f32 %v4422, %v4596
        %4598 = vmatmul.bf16.gmra.mxu0 %v4533
        %v4599 = vpop.f32.mrf.mxu0
        %v4600 = vadd.f32 %v4422, %v4599
        %v4601 = vpop.f32.mrf.mxu0
        %v4602 = vadd.f32 %v4422, %v4601
        %4603 = vmatmul.bf16.gmra.mxu0 %v4536
        %v4604 = vpop.f32.mrf.mxu0
        %v4605 = vadd.f32 %v4422, %v4604
        %v4606 = vpop.f32.mrf.mxu0
        %v4607 = vadd.f32 %v4422, %v4606
        %4608 = vmatmul.bf16.gmra.mxu0 %v4539
        %v4609 = vpop.f32.mrf.mxu0
        %v4610 = vadd.f32 %v4422, %v4609
        %v4611 = vpop.f32.mrf.mxu0
        %v4612 = vadd.f32 %v4422, %v4611
        %4613 = vmatmul.bf16.gmra.mxu0 %v4542
        %v4614 = vpop.f32.mrf.mxu0
        %v4615 = vadd.f32 %v4422, %v4614
        %v4616 = vpop.f32.mrf.mxu0
        %v4617 = vadd.f32 %v4422, %v4616
        %4618 = vmatmul.bf16.gmra.mxu0 %v4545
        %v4619 = vpop.f32.mrf.mxu0
        %v4620 = vadd.f32 %v4422, %v4619
        %v4621 = vpop.f32.mrf.mxu0
        %v4622 = vadd.f32 %v4422, %v4621
        %4623 = vmatmul.bf16.gmra.mxu0 %v4548
        %v4624 = vpop.f32.mrf.mxu0
        %v4625 = vadd.f32 %v4422, %v4624
        %v4626 = vpop.f32.mrf.mxu0
        %v4627 = vadd.f32 %v4422, %v4626
        %4628 = vmatmul.bf16.gmra.mxu0 %v4551
        %v4629 = vpop.f32.mrf.mxu0
        %v4630 = vadd.f32 %v4422, %v4629
        %v4631 = vpop.f32.mrf.mxu0
        %v4632 = vadd.f32 %v4422, %v4631
        %4633 = vmatmul.bf16.gmra.mxu0 %v4554
        %v4634 = vpop.f32.mrf.mxu0
        %v4635 = vadd.f32 %v4422, %v4634
        %v4636 = vpop.f32.mrf.mxu0
        %v4637 = vadd.f32 %v4422, %v4636
        %4638 = vmatmul.bf16.gmra.mxu0 %v4557
        %v4639 = vpop.f32.mrf.mxu0
        %v4640 = vadd.f32 %v4422, %v4639
        %v4641 = vpop.f32.mrf.mxu0
        %v4642 = vadd.f32 %v4422, %v4641
        %4643 = vmatmul.bf16.gmra.mxu0 %v4560
        %v4644 = vpop.f32.mrf.mxu0
        %v4645 = vadd.f32 %v4422, %v4644
        %v4646 = vpop.f32.mrf.mxu0
        %v4647 = vadd.f32 %v4422, %v4646
        %4648 = vmatmul.bf16.gmra.mxu0 %v4563
        %v4649 = vpop.f32.mrf.mxu0
        %v4650 = vadd.f32 %v4422, %v4649
        %v4651 = vpop.f32.mrf.mxu0
        %v4652 = vadd.f32 %v4422, %v4651
        %4653 = vmatmul.bf16.gmra.mxu0 %v4566
        %v4654 = vpop.f32.mrf.mxu0
        %v4655 = vadd.f32 %v4422, %v4654
        %v4656 = vpop.f32.mrf.mxu0
        %v4657 = vadd.f32 %v4422, %v4656
        %4658 = vmatmul.bf16.gmra.mxu0 %v4569
        %v4659 = vpop.f32.mrf.mxu0
        %v4660 = vadd.f32 %v4422, %v4659
        %v4661 = vpop.f32.mrf.mxu0
        %v4662 = vadd.f32 %v4422, %v4661
        %4663 = vmatmul.bf16.gmra.mxu0 %v4572
        %v4664 = vpop.f32.mrf.mxu0
        %v4665 = vadd.f32 %v4422, %v4664
        %v4666 = vpop.f32.mrf.mxu0
        %v4667 = vadd.f32 %v4422, %v4666
        %4668 = vmatmul.bf16.gmra.mxu0 %v4575
        %v4669 = vpop.f32.mrf.mxu0
        %v4670 = vadd.f32 %v4422, %v4669
        %v4671 = vpop.f32.mrf.mxu0
        %v4672 = vadd.f32 %v4422, %v4671
        %4673 = vmatmul.bf16.gmra.mxu0 %v4578
        %v4674 = vpop.f32.mrf.mxu0
        %v4675 = vadd.f32 %v4422, %v4674
        %v4676 = vpop.f32.mrf.mxu0
        %v4677 = vadd.f32 %v4422, %v4676
        %4678 = vdwg.mxu0
        %v4679 = vmax.f32 %v4590, 0.0
        %v4680 = vmax.f32 %v4592, 0.0
        %v4681 = vmax.f32 %v4595, 0.0
        %v4682 = vmax.f32 %v4597, 0.0
        %v4683 = vmax.f32 %v4600, 0.0
        %v4684 = vmax.f32 %v4602, 0.0
        %v4685 = vmax.f32 %v4605, 0.0
        %v4686 = vmax.f32 %v4607, 0.0
        %v4687 = vmax.f32 %v4610, 0.0
        %v4688 = vmax.f32 %v4612, 0.0
        %v4689 = vmax.f32 %v4615, 0.0
        %v4690 = vmax.f32 %v4617, 0.0
        %v4691 = vmax.f32 %v4620, 0.0
        %v4692 = vmax.f32 %v4622, 0.0
        %v4693 = vmax.f32 %v4625, 0.0
        %v4694 = vmax.f32 %v4627, 0.0
        %v4695 = vmax.f32 %v4630, 0.0
        %v4696 = vmax.f32 %v4632, 0.0
        %v4697 = vmax.f32 %v4635, 0.0
        %v4698 = vmax.f32 %v4637, 0.0
        %v4699 = vmax.f32 %v4640, 0.0
        %v4700 = vmax.f32 %v4642, 0.0
        %v4701 = vmax.f32 %v4645, 0.0
        %v4702 = vmax.f32 %v4647, 0.0
        %v4703 = vmax.f32 %v4650, 0.0
        %v4704 = vmax.f32 %v4652, 0.0
        %v4705 = vmax.f32 %v4655, 0.0
        %v4706 = vmax.f32 %v4657, 0.0
        %v4707 = vmax.f32 %v4660, 0.0
        %v4708 = vmax.f32 %v4662, 0.0
        %v4709 = vmax.f32 %v4665, 0.0
        %v4710 = vmax.f32 %v4667, 0.0
        %v4711 = vmax.f32 %v4670, 0.0
        %v4712 = vmax.f32 %v4672, 0.0
        %v4713 = vmax.f32 %v4675, 0.0
        %v4714 = vmax.f32 %v4677, 0.0
        %4715 = vst.msk [vmem:[#allocation2] sm:$0xff] %vm801, %v4679
        %4716 = vst.msk [vmem:[#allocation2 + $0x8] sm:$0xff] %vm801, %v4680
        %4717 = vst.msk [vmem:[#allocation2 + $0x10] sm:$0xff] %vm801, %v4681
        %4718 = vst.msk [vmem:[#allocation2 + $0x18] sm:$0xff] %vm801, %v4682
        %4719 = vst.msk [vmem:[#allocation2 + $0x20] sm:$0xff] %vm801, %v4683
        %4720 = vst.msk [vmem:[#allocation2 + $0x28] sm:$0xff] %vm801, %v4684
        %4721 = vst.msk [vmem:[#allocation2 + $0x30] sm:$0xff] %vm801, %v4685
        %4722 = vst.msk [vmem:[#allocation2 + $0x38] sm:$0xff] %vm801, %v4686
        %4723 = vst.msk [vmem:[#allocation2 + $0x40] sm:$0xff] %vm801, %v4687
        %4724 = vst.msk [vmem:[#allocation2 + $0x48] sm:$0xff] %vm801, %v4688
        %4725 = vst.msk [vmem:[#allocation2 + $0x50] sm:$0xff] %vm801, %v4689
        %4726 = vst.msk [vmem:[#allocation2 + $0x58] sm:$0xff] %vm801, %v4690
        %4727 = vst.msk [vmem:[#allocation2 + $0x60] sm:$0xff] %vm801, %v4691
        %4728 = vst.msk [vmem:[#allocation2 + $0x68] sm:$0xff] %vm801, %v4692
        %4729 = vst.msk [vmem:[#allocation2 + $0x70] sm:$0xff] %vm801, %v4693
        %4730 = vst.msk [vmem:[#allocation2 + $0x78] sm:$0xff] %vm801, %v4694
        %4731 = vst.msk [vmem:[#allocation2 + $0x80] sm:$0xff] %vm801, %v4695
        %4732 = vst.msk [vmem:[#allocation2 + $0x88] sm:$0xff] %vm801, %v4696
        %4733 = vst.msk [vmem:[#allocation2 + $0x90] sm:$0xff] %vm801, %v4697
        %4734 = vst.msk [vmem:[#allocation2 + $0x98] sm:$0xff] %vm801, %v4698
        %4735 = vst.msk [vmem:[#allocation2 + $0xa0] sm:$0xff] %vm801, %v4699
        %4736 = vst.msk [vmem:[#allocation2 + $0xa8] sm:$0xff] %vm801, %v4700
        %4737 = vst.msk [vmem:[#allocation2 + $0xb0] sm:$0xff] %vm801, %v4701
        %4738 = vst.msk [vmem:[#allocation2 + $0xb8] sm:$0xff] %vm801, %v4702
        %4739 = vst.msk [vmem:[#allocation2 + $0xc0] sm:$0xff] %vm801, %v4703
        %4740 = vst.msk [vmem:[#allocation2 + $0xc8] sm:$0xff] %vm801, %v4704
        %4741 = vst.msk [vmem:[#allocation2 + $0xd0] sm:$0xff] %vm801, %v4705
        %4742 = vst.msk [vmem:[#allocation2 + $0xd8] sm:$0xff] %vm801, %v4706
        %4743 = vst.msk [vmem:[#allocation2 + $0xe0] sm:$0xff] %vm801, %v4707
        %4744 = vst.msk [vmem:[#allocation2 + $0xe8] sm:$0xff] %vm801, %v4708
        %4745 = vst.msk [vmem:[#allocation2 + $0xf0] sm:$0xff] %vm801, %v4709
        %4746 = vst.msk [vmem:[#allocation2 + $0xf8] sm:$0xff] %vm801, %v4710
        %4747 = vst.msk [vmem:[#allocation2 + $0x100] sm:$0xff] %vm801, %v4711
        %4748 = vst.msk [vmem:[#allocation2 + $0x108] sm:$0xff] %vm801, %v4712
        %4749 = vst.msk [vmem:[#allocation2 + $0x110] sm:$0xff] %vm801, %v4713
        %4750 = vst.msk [vmem:[#allocation2 + $0x118] sm:$0xff] %vm801, %v4714
        %v4751 = vld [vmem:[#allocation2] ss:$2 sm:$0xff]
        %v4752 = vld [vmem:[%s1028] ss:$2 sm:$0xff]
        %v4753 = vmax.f32 %v4751, %v4752
        %v4754 = vld [vmem:[%s1031] ss:$2 sm:$0xff]
        %v4755 = vld [vmem:[%s1033] ss:$2 sm:$0xff]
        %v4756 = vmax.f32 %v4754, %v4755
        %v4757 = vmax.f32 %v4753, %v4756
        %v4758 = vpack.c.bf16 %v4757, %v4757
        %v4760 = vshrl.u32 %v4758, 16
        %v4762 = vrot.slane %v4760, 6
        %v4763 = vshll.u32 %v4758, 16
        %v4765 = vrot.slane %v4763, 7
        %v4766 = vor.u32 %v4762, %v4765
        %v4767 = vrot.slane %v4766, 4
        %v4770 = vld [vmem:[#allocation5 + $0x4] sm:$0xe]
        %v4771 = vsel %vm1050, %v4766, %v4770
        %4772 = vst [vmem:[#allocation5 + $0x4] sm:$0xe] %v4771
        %v4773 = vld [vmem:[#allocation5 + $0x8] sm:$0x3]
        %v4774 = vsel %vm542, %v4767, %v4773
        %4775 = vst [vmem:[#allocation5 + $0x8] sm:$0x3] %v4774
        %v4776 = vld [vmem:[%s1057] ss:$2 sm:$0xff]
        %v4777 = vld [vmem:[%s1059] ss:$2 sm:$0xff]
        %v4778 = vmax.f32 %v4776, %v4777
        %v4779 = vld [vmem:[%s1062] ss:$2 sm:$0xff]
        %v4780 = vld [vmem:[%s1064] ss:$2 sm:$0xff]
        %v4781 = vmax.f32 %v4779, %v4780
        %v4782 = vmax.f32 %v4778, %v4781
        %v4783 = vpack.c.bf16 %v4782, %v4782
        %v4785 = vshrl.u32 %v4783, 16
        %v4787 = vrot.slane %v4785, 5
        %v4788 = vshll.u32 %v4783, 16
        %v4790 = vrot.slane %v4788, 6
        %v4791 = vor.u32 %v4787, %v4790
        %v4792 = vrot.slane %v4791, 4
        %v4795 = vld [vmem:[#allocation5 + $0x8] sm:$0xc]
        %v4796 = vsel %vm1080, %v4791, %v4795
        %4797 = vst [vmem:[#allocation5 + $0x8] sm:$0xc] %v4796
        %v4798 = vld [vmem:[#allocation5 + $0xc] sm:$0x7]
        %v4799 = vsel %vm1085, %v4792, %v4798
        %4800 = vst [vmem:[#allocation5 + $0xc] sm:$0x7] %v4799
        %v4801 = vld [vmem:[%s1089] ss:$2 sm:$0xff]
        %v4802 = vld [vmem:[%s1091] ss:$2 sm:$0xff]
        %v4803 = vmax.f32 %v4801, %v4802
        %v4804 = vld [vmem:[%s1094] ss:$2 sm:$0xff]
        %v4805 = vld [vmem:[%s1096] ss:$2 sm:$0xff]
        %v4806 = vmax.f32 %v4804, %v4805
        %v4807 = vmax.f32 %v4803, %v4806
        %v4808 = vpack.c.bf16 %v4807, %v4807
        %v4810 = vshll.u32 %v4808, 16
        %v4812 = vrot.slane %v4810, 5
        %v4813 = vshrl.u32 %v4808, 16
        %v4815 = vrot.slane %v4813, 4
        %v4816 = vor.u32 %v4815, %v4812
        %v4817 = vrot.slane %v4816, 4
        %v4820 = vld [vmem:[#allocation5 + $0xc] sm:$0x8]
        %v4821 = vsel %vm560, %v4812, %v4820
        %4822 = vst [vmem:[#allocation5 + $0xc] sm:$0x8] %v4821
        %v4823 = vld [vmem:[#allocation5 + $0x10] sm:$0xf]
        %v4824 = vsel %vm1115, %v4817, %v4823
        %4825 = vst [vmem:[#allocation5 + $0x10] sm:$0xf] %v4824
        %v4826 = vld [vmem:[%s1119] ss:$2 sm:$0xff]
        %v4827 = vld [vmem:[%s1121] ss:$2 sm:$0xff]
        %v4828 = vmax.f32 %v4826, %v4827
        %v4829 = vld [vmem:[%s1124] ss:$2 sm:$0xff]
        %v4830 = vld [vmem:[%s1126] ss:$2 sm:$0xff]
        %v4831 = vmax.f32 %v4829, %v4830
        %v4832 = vmax.f32 %v4828, %v4831
        %v4833 = vpack.c.bf16 %v4832, %v4832
        %v4835 = vshrl.u32 %v4833, 16
        %v4837 = vrot.slane %v4835, 7
        %v4838 = vshll.u32 %v4833, 16
        %v4840 = vor.u32 %v4837, %v4838
        %v4841 = vrot.slane %v4837, 4
        %v4844 = vld [vmem:[#allocation5 + $0x14] sm:$0xf]
        %v4845 = vsel %vm589, %v4840, %v4844
        %4846 = vst [vmem:[#allocation5 + $0x14] sm:$0xf] %v4845
        %v4847 = vld [vmem:[#allocation5 + $0x18] sm:$0x1]
        %v4848 = vsel %vm566, %v4841, %v4847
        %4849 = vst [vmem:[#allocation5 + $0x18] sm:$0x1] %v4848
        %v4850 = vld [vmem:[%s1147] ss:$2 sm:$0xff]
        %v4851 = vld [vmem:[%s1149] ss:$2 sm:$0xff]
        %v4852 = vmax.f32 %v4850, %v4851
        %v4853 = vld [vmem:[%s1152] ss:$2 sm:$0xff]
        %v4854 = vld [vmem:[%s1154] ss:$2 sm:$0xff]
        %v4855 = vmax.f32 %v4853, %v4854
        %v4856 = vmax.f32 %v4852, %v4855
        %v4857 = vpack.c.bf16 %v4856, %v4856
        %v4859 = vshrl.u32 %v4857, 16
        %v4861 = vrot.slane %v4859, 6
        %v4862 = vshll.u32 %v4857, 16
        %v4864 = vrot.slane %v4862, 7
        %v4865 = vor.u32 %v4861, %v4864
        %v4866 = vrot.slane %v4865, 4
        %v4869 = vld [vmem:[#allocation5 + $0x18] sm:$0xe]
        %v4870 = vsel %vm1050, %v4865, %v4869
        %4871 = vst [vmem:[#allocation5 + $0x18] sm:$0xe] %v4870
        %v4872 = vld [vmem:[#allocation5 + $0x1c] sm:$0x3]
        %v4873 = vsel %vm542, %v4866, %v4872
        %4874 = vst [vmem:[#allocation5 + $0x1c] sm:$0x3] %v4873
        %v4875 = vld [vmem:[%s1176] ss:$2 sm:$0xff]
        %v4876 = vld [vmem:[%s1178] ss:$2 sm:$0xff]
        %v4877 = vmax.f32 %v4875, %v4876
        %v4878 = vld [vmem:[%s1181] ss:$2 sm:$0xff]
        %v4879 = vld [vmem:[%s1183] ss:$2 sm:$0xff]
        %v4880 = vmax.f32 %v4878, %v4879
        %v4881 = vmax.f32 %v4877, %v4880
        %v4882 = vpack.c.bf16 %v4881, %v4881
        %v4884 = vshrl.u32 %v4882, 16
        %v4886 = vrot.slane %v4884, 5
        %v4887 = vshll.u32 %v4882, 16
        %v4889 = vrot.slane %v4887, 6
        %v4890 = vor.u32 %v4886, %v4889
        %v4891 = vrot.slane %v4890, 4
        %v4894 = vld [vmem:[#allocation5 + $0x1c] sm:$0xc]
        %v4895 = vsel %vm1080, %v4890, %v4894
        %4896 = vst [vmem:[#allocation5 + $0x1c] sm:$0xc] %v4895
        %v4897 = vld [vmem:[#allocation5 + $0x20] sm:$0x7]
        %v4898 = vsel %vm1085, %v4891, %v4897
        %4899 = vst [vmem:[#allocation5 + $0x20] sm:$0x7] %v4898
        %v4900 = vld [vmem:[%s1205] ss:$2 sm:$0xff]
        %v4901 = vld [vmem:[%s1207] ss:$2 sm:$0xff]
        %v4902 = vmax.f32 %v4900, %v4901
        %v4903 = vld [vmem:[%s1210] ss:$2 sm:$0xff]
        %v4904 = vld [vmem:[%s1212] ss:$2 sm:$0xff]
        %v4905 = vmax.f32 %v4903, %v4904
        %v4906 = vmax.f32 %v4902, %v4905
        %v4907 = vpack.c.bf16 %v4906, %v4906
        %v4909 = vshll.u32 %v4907, 16
        %v4911 = vrot.slane %v4909, 5
        %v4912 = vshrl.u32 %v4907, 16
        %v4914 = vrot.slane %v4912, 4
        %v4915 = vor.u32 %v4914, %v4911
        %v4916 = vrot.slane %v4915, 4
        %v4919 = vld [vmem:[#allocation5 + $0x20] sm:$0x8]
        %v4920 = vsel %vm560, %v4911, %v4919
        %4921 = vst [vmem:[#allocation5 + $0x20] sm:$0x8] %v4920
        %v4922 = vld [vmem:[#allocation5 + $0x24] sm:$0xf]
        %v4923 = vsel %vm1115, %v4916, %v4922
        %4924 = vst [vmem:[#allocation5 + $0x24] sm:$0xf] %v4923
        %v4925 = vld [vmem:[%s1234] ss:$2 sm:$0xff]
        %v4926 = vld [vmem:[%s1236] ss:$2 sm:$0xff]
        %v4927 = vmax.f32 %v4925, %v4926
        %v4928 = vld [vmem:[%s1239] ss:$2 sm:$0xff]
        %v4929 = vld [vmem:[%s1241] ss:$2 sm:$0xff]
        %v4930 = vmax.f32 %v4928, %v4929
        %v4931 = vmax.f32 %v4927, %v4930
        %v4932 = vpack.c.bf16 %v4931, %v4931
        %v4934 = vshrl.u32 %v4932, 16
        %v4936 = vrot.slane %v4934, 7
        %v4937 = vshll.u32 %v4932, 16
        %v4939 = vor.u32 %v4936, %v4937
        %v4940 = vrot.slane %v4936, 4
        %v4943 = vld [vmem:[#allocation5 + $0x28] sm:$0xf]
        %v4944 = vsel %vm589, %v4939, %v4943
        %4945 = vst [vmem:[#allocation5 + $0x28] sm:$0xf] %v4944
        %v4946 = vld [vmem:[#allocation5 + $0x2c] sm:$0x1]
        %v4947 = vsel %vm566, %v4940, %v4946
        %4948 = vst [vmem:[#allocation5 + $0x2c] sm:$0x1] %v4947
        %v4949 = vld [vmem:[#allocation5] sm:$0xf]
        %v4950 = vld [vmem:[#allocation5 + $0x4] sm:$0xf]
        %v4951 = vld [vmem:[#allocation5 + $0x8] sm:$0xf]
        %v4952 = vld [vmem:[#allocation5 + $0xc] sm:$0xf]
        %v4953 = vld [vmem:[#allocation5 + $0x10] sm:$0xf]
        %v4954 = vld [vmem:[#allocation5 + $0x14] sm:$0xf]
        %v4955 = vld [vmem:[#allocation5 + $0x18] sm:$0xf]
        %v4956 = vld [vmem:[#allocation5 + $0x1c] sm:$0xf]
        %v4957 = vld [vmem:[#allocation5 + $0x20] sm:$0xf]
        %v4958 = vld [vmem:[#allocation5 + $0x24] sm:$0xf]
        %v4959 = vld [vmem:[%s4] sm:$0xf]
        %v4960 = vld [vmem:[%s4 + $0x4] sm:$0xf]
        %v4961 = vld [vmem:[%s4 + $0x8] sm:$0xf]
        %v4962 = vld [vmem:[%s4 + $0xc] sm:$0xf]
        %v4963 = vld [vmem:[#allocation5 + $0x28] sm:$0x1]
        %v4964 = vld [vmem:[%s1277] sm:$0xf]
        %v4965 = vld [vmem:[%s1277 + $0x4] sm:$0xf]
        %v4966 = vld [vmem:[%s1277 + $0x8] sm:$0xf]
        %v4967 = vld [vmem:[%s1277 + $0xc] sm:$0xf]
        %v4979 = vunpack.c.l.b16 %v4949
        %v4980 = vunpack.c.l.b16 %v4950
        %v4981 = vunpack.c.l.b16 %v4951
        %v4982 = vunpack.c.l.b16 %v4952
        %v4983 = vunpack.c.l.b16 %v4953
        %v4984 = vunpack.c.l.b16 %v4954
        %v4985 = vunpack.c.l.b16 %v4955
        %v4986 = vunpack.c.l.b16 %v4956
        %v4987 = vunpack.c.l.b16 %v4957
        %v4988 = vunpack.c.l.b16 %v4958
        %v4989 = vunpack.c.l.b16 %v4963
        %v4990 = vpack.c.b16 %v4980, %v4979
        %v4991 = vpack.c.b16 %v4982, %v4981
        %v4992 = vpack.c.b16 %v4984, %v4983
        %v4993 = vpack.c.b16 %v4986, %v4985
        %v4994 = vpack.c.b16 %v4988, %v4987
        %v4995 = vpack.c.b16 %v4989, %v4989
        %v4997 = vshrl.u32 %v4990, 16
        %v4999 = vshll.u32 %v4990, 16
        %v5001 = vrot.slane %v4999, 1
        %v5002 = vor.u32 %v4997, %v5001
        %v5004 = vshll.u32 %v4991, 16
        %v5006 = vrot.slane %v5004, 1
        %v5007 = vsel %vm1310, %v5002, %v5006
        %v5008 = vshrl.u32 %v4991, 16
        %v5010 = vor.u32 %v5008, %v5006
        %v5012 = vshll.u32 %v4992, 16
        %v5014 = vrot.slane %v5012, 1
        %v5015 = vsel %vm1310, %v5010, %v5014
        %v5016 = vshrl.u32 %v4992, 16
        %v5018 = vor.u32 %v5016, %v5014
        %v5020 = vshll.u32 %v4993, 16
        %v5022 = vrot.slane %v5020, 1
        %v5023 = vsel %vm1310, %v5018, %v5022
        %v5024 = vshrl.u32 %v4993, 16
        %v5026 = vor.u32 %v5024, %v5022
        %v5028 = vshll.u32 %v4994, 16
        %v5030 = vrot.slane %v5028, 1
        %v5031 = vsel %vm1310, %v5026, %v5030
        %v5032 = vshrl.u32 %v4994, 16
        %v5034 = vor.u32 %v5032, %v5030
        %v5036 = vshll.u32 %v4995, 16
        %v5038 = vrot.slane %v5036, 1
        %v5039 = vsel %vm1310, %v5034, %v5038
        %v5044 = vunpack.c.l.b16 %v4964
        %v5045 = vunpack.c.l.b16 %v4965
        %v5046 = vunpack.c.l.b16 %v4966
        %v5047 = vunpack.c.l.b16 %v4967
        %v5048 = vpack.c.b16 %v5045, %v5044
        %v5049 = vpack.c.b16 %v5047, %v5046
        %v5053 = vsel %vm801, %v5007, 0
        %v5056 = vsel %vm801, %v5015, 0
        %v5059 = vsel %vm801, %v5023, 0
        %v5062 = vsel %vm801, %v5031, 0
        %v5065 = vsel %vm801, %v5039, 0
        %5067 = vmatpush.bf16.msra.mxu0 0
        %5068 = vmatpush.bf16.msra.mxu0 0
        %5069 = vmatpush.bf16.msra.mxu0 0
        %5070 = vmatpush.bf16.msra.mxu0 0
        %5071 = vmatpush.bf16.msra.mxu0 0
        %5072 = vmatpush.bf16.msra.mxu0 0
        %5073 = vmatpush.bf16.msra.mxu0 %v5049
        %5074 = vmatpush.bf16.msra.mxu0 %v5048
        %5075 = vmatmul.bf16.gmra.mxu0 %v5053
        %v5076 = vpop.f32.mrf.mxu0
        %v5077 = vadd.f32 0.0, %v5076
        %v5078 = vpop.f32.mrf.mxu0
        %v5079 = vadd.f32 0.0, %v5078
        %5080 = vmatmul.bf16.gmra.mxu0 %v5056
        %v5081 = vpop.f32.mrf.mxu0
        %v5082 = vadd.f32 0.0, %v5081
        %v5083 = vpop.f32.mrf.mxu0
        %v5084 = vadd.f32 0.0, %v5083
        %5085 = vmatmul.bf16.gmra.mxu0 %v5059
        %v5086 = vpop.f32.mrf.mxu0
        %v5087 = vadd.f32 0.0, %v5086
        %v5088 = vpop.f32.mrf.mxu0
        %v5089 = vadd.f32 0.0, %v5088
        %5090 = vmatmul.bf16.gmra.mxu0 %v5062
        %v5091 = vpop.f32.mrf.mxu0
        %v5092 = vadd.f32 0.0, %v5091
        %v5093 = vpop.f32.mrf.mxu0
        %v5094 = vadd.f32 0.0, %v5093
        %5095 = vmatmul.bf16.gmra.mxu0 %v5065
        %v5096 = vpop.f32.mrf.mxu0
        %v5097 = vadd.f32 0.0, %v5096
        %v5098 = vpop.f32.mrf.mxu0
        %v5099 = vadd.f32 0.0, %v5098
        %5100 = vdwg.mxu0
        %v5105 = vunpack.c.l.b16 %v4959
        %v5106 = vunpack.c.l.b16 %v4960
        %v5107 = vunpack.c.l.b16 %v4961
        %v5108 = vunpack.c.l.b16 %v4962
        %v5109 = vpack.c.b16 %v5106, %v5105
        %v5110 = vpack.c.b16 %v5108, %v5107
        %v5113 = vsel %vm801, %v4990, 0
        %v5115 = vsel %vm801, %v4991, 0
        %v5117 = vsel %vm801, %v4992, 0
        %v5119 = vsel %vm801, %v4993, 0
        %v5121 = vsel %vm801, %v4994, 0
        %5123 = vmatpush.bf16.msra.mxu0 0
        %5124 = vmatpush.bf16.msra.mxu0 0
        %5125 = vmatpush.bf16.msra.mxu0 0
        %5126 = vmatpush.bf16.msra.mxu0 0
        %5127 = vmatpush.bf16.msra.mxu0 0
        %5128 = vmatpush.bf16.msra.mxu0 0
        %5129 = vmatpush.bf16.msra.mxu0 %v5110
        %5130 = vmatpush.bf16.msra.mxu0 %v5109
        %5131 = vmatmul.bf16.gmra.mxu0 %v5113
        %v5132 = vpop.f32.mrf.mxu0
        %v5133 = vadd.f32 %v5077, %v5132
        %v5134 = vpop.f32.mrf.mxu0
        %v5135 = vadd.f32 %v5079, %v5134
        %5136 = vmatmul.bf16.gmra.mxu0 %v5115
        %v5137 = vpop.f32.mrf.mxu0
        %v5138 = vadd.f32 %v5082, %v5137
        %v5139 = vpop.f32.mrf.mxu0
        %v5140 = vadd.f32 %v5084, %v5139
        %5141 = vmatmul.bf16.gmra.mxu0 %v5117
        %v5142 = vpop.f32.mrf.mxu0
        %v5143 = vadd.f32 %v5087, %v5142
        %v5144 = vpop.f32.mrf.mxu0
        %v5145 = vadd.f32 %v5089, %v5144
        %5146 = vmatmul.bf16.gmra.mxu0 %v5119
        %v5147 = vpop.f32.mrf.mxu0
        %v5148 = vadd.f32 %v5092, %v5147
        %v5149 = vpop.f32.mrf.mxu0
        %v5150 = vadd.f32 %v5094, %v5149
        %5151 = vmatmul.bf16.gmra.mxu0 %v5121
        %v5152 = vpop.f32.mrf.mxu0
        %v5153 = vadd.f32 %v5097, %v5152
        %v5154 = vpop.f32.mrf.mxu0
        %v5155 = vadd.f32 %v5099, %v5154
        %5156 = vdwg.mxu0
        %v5157 = vld [vmem:[#allocation5] sm:$0xe]
        %v5158 = vld [vmem:[%s1473] sm:$0xf]
        %v5159 = vld [vmem:[%s1473 + $0x4] sm:$0xf]
        %v5160 = vld [vmem:[%s1473 + $0x8] sm:$0xf]
        %v5161 = vld [vmem:[%s1473 + $0xc] sm:$0xf]
        %v5163 = vunpack.c.l.b16 %v5157
        %v5164 = vpack.c.b16 %v4980, %v5163
        %v5165 = vrot.slane %v5164, 1
        %v5166 = vrot.slane %v4991, 1
        %v5167 = vsel %vm1481, %v5165, %v5166
        %v5168 = vrot.slane %v4992, 1
        %v5169 = vsel %vm1481, %v5166, %v5168
        %v5170 = vrot.slane %v4993, 1
        %v5171 = vsel %vm1481, %v5168, %v5170
        %v5172 = vrot.slane %v4994, 1
        %v5173 = vsel %vm1481, %v5170, %v5172
        %v5174 = vrot.slane %v4995, 1
        %v5175 = vsel %vm1481, %v5172, %v5174
        %v5180 = vunpack.c.l.b16 %v5158
        %v5181 = vunpack.c.l.b16 %v5159
        %v5182 = vunpack.c.l.b16 %v5160
        %v5183 = vunpack.c.l.b16 %v5161
        %v5184 = vpack.c.b16 %v5181, %v5180
        %v5185 = vpack.c.b16 %v5183, %v5182
        %v5189 = vsel %vm801, %v5167, 0
        %v5192 = vsel %vm801, %v5169, 0
        %v5195 = vsel %vm801, %v5171, 0
        %v5198 = vsel %vm801, %v5173, 0
        %v5201 = vsel %vm801, %v5175, 0
        %5203 = vmatpush.bf16.msra.mxu0 0
        %5204 = vmatpush.bf16.msra.mxu0 0
        %5205 = vmatpush.bf16.msra.mxu0 0
        %5206 = vmatpush.bf16.msra.mxu0 0
        %5207 = vmatpush.bf16.msra.mxu0 0
        %5208 = vmatpush.bf16.msra.mxu0 0
        %5209 = vmatpush.bf16.msra.mxu0 %v5185
        %5210 = vmatpush.bf16.msra.mxu0 %v5184
        %5211 = vmatmul.bf16.gmra.mxu0 %v5189
        %v5212 = vpop.f32.mrf.mxu0
        %v5213 = vadd.f32 0.0, %v5212
        %v5214 = vpop.f32.mrf.mxu0
        %v5215 = vadd.f32 0.0, %v5214
        %5216 = vmatmul.bf16.gmra.mxu0 %v5192
        %v5217 = vpop.f32.mrf.mxu0
        %v5218 = vadd.f32 0.0, %v5217
        %v5219 = vpop.f32.mrf.mxu0
        %v5220 = vadd.f32 0.0, %v5219
        %5221 = vmatmul.bf16.gmra.mxu0 %v5195
        %v5222 = vpop.f32.mrf.mxu0
        %v5223 = vadd.f32 0.0, %v5222
        %v5224 = vpop.f32.mrf.mxu0
        %v5225 = vadd.f32 0.0, %v5224
        %5226 = vmatmul.bf16.gmra.mxu0 %v5198
        %v5227 = vpop.f32.mrf.mxu0
        %v5228 = vadd.f32 0.0, %v5227
        %v5229 = vpop.f32.mrf.mxu0
        %v5230 = vadd.f32 0.0, %v5229
        %5231 = vmatmul.bf16.gmra.mxu0 %v5201
        %v5232 = vpop.f32.mrf.mxu0
        %v5233 = vadd.f32 0.0, %v5232
        %v5234 = vpop.f32.mrf.mxu0
        %v5235 = vadd.f32 0.0, %v5234
        %5236 = vdwg.mxu0
        %v5237 = vadd.f32 %v5133, %v5213
        %v5238 = vadd.f32 %v5135, %v5215
        %v5239 = vadd.f32 %v5138, %v5218
        %v5240 = vadd.f32 %v5140, %v5220
        %v5241 = vadd.f32 %v5143, %v5223
        %v5242 = vadd.f32 %v5145, %v5225
        %v5243 = vadd.f32 %v5148, %v5228
        %v5244 = vadd.f32 %v5150, %v5230
        %v5245 = vadd.f32 %v5153, %v5233
        %v5246 = vadd.f32 %v5155, %v5235
        %v5247 = vld [vmem:[#allocation5 + $0x4] sm:$0xe]
        %v5248 = vld [vmem:[#allocation5 + $0x8] sm:$0xf]
        %v5249 = vld [vmem:[#allocation5 + $0xc] sm:$0xf]
        %v5250 = vld [vmem:[#allocation5 + $0x10] sm:$0xf]
        %v5251 = vld [vmem:[#allocation5 + $0x14] sm:$0xf]
        %v5252 = vld [vmem:[#allocation5 + $0x18] sm:$0xf]
        %v5253 = vld [vmem:[#allocation5 + $0x1c] sm:$0xf]
        %v5254 = vld [vmem:[#allocation5 + $0x20] sm:$0xf]
        %v5255 = vld [vmem:[#allocation5 + $0x24] sm:$0xf]
        %v5256 = vld [vmem:[#allocation5 + $0x28] sm:$0xf]
        %v5257 = vld [vmem:[#allocation5 + $0x2c] sm:$0x1]
        %v5258 = vld [vmem:[%s1575] sm:$0xf]
        %v5259 = vld [vmem:[%s1575 + $0x4] sm:$0xf]
        %v5260 = vld [vmem:[%s1575 + $0x8] sm:$0xf]
        %v5261 = vld [vmem:[%s1575 + $0xc] sm:$0xf]
        %v5273 = vunpack.c.l.b16 %v5247
        %v5274 = vunpack.c.l.b16 %v5248
        %v5275 = vunpack.c.l.b16 %v5249
        %v5276 = vunpack.c.l.b16 %v5250
        %v5277 = vunpack.c.l.b16 %v5251
        %v5278 = vunpack.c.l.b16 %v5252
        %v5279 = vunpack.c.l.b16 %v5253
        %v5280 = vunpack.c.l.b16 %v5254
        %v5281 = vunpack.c.l.b16 %v5255
        %v5282 = vunpack.c.l.b16 %v5256
        %v5283 = vunpack.c.l.b16 %v5257
        %v5284 = vpack.c.b16 %v5274, %v5273
        %v5285 = vpack.c.b16 %v5276, %v5275
        %v5286 = vpack.c.b16 %v5278, %v5277
        %v5287 = vpack.c.b16 %v5280, %v5279
        %v5288 = vpack.c.b16 %v5282, %v5281
        %v5289 = vpack.c.b16 %v5283, %v5283
        %v5290 = vrot.slane %v5284, 1
        %v5291 = vrot.slane %v5285, 1
        %v5292 = vsel %vm1481, %v5290, %v5291
        %v5293 = vrot.slane %v5286, 1
        %v5294 = vsel %vm1481, %v5291, %v5293
        %v5295 = vrot.slane %v5287, 1
        %v5296 = vsel %vm1481, %v5293, %v5295
        %v5297 = vrot.slane %v5288, 1
        %v5298 = vsel %vm1481, %v5295, %v5297
        %v5299 = vrot.slane %v5289, 1
        %v5300 = vsel %vm1481, %v5297, %v5299
        %v5305 = vunpack.c.l.b16 %v5258
        %v5306 = vunpack.c.l.b16 %v5259
        %v5307 = vunpack.c.l.b16 %v5260
        %v5308 = vunpack.c.l.b16 %v5261
        %v5309 = vpack.c.b16 %v5306, %v5305
        %v5310 = vpack.c.b16 %v5308, %v5307
        %v5314 = vsel %vm801, %v5292, 0
        %v5317 = vsel %vm801, %v5294, 0
        %v5320 = vsel %vm801, %v5296, 0
        %v5323 = vsel %vm801, %v5298, 0
        %v5326 = vsel %vm801, %v5300, 0
        %5328 = vmatpush.bf16.msra.mxu0 0
        %5329 = vmatpush.bf16.msra.mxu0 0
        %5330 = vmatpush.bf16.msra.mxu0 0
        %5331 = vmatpush.bf16.msra.mxu0 0
        %5332 = vmatpush.bf16.msra.mxu0 0
        %5333 = vmatpush.bf16.msra.mxu0 0
        %5334 = vmatpush.bf16.msra.mxu0 %v5310
        %5335 = vmatpush.bf16.msra.mxu0 %v5309
        %5336 = vmatmul.bf16.gmra.mxu0 %v5314
        %v5337 = vpop.f32.mrf.mxu0
        %v5338 = vadd.f32 0.0, %v5337
        %v5339 = vpop.f32.mrf.mxu0
        %v5340 = vadd.f32 0.0, %v5339
        %5341 = vmatmul.bf16.gmra.mxu0 %v5317
        %v5342 = vpop.f32.mrf.mxu0
        %v5343 = vadd.f32 0.0, %v5342
        %v5344 = vpop.f32.mrf.mxu0
        %v5345 = vadd.f32 0.0, %v5344
        %5346 = vmatmul.bf16.gmra.mxu0 %v5320
        %v5347 = vpop.f32.mrf.mxu0
        %v5348 = vadd.f32 0.0, %v5347
        %v5349 = vpop.f32.mrf.mxu0
        %v5350 = vadd.f32 0.0, %v5349
        %5351 = vmatmul.bf16.gmra.mxu0 %v5323
        %v5352 = vpop.f32.mrf.mxu0
        %v5353 = vadd.f32 0.0, %v5352
        %v5354 = vpop.f32.mrf.mxu0
        %v5355 = vadd.f32 0.0, %v5354
        %5356 = vmatmul.bf16.gmra.mxu0 %v5326
        %v5357 = vpop.f32.mrf.mxu0
        %v5358 = vadd.f32 0.0, %v5357
        %v5359 = vpop.f32.mrf.mxu0
        %v5360 = vadd.f32 0.0, %v5359
        %5361 = vdwg.mxu0
        %v5362 = vadd.f32 %v5237, %v5338
        %v5363 = vadd.f32 %v5238, %v5340
        %v5364 = vadd.f32 %v5239, %v5343
        %v5365 = vadd.f32 %v5240, %v5345
        %v5366 = vadd.f32 %v5241, %v5348
        %v5367 = vadd.f32 %v5242, %v5350
        %v5368 = vadd.f32 %v5243, %v5353
        %v5369 = vadd.f32 %v5244, %v5355
        %v5370 = vadd.f32 %v5245, %v5358
        %v5371 = vadd.f32 %v5246, %v5360
        %v5372 = vld [vmem:[#allocation5 + $0x2c] sm:$0x3]
        %v5373 = vld [vmem:[%s1691] sm:$0xf]
        %v5374 = vld [vmem:[%s1691 + $0x4] sm:$0xf]
        %v5375 = vld [vmem:[%s1691 + $0x8] sm:$0xf]
        %v5376 = vld [vmem:[%s1691 + $0xc] sm:$0xf]
        %v5378 = vunpack.c.l.b16 %v5372
        %v5379 = vpack.c.b16 %v5378, %v5378
        %v5381 = vshrl.u32 %v5284, 16
        %v5383 = vrot.slane %v5381, 1
        %v5384 = vshll.u32 %v5284, 16
        %v5386 = vrot.slane %v5384, 2
        %v5387 = vor.u32 %v5383, %v5386
        %v5389 = vshrl.u32 %v5285, 16
        %v5391 = vrot.slane %v5389, 1
        %v5392 = vshll.u32 %v5285, 16
        %v5394 = vrot.slane %v5392, 2
        %v5395 = vor.u32 %v5391, %v5394
        %v5396 = vsel %vm1699, %v5387, %v5395
        %v5398 = vshrl.u32 %v5286, 16
        %v5400 = vrot.slane %v5398, 1
        %v5401 = vshll.u32 %v5286, 16
        %v5403 = vrot.slane %v5401, 2
        %v5404 = vor.u32 %v5400, %v5403
        %v5405 = vsel %vm1699, %v5395, %v5404
        %v5407 = vshrl.u32 %v5287, 16
        %v5409 = vrot.slane %v5407, 1
        %v5410 = vshll.u32 %v5287, 16
        %v5412 = vrot.slane %v5410, 2
        %v5413 = vor.u32 %v5409, %v5412
        %v5414 = vsel %vm1699, %v5404, %v5413
        %v5416 = vshrl.u32 %v5288, 16
        %v5418 = vrot.slane %v5416, 1
        %v5419 = vshll.u32 %v5288, 16
        %v5421 = vrot.slane %v5419, 2
        %v5422 = vor.u32 %v5418, %v5421
        %v5423 = vsel %vm1699, %v5413, %v5422
        %v5425 = vshrl.u32 %v5379, 16
        %v5427 = vrot.slane %v5425, 1
        %v5428 = vshll.u32 %v5379, 16
        %v5430 = vrot.slane %v5428, 2
        %v5431 = vor.u32 %v5427, %v5430
        %v5432 = vsel %vm1699, %v5422, %v5431
        %v5437 = vunpack.c.l.b16 %v5373
        %v5438 = vunpack.c.l.b16 %v5374
        %v5439 = vunpack.c.l.b16 %v5375
        %v5440 = vunpack.c.l.b16 %v5376
        %v5441 = vpack.c.b16 %v5438, %v5437
        %v5442 = vpack.c.b16 %v5440, %v5439
        %v5446 = vsel %vm801, %v5396, 0
        %v5449 = vsel %vm801, %v5405, 0
        %v5452 = vsel %vm801, %v5414, 0
        %v5455 = vsel %vm801, %v5423, 0
        %v5458 = vsel %vm801, %v5432, 0
        %5460 = vmatpush.bf16.msra.mxu0 0
        %5461 = vmatpush.bf16.msra.mxu0 0
        %5462 = vmatpush.bf16.msra.mxu0 0
        %5463 = vmatpush.bf16.msra.mxu0 0
        %5464 = vmatpush.bf16.msra.mxu0 0
        %5465 = vmatpush.bf16.msra.mxu0 0
        %5466 = vmatpush.bf16.msra.mxu0 %v5442
        %5467 = vmatpush.bf16.msra.mxu0 %v5441
        %5468 = vmatmul.bf16.gmra.mxu0 %v5446
        %v5469 = vpop.f32.mrf.mxu0
        %v5470 = vadd.f32 0.0, %v5469
        %v5471 = vpop.f32.mrf.mxu0
        %v5472 = vadd.f32 0.0, %v5471
        %5473 = vmatmul.bf16.gmra.mxu0 %v5449
        %v5474 = vpop.f32.mrf.mxu0
        %v5475 = vadd.f32 0.0, %v5474
        %v5476 = vpop.f32.mrf.mxu0
        %v5477 = vadd.f32 0.0, %v5476
        %5478 = vmatmul.bf16.gmra.mxu0 %v5452
        %v5479 = vpop.f32.mrf.mxu0
        %v5480 = vadd.f32 0.0, %v5479
        %v5481 = vpop.f32.mrf.mxu0
        %v5482 = vadd.f32 0.0, %v5481
        %5483 = vmatmul.bf16.gmra.mxu0 %v5455
        %v5484 = vpop.f32.mrf.mxu0
        %v5485 = vadd.f32 0.0, %v5484
        %v5486 = vpop.f32.mrf.mxu0
        %v5487 = vadd.f32 0.0, %v5486
        %5488 = vmatmul.bf16.gmra.mxu0 %v5458
        %v5489 = vpop.f32.mrf.mxu0
        %v5490 = vadd.f32 0.0, %v5489
        %v5491 = vpop.f32.mrf.mxu0
        %v5492 = vadd.f32 0.0, %v5491
        %5493 = vdwg.mxu0
        %v5494 = vadd.f32 %v5362, %v5470
        %v5495 = vadd.f32 %v5363, %v5472
        %v5496 = vadd.f32 %v5364, %v5475
        %v5497 = vadd.f32 %v5365, %v5477
        %v5498 = vadd.f32 %v5366, %v5480
        %v5499 = vadd.f32 %v5367, %v5482
        %v5500 = vadd.f32 %v5368, %v5485
        %v5501 = vadd.f32 %v5369, %v5487
        %v5502 = vadd.f32 %v5370, %v5490
        %v5503 = vadd.f32 %v5371, %v5492
        %v5504 = vld [vmem:[#allocation5 + $0x4] sm:$0xc]
        %v5505 = vld [vmem:[%s1825] sm:$0xf]
        %v5506 = vld [vmem:[%s1825 + $0x4] sm:$0xf]
        %v5507 = vld [vmem:[%s1825 + $0x8] sm:$0xf]
        %v5508 = vld [vmem:[%s1825 + $0xc] sm:$0xf]
        %v5510 = vunpack.c.l.b16 %v5504
        %v5511 = vpack.c.b16 %v5274, %v5510
        %v5512 = vrot.slane %v5511, 2
        %v5513 = vrot.slane %v5285, 2
        %v5514 = vsel %vm1833, %v5512, %v5513
        %v5515 = vrot.slane %v5286, 2
        %v5516 = vsel %vm1833, %v5513, %v5515
        %v5517 = vrot.slane %v5287, 2
        %v5518 = vsel %vm1833, %v5515, %v5517
        %v5519 = vrot.slane %v5288, 2
        %v5520 = vsel %vm1833, %v5517, %v5519
        %v5521 = vrot.slane %v5379, 2
        %v5522 = vsel %vm1833, %v5519, %v5521
        %v5527 = vunpack.c.l.b16 %v5505
        %v5528 = vunpack.c.l.b16 %v5506
        %v5529 = vunpack.c.l.b16 %v5507
        %v5530 = vunpack.c.l.b16 %v5508
        %v5531 = vpack.c.b16 %v5528, %v5527
        %v5532 = vpack.c.b16 %v5530, %v5529
        %v5536 = vsel %vm801, %v5514, 0
        %v5539 = vsel %vm801, %v5516, 0
        %v5542 = vsel %vm801, %v5518, 0
        %v5545 = vsel %vm801, %v5520, 0
        %v5548 = vsel %vm801, %v5522, 0
        %5550 = vmatpush.bf16.msra.mxu0 0
        %5551 = vmatpush.bf16.msra.mxu0 0
        %5552 = vmatpush.bf16.msra.mxu0 0
        %5553 = vmatpush.bf16.msra.mxu0 0
        %5554 = vmatpush.bf16.msra.mxu0 0
        %5555 = vmatpush.bf16.msra.mxu0 0
        %5556 = vmatpush.bf16.msra.mxu0 %v5532
        %5557 = vmatpush.bf16.msra.mxu0 %v5531
        %5558 = vmatmul.bf16.gmra.mxu0 %v5536
        %v5559 = vpop.f32.mrf.mxu0
        %v5560 = vadd.f32 0.0, %v5559
        %v5561 = vpop.f32.mrf.mxu0
        %v5562 = vadd.f32 0.0, %v5561
        %5563 = vmatmul.bf16.gmra.mxu0 %v5539
        %v5564 = vpop.f32.mrf.mxu0
        %v5565 = vadd.f32 0.0, %v5564
        %v5566 = vpop.f32.mrf.mxu0
        %v5567 = vadd.f32 0.0, %v5566
        %5568 = vmatmul.bf16.gmra.mxu0 %v5542
        %v5569 = vpop.f32.mrf.mxu0
        %v5570 = vadd.f32 0.0, %v5569
        %v5571 = vpop.f32.mrf.mxu0
        %v5572 = vadd.f32 0.0, %v5571
        %5573 = vmatmul.bf16.gmra.mxu0 %v5545
        %v5574 = vpop.f32.mrf.mxu0
        %v5575 = vadd.f32 0.0, %v5574
        %v5576 = vpop.f32.mrf.mxu0
        %v5577 = vadd.f32 0.0, %v5576
        %5578 = vmatmul.bf16.gmra.mxu0 %v5548
        %v5579 = vpop.f32.mrf.mxu0
        %v5580 = vadd.f32 0.0, %v5579
        %v5581 = vpop.f32.mrf.mxu0
        %v5582 = vadd.f32 0.0, %v5581
        %5583 = vdwg.mxu0
        %v5584 = vadd.f32 %v5494, %v5560
        %v5585 = vadd.f32 %v5495, %v5562
        %v5586 = vadd.f32 %v5496, %v5565
        %v5587 = vadd.f32 %v5497, %v5567
        %v5588 = vadd.f32 %v5498, %v5570
        %v5589 = vadd.f32 %v5499, %v5572
        %v5590 = vadd.f32 %v5500, %v5575
        %v5591 = vadd.f32 %v5501, %v5577
        %v5592 = vadd.f32 %v5502, %v5580
        %v5593 = vadd.f32 %v5503, %v5582
        %v5594 = vld [vmem:[#allocation5 + $0x8] sm:$0xc]
        %v5595 = vld [vmem:[#allocation5 + $0xc] sm:$0xf]
        %v5596 = vld [vmem:[#allocation5 + $0x10] sm:$0xf]
        %v5597 = vld [vmem:[#allocation5 + $0x14] sm:$0xf]
        %v5598 = vld [vmem:[#allocation5 + $0x18] sm:$0xf]
        %v5599 = vld [vmem:[#allocation5 + $0x1c] sm:$0xf]
        %v5600 = vld [vmem:[#allocation5 + $0x20] sm:$0xf]
        %v5601 = vld [vmem:[#allocation5 + $0x24] sm:$0xf]
        %v5602 = vld [vmem:[#allocation5 + $0x28] sm:$0xf]
        %v5603 = vld [vmem:[#allocation5 + $0x2c] sm:$0xf]
        %v5604 = vld [vmem:[#allocation5 + $0x30] sm:$0x3]
        %v5605 = vld [vmem:[%s1927] sm:$0xf]
        %v5606 = vld [vmem:[%s1927 + $0x4] sm:$0xf]
        %v5607 = vld [vmem:[%s1927 + $0x8] sm:$0xf]
        %v5608 = vld [vmem:[%s1927 + $0xc] sm:$0xf]
        %v5620 = vunpack.c.l.b16 %v5594
        %v5621 = vunpack.c.l.b16 %v5595
        %v5622 = vunpack.c.l.b16 %v5596
        %v5623 = vunpack.c.l.b16 %v5597
        %v5624 = vunpack.c.l.b16 %v5598
        %v5625 = vunpack.c.l.b16 %v5599
        %v5626 = vunpack.c.l.b16 %v5600
        %v5627 = vunpack.c.l.b16 %v5601
        %v5628 = vunpack.c.l.b16 %v5602
        %v5629 = vunpack.c.l.b16 %v5603
        %v5630 = vunpack.c.l.b16 %v5604
        %v5631 = vpack.c.b16 %v5621, %v5620
        %v5632 = vpack.c.b16 %v5623, %v5622
        %v5633 = vpack.c.b16 %v5625, %v5624
        %v5634 = vpack.c.b16 %v5627, %v5626
        %v5635 = vpack.c.b16 %v5629, %v5628
        %v5636 = vpack.c.b16 %v5630, %v5630
        %v5637 = vrot.slane %v5631, 2
        %v5638 = vrot.slane %v5632, 2
        %v5639 = vsel %vm1833, %v5637, %v5638
        %v5640 = vrot.slane %v5633, 2
        %v5641 = vsel %vm1833, %v5638, %v5640
        %v5642 = vrot.slane %v5634, 2
        %v5643 = vsel %vm1833, %v5640, %v5642
        %v5644 = vrot.slane %v5635, 2
        %v5645 = vsel %vm1833, %v5642, %v5644
        %v5646 = vrot.slane %v5636, 2
        %v5647 = vsel %vm1833, %v5644, %v5646
        %v5652 = vunpack.c.l.b16 %v5605
        %v5653 = vunpack.c.l.b16 %v5606
        %v5654 = vunpack.c.l.b16 %v5607
        %v5655 = vunpack.c.l.b16 %v5608
        %v5656 = vpack.c.b16 %v5653, %v5652
        %v5657 = vpack.c.b16 %v5655, %v5654
        %v5661 = vsel %vm801, %v5639, 0
        %v5664 = vsel %vm801, %v5641, 0
        %v5667 = vsel %vm801, %v5643, 0
        %v5670 = vsel %vm801, %v5645, 0
        %v5673 = vsel %vm801, %v5647, 0
        %5675 = vmatpush.bf16.msra.mxu0 0
        %5676 = vmatpush.bf16.msra.mxu0 0
        %5677 = vmatpush.bf16.msra.mxu0 0
        %5678 = vmatpush.bf16.msra.mxu0 0
        %5679 = vmatpush.bf16.msra.mxu0 0
        %5680 = vmatpush.bf16.msra.mxu0 0
        %5681 = vmatpush.bf16.msra.mxu0 %v5657
        %5682 = vmatpush.bf16.msra.mxu0 %v5656
        %5683 = vmatmul.bf16.gmra.mxu0 %v5661
        %v5684 = vpop.f32.mrf.mxu0
        %v5685 = vadd.f32 0.0, %v5684
        %v5686 = vpop.f32.mrf.mxu0
        %v5687 = vadd.f32 0.0, %v5686
        %5688 = vmatmul.bf16.gmra.mxu0 %v5664
        %v5689 = vpop.f32.mrf.mxu0
        %v5690 = vadd.f32 0.0, %v5689
        %v5691 = vpop.f32.mrf.mxu0
        %v5692 = vadd.f32 0.0, %v5691
        %5693 = vmatmul.bf16.gmra.mxu0 %v5667
        %v5694 = vpop.f32.mrf.mxu0
        %v5695 = vadd.f32 0.0, %v5694
        %v5696 = vpop.f32.mrf.mxu0
        %v5697 = vadd.f32 0.0, %v5696
        %5698 = vmatmul.bf16.gmra.mxu0 %v5670
        %v5699 = vpop.f32.mrf.mxu0
        %v5700 = vadd.f32 0.0, %v5699
        %v5701 = vpop.f32.mrf.mxu0
        %v5702 = vadd.f32 0.0, %v5701
        %5703 = vmatmul.bf16.gmra.mxu0 %v5673
        %v5704 = vpop.f32.mrf.mxu0
        %v5705 = vadd.f32 0.0, %v5704
        %v5706 = vpop.f32.mrf.mxu0
        %v5707 = vadd.f32 0.0, %v5706
        %5708 = vdwg.mxu0
        %v5709 = vadd.f32 %v5584, %v5685
        %v5710 = vadd.f32 %v5585, %v5687
        %v5711 = vadd.f32 %v5586, %v5690
        %v5712 = vadd.f32 %v5587, %v5692
        %v5713 = vadd.f32 %v5588, %v5695
        %v5714 = vadd.f32 %v5589, %v5697
        %v5715 = vadd.f32 %v5590, %v5700
        %v5716 = vadd.f32 %v5591, %v5702
        %v5717 = vadd.f32 %v5592, %v5705
        %v5718 = vadd.f32 %v5593, %v5707
        %v5719 = vld [vmem:[#allocation5 + $0x30] sm:$0x7]
        %v5720 = vld [vmem:[%s2043] sm:$0xf]
        %v5721 = vld [vmem:[%s2043 + $0x4] sm:$0xf]
        %v5722 = vld [vmem:[%s2043 + $0x8] sm:$0xf]
        %v5723 = vld [vmem:[%s2043 + $0xc] sm:$0xf]
        %v5725 = vunpack.c.l.b16 %v5719
        %v5726 = vpack.c.b16 %v5725, %v5725
        %v5728 = vshrl.u32 %v5631, 16
        %v5730 = vrot.slane %v5728, 2
        %v5731 = vshll.u32 %v5631, 16
        %v5733 = vrot.slane %v5731, 3
        %v5734 = vor.u32 %v5730, %v5733
        %v5736 = vshrl.u32 %v5632, 16
        %v5738 = vrot.slane %v5736, 2
        %v5739 = vshll.u32 %v5632, 16
        %v5741 = vrot.slane %v5739, 3
        %v5742 = vor.u32 %v5738, %v5741
        %v5743 = vsel %vm2051, %v5734, %v5742
        %v5745 = vshrl.u32 %v5633, 16
        %v5747 = vrot.slane %v5745, 2
        %v5748 = vshll.u32 %v5633, 16
        %v5750 = vrot.slane %v5748, 3
        %v5751 = vor.u32 %v5747, %v5750
        %v5752 = vsel %vm2051, %v5742, %v5751
        %v5754 = vshrl.u32 %v5634, 16
        %v5756 = vrot.slane %v5754, 2
        %v5757 = vshll.u32 %v5634, 16
        %v5759 = vrot.slane %v5757, 3
        %v5760 = vor.u32 %v5756, %v5759
        %v5761 = vsel %vm2051, %v5751, %v5760
        %v5763 = vshrl.u32 %v5635, 16
        %v5765 = vrot.slane %v5763, 2
        %v5766 = vshll.u32 %v5635, 16
        %v5768 = vrot.slane %v5766, 3
        %v5769 = vor.u32 %v5765, %v5768
        %v5770 = vsel %vm2051, %v5760, %v5769
        %v5772 = vshrl.u32 %v5726, 16
        %v5774 = vrot.slane %v5772, 2
        %v5775 = vshll.u32 %v5726, 16
        %v5777 = vrot.slane %v5775, 3
        %v5778 = vor.u32 %v5774, %v5777
        %v5779 = vsel %vm2051, %v5769, %v5778
        %v5784 = vunpack.c.l.b16 %v5720
        %v5785 = vunpack.c.l.b16 %v5721
        %v5786 = vunpack.c.l.b16 %v5722
        %v5787 = vunpack.c.l.b16 %v5723
        %v5788 = vpack.c.b16 %v5785, %v5784
        %v5789 = vpack.c.b16 %v5787, %v5786
        %v5793 = vsel %vm801, %v5743, 0
        %v5796 = vsel %vm801, %v5752, 0
        %v5799 = vsel %vm801, %v5761, 0
        %v5802 = vsel %vm801, %v5770, 0
        %v5805 = vsel %vm801, %v5779, 0
        %5807 = vmatpush.bf16.msra.mxu0 0
        %5808 = vmatpush.bf16.msra.mxu0 0
        %5809 = vmatpush.bf16.msra.mxu0 0
        %5810 = vmatpush.bf16.msra.mxu0 0
        %5811 = vmatpush.bf16.msra.mxu0 0
        %5812 = vmatpush.bf16.msra.mxu0 0
        %5813 = vmatpush.bf16.msra.mxu0 %v5789
        %5814 = vmatpush.bf16.msra.mxu0 %v5788
        %5815 = vmatmul.bf16.gmra.mxu0 %v5793
        %v5816 = vpop.f32.mrf.mxu0
        %v5817 = vadd.f32 0.0, %v5816
        %v5818 = vpop.f32.mrf.mxu0
        %v5819 = vadd.f32 0.0, %v5818
        %5820 = vmatmul.bf16.gmra.mxu0 %v5796
        %v5821 = vpop.f32.mrf.mxu0
        %v5822 = vadd.f32 0.0, %v5821
        %v5823 = vpop.f32.mrf.mxu0
        %v5824 = vadd.f32 0.0, %v5823
        %5825 = vmatmul.bf16.gmra.mxu0 %v5799
        %v5826 = vpop.f32.mrf.mxu0
        %v5827 = vadd.f32 0.0, %v5826
        %v5828 = vpop.f32.mrf.mxu0
        %v5829 = vadd.f32 0.0, %v5828
        %5830 = vmatmul.bf16.gmra.mxu0 %v5802
        %v5831 = vpop.f32.mrf.mxu0
        %v5832 = vadd.f32 0.0, %v5831
        %v5833 = vpop.f32.mrf.mxu0
        %v5834 = vadd.f32 0.0, %v5833
        %5835 = vmatmul.bf16.gmra.mxu0 %v5805
        %v5836 = vpop.f32.mrf.mxu0
        %v5837 = vadd.f32 0.0, %v5836
        %v5838 = vpop.f32.mrf.mxu0
        %v5839 = vadd.f32 0.0, %v5838
        %5840 = vdwg.mxu0
        %v5841 = vadd.f32 %v5709, %v5817
        %v5842 = vadd.f32 %v5710, %v5819
        %v5843 = vadd.f32 %v5711, %v5822
        %v5844 = vadd.f32 %v5712, %v5824
        %v5845 = vadd.f32 %v5713, %v5827
        %v5846 = vadd.f32 %v5714, %v5829
        %v5847 = vadd.f32 %v5715, %v5832
        %v5848 = vadd.f32 %v5716, %v5834
        %v5849 = vadd.f32 %v5717, %v5837
        %v5850 = vadd.f32 %v5718, %v5839
        %v5851 = vld [vmem:[#allocation5 + $0x8] sm:$0x8]
        %v5852 = vld [vmem:[%s2177] sm:$0xf]
        %v5853 = vld [vmem:[%s2177 + $0x4] sm:$0xf]
        %v5854 = vld [vmem:[%s2177 + $0x8] sm:$0xf]
        %v5855 = vld [vmem:[%s2177 + $0xc] sm:$0xf]
        %v5857 = vunpack.c.l.b16 %v5851
        %v5858 = vpack.c.b16 %v5621, %v5857
        %v5859 = vrot.slane %v5858, 3
        %v5860 = vrot.slane %v5632, 3
        %v5861 = vsel %vm2185, %v5859, %v5860
        %v5862 = vrot.slane %v5633, 3
        %v5863 = vsel %vm2185, %v5860, %v5862
        %v5864 = vrot.slane %v5634, 3
        %v5865 = vsel %vm2185, %v5862, %v5864
        %v5866 = vrot.slane %v5635, 3
        %v5867 = vsel %vm2185, %v5864, %v5866
        %v5868 = vrot.slane %v5726, 3
        %v5869 = vsel %vm2185, %v5866, %v5868
        %v5874 = vunpack.c.l.b16 %v5852
        %v5875 = vunpack.c.l.b16 %v5853
        %v5876 = vunpack.c.l.b16 %v5854
        %v5877 = vunpack.c.l.b16 %v5855
        %v5878 = vpack.c.b16 %v5875, %v5874
        %v5879 = vpack.c.b16 %v5877, %v5876
        %v5883 = vsel %vm801, %v5861, 0
        %v5886 = vsel %vm801, %v5863, 0
        %v5889 = vsel %vm801, %v5865, 0
        %v5892 = vsel %vm801, %v5867, 0
        %v5895 = vsel %vm801, %v5869, 0
        %5897 = vmatpush.bf16.msra.mxu0 0
        %5898 = vmatpush.bf16.msra.mxu0 0
        %5899 = vmatpush.bf16.msra.mxu0 0
        %5900 = vmatpush.bf16.msra.mxu0 0
        %5901 = vmatpush.bf16.msra.mxu0 0
        %5902 = vmatpush.bf16.msra.mxu0 0
        %5903 = vmatpush.bf16.msra.mxu0 %v5879
        %5904 = vmatpush.bf16.msra.mxu0 %v5878
        %5905 = vmatmul.bf16.gmra.mxu0 %v5883
        %v5906 = vpop.f32.mrf.mxu0
        %v5907 = vadd.f32 0.0, %v5906
        %v5908 = vpop.f32.mrf.mxu0
        %v5909 = vadd.f32 0.0, %v5908
        %5910 = vmatmul.bf16.gmra.mxu0 %v5886
        %v5911 = vpop.f32.mrf.mxu0
        %v5912 = vadd.f32 0.0, %v5911
        %v5913 = vpop.f32.mrf.mxu0
        %v5914 = vadd.f32 0.0, %v5913
        %5915 = vmatmul.bf16.gmra.mxu0 %v5889
        %v5916 = vpop.f32.mrf.mxu0
        %v5917 = vadd.f32 0.0, %v5916
        %v5918 = vpop.f32.mrf.mxu0
        %v5919 = vadd.f32 0.0, %v5918
        %5920 = vmatmul.bf16.gmra.mxu0 %v5892
        %v5921 = vpop.f32.mrf.mxu0
        %v5922 = vadd.f32 0.0, %v5921
        %v5923 = vpop.f32.mrf.mxu0
        %v5924 = vadd.f32 0.0, %v5923
        %5925 = vmatmul.bf16.gmra.mxu0 %v5895
        %v5926 = vpop.f32.mrf.mxu0
        %v5927 = vadd.f32 0.0, %v5926
        %v5928 = vpop.f32.mrf.mxu0
        %v5929 = vadd.f32 0.0, %v5928
        %5930 = vdwg.mxu0
        %v5931 = vadd.f32 %v5841, %v5907
        %v5932 = vadd.f32 %v5842, %v5909
        %v5933 = vadd.f32 %v5843, %v5912
        %v5934 = vadd.f32 %v5844, %v5914
        %v5935 = vadd.f32 %v5845, %v5917
        %v5936 = vadd.f32 %v5846, %v5919
        %v5937 = vadd.f32 %v5847, %v5922
        %v5938 = vadd.f32 %v5848, %v5924
        %v5939 = vadd.f32 %v5849, %v5927
        %v5940 = vadd.f32 %v5850, %v5929
        %v5941 = vld [vmem:[%s5] sm:$0x1]
        %v5943 = vperm.slane %v5941, 0
        %v5945 = vadd.f32 %v5931, %v5943
        %v5946 = vadd.f32 %v5932, %v5943
        %v5947 = vadd.f32 %v5933, %v5943
        %v5948 = vadd.f32 %v5934, %v5943
        %v5949 = vadd.f32 %v5935, %v5943
        %v5950 = vadd.f32 %v5936, %v5943
        %v5951 = vadd.f32 %v5937, %v5943
        %v5952 = vadd.f32 %v5938, %v5943
        %v5953 = vadd.f32 %v5939, %v5943
        %v5954 = vadd.f32 %v5940, %v5943
        %v5955 = vmax.f32 %v5945, 0.0
        %v5956 = vmax.f32 %v5946, 0.0
        %v5957 = vmax.f32 %v5947, 0.0
        %v5958 = vmax.f32 %v5948, 0.0
        %v5959 = vmax.f32 %v5949, 0.0
        %v5960 = vmax.f32 %v5950, 0.0
        %v5961 = vmax.f32 %v5951, 0.0
        %v5962 = vmax.f32 %v5952, 0.0
        %v5963 = vmax.f32 %v5953, 0.0
        %v5964 = vmax.f32 %v5954, 0.0
        %5965 = vst.msk [vmem:[#allocation3] sm:$0xff] %vm2292, %v5955
        %5966 = vst.msk [vmem:[#allocation3 + $0x8] sm:$0xff] %vm2292, %v5956
        %5967 = vst.msk [vmem:[#allocation3 + $0x10] sm:$0xff] %vm2292, %v5957
        %5968 = vst.msk [vmem:[#allocation3 + $0x18] sm:$0xff] %vm2292, %v5958
        %5969 = vst.msk [vmem:[#allocation3 + $0x20] sm:$0xff] %vm2292, %v5959
        %5970 = vst.msk [vmem:[#allocation3 + $0x28] sm:$0xff] %vm2292, %v5960
        %5971 = vst.msk [vmem:[#allocation3 + $0x30] sm:$0xff] %vm2292, %v5961
        %5972 = vst.msk [vmem:[#allocation3 + $0x38] sm:$0xff] %vm2292, %v5962
        %5973 = vst.msk [vmem:[#allocation3 + $0x40] sm:$0xff] %vm2292, %v5963
        %5974 = vst.msk [vmem:[#allocation3 + $0x48] sm:$0xff] %vm2292, %v5964
        %v5975 = vld [vmem:[#allocation3] ss:$2 sm:$0xf]
        %v5976 = vld [vmem:[%s2304] ss:$2 sm:$0xf]
        %v5977 = vmax.f32 %v5975, %v5976
        %v5978 = vld [vmem:[%s2307] ss:$2 sm:$0xf]
        %v5979 = vld [vmem:[%s2309] ss:$2 sm:$0xf]
        %v5980 = vmax.f32 %v5978, %v5979
        %v5981 = vmax.f32 %v5977, %v5980
        %v5982 = vpack.c.bf16 %v5981, %v5981
        %v5984 = vshll.u32 %v5982, 16
        %v5986 = vrot.slane %v5984, 5
        %v5987 = vshrl.u32 %v5982, 16
        %v5989 = vrot.slane %v5987, 4
        %v5990 = vor.u32 %v5989, %v5986
        %v5991 = vrot.slane %v5990, 4
        %v5994 = vld [vmem:[#allocation6] sm:$0x8]
        %v5995 = vsel %vm613, %v5986, %v5994
        %5996 = vst [vmem:[#allocation6] sm:$0x8] %v5995
        %v5997 = vld [vmem:[#allocation6 + $0x4] sm:$0x3]
        %v5998 = vsel %vm2328, %v5991, %v5997
        %5999 = vst [vmem:[#allocation6 + $0x4] sm:$0x3] %v5998
        %v6000 = vld [vmem:[%s2332] ss:$2 sm:$0xf]
        %v6001 = vld [vmem:[%s2334] ss:$2 sm:$0xf]
        %v6002 = vmax.f32 %v6000, %v6001
        %v6003 = vld [vmem:[%s2337] ss:$2 sm:$0xf]
        %v6004 = vld [vmem:[%s2339] ss:$2 sm:$0xf]
        %v6005 = vmax.f32 %v6003, %v6004
        %v6006 = vmax.f32 %v6002, %v6005
        %v6007 = vpack.c.bf16 %v6006, %v6006
        %v6009 = vshrl.u32 %v6007, 16
        %v6011 = vrot.slane %v6009, 5
        %v6012 = vshll.u32 %v6007, 16
        %v6014 = vrot.slane %v6012, 6
        %v6015 = vor.u32 %v6011, %v6014
        %v6016 = vrot.slane %v6011, 4
        %v6019 = vld [vmem:[#allocation6 + $0x4] sm:$0xc]
        %v6020 = vsel %vm624, %v6015, %v6019
        %6021 = vst [vmem:[#allocation6 + $0x4] sm:$0xc] %v6020
        %v6022 = vld [vmem:[#allocation6 + $0x8] sm:$0x1]
        %v6023 = vsel %vm618, %v6016, %v6022
        %6024 = vst [vmem:[#allocation6 + $0x8] sm:$0x1] %v6023
        %v6025 = vld [vmem:[%s2361] ss:$2 sm:$0xf]
        %v6026 = vld [vmem:[%s2363] ss:$2 sm:$0xf]
        %v6027 = vmax.f32 %v6025, %v6026
        %v6028 = vld [vmem:[%s2366] ss:$2 sm:$0xf]
        %v6029 = vld [vmem:[%s2368] ss:$2 sm:$0xf]
        %v6030 = vmax.f32 %v6028, %v6029
        %v6031 = vmax.f32 %v6027, %v6030
        %v6032 = vpack.c.bf16 %v6031, %v6031
        %v6034 = vshrl.u32 %v6032, 16
        %v6036 = vrot.slane %v6034, 6
        %v6037 = vshll.u32 %v6032, 16
        %v6039 = vrot.slane %v6037, 7
        %v6040 = vor.u32 %v6036, %v6039
        %v6042 = vld [vmem:[#allocation6 + $0x8] sm:$0xe]
        %v6043 = vsel %vm2384, %v6040, %v6042
        %6044 = vst [vmem:[#allocation6 + $0x8] sm:$0xe] %v6043
        %v6045 = vld [vmem:[%s2388] ss:$2 sm:$0xf]
        %v6046 = vld [vmem:[%s2390] ss:$2 sm:$0xf]
        %v6047 = vmax.f32 %v6045, %v6046
        %v6048 = vld [vmem:[%s2393] ss:$2 sm:$0xf]
        %v6049 = vld [vmem:[%s2395] ss:$2 sm:$0xf]
        %v6050 = vmax.f32 %v6048, %v6049
        %v6051 = vmax.f32 %v6047, %v6050
        %v6052 = vpack.c.bf16 %v6051, %v6051
        %v6054 = vshrl.u32 %v6052, 16
        %v6056 = vrot.slane %v6054, 7
        %v6057 = vshll.u32 %v6052, 16
        %v6059 = vor.u32 %v6056, %v6057
        %v6061 = vld [vmem:[#allocation6 + $0xc] sm:$0x7]
        %v6062 = vsel %vm2410, %v6059, %v6061
        %6063 = vst [vmem:[#allocation6 + $0xc] sm:$0x7] %v6062
        %v6064 = vld [vmem:[#allocation6] sm:$0xf]
        %v6065 = vld [vmem:[#allocation6 + $0x4] sm:$0xf]
        %v6066 = vld [vmem:[#allocation6 + $0x8] sm:$0xf]
        %v6067 = vld [vmem:[%s6] sm:$0xf]
        %v6068 = vld [vmem:[%s6 + $0x4] sm:$0xf]
        %v6069 = vld [vmem:[%s6 + $0x8] sm:$0xf]
        %v6070 = vld [vmem:[%s6 + $0xc] sm:$0xf]
        %v6071 = vld [vmem:[%s6 + $0x10] sm:$0xf]
        %v6072 = vld [vmem:[%s6 + $0x14] sm:$0xf]
        %v6073 = vld [vmem:[%s6 + $0x18] sm:$0xf]
        %v6074 = vld [vmem:[%s6 + $0x1c] sm:$0xf]
        %v6075 = vld [vmem:[#allocation6 + $0xc] sm:$0x1]
        %v6076 = vld [vmem:[%s2426] sm:$0xf]
        %v6077 = vld [vmem:[%s2426 + $0x4] sm:$0xf]
        %v6078 = vld [vmem:[%s2426 + $0x8] sm:$0xf]
        %v6079 = vld [vmem:[%s2426 + $0xc] sm:$0xf]
        %v6080 = vld [vmem:[%s2426 + $0x10] sm:$0xf]
        %v6081 = vld [vmem:[%s2426 + $0x14] sm:$0xf]
        %v6082 = vld [vmem:[%s2426 + $0x18] sm:$0xf]
        %v6083 = vld [vmem:[%s2426 + $0x1c] sm:$0xf]
        %v6088 = vunpack.c.l.b16 %v6064
        %v6089 = vunpack.c.l.b16 %v6065
        %v6090 = vunpack.c.l.b16 %v6066
        %v6091 = vunpack.c.l.b16 %v6075
        %v6092 = vpack.c.b16 %v6089, %v6088
        %v6093 = vpack.c.b16 %v6091, %v6090
        %v6095 = vshrl.u32 %v6092, 16
        %v6097 = vshll.u32 %v6092, 16
        %v6099 = vrot.slane %v6097, 1
        %v6100 = vor.u32 %v6095, %v6099
        %v6102 = vshll.u32 %v6093, 16
        %v6104 = vrot.slane %v6102, 1
        %v6105 = vsel %vm1310, %v6100, %v6104
        %v6106 = vshrl.u32 %v6093, 16
        %v6108 = vor.u32 %v6106, %v6104
        %v6117 = vunpack.c.l.b16 %v6076
        %v6118 = vunpack.c.l.b16 %v6077
        %v6119 = vunpack.c.l.b16 %v6078
        %v6120 = vunpack.c.l.b16 %v6079
        %v6121 = vunpack.c.l.b16 %v6080
        %v6122 = vunpack.c.l.b16 %v6081
        %v6123 = vunpack.c.l.b16 %v6082
        %v6124 = vunpack.c.l.b16 %v6083
        %v6125 = vpack.c.b16 %v6118, %v6117
        %v6126 = vpack.c.b16 %v6120, %v6119
        %v6127 = vpack.c.b16 %v6122, %v6121
        %v6128 = vpack.c.b16 %v6124, %v6123
        %v6134 = vsel %vm2292, %v6105, 0
        %v6137 = vsel %vm2292, %v6108, 0
        %6139 = vmatpush.bf16.msra.mxu0 0
        %6140 = vmatpush.bf16.msra.mxu0 0
        %6141 = vmatpush.bf16.msra.mxu0 0
        %6142 = vmatpush.bf16.msra.mxu0 0
        %6143 = vmatpush.bf16.msra.mxu0 %v6128
        %6144 = vmatpush.bf16.msra.mxu0 %v6127
        %6145 = vmatpush.bf16.msra.mxu0 %v6126
        %6146 = vmatpush.bf16.msra.mxu0 %v6125
        %6147 = vmatmul.bf16.gmra.mxu0 %v6134
        %v6148 = vpop.f32.mrf.mxu0
        %v6149 = vadd.f32 0.0, %v6148
        %v6150 = vpop.f32.mrf.mxu0
        %v6151 = vadd.f32 0.0, %v6150
        %6152 = vmatmul.bf16.gmra.mxu0 %v6137
        %v6153 = vpop.f32.mrf.mxu0
        %v6154 = vadd.f32 0.0, %v6153
        %v6155 = vpop.f32.mrf.mxu0
        %6156 = vdwg.mxu0
        %v6157 = vpack.c.b16 %v6090, %v6090
        %v6166 = vunpack.c.l.b16 %v6067
        %v6167 = vunpack.c.l.b16 %v6068
        %v6168 = vunpack.c.l.b16 %v6069
        %v6169 = vunpack.c.l.b16 %v6070
        %v6170 = vunpack.c.l.b16 %v6071
        %v6171 = vunpack.c.l.b16 %v6072
        %v6172 = vunpack.c.l.b16 %v6073
        %v6173 = vunpack.c.l.b16 %v6074
        %v6174 = vpack.c.b16 %v6167, %v6166
        %v6175 = vpack.c.b16 %v6169, %v6168
        %v6176 = vpack.c.b16 %v6171, %v6170
        %v6177 = vpack.c.b16 %v6173, %v6172
        %v6182 = vsel %vm2292, %v6092, 0
        %v6185 = vsel %vm2292, %v6157, 0
        %6187 = vmatpush.bf16.msra.mxu0 0
        %6188 = vmatpush.bf16.msra.mxu0 0
        %6189 = vmatpush.bf16.msra.mxu0 0
        %6190 = vmatpush.bf16.msra.mxu0 0
        %6191 = vmatpush.bf16.msra.mxu0 %v6177
        %6192 = vmatpush.bf16.msra.mxu0 %v6176
        %6193 = vmatpush.bf16.msra.mxu0 %v6175
        %6194 = vmatpush.bf16.msra.mxu0 %v6174
        %6195 = vmatmul.bf16.gmra.mxu0 %v6182
        %v6196 = vpop.f32.mrf.mxu0
        %v6197 = vadd.f32 %v6149, %v6196
        %v6198 = vpop.f32.mrf.mxu0
        %v6199 = vadd.f32 %v6151, %v6198
        %6200 = vmatmul.bf16.gmra.mxu0 %v6185
        %v6201 = vpop.f32.mrf.mxu0
        %v6202 = vadd.f32 %v6154, %v6201
        %v6203 = vpop.f32.mrf.mxu0
        %6204 = vdwg.mxu0
        %v6205 = vld [vmem:[#allocation6] sm:$0xe]
        %v6206 = vld [vmem:[%s2557] sm:$0xf]
        %v6207 = vld [vmem:[%s2557 + $0x4] sm:$0xf]
        %v6208 = vld [vmem:[%s2557 + $0x8] sm:$0xf]
        %v6209 = vld [vmem:[%s2557 + $0xc] sm:$0xf]
        %v6210 = vld [vmem:[%s2557 + $0x10] sm:$0xf]
        %v6211 = vld [vmem:[%s2557 + $0x14] sm:$0xf]
        %v6212 = vld [vmem:[%s2557 + $0x18] sm:$0xf]
        %v6213 = vld [vmem:[%s2557 + $0x1c] sm:$0xf]
        %v6215 = vunpack.c.l.b16 %v6205
        %v6216 = vpack.c.b16 %v6089, %v6215
        %v6217 = vrot.slane %v6216, 1
        %v6218 = vrot.slane %v6093, 1
        %v6219 = vsel %vm1481, %v6217, %v6218
        %v6228 = vunpack.c.l.b16 %v6206
        %v6229 = vunpack.c.l.b16 %v6207
        %v6230 = vunpack.c.l.b16 %v6208
        %v6231 = vunpack.c.l.b16 %v6209
        %v6232 = vunpack.c.l.b16 %v6210
        %v6233 = vunpack.c.l.b16 %v6211
        %v6234 = vunpack.c.l.b16 %v6212
        %v6235 = vunpack.c.l.b16 %v6213
        %v6236 = vpack.c.b16 %v6229, %v6228
        %v6237 = vpack.c.b16 %v6231, %v6230
        %v6238 = vpack.c.b16 %v6233, %v6232
        %v6239 = vpack.c.b16 %v6235, %v6234
        %v6245 = vsel %vm2292, %v6219, 0
        %v6248 = vsel %vm2292, %v6218, 0
        %6250 = vmatpush.bf16.msra.mxu0 0
        %6251 = vmatpush.bf16.msra.mxu0 0
        %6252 = vmatpush.bf16.msra.mxu0 0
        %6253 = vmatpush.bf16.msra.mxu0 0
        %6254 = vmatpush.bf16.msra.mxu0 %v6239
        %6255 = vmatpush.bf16.msra.mxu0 %v6238
        %6256 = vmatpush.bf16.msra.mxu0 %v6237
        %6257 = vmatpush.bf16.msra.mxu0 %v6236
        %6258 = vmatmul.bf16.gmra.mxu0 %v6245
        %v6259 = vpop.f32.mrf.mxu0
        %v6260 = vadd.f32 0.0, %v6259
        %v6261 = vpop.f32.mrf.mxu0
        %v6262 = vadd.f32 0.0, %v6261
        %6263 = vmatmul.bf16.gmra.mxu0 %v6248
        %v6264 = vpop.f32.mrf.mxu0
        %v6265 = vadd.f32 0.0, %v6264
        %v6266 = vpop.f32.mrf.mxu0
        %6267 = vdwg.mxu0
        %v6268 = vadd.f32 %v6197, %v6260
        %v6269 = vadd.f32 %v6199, %v6262
        %v6270 = vadd.f32 %v6202, %v6265
        %v6271 = vld [vmem:[#allocation6] sm:$0x8]
        %v6272 = vld [vmem:[#allocation6 + $0xc] sm:$0x7]
        %v6273 = vld [vmem:[%s2625] sm:$0xf]
        %v6274 = vld [vmem:[%s2625 + $0x4] sm:$0xf]
        %v6275 = vld [vmem:[%s2625 + $0x8] sm:$0xf]
        %v6276 = vld [vmem:[%s2625 + $0xc] sm:$0xf]
        %v6277 = vld [vmem:[%s2625 + $0x10] sm:$0xf]
        %v6278 = vld [vmem:[%s2625 + $0x14] sm:$0xf]
        %v6279 = vld [vmem:[%s2625 + $0x18] sm:$0xf]
        %v6280 = vld [vmem:[%s2625 + $0x1c] sm:$0xf]
        %v6283 = vunpack.c.l.b16 %v6271
        %v6284 = vunpack.c.l.b16 %v6272
        %v6285 = vpack.c.b16 %v6089, %v6283
        %v6286 = vpack.c.b16 %v6284, %v6090
        %v6287 = vrot.slane %v6285, 3
        %v6288 = vrot.slane %v6286, 3
        %v6289 = vsel %vm2185, %v6287, %v6288
        %v6298 = vunpack.c.l.b16 %v6273
        %v6299 = vunpack.c.l.b16 %v6274
        %v6300 = vunpack.c.l.b16 %v6275
        %v6301 = vunpack.c.l.b16 %v6276
        %v6302 = vunpack.c.l.b16 %v6277
        %v6303 = vunpack.c.l.b16 %v6278
        %v6304 = vunpack.c.l.b16 %v6279
        %v6305 = vunpack.c.l.b16 %v6280
        %v6306 = vpack.c.b16 %v6299, %v6298
        %v6307 = vpack.c.b16 %v6301, %v6300
        %v6308 = vpack.c.b16 %v6303, %v6302
        %v6309 = vpack.c.b16 %v6305, %v6304
        %v6315 = vsel %vm2292, %v6289, 0
        %v6318 = vsel %vm2292, %v6288, 0
        %6320 = vmatpush.bf16.msra.mxu0 0
        %6321 = vmatpush.bf16.msra.mxu0 0
        %6322 = vmatpush.bf16.msra.mxu0 0
        %6323 = vmatpush.bf16.msra.mxu0 0
        %6324 = vmatpush.bf16.msra.mxu0 %v6309
        %6325 = vmatpush.bf16.msra.mxu0 %v6308
        %6326 = vmatpush.bf16.msra.mxu0 %v6307
        %6327 = vmatpush.bf16.msra.mxu0 %v6306
        %6328 = vmatmul.bf16.gmra.mxu0 %v6315
        %v6329 = vpop.f32.mrf.mxu0
        %v6330 = vadd.f32 0.0, %v6329
        %v6331 = vpop.f32.mrf.mxu0
        %v6332 = vadd.f32 0.0, %v6331
        %6333 = vmatmul.bf16.gmra.mxu0 %v6318
        %v6334 = vpop.f32.mrf.mxu0
        %v6335 = vadd.f32 0.0, %v6334
        %v6336 = vpop.f32.mrf.mxu0
        %6337 = vdwg.mxu0
        %v6338 = vadd.f32 %v6268, %v6330
        %v6339 = vadd.f32 %v6269, %v6332
        %v6340 = vadd.f32 %v6270, %v6335
        %v6341 = vld [vmem:[#allocation6 + $0xc] sm:$0xf]
        %v6342 = vld [vmem:[%s2695] sm:$0xf]
        %v6343 = vld [vmem:[%s2695 + $0x4] sm:$0xf]
        %v6344 = vld [vmem:[%s2695 + $0x8] sm:$0xf]
        %v6345 = vld [vmem:[%s2695 + $0xc] sm:$0xf]
        %v6346 = vld [vmem:[%s2695 + $0x10] sm:$0xf]
        %v6347 = vld [vmem:[%s2695 + $0x14] sm:$0xf]
        %v6348 = vld [vmem:[%s2695 + $0x18] sm:$0xf]
        %v6349 = vld [vmem:[%s2695 + $0x1c] sm:$0xf]
        %v6351 = vunpack.c.l.b16 %v6341
        %v6352 = vpack.c.b16 %v6351, %v6090
        %v6354 = vshrl.u32 %v6285, 16
        %v6356 = vrot.slane %v6354, 3
        %v6357 = vshll.u32 %v6285, 16
        %v6359 = vrot.slane %v6357, 4
        %v6360 = vor.u32 %v6356, %v6359
        %v6362 = vshrl.u32 %v6352, 16
        %v6364 = vrot.slane %v6362, 3
        %v6365 = vshll.u32 %v6352, 16
        %v6367 = vrot.slane %v6365, 4
        %v6368 = vor.u32 %v6364, %v6367
        %v6369 = vsel %vm2707, %v6360, %v6368
        %v6378 = vunpack.c.l.b16 %v6342
        %v6379 = vunpack.c.l.b16 %v6343
        %v6380 = vunpack.c.l.b16 %v6344
        %v6381 = vunpack.c.l.b16 %v6345
        %v6382 = vunpack.c.l.b16 %v6346
        %v6383 = vunpack.c.l.b16 %v6347
        %v6384 = vunpack.c.l.b16 %v6348
        %v6385 = vunpack.c.l.b16 %v6349
        %v6386 = vpack.c.b16 %v6379, %v6378
        %v6387 = vpack.c.b16 %v6381, %v6380
        %v6388 = vpack.c.b16 %v6383, %v6382
        %v6389 = vpack.c.b16 %v6385, %v6384
        %v6395 = vsel %vm2292, %v6369, 0
        %v6398 = vsel %vm2292, %v6368, 0
        %6400 = vmatpush.bf16.msra.mxu0 0
        %6401 = vmatpush.bf16.msra.mxu0 0
        %6402 = vmatpush.bf16.msra.mxu0 0
        %6403 = vmatpush.bf16.msra.mxu0 0
        %6404 = vmatpush.bf16.msra.mxu0 %v6389
        %6405 = vmatpush.bf16.msra.mxu0 %v6388
        %6406 = vmatpush.bf16.msra.mxu0 %v6387
        %6407 = vmatpush.bf16.msra.mxu0 %v6386
        %6408 = vmatmul.bf16.gmra.mxu0 %v6395
        %v6409 = vpop.f32.mrf.mxu0
        %v6410 = vadd.f32 0.0, %v6409
        %v6411 = vpop.f32.mrf.mxu0
        %v6412 = vadd.f32 0.0, %v6411
        %6413 = vmatmul.bf16.gmra.mxu0 %v6398
        %v6414 = vpop.f32.mrf.mxu0
        %v6415 = vadd.f32 0.0, %v6414
        %v6416 = vpop.f32.mrf.mxu0
        %6417 = vdwg.mxu0
        %v6418 = vadd.f32 %v6338, %v6410
        %v6419 = vadd.f32 %v6339, %v6412
        %v6420 = vadd.f32 %v6340, %v6415
        %v6421 = vld [vmem:[%s2776] sm:$0xf]
        %v6422 = vld [vmem:[%s2776 + $0x4] sm:$0xf]
        %v6423 = vld [vmem:[%s2776 + $0x8] sm:$0xf]
        %v6424 = vld [vmem:[%s2776 + $0xc] sm:$0xf]
        %v6425 = vld [vmem:[%s2776 + $0x10] sm:$0xf]
        %v6426 = vld [vmem:[%s2776 + $0x14] sm:$0xf]
        %v6427 = vld [vmem:[%s2776 + $0x18] sm:$0xf]
        %v6428 = vld [vmem:[%s2776 + $0x1c] sm:$0xf]
        %v6429 = vpack.c.b16 %v6090, %v6089
        %v6430 = vpack.c.b16 %v6351, %v6351
        %v6439 = vunpack.c.l.b16 %v6421
        %v6440 = vunpack.c.l.b16 %v6422
        %v6441 = vunpack.c.l.b16 %v6423
        %v6442 = vunpack.c.l.b16 %v6424
        %v6443 = vunpack.c.l.b16 %v6425
        %v6444 = vunpack.c.l.b16 %v6426
        %v6445 = vunpack.c.l.b16 %v6427
        %v6446 = vunpack.c.l.b16 %v6428
        %v6447 = vpack.c.b16 %v6440, %v6439
        %v6448 = vpack.c.b16 %v6442, %v6441
        %v6449 = vpack.c.b16 %v6444, %v6443
        %v6450 = vpack.c.b16 %v6446, %v6445
        %v6456 = vsel %vm2292, %v6429, 0
        %v6459 = vsel %vm2292, %v6430, 0
        %6461 = vmatpush.bf16.msra.mxu0 0
        %6462 = vmatpush.bf16.msra.mxu0 0
        %6463 = vmatpush.bf16.msra.mxu0 0
        %6464 = vmatpush.bf16.msra.mxu0 0
        %6465 = vmatpush.bf16.msra.mxu0 %v6450
        %6466 = vmatpush.bf16.msra.mxu0 %v6449
        %6467 = vmatpush.bf16.msra.mxu0 %v6448
        %6468 = vmatpush.bf16.msra.mxu0 %v6447
        %6469 = vmatmul.bf16.gmra.mxu0 %v6456
        %v6470 = vpop.f32.mrf.mxu0
        %v6471 = vadd.f32 0.0, %v6470
        %v6472 = vpop.f32.mrf.mxu0
        %v6473 = vadd.f32 0.0, %v6472
        %6474 = vmatmul.bf16.gmra.mxu0 %v6459
        %v6475 = vpop.f32.mrf.mxu0
        %v6476 = vadd.f32 0.0, %v6475
        %v6477 = vpop.f32.mrf.mxu0
        %6478 = vdwg.mxu0
        %v6479 = vadd.f32 %v6418, %v6471
        %v6480 = vadd.f32 %v6419, %v6473
        %v6481 = vadd.f32 %v6420, %v6476
        %v6482 = vld [vmem:[#allocation6 + $0x4] sm:$0xc]
        %v6483 = vld [vmem:[#allocation6 + $0x8] sm:$0xf]
        %v6484 = vld [vmem:[#allocation6 + $0xc] sm:$0xf]
        %v6485 = vld [vmem:[#allocation6 + $0x10] sm:$0x3]
        %v6486 = vld [vmem:[%s2842] sm:$0xf]
        %v6487 = vld [vmem:[%s2842 + $0x4] sm:$0xf]
        %v6488 = vld [vmem:[%s2842 + $0x8] sm:$0xf]
        %v6489 = vld [vmem:[%s2842 + $0xc] sm:$0xf]
        %v6490 = vld [vmem:[%s2842 + $0x10] sm:$0xf]
        %v6491 = vld [vmem:[%s2842 + $0x14] sm:$0xf]
        %v6492 = vld [vmem:[%s2842 + $0x18] sm:$0xf]
        %v6493 = vld [vmem:[%s2842 + $0x1c] sm:$0xf]
        %v6498 = vunpack.c.l.b16 %v6482
        %v6499 = vunpack.c.l.b16 %v6483
        %v6500 = vunpack.c.l.b16 %v6484
        %v6501 = vunpack.c.l.b16 %v6485
        %v6502 = vpack.c.b16 %v6499, %v6498
        %v6503 = vpack.c.b16 %v6501, %v6500
        %v6504 = vrot.slane %v6502, 2
        %v6505 = vrot.slane %v6503, 2
        %v6506 = vsel %vm1833, %v6504, %v6505
        %v6515 = vunpack.c.l.b16 %v6486
        %v6516 = vunpack.c.l.b16 %v6487
        %v6517 = vunpack.c.l.b16 %v6488
        %v6518 = vunpack.c.l.b16 %v6489
        %v6519 = vunpack.c.l.b16 %v6490
        %v6520 = vunpack.c.l.b16 %v6491
        %v6521 = vunpack.c.l.b16 %v6492
        %v6522 = vunpack.c.l.b16 %v6493
        %v6523 = vpack.c.b16 %v6516, %v6515
        %v6524 = vpack.c.b16 %v6518, %v6517
        %v6525 = vpack.c.b16 %v6520, %v6519
        %v6526 = vpack.c.b16 %v6522, %v6521
        %v6532 = vsel %vm2292, %v6506, 0
        %v6535 = vsel %vm2292, %v6505, 0
        %6537 = vmatpush.bf16.msra.mxu0 0
        %6538 = vmatpush.bf16.msra.mxu0 0
        %6539 = vmatpush.bf16.msra.mxu0 0
        %6540 = vmatpush.bf16.msra.mxu0 0
        %6541 = vmatpush.bf16.msra.mxu0 %v6526
        %6542 = vmatpush.bf16.msra.mxu0 %v6525
        %6543 = vmatpush.bf16.msra.mxu0 %v6524
        %6544 = vmatpush.bf16.msra.mxu0 %v6523
        %6545 = vmatmul.bf16.gmra.mxu0 %v6532
        %v6546 = vpop.f32.mrf.mxu0
        %v6547 = vadd.f32 0.0, %v6546
        %v6548 = vpop.f32.mrf.mxu0
        %v6549 = vadd.f32 0.0, %v6548
        %6550 = vmatmul.bf16.gmra.mxu0 %v6535
        %v6551 = vpop.f32.mrf.mxu0
        %v6552 = vadd.f32 0.0, %v6551
        %v6553 = vpop.f32.mrf.mxu0
        %6554 = vdwg.mxu0
        %v6555 = vadd.f32 %v6479, %v6547
        %v6556 = vadd.f32 %v6480, %v6549
        %v6557 = vadd.f32 %v6481, %v6552
        %v6558 = vld [vmem:[#allocation6 + $0x10] sm:$0x7]
        %v6559 = vld [vmem:[%s2916] sm:$0xf]
        %v6560 = vld [vmem:[%s2916 + $0x4] sm:$0xf]
        %v6561 = vld [vmem:[%s2916 + $0x8] sm:$0xf]
        %v6562 = vld [vmem:[%s2916 + $0xc] sm:$0xf]
        %v6563 = vld [vmem:[%s2916 + $0x10] sm:$0xf]
        %v6564 = vld [vmem:[%s2916 + $0x14] sm:$0xf]
        %v6565 = vld [vmem:[%s2916 + $0x18] sm:$0xf]
        %v6566 = vld [vmem:[%s2916 + $0x1c] sm:$0xf]
        %v6568 = vunpack.c.l.b16 %v6558
        %v6569 = vpack.c.b16 %v6568, %v6500
        %v6571 = vshrl.u32 %v6502, 16
        %v6573 = vrot.slane %v6571, 2
        %v6574 = vshll.u32 %v6502, 16
        %v6576 = vrot.slane %v6574, 3
        %v6577 = vor.u32 %v6573, %v6576
        %v6579 = vshrl.u32 %v6569, 16
        %v6581 = vrot.slane %v6579, 2
        %v6582 = vshll.u32 %v6569, 16
        %v6584 = vrot.slane %v6582, 3
        %v6585 = vor.u32 %v6581, %v6584
        %v6586 = vsel %vm2051, %v6577, %v6585
        %v6595 = vunpack.c.l.b16 %v6559
        %v6596 = vunpack.c.l.b16 %v6560
        %v6597 = vunpack.c.l.b16 %v6561
        %v6598 = vunpack.c.l.b16 %v6562
        %v6599 = vunpack.c.l.b16 %v6563
        %v6600 = vunpack.c.l.b16 %v6564
        %v6601 = vunpack.c.l.b16 %v6565
        %v6602 = vunpack.c.l.b16 %v6566
        %v6603 = vpack.c.b16 %v6596, %v6595
        %v6604 = vpack.c.b16 %v6598, %v6597
        %v6605 = vpack.c.b16 %v6600, %v6599
        %v6606 = vpack.c.b16 %v6602, %v6601
        %v6612 = vsel %vm2292, %v6586, 0
        %v6615 = vsel %vm2292, %v6585, 0
        %6617 = vmatpush.bf16.msra.mxu0 0
        %6618 = vmatpush.bf16.msra.mxu0 0
        %6619 = vmatpush.bf16.msra.mxu0 0
        %6620 = vmatpush.bf16.msra.mxu0 0
        %6621 = vmatpush.bf16.msra.mxu0 %v6606
        %6622 = vmatpush.bf16.msra.mxu0 %v6605
        %6623 = vmatpush.bf16.msra.mxu0 %v6604
        %6624 = vmatpush.bf16.msra.mxu0 %v6603
        %6625 = vmatmul.bf16.gmra.mxu0 %v6612
        %v6626 = vpop.f32.mrf.mxu0
        %v6627 = vadd.f32 0.0, %v6626
        %v6628 = vpop.f32.mrf.mxu0
        %v6629 = vadd.f32 0.0, %v6628
        %6630 = vmatmul.bf16.gmra.mxu0 %v6615
        %v6631 = vpop.f32.mrf.mxu0
        %v6632 = vadd.f32 0.0, %v6631
        %v6633 = vpop.f32.mrf.mxu0
        %6634 = vdwg.mxu0
        %v6635 = vadd.f32 %v6555, %v6627
        %v6636 = vadd.f32 %v6556, %v6629
        %v6637 = vadd.f32 %v6557, %v6632
        %v6638 = vld [vmem:[#allocation6 + $0x4] sm:$0x8]
        %v6639 = vld [vmem:[%s2997] sm:$0xf]
        %v6640 = vld [vmem:[%s2997 + $0x4] sm:$0xf]
        %v6641 = vld [vmem:[%s2997 + $0x8] sm:$0xf]
        %v6642 = vld [vmem:[%s2997 + $0xc] sm:$0xf]
        %v6643 = vld [vmem:[%s2997 + $0x10] sm:$0xf]
        %v6644 = vld [vmem:[%s2997 + $0x14] sm:$0xf]
        %v6645 = vld [vmem:[%s2997 + $0x18] sm:$0xf]
        %v6646 = vld [vmem:[%s2997 + $0x1c] sm:$0xf]
        %v6648 = vunpack.c.l.b16 %v6638
        %v6649 = vpack.c.b16 %v6499, %v6648
        %v6650 = vrot.slane %v6649, 3
        %v6651 = vrot.slane %v6569, 3
        %v6652 = vsel %vm2185, %v6650, %v6651
        %v6661 = vunpack.c.l.b16 %v6639
        %v6662 = vunpack.c.l.b16 %v6640
        %v6663 = vunpack.c.l.b16 %v6641
        %v6664 = vunpack.c.l.b16 %v6642
        %v6665 = vunpack.c.l.b16 %v6643
        %v6666 = vunpack.c.l.b16 %v6644
        %v6667 = vunpack.c.l.b16 %v6645
        %v6668 = vunpack.c.l.b16 %v6646
        %v6669 = vpack.c.b16 %v6662, %v6661
        %v6670 = vpack.c.b16 %v6664, %v6663
        %v6671 = vpack.c.b16 %v6666, %v6665
        %v6672 = vpack.c.b16 %v6668, %v6667
        %v6678 = vsel %vm2292, %v6652, 0
        %v6681 = vsel %vm2292, %v6651, 0
        %6683 = vmatpush.bf16.msra.mxu0 0
        %6684 = vmatpush.bf16.msra.mxu0 0
        %6685 = vmatpush.bf16.msra.mxu0 0
        %6686 = vmatpush.bf16.msra.mxu0 0
        %6687 = vmatpush.bf16.msra.mxu0 %v6672
        %6688 = vmatpush.bf16.msra.mxu0 %v6671
        %6689 = vmatpush.bf16.msra.mxu0 %v6670
        %6690 = vmatpush.bf16.msra.mxu0 %v6669
        %6691 = vmatmul.bf16.gmra.mxu0 %v6678
        %v6692 = vpop.f32.mrf.mxu0
        %v6693 = vadd.f32 0.0, %v6692
        %v6694 = vpop.f32.mrf.mxu0
        %v6695 = vadd.f32 0.0, %v6694
        %6696 = vmatmul.bf16.gmra.mxu0 %v6681
        %v6697 = vpop.f32.mrf.mxu0
        %v6698 = vadd.f32 0.0, %v6697
        %v6699 = vpop.f32.mrf.mxu0
        %6700 = vdwg.mxu0
        %v6701 = vadd.f32 %v6635, %v6693
        %v6702 = vadd.f32 %v6636, %v6695
        %v6703 = vadd.f32 %v6637, %v6698
        %v6704 = vld [vmem:[%s7] sm:$0x1]
        %v6706 = vperm.slane %v6704, 0
        %v6708 = vadd.f32 %v6701, %v6706
        %v6709 = vadd.f32 %v6702, %v6706
        %v6710 = vadd.f32 %v6703, %v6706
        %v6711 = vmax.f32 %v6708, 0.0
        %v6712 = vmax.f32 %v6709, 0.0
        %v6713 = vmax.f32 %v6710, 0.0
        %6714 = vst [vmem:[#allocation4] sm:$0xff] %v6711
        %6715 = vst [vmem:[#allocation4 + $0x8] sm:$0xff] %v6712
        %6716 = vst [vmem:[#allocation4 + $0x10] sm:$0xff] %v6713
        %v6717 = vld [vmem:[#allocation4] ss:$2 sm:$0x3]
        %v6718 = vld [vmem:[%s3077] ss:$2 sm:$0x3]
        %v6719 = vmax.f32 %v6717, %v6718
        %v6720 = vld [vmem:[%s3080] ss:$2 sm:$0x3]
        %v6721 = vld [vmem:[%s3082] ss:$2 sm:$0x3]
        %v6722 = vmax.f32 %v6720, %v6721
        %v6723 = vmax.f32 %v6719, %v6722
        %v6724 = vpack.c.bf16 %v6723, %v6723
        %v6726 = vshrl.u32 %v6724, 16
        %v6728 = vrot.slane %v6726, 5
        %v6729 = vshll.u32 %v6724, 16
        %v6731 = vrot.slane %v6729, 6
        %v6732 = vor.u32 %v6728, %v6731
        %v6734 = vld [vmem:[#allocation7] sm:$0xc]
        %v6735 = vsel %vm3097, %v6732, %v6734
        %6736 = vst [vmem:[#allocation7] sm:$0xc] %v6735
        %v6737 = vld [vmem:[%s3101] ss:$2 sm:$0x3]
        %v6738 = vld [vmem:[%s3103] ss:$2 sm:$0x3]
        %v6739 = vmax.f32 %v6737, %v6738
        %v6740 = vld [vmem:[%s3106] ss:$2 sm:$0x3]
        %v6741 = vld [vmem:[%s3108] ss:$2 sm:$0x3]
        %v6742 = vmax.f32 %v6740, %v6741
        %v6743 = vmax.f32 %v6739, %v6742
        %v6744 = vpack.c.bf16 %v6743, %v6743
        %v6746 = vshrl.u32 %v6744, 16
        %v6748 = vrot.slane %v6746, 7
        %v6749 = vshll.u32 %v6744, 16
        %v6751 = vor.u32 %v6748, %v6749
        %v6753 = vld [vmem:[#allocation7 + $0x4] sm:$0x3]
        %v6754 = vsel %vm3122, %v6751, %v6753
        %6755 = vst [vmem:[#allocation7 + $0x4] sm:$0x3] %v6754
        %v6756 = vld [vmem:[#allocation7] sm:$0xf]
        %v6757 = vld [vmem:[%s8] sm:$0xff]
        %v6758 = vld [vmem:[%s8 + $0x8] sm:$0xff]
        %v6759 = vld [vmem:[%s8 + $0x10] sm:$0xff]
        %v6760 = vld [vmem:[%s8 + $0x18] sm:$0xff]
        %v6761 = vld [vmem:[%s8 + $0x20] sm:$0xff]
        %v6762 = vld [vmem:[%s8 + $0x28] sm:$0xff]
        %v6763 = vld [vmem:[%s8 + $0x30] sm:$0xff]
        %v6764 = vld [vmem:[%s8 + $0x38] sm:$0xff]
        %v6765 = vld [vmem:[%s8 + $0x40] sm:$0xff]
        %v6766 = vld [vmem:[%s8 + $0x48] sm:$0xff]
        %v6767 = vld [vmem:[%s8 + $0x50] sm:$0xff]
        %v6768 = vld [vmem:[%s8 + $0x58] sm:$0xff]
        %v6769 = vld [vmem:[%s8 + $0x60] sm:$0xff]
        %v6770 = vld [vmem:[%s8 + $0x68] sm:$0xff]
        %v6771 = vld [vmem:[%s8 + $0x70] sm:$0xff]
        %v6772 = vld [vmem:[%s8 + $0x78] sm:$0xff]
        %v6773 = vld [vmem:[#allocation7 + $0x4] sm:$0x1]
        %v6774 = vld [vmem:[%s3144] sm:$0xff]
        %v6775 = vld [vmem:[%s3144 + $0x8] sm:$0xff]
        %v6776 = vld [vmem:[%s3144 + $0x10] sm:$0xff]
        %v6777 = vld [vmem:[%s3144 + $0x18] sm:$0xff]
        %v6778 = vld [vmem:[%s3144 + $0x20] sm:$0xff]
        %v6779 = vld [vmem:[%s3144 + $0x28] sm:$0xff]
        %v6780 = vld [vmem:[%s3144 + $0x30] sm:$0xff]
        %v6781 = vld [vmem:[%s3144 + $0x38] sm:$0xff]
        %v6782 = vld [vmem:[%s3144 + $0x40] sm:$0xff]
        %v6783 = vld [vmem:[%s3144 + $0x48] sm:$0xff]
        %v6784 = vld [vmem:[%s3144 + $0x50] sm:$0xff]
        %v6785 = vld [vmem:[%s3144 + $0x58] sm:$0xff]
        %v6786 = vld [vmem:[%s3144 + $0x60] sm:$0xff]
        %v6787 = vld [vmem:[%s3144 + $0x68] sm:$0xff]
        %v6788 = vld [vmem:[%s3144 + $0x70] sm:$0xff]
        %v6789 = vld [vmem:[%s3144 + $0x78] sm:$0xff]
        %v6792 = vunpack.c.l.b16 %v6756
        %v6793 = vunpack.c.l.b16 %v6773
        %v6794 = vpack.c.b16 %v6793, %v6792
        %v6796 = vshrl.u32 %v6794, 16
        %v6798 = vshll.u32 %v6794, 16
        %v6800 = vrot.slane %v6798, 1
        %v6801 = vor.u32 %v6796, %v6800
        %v6819 = vunpack.c.l.b16 %v6774
        %v6820 = vunpack.c.h.b16 %v6774
        %v6821 = vunpack.c.l.b16 %v6775
        %v6822 = vunpack.c.h.b16 %v6775
        %v6823 = vunpack.c.l.b16 %v6776
        %v6824 = vunpack.c.h.b16 %v6776
        %v6825 = vunpack.c.l.b16 %v6777
        %v6826 = vunpack.c.h.b16 %v6777
        %v6827 = vunpack.c.l.b16 %v6778
        %v6828 = vunpack.c.h.b16 %v6778
        %v6829 = vunpack.c.l.b16 %v6779
        %v6830 = vunpack.c.h.b16 %v6779
        %v6831 = vunpack.c.l.b16 %v6780
        %v6832 = vunpack.c.h.b16 %v6780
        %v6833 = vunpack.c.l.b16 %v6781
        %v6834 = vunpack.c.h.b16 %v6781
        %v6835 = vunpack.c.l.b16 %v6782
        %v6836 = vunpack.c.h.b16 %v6782
        %v6837 = vunpack.c.l.b16 %v6783
        %v6838 = vunpack.c.h.b16 %v6783
        %v6839 = vunpack.c.l.b16 %v6784
        %v6840 = vunpack.c.h.b16 %v6784
        %v6841 = vunpack.c.l.b16 %v6785
        %v6842 = vunpack.c.h.b16 %v6785
        %v6843 = vunpack.c.l.b16 %v6786
        %v6844 = vunpack.c.h.b16 %v6786
        %v6845 = vunpack.c.l.b16 %v6787
        %v6846 = vunpack.c.h.b16 %v6787
        %v6847 = vunpack.c.l.b16 %v6788
        %v6848 = vunpack.c.h.b16 %v6788
        %v6849 = vunpack.c.l.b16 %v6789
        %v6850 = vunpack.c.h.b16 %v6789
        %v6851 = vpack.c.b16 %v6821, %v6819
        %v6852 = vpack.c.b16 %v6822, %v6820
        %v6853 = vpack.c.b16 %v6825, %v6823
        %v6854 = vpack.c.b16 %v6826, %v6824
        %v6855 = vpack.c.b16 %v6829, %v6827
        %v6856 = vpack.c.b16 %v6830, %v6828
        %v6857 = vpack.c.b16 %v6833, %v6831
        %v6858 = vpack.c.b16 %v6834, %v6832
        %v6859 = vpack.c.b16 %v6837, %v6835
        %v6860 = vpack.c.b16 %v6838, %v6836
        %v6861 = vpack.c.b16 %v6841, %v6839
        %v6862 = vpack.c.b16 %v6842, %v6840
        %v6863 = vpack.c.b16 %v6845, %v6843
        %v6864 = vpack.c.b16 %v6846, %v6844
        %v6865 = vpack.c.b16 %v6849, %v6847
        %v6866 = vpack.c.b16 %v6850, %v6848
        %6883 = vmatpush.bf16.msra.mxu0 %v6865
        %6884 = vmatpush.bf16.msra.mxu0 %v6863
        %6885 = vmatpush.bf16.msra.mxu0 %v6861
        %6886 = vmatpush.bf16.msra.mxu0 %v6859
        %6887 = vmatpush.bf16.msra.mxu0 %v6857
        %6888 = vmatpush.bf16.msra.mxu0 %v6855
        %6889 = vmatpush.bf16.msra.mxu0 %v6853
        %6890 = vmatpush.bf16.msra.mxu0 %v6851
        %6891 = vmatmul.bf16.gmra.mxu0 %v6801
        %v6892 = vpop.f32.mrf.mxu0
        %v6893 = vadd.f32 0.0, %v6892
        %v6894 = vpop.f32.mrf.mxu0
        %6895 = vdwg.mxu0
        %6896 = vmatpush.bf16.msra.mxu0 %v6866
        %6897 = vmatpush.bf16.msra.mxu0 %v6864
        %6898 = vmatpush.bf16.msra.mxu0 %v6862
        %6899 = vmatpush.bf16.msra.mxu0 %v6860
        %6900 = vmatpush.bf16.msra.mxu0 %v6858
        %6901 = vmatpush.bf16.msra.mxu0 %v6856
        %6902 = vmatpush.bf16.msra.mxu0 %v6854
        %6903 = vmatpush.bf16.msra.mxu0 %v6852
        %6904 = vmatmul.bf16.gmra.mxu0 %v6801
        %v6905 = vpop.f32.mrf.mxu0
        %v6906 = vadd.f32 0.0, %v6905
        %v6907 = vpop.f32.mrf.mxu0
        %6908 = vdwg.mxu0
        %v6925 = vunpack.c.l.b16 %v6757
        %v6926 = vunpack.c.h.b16 %v6757
        %v6927 = vunpack.c.l.b16 %v6758
        %v6928 = vunpack.c.h.b16 %v6758
        %v6929 = vunpack.c.l.b16 %v6759
        %v6930 = vunpack.c.h.b16 %v6759
        %v6931 = vunpack.c.l.b16 %v6760
        %v6932 = vunpack.c.h.b16 %v6760
        %v6933 = vunpack.c.l.b16 %v6761
        %v6934 = vunpack.c.h.b16 %v6761
        %v6935 = vunpack.c.l.b16 %v6762
        %v6936 = vunpack.c.h.b16 %v6762
        %v6937 = vunpack.c.l.b16 %v6763
        %v6938 = vunpack.c.h.b16 %v6763
        %v6939 = vunpack.c.l.b16 %v6764
        %v6940 = vunpack.c.h.b16 %v6764
        %v6941 = vunpack.c.l.b16 %v6765
        %v6942 = vunpack.c.h.b16 %v6765
        %v6943 = vunpack.c.l.b16 %v6766
        %v6944 = vunpack.c.h.b16 %v6766
        %v6945 = vunpack.c.l.b16 %v6767
        %v6946 = vunpack.c.h.b16 %v6767
        %v6947 = vunpack.c.l.b16 %v6768
        %v6948 = vunpack.c.h.b16 %v6768
        %v6949 = vunpack.c.l.b16 %v6769
        %v6950 = vunpack.c.h.b16 %v6769
        %v6951 = vunpack.c.l.b16 %v6770
        %v6952 = vunpack.c.h.b16 %v6770
        %v6953 = vunpack.c.l.b16 %v6771
        %v6954 = vunpack.c.h.b16 %v6771
        %v6955 = vunpack.c.l.b16 %v6772
        %v6956 = vunpack.c.h.b16 %v6772
        %v6957 = vpack.c.b16 %v6927, %v6925
        %v6958 = vpack.c.b16 %v6928, %v6926
        %v6959 = vpack.c.b16 %v6931, %v6929
        %v6960 = vpack.c.b16 %v6932, %v6930
        %v6961 = vpack.c.b16 %v6935, %v6933
        %v6962 = vpack.c.b16 %v6936, %v6934
        %v6963 = vpack.c.b16 %v6939, %v6937
        %v6964 = vpack.c.b16 %v6940, %v6938
        %v6965 = vpack.c.b16 %v6943, %v6941
        %v6966 = vpack.c.b16 %v6944, %v6942
        %v6967 = vpack.c.b16 %v6947, %v6945
        %v6968 = vpack.c.b16 %v6948, %v6946
        %v6969 = vpack.c.b16 %v6951, %v6949
        %v6970 = vpack.c.b16 %v6952, %v6950
        %v6971 = vpack.c.b16 %v6955, %v6953
        %v6972 = vpack.c.b16 %v6956, %v6954
        %6989 = vmatpush.bf16.msra.mxu0 %v6971
        %6990 = vmatpush.bf16.msra.mxu0 %v6969
        %6991 = vmatpush.bf16.msra.mxu0 %v6967
        %6992 = vmatpush.bf16.msra.mxu0 %v6965
        %6993 = vmatpush.bf16.msra.mxu0 %v6963
        %6994 = vmatpush.bf16.msra.mxu0 %v6961
        %6995 = vmatpush.bf16.msra.mxu0 %v6959
        %6996 = vmatpush.bf16.msra.mxu0 %v6957
        %6997 = vmatmul.bf16.gmra.mxu0 %v6756
        %v6998 = vpop.f32.mrf.mxu0
        %v6999 = vadd.f32 %v6893, %v6998
        %v7000 = vpop.f32.mrf.mxu0
        %7001 = vdwg.mxu0
        %7002 = vmatpush.bf16.msra.mxu0 %v6972
        %7003 = vmatpush.bf16.msra.mxu0 %v6970
        %7004 = vmatpush.bf16.msra.mxu0 %v6968
        %7005 = vmatpush.bf16.msra.mxu0 %v6966
        %7006 = vmatpush.bf16.msra.mxu0 %v6964
        %7007 = vmatpush.bf16.msra.mxu0 %v6962
        %7008 = vmatpush.bf16.msra.mxu0 %v6960
        %7009 = vmatpush.bf16.msra.mxu0 %v6958
        %7010 = vmatmul.bf16.gmra.mxu0 %v6756
        %v7011 = vpop.f32.mrf.mxu0
        %v7012 = vadd.f32 %v6906, %v7011
        %v7013 = vpop.f32.mrf.mxu0
        %7014 = vdwg.mxu0
        %v7015 = vld [vmem:[#allocation7] sm:$0xe]
        %v7016 = vld [vmem:[%s3387] sm:$0xff]
        %v7017 = vld [vmem:[%s3387 + $0x8] sm:$0xff]
        %v7018 = vld [vmem:[%s3387 + $0x10] sm:$0xff]
        %v7019 = vld [vmem:[%s3387 + $0x18] sm:$0xff]
        %v7020 = vld [vmem:[%s3387 + $0x20] sm:$0xff]
        %v7021 = vld [vmem:[%s3387 + $0x28] sm:$0xff]
        %v7022 = vld [vmem:[%s3387 + $0x30] sm:$0xff]
        %v7023 = vld [vmem:[%s3387 + $0x38] sm:$0xff]
        %v7024 = vld [vmem:[%s3387 + $0x40] sm:$0xff]
        %v7025 = vld [vmem:[%s3387 + $0x48] sm:$0xff]
        %v7026 = vld [vmem:[%s3387 + $0x50] sm:$0xff]
        %v7027 = vld [vmem:[%s3387 + $0x58] sm:$0xff]
        %v7028 = vld [vmem:[%s3387 + $0x60] sm:$0xff]
        %v7029 = vld [vmem:[%s3387 + $0x68] sm:$0xff]
        %v7030 = vld [vmem:[%s3387 + $0x70] sm:$0xff]
        %v7031 = vld [vmem:[%s3387 + $0x78] sm:$0xff]
        %v7033 = vunpack.c.l.b16 %v7015
        %v7034 = vpack.c.b16 %v6793, %v7033
        %v7035 = vrot.slane %v7034, 1
        %v7053 = vunpack.c.l.b16 %v7016
        %v7054 = vunpack.c.h.b16 %v7016
        %v7055 = vunpack.c.l.b16 %v7017
        %v7056 = vunpack.c.h.b16 %v7017
        %v7057 = vunpack.c.l.b16 %v7018
        %v7058 = vunpack.c.h.b16 %v7018
        %v7059 = vunpack.c.l.b16 %v7019
        %v7060 = vunpack.c.h.b16 %v7019
        %v7061 = vunpack.c.l.b16 %v7020
        %v7062 = vunpack.c.h.b16 %v7020
        %v7063 = vunpack.c.l.b16 %v7021
        %v7064 = vunpack.c.h.b16 %v7021
        %v7065 = vunpack.c.l.b16 %v7022
        %v7066 = vunpack.c.h.b16 %v7022
        %v7067 = vunpack.c.l.b16 %v7023
        %v7068 = vunpack.c.h.b16 %v7023
        %v7069 = vunpack.c.l.b16 %v7024
        %v7070 = vunpack.c.h.b16 %v7024
        %v7071 = vunpack.c.l.b16 %v7025
        %v7072 = vunpack.c.h.b16 %v7025
        %v7073 = vunpack.c.l.b16 %v7026
        %v7074 = vunpack.c.h.b16 %v7026
        %v7075 = vunpack.c.l.b16 %v7027
        %v7076 = vunpack.c.h.b16 %v7027
        %v7077 = vunpack.c.l.b16 %v7028
        %v7078 = vunpack.c.h.b16 %v7028
        %v7079 = vunpack.c.l.b16 %v7029
        %v7080 = vunpack.c.h.b16 %v7029
        %v7081 = vunpack.c.l.b16 %v7030
        %v7082 = vunpack.c.h.b16 %v7030
        %v7083 = vunpack.c.l.b16 %v7031
        %v7084 = vunpack.c.h.b16 %v7031
        %v7085 = vpack.c.b16 %v7055, %v7053
        %v7086 = vpack.c.b16 %v7056, %v7054
        %v7087 = vpack.c.b16 %v7059, %v7057
        %v7088 = vpack.c.b16 %v7060, %v7058
        %v7089 = vpack.c.b16 %v7063, %v7061
        %v7090 = vpack.c.b16 %v7064, %v7062
        %v7091 = vpack.c.b16 %v7067, %v7065
        %v7092 = vpack.c.b16 %v7068, %v7066
        %v7093 = vpack.c.b16 %v7071, %v7069
        %v7094 = vpack.c.b16 %v7072, %v7070
        %v7095 = vpack.c.b16 %v7075, %v7073
        %v7096 = vpack.c.b16 %v7076, %v7074
        %v7097 = vpack.c.b16 %v7079, %v7077
        %v7098 = vpack.c.b16 %v7080, %v7078
        %v7099 = vpack.c.b16 %v7083, %v7081
        %v7100 = vpack.c.b16 %v7084, %v7082
        %7117 = vmatpush.bf16.msra.mxu0 %v7099
        %7118 = vmatpush.bf16.msra.mxu0 %v7097
        %7119 = vmatpush.bf16.msra.mxu0 %v7095
        %7120 = vmatpush.bf16.msra.mxu0 %v7093
        %7121 = vmatpush.bf16.msra.mxu0 %v7091
        %7122 = vmatpush.bf16.msra.mxu0 %v7089
        %7123 = vmatpush.bf16.msra.mxu0 %v7087
        %7124 = vmatpush.bf16.msra.mxu0 %v7085
        %7125 = vmatmul.bf16.gmra.mxu0 %v7035
        %v7126 = vpop.f32.mrf.mxu0
        %v7127 = vadd.f32 0.0, %v7126
        %v7128 = vpop.f32.mrf.mxu0
        %7129 = vdwg.mxu0
        %7130 = vmatpush.bf16.msra.mxu0 %v7100
        %7131 = vmatpush.bf16.msra.mxu0 %v7098
        %7132 = vmatpush.bf16.msra.mxu0 %v7096
        %7133 = vmatpush.bf16.msra.mxu0 %v7094
        %7134 = vmatpush.bf16.msra.mxu0 %v7092
        %7135 = vmatpush.bf16.msra.mxu0 %v7090
        %7136 = vmatpush.bf16.msra.mxu0 %v7088
        %7137 = vmatpush.bf16.msra.mxu0 %v7086
        %7138 = vmatmul.bf16.gmra.mxu0 %v7035
        %v7139 = vpop.f32.mrf.mxu0
        %v7140 = vadd.f32 0.0, %v7139
        %v7141 = vpop.f32.mrf.mxu0
        %7142 = vdwg.mxu0
        %v7143 = vadd.f32 %v6999, %v7127
        %v7144 = vadd.f32 %v7012, %v7140
        %v7145 = vld [vmem:[#allocation7] sm:$0xc]
        %v7146 = vld [vmem:[#allocation7 + $0x4] sm:$0x3]
        %v7147 = vld [vmem:[%s3519] sm:$0xff]
        %v7148 = vld [vmem:[%s3519 + $0x8] sm:$0xff]
        %v7149 = vld [vmem:[%s3519 + $0x10] sm:$0xff]
        %v7150 = vld [vmem:[%s3519 + $0x18] sm:$0xff]
        %v7151 = vld [vmem:[%s3519 + $0x20] sm:$0xff]
        %v7152 = vld [vmem:[%s3519 + $0x28] sm:$0xff]
        %v7153 = vld [vmem:[%s3519 + $0x30] sm:$0xff]
        %v7154 = vld [vmem:[%s3519 + $0x38] sm:$0xff]
        %v7155 = vld [vmem:[%s3519 + $0x40] sm:$0xff]
        %v7156 = vld [vmem:[%s3519 + $0x48] sm:$0xff]
        %v7157 = vld [vmem:[%s3519 + $0x50] sm:$0xff]
        %v7158 = vld [vmem:[%s3519 + $0x58] sm:$0xff]
        %v7159 = vld [vmem:[%s3519 + $0x60] sm:$0xff]
        %v7160 = vld [vmem:[%s3519 + $0x68] sm:$0xff]
        %v7161 = vld [vmem:[%s3519 + $0x70] sm:$0xff]
        %v7162 = vld [vmem:[%s3519 + $0x78] sm:$0xff]
        %v7165 = vunpack.c.l.b16 %v7145
        %v7166 = vunpack.c.l.b16 %v7146
        %v7167 = vpack.c.b16 %v7166, %v7165
        %v7168 = vrot.slane %v7167, 2
        %v7186 = vunpack.c.l.b16 %v7147
        %v7187 = vunpack.c.h.b16 %v7147
        %v7188 = vunpack.c.l.b16 %v7148
        %v7189 = vunpack.c.h.b16 %v7148
        %v7190 = vunpack.c.l.b16 %v7149
        %v7191 = vunpack.c.h.b16 %v7149
        %v7192 = vunpack.c.l.b16 %v7150
        %v7193 = vunpack.c.h.b16 %v7150
        %v7194 = vunpack.c.l.b16 %v7151
        %v7195 = vunpack.c.h.b16 %v7151
        %v7196 = vunpack.c.l.b16 %v7152
        %v7197 = vunpack.c.h.b16 %v7152
        %v7198 = vunpack.c.l.b16 %v7153
        %v7199 = vunpack.c.h.b16 %v7153
        %v7200 = vunpack.c.l.b16 %v7154
        %v7201 = vunpack.c.h.b16 %v7154
        %v7202 = vunpack.c.l.b16 %v7155
        %v7203 = vunpack.c.h.b16 %v7155
        %v7204 = vunpack.c.l.b16 %v7156
        %v7205 = vunpack.c.h.b16 %v7156
        %v7206 = vunpack.c.l.b16 %v7157
        %v7207 = vunpack.c.h.b16 %v7157
        %v7208 = vunpack.c.l.b16 %v7158
        %v7209 = vunpack.c.h.b16 %v7158
        %v7210 = vunpack.c.l.b16 %v7159
        %v7211 = vunpack.c.h.b16 %v7159
        %v7212 = vunpack.c.l.b16 %v7160
        %v7213 = vunpack.c.h.b16 %v7160
        %v7214 = vunpack.c.l.b16 %v7161
        %v7215 = vunpack.c.h.b16 %v7161
        %v7216 = vunpack.c.l.b16 %v7162
        %v7217 = vunpack.c.h.b16 %v7162
        %v7218 = vpack.c.b16 %v7188, %v7186
        %v7219 = vpack.c.b16 %v7189, %v7187
        %v7220 = vpack.c.b16 %v7192, %v7190
        %v7221 = vpack.c.b16 %v7193, %v7191
        %v7222 = vpack.c.b16 %v7196, %v7194
        %v7223 = vpack.c.b16 %v7197, %v7195
        %v7224 = vpack.c.b16 %v7200, %v7198
        %v7225 = vpack.c.b16 %v7201, %v7199
        %v7226 = vpack.c.b16 %v7204, %v7202
        %v7227 = vpack.c.b16 %v7205, %v7203
        %v7228 = vpack.c.b16 %v7208, %v7206
        %v7229 = vpack.c.b16 %v7209, %v7207
        %v7230 = vpack.c.b16 %v7212, %v7210
        %v7231 = vpack.c.b16 %v7213, %v7211
        %v7232 = vpack.c.b16 %v7216, %v7214
        %v7233 = vpack.c.b16 %v7217, %v7215
        %7250 = vmatpush.bf16.msra.mxu0 %v7232
        %7251 = vmatpush.bf16.msra.mxu0 %v7230
        %7252 = vmatpush.bf16.msra.mxu0 %v7228
        %7253 = vmatpush.bf16.msra.mxu0 %v7226
        %7254 = vmatpush.bf16.msra.mxu0 %v7224
        %7255 = vmatpush.bf16.msra.mxu0 %v7222
        %7256 = vmatpush.bf16.msra.mxu0 %v7220
        %7257 = vmatpush.bf16.msra.mxu0 %v7218
        %7258 = vmatmul.bf16.gmra.mxu0 %v7168
        %v7259 = vpop.f32.mrf.mxu0
        %v7260 = vadd.f32 0.0, %v7259
        %v7261 = vpop.f32.mrf.mxu0
        %7262 = vdwg.mxu0
        %7263 = vmatpush.bf16.msra.mxu0 %v7233
        %7264 = vmatpush.bf16.msra.mxu0 %v7231
        %7265 = vmatpush.bf16.msra.mxu0 %v7229
        %7266 = vmatpush.bf16.msra.mxu0 %v7227
        %7267 = vmatpush.bf16.msra.mxu0 %v7225
        %7268 = vmatpush.bf16.msra.mxu0 %v7223
        %7269 = vmatpush.bf16.msra.mxu0 %v7221
        %7270 = vmatpush.bf16.msra.mxu0 %v7219
        %7271 = vmatmul.bf16.gmra.mxu0 %v7168
        %v7272 = vpop.f32.mrf.mxu0
        %v7273 = vadd.f32 0.0, %v7272
        %v7274 = vpop.f32.mrf.mxu0
        %7275 = vdwg.mxu0
        %v7276 = vadd.f32 %v7143, %v7260
        %v7277 = vadd.f32 %v7144, %v7273
        %v7278 = vld [vmem:[#allocation7 + $0x4] sm:$0x7]
        %v7279 = vld [vmem:[%s3652] sm:$0xff]
        %v7280 = vld [vmem:[%s3652 + $0x8] sm:$0xff]
        %v7281 = vld [vmem:[%s3652 + $0x10] sm:$0xff]
        %v7282 = vld [vmem:[%s3652 + $0x18] sm:$0xff]
        %v7283 = vld [vmem:[%s3652 + $0x20] sm:$0xff]
        %v7284 = vld [vmem:[%s3652 + $0x28] sm:$0xff]
        %v7285 = vld [vmem:[%s3652 + $0x30] sm:$0xff]
        %v7286 = vld [vmem:[%s3652 + $0x38] sm:$0xff]
        %v7287 = vld [vmem:[%s3652 + $0x40] sm:$0xff]
        %v7288 = vld [vmem:[%s3652 + $0x48] sm:$0xff]
        %v7289 = vld [vmem:[%s3652 + $0x50] sm:$0xff]
        %v7290 = vld [vmem:[%s3652 + $0x58] sm:$0xff]
        %v7291 = vld [vmem:[%s3652 + $0x60] sm:$0xff]
        %v7292 = vld [vmem:[%s3652 + $0x68] sm:$0xff]
        %v7293 = vld [vmem:[%s3652 + $0x70] sm:$0xff]
        %v7294 = vld [vmem:[%s3652 + $0x78] sm:$0xff]
        %v7296 = vunpack.c.l.b16 %v7278
        %v7297 = vpack.c.b16 %v7296, %v7165
        %v7299 = vshrl.u32 %v7297, 16
        %v7301 = vrot.slane %v7299, 2
        %v7302 = vshll.u32 %v7297, 16
        %v7304 = vrot.slane %v7302, 3
        %v7305 = vor.u32 %v7301, %v7304
        %v7323 = vunpack.c.l.b16 %v7279
        %v7324 = vunpack.c.h.b16 %v7279
        %v7325 = vunpack.c.l.b16 %v7280
        %v7326 = vunpack.c.h.b16 %v7280
        %v7327 = vunpack.c.l.b16 %v7281
        %v7328 = vunpack.c.h.b16 %v7281
        %v7329 = vunpack.c.l.b16 %v7282
        %v7330 = vunpack.c.h.b16 %v7282
        %v7331 = vunpack.c.l.b16 %v7283
        %v7332 = vunpack.c.h.b16 %v7283
        %v7333 = vunpack.c.l.b16 %v7284
        %v7334 = vunpack.c.h.b16 %v7284
        %v7335 = vunpack.c.l.b16 %v7285
        %v7336 = vunpack.c.h.b16 %v7285
        %v7337 = vunpack.c.l.b16 %v7286
        %v7338 = vunpack.c.h.b16 %v7286
        %v7339 = vunpack.c.l.b16 %v7287
        %v7340 = vunpack.c.h.b16 %v7287
        %v7341 = vunpack.c.l.b16 %v7288
        %v7342 = vunpack.c.h.b16 %v7288
        %v7343 = vunpack.c.l.b16 %v7289
        %v7344 = vunpack.c.h.b16 %v7289
        %v7345 = vunpack.c.l.b16 %v7290
        %v7346 = vunpack.c.h.b16 %v7290
        %v7347 = vunpack.c.l.b16 %v7291
        %v7348 = vunpack.c.h.b16 %v7291
        %v7349 = vunpack.c.l.b16 %v7292
        %v7350 = vunpack.c.h.b16 %v7292
        %v7351 = vunpack.c.l.b16 %v7293
        %v7352 = vunpack.c.h.b16 %v7293
        %v7353 = vunpack.c.l.b16 %v7294
        %v7354 = vunpack.c.h.b16 %v7294
        %v7355 = vpack.c.b16 %v7325, %v7323
        %v7356 = vpack.c.b16 %v7326, %v7324
        %v7357 = vpack.c.b16 %v7329, %v7327
        %v7358 = vpack.c.b16 %v7330, %v7328
        %v7359 = vpack.c.b16 %v7333, %v7331
        %v7360 = vpack.c.b16 %v7334, %v7332
        %v7361 = vpack.c.b16 %v7337, %v7335
        %v7362 = vpack.c.b16 %v7338, %v7336
        %v7363 = vpack.c.b16 %v7341, %v7339
        %v7364 = vpack.c.b16 %v7342, %v7340
        %v7365 = vpack.c.b16 %v7345, %v7343
        %v7366 = vpack.c.b16 %v7346, %v7344
        %v7367 = vpack.c.b16 %v7349, %v7347
        %v7368 = vpack.c.b16 %v7350, %v7348
        %v7369 = vpack.c.b16 %v7353, %v7351
        %v7370 = vpack.c.b16 %v7354, %v7352
        %7387 = vmatpush.bf16.msra.mxu0 %v7369
        %7388 = vmatpush.bf16.msra.mxu0 %v7367
        %7389 = vmatpush.bf16.msra.mxu0 %v7365
        %7390 = vmatpush.bf16.msra.mxu0 %v7363
        %7391 = vmatpush.bf16.msra.mxu0 %v7361
        %7392 = vmatpush.bf16.msra.mxu0 %v7359
        %7393 = vmatpush.bf16.msra.mxu0 %v7357
        %7394 = vmatpush.bf16.msra.mxu0 %v7355
        %7395 = vmatmul.bf16.gmra.mxu0 %v7305
        %v7396 = vpop.f32.mrf.mxu0
        %v7397 = vadd.f32 0.0, %v7396
        %v7398 = vpop.f32.mrf.mxu0
        %7399 = vdwg.mxu0
        %7400 = vmatpush.bf16.msra.mxu0 %v7370
        %7401 = vmatpush.bf16.msra.mxu0 %v7368
        %7402 = vmatpush.bf16.msra.mxu0 %v7366
        %7403 = vmatpush.bf16.msra.mxu0 %v7364
        %7404 = vmatpush.bf16.msra.mxu0 %v7362
        %7405 = vmatpush.bf16.msra.mxu0 %v7360
        %7406 = vmatpush.bf16.msra.mxu0 %v7358
        %7407 = vmatpush.bf16.msra.mxu0 %v7356
        %7408 = vmatmul.bf16.gmra.mxu0 %v7305
        %v7409 = vpop.f32.mrf.mxu0
        %v7410 = vadd.f32 0.0, %v7409
        %v7411 = vpop.f32.mrf.mxu0
        %7412 = vdwg.mxu0
        %v7413 = vadd.f32 %v7276, %v7397
        %v7414 = vadd.f32 %v7277, %v7410
        %v7415 = vld [vmem:[#allocation7] sm:$0x8]
        %v7416 = vld [vmem:[%s3790] sm:$0xff]
        %v7417 = vld [vmem:[%s3790 + $0x8] sm:$0xff]
        %v7418 = vld [vmem:[%s3790 + $0x10] sm:$0xff]
        %v7419 = vld [vmem:[%s3790 + $0x18] sm:$0xff]
        %v7420 = vld [vmem:[%s3790 + $0x20] sm:$0xff]
        %v7421 = vld [vmem:[%s3790 + $0x28] sm:$0xff]
        %v7422 = vld [vmem:[%s3790 + $0x30] sm:$0xff]
        %v7423 = vld [vmem:[%s3790 + $0x38] sm:$0xff]
        %v7424 = vld [vmem:[%s3790 + $0x40] sm:$0xff]
        %v7425 = vld [vmem:[%s3790 + $0x48] sm:$0xff]
        %v7426 = vld [vmem:[%s3790 + $0x50] sm:$0xff]
        %v7427 = vld [vmem:[%s3790 + $0x58] sm:$0xff]
        %v7428 = vld [vmem:[%s3790 + $0x60] sm:$0xff]
        %v7429 = vld [vmem:[%s3790 + $0x68] sm:$0xff]
        %v7430 = vld [vmem:[%s3790 + $0x70] sm:$0xff]
        %v7431 = vld [vmem:[%s3790 + $0x78] sm:$0xff]
        %v7433 = vunpack.c.l.b16 %v7415
        %v7434 = vpack.c.b16 %v7296, %v7433
        %v7435 = vrot.slane %v7434, 3
        %v7453 = vunpack.c.l.b16 %v7416
        %v7454 = vunpack.c.h.b16 %v7416
        %v7455 = vunpack.c.l.b16 %v7417
        %v7456 = vunpack.c.h.b16 %v7417
        %v7457 = vunpack.c.l.b16 %v7418
        %v7458 = vunpack.c.h.b16 %v7418
        %v7459 = vunpack.c.l.b16 %v7419
        %v7460 = vunpack.c.h.b16 %v7419
        %v7461 = vunpack.c.l.b16 %v7420
        %v7462 = vunpack.c.h.b16 %v7420
        %v7463 = vunpack.c.l.b16 %v7421
        %v7464 = vunpack.c.h.b16 %v7421
        %v7465 = vunpack.c.l.b16 %v7422
        %v7466 = vunpack.c.h.b16 %v7422
        %v7467 = vunpack.c.l.b16 %v7423
        %v7468 = vunpack.c.h.b16 %v7423
        %v7469 = vunpack.c.l.b16 %v7424
        %v7470 = vunpack.c.h.b16 %v7424
        %v7471 = vunpack.c.l.b16 %v7425
        %v7472 = vunpack.c.h.b16 %v7425
        %v7473 = vunpack.c.l.b16 %v7426
        %v7474 = vunpack.c.h.b16 %v7426
        %v7475 = vunpack.c.l.b16 %v7427
        %v7476 = vunpack.c.h.b16 %v7427
        %v7477 = vunpack.c.l.b16 %v7428
        %v7478 = vunpack.c.h.b16 %v7428
        %v7479 = vunpack.c.l.b16 %v7429
        %v7480 = vunpack.c.h.b16 %v7429
        %v7481 = vunpack.c.l.b16 %v7430
        %v7482 = vunpack.c.h.b16 %v7430
        %v7483 = vunpack.c.l.b16 %v7431
        %v7484 = vunpack.c.h.b16 %v7431
        %v7485 = vpack.c.b16 %v7455, %v7453
        %v7486 = vpack.c.b16 %v7456, %v7454
        %v7487 = vpack.c.b16 %v7459, %v7457
        %v7488 = vpack.c.b16 %v7460, %v7458
        %v7489 = vpack.c.b16 %v7463, %v7461
        %v7490 = vpack.c.b16 %v7464, %v7462
        %v7491 = vpack.c.b16 %v7467, %v7465
        %v7492 = vpack.c.b16 %v7468, %v7466
        %v7493 = vpack.c.b16 %v7471, %v7469
        %v7494 = vpack.c.b16 %v7472, %v7470
        %v7495 = vpack.c.b16 %v7475, %v7473
        %v7496 = vpack.c.b16 %v7476, %v7474
        %v7497 = vpack.c.b16 %v7479, %v7477
        %v7498 = vpack.c.b16 %v7480, %v7478
        %v7499 = vpack.c.b16 %v7483, %v7481
        %v7500 = vpack.c.b16 %v7484, %v7482
        %7517 = vmatpush.bf16.msra.mxu0 %v7499
        %7518 = vmatpush.bf16.msra.mxu0 %v7497
        %7519 = vmatpush.bf16.msra.mxu0 %v7495
        %7520 = vmatpush.bf16.msra.mxu0 %v7493
        %7521 = vmatpush.bf16.msra.mxu0 %v7491
        %7522 = vmatpush.bf16.msra.mxu0 %v7489
        %7523 = vmatpush.bf16.msra.mxu0 %v7487
        %7524 = vmatpush.bf16.msra.mxu0 %v7485
        %7525 = vmatmul.bf16.gmra.mxu0 %v7435
        %v7526 = vpop.f32.mrf.mxu0
        %v7527 = vadd.f32 0.0, %v7526
        %v7528 = vpop.f32.mrf.mxu0
        %7529 = vdwg.mxu0
        %7530 = vmatpush.bf16.msra.mxu0 %v7500
        %7531 = vmatpush.bf16.msra.mxu0 %v7498
        %7532 = vmatpush.bf16.msra.mxu0 %v7496
        %7533 = vmatpush.bf16.msra.mxu0 %v7494
        %7534 = vmatpush.bf16.msra.mxu0 %v7492
        %7535 = vmatpush.bf16.msra.mxu0 %v7490
        %7536 = vmatpush.bf16.msra.mxu0 %v7488
        %7537 = vmatpush.bf16.msra.mxu0 %v7486
        %7538 = vmatmul.bf16.gmra.mxu0 %v7435
        %v7539 = vpop.f32.mrf.mxu0
        %v7540 = vadd.f32 0.0, %v7539
        %v7541 = vpop.f32.mrf.mxu0
        %7542 = vdwg.mxu0
        %v7543 = vadd.f32 %v7413, %v7527
        %v7544 = vadd.f32 %v7414, %v7540
        %v7545 = vld [vmem:[#allocation7 + $0x4] sm:$0xf]
        %v7546 = vld [vmem:[%s3921] sm:$0xff]
        %v7547 = vld [vmem:[%s3921 + $0x8] sm:$0xff]
        %v7548 = vld [vmem:[%s3921 + $0x10] sm:$0xff]
        %v7549 = vld [vmem:[%s3921 + $0x18] sm:$0xff]
        %v7550 = vld [vmem:[%s3921 + $0x20] sm:$0xff]
        %v7551 = vld [vmem:[%s3921 + $0x28] sm:$0xff]
        %v7552 = vld [vmem:[%s3921 + $0x30] sm:$0xff]
        %v7553 = vld [vmem:[%s3921 + $0x38] sm:$0xff]
        %v7554 = vld [vmem:[%s3921 + $0x40] sm:$0xff]
        %v7555 = vld [vmem:[%s3921 + $0x48] sm:$0xff]
        %v7556 = vld [vmem:[%s3921 + $0x50] sm:$0xff]
        %v7557 = vld [vmem:[%s3921 + $0x58] sm:$0xff]
        %v7558 = vld [vmem:[%s3921 + $0x60] sm:$0xff]
        %v7559 = vld [vmem:[%s3921 + $0x68] sm:$0xff]
        %v7560 = vld [vmem:[%s3921 + $0x70] sm:$0xff]
        %v7561 = vld [vmem:[%s3921 + $0x78] sm:$0xff]
        %v7578 = vunpack.c.l.b16 %v7546
        %v7579 = vunpack.c.h.b16 %v7546
        %v7580 = vunpack.c.l.b16 %v7547
        %v7581 = vunpack.c.h.b16 %v7547
        %v7582 = vunpack.c.l.b16 %v7548
        %v7583 = vunpack.c.h.b16 %v7548
        %v7584 = vunpack.c.l.b16 %v7549
        %v7585 = vunpack.c.h.b16 %v7549
        %v7586 = vunpack.c.l.b16 %v7550
        %v7587 = vunpack.c.h.b16 %v7550
        %v7588 = vunpack.c.l.b16 %v7551
        %v7589 = vunpack.c.h.b16 %v7551
        %v7590 = vunpack.c.l.b16 %v7552
        %v7591 = vunpack.c.h.b16 %v7552
        %v7592 = vunpack.c.l.b16 %v7553
        %v7593 = vunpack.c.h.b16 %v7553
        %v7594 = vunpack.c.l.b16 %v7554
        %v7595 = vunpack.c.h.b16 %v7554
        %v7596 = vunpack.c.l.b16 %v7555
        %v7597 = vunpack.c.h.b16 %v7555
        %v7598 = vunpack.c.l.b16 %v7556
        %v7599 = vunpack.c.h.b16 %v7556
        %v7600 = vunpack.c.l.b16 %v7557
        %v7601 = vunpack.c.h.b16 %v7557
        %v7602 = vunpack.c.l.b16 %v7558
        %v7603 = vunpack.c.h.b16 %v7558
        %v7604 = vunpack.c.l.b16 %v7559
        %v7605 = vunpack.c.h.b16 %v7559
        %v7606 = vunpack.c.l.b16 %v7560
        %v7607 = vunpack.c.h.b16 %v7560
        %v7608 = vunpack.c.l.b16 %v7561
        %v7609 = vunpack.c.h.b16 %v7561
        %v7610 = vpack.c.b16 %v7580, %v7578
        %v7611 = vpack.c.b16 %v7581, %v7579
        %v7612 = vpack.c.b16 %v7584, %v7582
        %v7613 = vpack.c.b16 %v7585, %v7583
        %v7614 = vpack.c.b16 %v7588, %v7586
        %v7615 = vpack.c.b16 %v7589, %v7587
        %v7616 = vpack.c.b16 %v7592, %v7590
        %v7617 = vpack.c.b16 %v7593, %v7591
        %v7618 = vpack.c.b16 %v7596, %v7594
        %v7619 = vpack.c.b16 %v7597, %v7595
        %v7620 = vpack.c.b16 %v7600, %v7598
        %v7621 = vpack.c.b16 %v7601, %v7599
        %v7622 = vpack.c.b16 %v7604, %v7602
        %v7623 = vpack.c.b16 %v7605, %v7603
        %v7624 = vpack.c.b16 %v7608, %v7606
        %v7625 = vpack.c.b16 %v7609, %v7607
        %7642 = vmatpush.bf16.msra.mxu0 %v7624
        %7643 = vmatpush.bf16.msra.mxu0 %v7622
        %7644 = vmatpush.bf16.msra.mxu0 %v7620
        %7645 = vmatpush.bf16.msra.mxu0 %v7618
        %7646 = vmatpush.bf16.msra.mxu0 %v7616
        %7647 = vmatpush.bf16.msra.mxu0 %v7614
        %7648 = vmatpush.bf16.msra.mxu0 %v7612
        %7649 = vmatpush.bf16.msra.mxu0 %v7610
        %7650 = vmatmul.bf16.gmra.mxu0 %v7545
        %v7651 = vpop.f32.mrf.mxu0
        %v7652 = vadd.f32 0.0, %v7651
        %v7653 = vpop.f32.mrf.mxu0
        %7654 = vdwg.mxu0
        %7655 = vmatpush.bf16.msra.mxu0 %v7625
        %7656 = vmatpush.bf16.msra.mxu0 %v7623
        %7657 = vmatpush.bf16.msra.mxu0 %v7621
        %7658 = vmatpush.bf16.msra.mxu0 %v7619
        %7659 = vmatpush.bf16.msra.mxu0 %v7617
        %7660 = vmatpush.bf16.msra.mxu0 %v7615
        %7661 = vmatpush.bf16.msra.mxu0 %v7613
        %7662 = vmatpush.bf16.msra.mxu0 %v7611
        %7663 = vmatmul.bf16.gmra.mxu0 %v7545
        %v7664 = vpop.f32.mrf.mxu0
        %v7665 = vadd.f32 0.0, %v7664
        %v7666 = vpop.f32.mrf.mxu0
        %7667 = vdwg.mxu0
        %v7668 = vadd.f32 %v7543, %v7652
        %v7669 = vadd.f32 %v7544, %v7665
        %v7670 = vld [vmem:[#allocation7 + $0x4] sm:$0xf]
        %v7671 = vld [vmem:[#allocation7 + $0x8] sm:$0x1]
        %v7672 = vld [vmem:[%s4048] sm:$0xff]
        %v7673 = vld [vmem:[%s4048 + $0x8] sm:$0xff]
        %v7674 = vld [vmem:[%s4048 + $0x10] sm:$0xff]
        %v7675 = vld [vmem:[%s4048 + $0x18] sm:$0xff]
        %v7676 = vld [vmem:[%s4048 + $0x20] sm:$0xff]
        %v7677 = vld [vmem:[%s4048 + $0x28] sm:$0xff]
        %v7678 = vld [vmem:[%s4048 + $0x30] sm:$0xff]
        %v7679 = vld [vmem:[%s4048 + $0x38] sm:$0xff]
        %v7680 = vld [vmem:[%s4048 + $0x40] sm:$0xff]
        %v7681 = vld [vmem:[%s4048 + $0x48] sm:$0xff]
        %v7682 = vld [vmem:[%s4048 + $0x50] sm:$0xff]
        %v7683 = vld [vmem:[%s4048 + $0x58] sm:$0xff]
        %v7684 = vld [vmem:[%s4048 + $0x60] sm:$0xff]
        %v7685 = vld [vmem:[%s4048 + $0x68] sm:$0xff]
        %v7686 = vld [vmem:[%s4048 + $0x70] sm:$0xff]
        %v7687 = vld [vmem:[%s4048 + $0x78] sm:$0xff]
        %v7690 = vunpack.c.l.b16 %v7670
        %v7691 = vunpack.c.l.b16 %v7671
        %v7692 = vpack.c.b16 %v7691, %v7690
        %v7694 = vshrl.u32 %v7692, 16
        %v7696 = vshll.u32 %v7692, 16
        %v7698 = vrot.slane %v7696, 1
        %v7699 = vor.u32 %v7694, %v7698
        %v7717 = vunpack.c.l.b16 %v7672
        %v7718 = vunpack.c.h.b16 %v7672
        %v7719 = vunpack.c.l.b16 %v7673
        %v7720 = vunpack.c.h.b16 %v7673
        %v7721 = vunpack.c.l.b16 %v7674
        %v7722 = vunpack.c.h.b16 %v7674
        %v7723 = vunpack.c.l.b16 %v7675
        %v7724 = vunpack.c.h.b16 %v7675
        %v7725 = vunpack.c.l.b16 %v7676
        %v7726 = vunpack.c.h.b16 %v7676
        %v7727 = vunpack.c.l.b16 %v7677
        %v7728 = vunpack.c.h.b16 %v7677
        %v7729 = vunpack.c.l.b16 %v7678
        %v7730 = vunpack.c.h.b16 %v7678
        %v7731 = vunpack.c.l.b16 %v7679
        %v7732 = vunpack.c.h.b16 %v7679
        %v7733 = vunpack.c.l.b16 %v7680
        %v7734 = vunpack.c.h.b16 %v7680
        %v7735 = vunpack.c.l.b16 %v7681
        %v7736 = vunpack.c.h.b16 %v7681
        %v7737 = vunpack.c.l.b16 %v7682
        %v7738 = vunpack.c.h.b16 %v7682
        %v7739 = vunpack.c.l.b16 %v7683
        %v7740 = vunpack.c.h.b16 %v7683
        %v7741 = vunpack.c.l.b16 %v7684
        %v7742 = vunpack.c.h.b16 %v7684
        %v7743 = vunpack.c.l.b16 %v7685
        %v7744 = vunpack.c.h.b16 %v7685
        %v7745 = vunpack.c.l.b16 %v7686
        %v7746 = vunpack.c.h.b16 %v7686
        %v7747 = vunpack.c.l.b16 %v7687
        %v7748 = vunpack.c.h.b16 %v7687
        %v7749 = vpack.c.b16 %v7719, %v7717
        %v7750 = vpack.c.b16 %v7720, %v7718
        %v7751 = vpack.c.b16 %v7723, %v7721
        %v7752 = vpack.c.b16 %v7724, %v7722
        %v7753 = vpack.c.b16 %v7727, %v7725
        %v7754 = vpack.c.b16 %v7728, %v7726
        %v7755 = vpack.c.b16 %v7731, %v7729
        %v7756 = vpack.c.b16 %v7732, %v7730
        %v7757 = vpack.c.b16 %v7735, %v7733
        %v7758 = vpack.c.b16 %v7736, %v7734
        %v7759 = vpack.c.b16 %v7739, %v7737
        %v7760 = vpack.c.b16 %v7740, %v7738
        %v7761 = vpack.c.b16 %v7743, %v7741
        %v7762 = vpack.c.b16 %v7744, %v7742
        %v7763 = vpack.c.b16 %v7747, %v7745
        %v7764 = vpack.c.b16 %v7748, %v7746
        %7781 = vmatpush.bf16.msra.mxu0 %v7763
        %7782 = vmatpush.bf16.msra.mxu0 %v7761
        %7783 = vmatpush.bf16.msra.mxu0 %v7759
        %7784 = vmatpush.bf16.msra.mxu0 %v7757
        %7785 = vmatpush.bf16.msra.mxu0 %v7755
        %7786 = vmatpush.bf16.msra.mxu0 %v7753
        %7787 = vmatpush.bf16.msra.mxu0 %v7751
        %7788 = vmatpush.bf16.msra.mxu0 %v7749
        %7789 = vmatmul.bf16.gmra.mxu0 %v7699
        %v7790 = vpop.f32.mrf.mxu0
        %v7791 = vadd.f32 0.0, %v7790
        %v7792 = vpop.f32.mrf.mxu0
        %7793 = vdwg.mxu0
        %7794 = vmatpush.bf16.msra.mxu0 %v7764
        %7795 = vmatpush.bf16.msra.mxu0 %v7762
        %7796 = vmatpush.bf16.msra.mxu0 %v7760
        %7797 = vmatpush.bf16.msra.mxu0 %v7758
        %7798 = vmatpush.bf16.msra.mxu0 %v7756
        %7799 = vmatpush.bf16.msra.mxu0 %v7754
        %7800 = vmatpush.bf16.msra.mxu0 %v7752
        %7801 = vmatpush.bf16.msra.mxu0 %v7750
        %7802 = vmatmul.bf16.gmra.mxu0 %v7699
        %v7803 = vpop.f32.mrf.mxu0
        %v7804 = vadd.f32 0.0, %v7803
        %v7805 = vpop.f32.mrf.mxu0
        %7806 = vdwg.mxu0
        %v7807 = vadd.f32 %v7668, %v7791
        %v7808 = vadd.f32 %v7669, %v7804
        %v7809 = vld [vmem:[#allocation7 + $0x4] sm:$0xe]
        %v7810 = vld [vmem:[%s4187] sm:$0xff]
        %v7811 = vld [vmem:[%s4187 + $0x8] sm:$0xff]
        %v7812 = vld [vmem:[%s4187 + $0x10] sm:$0xff]
        %v7813 = vld [vmem:[%s4187 + $0x18] sm:$0xff]
        %v7814 = vld [vmem:[%s4187 + $0x20] sm:$0xff]
        %v7815 = vld [vmem:[%s4187 + $0x28] sm:$0xff]
        %v7816 = vld [vmem:[%s4187 + $0x30] sm:$0xff]
        %v7817 = vld [vmem:[%s4187 + $0x38] sm:$0xff]
        %v7818 = vld [vmem:[%s4187 + $0x40] sm:$0xff]
        %v7819 = vld [vmem:[%s4187 + $0x48] sm:$0xff]
        %v7820 = vld [vmem:[%s4187 + $0x50] sm:$0xff]
        %v7821 = vld [vmem:[%s4187 + $0x58] sm:$0xff]
        %v7822 = vld [vmem:[%s4187 + $0x60] sm:$0xff]
        %v7823 = vld [vmem:[%s4187 + $0x68] sm:$0xff]
        %v7824 = vld [vmem:[%s4187 + $0x70] sm:$0xff]
        %v7825 = vld [vmem:[%s4187 + $0x78] sm:$0xff]
        %v7827 = vunpack.c.l.b16 %v7809
        %v7828 = vpack.c.b16 %v7691, %v7827
        %v7829 = vrot.slane %v7828, 1
        %v7847 = vunpack.c.l.b16 %v7810
        %v7848 = vunpack.c.h.b16 %v7810
        %v7849 = vunpack.c.l.b16 %v7811
        %v7850 = vunpack.c.h.b16 %v7811
        %v7851 = vunpack.c.l.b16 %v7812
        %v7852 = vunpack.c.h.b16 %v7812
        %v7853 = vunpack.c.l.b16 %v7813
        %v7854 = vunpack.c.h.b16 %v7813
        %v7855 = vunpack.c.l.b16 %v7814
        %v7856 = vunpack.c.h.b16 %v7814
        %v7857 = vunpack.c.l.b16 %v7815
        %v7858 = vunpack.c.h.b16 %v7815
        %v7859 = vunpack.c.l.b16 %v7816
        %v7860 = vunpack.c.h.b16 %v7816
        %v7861 = vunpack.c.l.b16 %v7817
        %v7862 = vunpack.c.h.b16 %v7817
        %v7863 = vunpack.c.l.b16 %v7818
        %v7864 = vunpack.c.h.b16 %v7818
        %v7865 = vunpack.c.l.b16 %v7819
        %v7866 = vunpack.c.h.b16 %v7819
        %v7867 = vunpack.c.l.b16 %v7820
        %v7868 = vunpack.c.h.b16 %v7820
        %v7869 = vunpack.c.l.b16 %v7821
        %v7870 = vunpack.c.h.b16 %v7821
        %v7871 = vunpack.c.l.b16 %v7822
        %v7872 = vunpack.c.h.b16 %v7822
        %v7873 = vunpack.c.l.b16 %v7823
        %v7874 = vunpack.c.h.b16 %v7823
        %v7875 = vunpack.c.l.b16 %v7824
        %v7876 = vunpack.c.h.b16 %v7824
        %v7877 = vunpack.c.l.b16 %v7825
        %v7878 = vunpack.c.h.b16 %v7825
        %v7879 = vpack.c.b16 %v7849, %v7847
        %v7880 = vpack.c.b16 %v7850, %v7848
        %v7881 = vpack.c.b16 %v7853, %v7851
        %v7882 = vpack.c.b16 %v7854, %v7852
        %v7883 = vpack.c.b16 %v7857, %v7855
        %v7884 = vpack.c.b16 %v7858, %v7856
        %v7885 = vpack.c.b16 %v7861, %v7859
        %v7886 = vpack.c.b16 %v7862, %v7860
        %v7887 = vpack.c.b16 %v7865, %v7863
        %v7888 = vpack.c.b16 %v7866, %v7864
        %v7889 = vpack.c.b16 %v7869, %v7867
        %v7890 = vpack.c.b16 %v7870, %v7868
        %v7891 = vpack.c.b16 %v7873, %v7871
        %v7892 = vpack.c.b16 %v7874, %v7872
        %v7893 = vpack.c.b16 %v7877, %v7875
        %v7894 = vpack.c.b16 %v7878, %v7876
        %7911 = vmatpush.bf16.msra.mxu0 %v7893
        %7912 = vmatpush.bf16.msra.mxu0 %v7891
        %7913 = vmatpush.bf16.msra.mxu0 %v7889
        %7914 = vmatpush.bf16.msra.mxu0 %v7887
        %7915 = vmatpush.bf16.msra.mxu0 %v7885
        %7916 = vmatpush.bf16.msra.mxu0 %v7883
        %7917 = vmatpush.bf16.msra.mxu0 %v7881
        %7918 = vmatpush.bf16.msra.mxu0 %v7879
        %7919 = vmatmul.bf16.gmra.mxu0 %v7829
        %v7920 = vpop.f32.mrf.mxu0
        %v7921 = vadd.f32 0.0, %v7920
        %v7922 = vpop.f32.mrf.mxu0
        %7923 = vdwg.mxu0
        %7924 = vmatpush.bf16.msra.mxu0 %v7894
        %7925 = vmatpush.bf16.msra.mxu0 %v7892
        %7926 = vmatpush.bf16.msra.mxu0 %v7890
        %7927 = vmatpush.bf16.msra.mxu0 %v7888
        %7928 = vmatpush.bf16.msra.mxu0 %v7886
        %7929 = vmatpush.bf16.msra.mxu0 %v7884
        %7930 = vmatpush.bf16.msra.mxu0 %v7882
        %7931 = vmatpush.bf16.msra.mxu0 %v7880
        %7932 = vmatmul.bf16.gmra.mxu0 %v7829
        %v7933 = vpop.f32.mrf.mxu0
        %v7934 = vadd.f32 0.0, %v7933
        %v7935 = vpop.f32.mrf.mxu0
        %7936 = vdwg.mxu0
        %v7937 = vadd.f32 %v7807, %v7921
        %v7938 = vadd.f32 %v7808, %v7934
        %v7939 = vld [vmem:[%s9] sm:$0x3]
        %v7941 = vperm.slane %v7939, 0
        %v7942 = vperm.slane %v7939, 1
        %v7945 = vadd.f32 %v7937, %v7941
        %v7946 = vadd.f32 %v7938, %v7942
        %v7947 = vmax.f32 %v7945, 0.0
        %v7948 = vmax.f32 %v7946, 0.0
        %v7949 = vsel %vm4327, %v7947, 0.0
        %v7950 = vrot.slane %v7949, 4
        %v7951 = vadd.f32 %v7949, %v7950
        %v7952 = vrot.slane %v7951, 2
        %v7953 = vadd.f32 %v7951, %v7952
        %v7954 = vrot.slane %v7953, 1
        %v7955 = vadd.f32 %v7953, %v7954
        %v7956 = vsel %vm4327, %v7948, 0.0
        %v7957 = vrot.slane %v7956, 4
        %v7958 = vadd.f32 %v7956, %v7957
        %v7959 = vrot.slane %v7958, 2
        %v7960 = vadd.f32 %v7958, %v7959
        %v7961 = vrot.slane %v7960, 1
        %v7962 = vadd.f32 %v7960, %v7961
        %v7963 = vadd.f32 %v7955, 0.0
        %v7964 = vadd.f32 %v7962, 0.0
        %v7967 = vrot.slane %v7947, 4
        %v7968 = vrot.slane %v7948, 4
        %v7971 = vsel %vm4327, %v7967, 0.0
        %v7972 = vrot.slane %v7971, 4
        %v7973 = vadd.f32 %v7971, %v7972
        %v7974 = vrot.slane %v7973, 2
        %v7975 = vadd.f32 %v7973, %v7974
        %v7976 = vrot.slane %v7975, 1
        %v7977 = vadd.f32 %v7975, %v7976
        %v7978 = vsel %vm4327, %v7968, 0.0
        %v7979 = vrot.slane %v7978, 4
        %v7980 = vadd.f32 %v7978, %v7979
        %v7981 = vrot.slane %v7980, 2
        %v7982 = vadd.f32 %v7980, %v7981
        %v7983 = vrot.slane %v7982, 1
        %v7984 = vadd.f32 %v7982, %v7983
        %v7985 = vadd.f32 %v7963, %v7977
        %v7986 = vadd.f32 %v7964, %v7984
        %v7987 = vmul.f32 %v7985, 0.25
        %v7988 = vmul.f32 %v7986, 0.25
        %v7991 = vrot.slane %v7988, 7
        %v7992 = vsel %vm4371, %v7987, %v7991
        %s7994 = scalar_lea.vmem [#allocation8], 1
        %7995 = vst.msk [vmem:[%s7994] ss:$2 sm:$0x3] %vm4377, %v7992
        %v7996 = vld [vmem:[#allocation8] sm:$0xf]
        %7998 = vst [vmem:[#allocation1] ss:$4 sm:$0xff] %v7996
        %v7999 = vld.sshfl [vmem:[#allocation1] sm:$0xff pattern:$0x73625140]
        %v8000 = vld.sshfl [vmem:[#allocation1 + $0x8] sm:$0xff pattern:$0x73625140]
        %v8003 = vpack.c.bf16 %v7999, %v7999
        %v8004 = vpack.c.bf16 %v8000, %v8000
        %v8005 = vld [vmem:[%s10] sm:$0xf]
        %v8006 = vld [vmem:[%s10 + $0x4] sm:$0xf]
        %v8007 = vld [vmem:[%s10 + $0x8] sm:$0xf]
        %v8008 = vld [vmem:[%s10 + $0xc] sm:$0xf]
        %v8009 = vld [vmem:[%s10 + $0x10] sm:$0xf]
        %v8010 = vld [vmem:[%s10 + $0x14] sm:$0xf]
        %v8011 = vld [vmem:[%s10 + $0x18] sm:$0xf]
        %v8012 = vld [vmem:[%s10 + $0x1c] sm:$0xf]
        %v8013 = vld [vmem:[%s10 + $0x20] sm:$0xf]
        %v8014 = vld [vmem:[%s10 + $0x24] sm:$0xf]
        %v8015 = vld [vmem:[%s10 + $0x28] sm:$0xf]
        %v8016 = vld [vmem:[%s10 + $0x2c] sm:$0xf]
        %v8017 = vld [vmem:[%s10 + $0x30] sm:$0xf]
        %v8018 = vld [vmem:[%s10 + $0x34] sm:$0xf]
        %v8019 = vld [vmem:[%s10 + $0x38] sm:$0xf]
        %v8020 = vld [vmem:[%s10 + $0x3c] sm:$0xf]
        %v8021 = vld [vmem:[%s10 + $0x40] sm:$0xf]
        %v8022 = vld [vmem:[%s10 + $0x44] sm:$0xf]
        %v8023 = vld [vmem:[%s10 + $0x48] sm:$0xf]
        %v8024 = vld [vmem:[%s10 + $0x4c] sm:$0xf]
        %v8025 = vld [vmem:[%s10 + $0x50] sm:$0xf]
        %v8026 = vld [vmem:[%s10 + $0x54] sm:$0xf]
        %v8027 = vld [vmem:[%s10 + $0x58] sm:$0xf]
        %v8028 = vld [vmem:[%s10 + $0x5c] sm:$0xf]
        %v8029 = vld [vmem:[%s10 + $0x60] sm:$0xf]
        %v8030 = vld [vmem:[%s10 + $0x64] sm:$0xf]
        %v8031 = vld [vmem:[%s10 + $0x68] sm:$0xf]
        %v8032 = vld [vmem:[%s10 + $0x6c] sm:$0xf]
        %v8033 = vld [vmem:[%s10 + $0x70] sm:$0xf]
        %v8034 = vld [vmem:[%s10 + $0x74] sm:$0xf]
        %v8035 = vld [vmem:[%s10 + $0x78] sm:$0xf]
        %v8036 = vld [vmem:[%s10 + $0x7c] sm:$0xf]
        %v8037 = vld [vmem:[%s11] sm:$0x1]
        %v8039 = vperm.slane %v8037, 0
        %v8073 = vunpack.c.l.b16 %v8005
        %v8074 = vunpack.c.l.b16 %v8006
        %v8075 = vunpack.c.l.b16 %v8007
        %v8076 = vunpack.c.l.b16 %v8008
        %v8077 = vunpack.c.l.b16 %v8009
        %v8078 = vunpack.c.l.b16 %v8010
        %v8079 = vunpack.c.l.b16 %v8011
        %v8080 = vunpack.c.l.b16 %v8012
        %v8081 = vunpack.c.l.b16 %v8013
        %v8082 = vunpack.c.l.b16 %v8014
        %v8083 = vunpack.c.l.b16 %v8015
        %v8084 = vunpack.c.l.b16 %v8016
        %v8085 = vunpack.c.l.b16 %v8017
        %v8086 = vunpack.c.l.b16 %v8018
        %v8087 = vunpack.c.l.b16 %v8019
        %v8088 = vunpack.c.l.b16 %v8020
        %v8089 = vunpack.c.l.b16 %v8021
        %v8090 = vunpack.c.l.b16 %v8022
        %v8091 = vunpack.c.l.b16 %v8023
        %v8092 = vunpack.c.l.b16 %v8024
        %v8093 = vunpack.c.l.b16 %v8025
        %v8094 = vunpack.c.l.b16 %v8026
        %v8095 = vunpack.c.l.b16 %v8027
        %v8096 = vunpack.c.l.b16 %v8028
        %v8097 = vunpack.c.l.b16 %v8029
        %v8098 = vunpack.c.l.b16 %v8030
        %v8099 = vunpack.c.l.b16 %v8031
        %v8100 = vunpack.c.l.b16 %v8032
        %v8101 = vunpack.c.l.b16 %v8033
        %v8102 = vunpack.c.l.b16 %v8034
        %v8103 = vunpack.c.l.b16 %v8035
        %v8104 = vunpack.c.l.b16 %v8036
        %v8105 = vpack.c.b16 %v8074, %v8073
        %v8106 = vpack.c.b16 %v8076, %v8075
        %v8107 = vpack.c.b16 %v8078, %v8077
        %v8108 = vpack.c.b16 %v8080, %v8079
        %v8109 = vpack.c.b16 %v8082, %v8081
        %v8110 = vpack.c.b16 %v8084, %v8083
        %v8111 = vpack.c.b16 %v8086, %v8085
        %v8112 = vpack.c.b16 %v8088, %v8087
        %v8113 = vpack.c.b16 %v8090, %v8089
        %v8114 = vpack.c.b16 %v8092, %v8091
        %v8115 = vpack.c.b16 %v8094, %v8093
        %v8116 = vpack.c.b16 %v8096, %v8095
        %v8117 = vpack.c.b16 %v8098, %v8097
        %v8118 = vpack.c.b16 %v8100, %v8099
        %v8119 = vpack.c.b16 %v8102, %v8101
        %v8120 = vpack.c.b16 %v8104, %v8103
        %8137 = vmatpush.bf16.msra.mxu0 %v8112
        %8138 = vmatpush.bf16.msra.mxu0 %v8111
        %8139 = vmatpush.bf16.msra.mxu0 %v8110
        %8140 = vmatpush.bf16.msra.mxu0 %v8109
        %8141 = vmatpush.bf16.msra.mxu0 %v8108
        %8142 = vmatpush.bf16.msra.mxu0 %v8107
        %8143 = vmatpush.bf16.msra.mxu0 %v8106
        %8144 = vmatpush.bf16.msra.mxu0 %v8105
        %8145 = vmatmul.bf16.gmra.mxu0 %v8003
        %v8146 = vpop.f32.mrf.mxu0
        %v8147 = vadd.f32 %v8039, %v8146
        %v8148 = vpop.f32.mrf.mxu0
        %8149 = vdwg.mxu0
        %8150 = vmatpush.bf16.msra.mxu0 %v8120
        %8151 = vmatpush.bf16.msra.mxu0 %v8119
        %8152 = vmatpush.bf16.msra.mxu0 %v8118
        %8153 = vmatpush.bf16.msra.mxu0 %v8117
        %8154 = vmatpush.bf16.msra.mxu0 %v8116
        %8155 = vmatpush.bf16.msra.mxu0 %v8115
        %8156 = vmatpush.bf16.msra.mxu0 %v8114
        %8157 = vmatpush.bf16.msra.mxu0 %v8113
        %8158 = vmatmul.bf16.gmra.mxu0 %v8004
        %v8159 = vpop.f32.mrf.mxu0
        %v8160 = vadd.f32 %v8147, %v8159
        %v8161 = vpop.f32.mrf.mxu0
        %8162 = vdwg.mxu0
        %v8163 = vld [vmem:[%s536] sm:$0x3]
        %v8164 = vpack.c.bf16 %v8163, %v8163
        %v8165 = vld [vmem:[%s12] sm:$0x7]
        %v8166 = vld [vmem:[%s13] sm:$0x1]
        %v8168 = vperm.slane %v8166, 0
        %vm8170 = vcmask 48128
        %v8172 = vsel %vm8170, %v8164, 0
        %vm8174 = vcmask 1042432
        %v8176 = vsel %vm8174, %v8165, 0
        %8178 = vmatpush.bf16.msra.mxu0 0
        %8179 = vmatpush.bf16.msra.mxu0 0
        %8180 = vmatpush.bf16.msra.mxu0 0
        %8181 = vmatpush.bf16.msra.mxu0 0
        %8182 = vmatpush.bf16.msra.mxu0 0
        %8183 = vmatpush.bf16.msra.mxu0 0
        %8184 = vmatpush.bf16.msra.mxu0 0
        %8185 = vmatpush.bf16.msra.mxu0 %v8176
        %8186 = vmatmul.bf16.gmra.mxu0 %v8172
        %v8187 = vpop.f32.mrf.mxu0
        %v8188 = vadd.f32 %v8168, %v8187
        %v8189 = vpop.f32.mrf.mxu0
        %8190 = vdwg.mxu0
        %v8191 = vmax.f32 %v8188, 0.0
        %v8192 = vpack.c.bf16 %v8191, %v8191
        %v8193 = vld [vmem:[%s14] sm:$0xf]
        %v8194 = vld [vmem:[%s14 + $0x4] sm:$0xf]
        %v8195 = vld [vmem:[%s14 + $0x8] sm:$0xf]
        %v8196 = vld [vmem:[%s14 + $0xc] sm:$0xf]
        %v8197 = vld [vmem:[%s15] sm:$0x1]
        %v8199 = vperm.slane %v8197, 0
        %v8205 = vunpack.c.l.b16 %v8193
        %v8206 = vunpack.c.l.b16 %v8194
        %v8207 = vunpack.c.l.b16 %v8195
        %v8208 = vunpack.c.l.b16 %v8196
        %v8209 = vpack.c.b16 %v8206, %v8205
        %v8210 = vpack.c.b16 %v8208, %v8207
        %v8214 = vsel %vm801, %v8192, 0
        %8216 = vmatpush.bf16.msra.mxu0 0
        %8217 = vmatpush.bf16.msra.mxu0 0
        %8218 = vmatpush.bf16.msra.mxu0 0
        %8219 = vmatpush.bf16.msra.mxu0 0
        %8220 = vmatpush.bf16.msra.mxu0 0
        %8221 = vmatpush.bf16.msra.mxu0 0
        %8222 = vmatpush.bf16.msra.mxu0 %v8210
        %8223 = vmatpush.bf16.msra.mxu0 %v8209
        %8224 = vmatmul.bf16.gmra.mxu0 %v8214
        %v8225 = vpop.f32.mrf.mxu0
        %v8226 = vadd.f32 %v8199, %v8225
        %v8227 = vpop.f32.mrf.mxu0
        %8228 = vdwg.mxu0
        %v8229 = vmul.f32 %v8226, 0.2
        %v8230 = vadd.f32 %v8160, %v8229
        %v8231 = vmul.f32 %v8230, %v8230
        %v8232 = vsel %vm4327, %v8231, 0.0
        %8233 = vadd.xlane.f32.xlu0 %v8232
        %v8234 = vpop.xlane.xlu0 %8233
        %v8235 = vmax.f32 %v8234, 1e-24
        %v8236 = vrsqrt.pop %v8235
        %v8237 = vmul.f32 %v8236, %v8235
        %v8238 = vmul.f32 %v8237, %v8236
        %v8239 = vmul.f32 0.5, %v8238
        %v8240 = vsub.f32 1.5, %v8239
        %v8241 = vmul.f32 %v8236, %v8240
        %vm8242 = vweird.f32 %v8235
        %vm8243 = vweird.f32 %v8236
        %vm8244 = vmor %vm8242, %vm8243
        %v8245 = vsel %vm8244, %v8236, %v8241
        %v8246 = vmul.f32 %v8230, %v8245
        %8247 = vst [vmem:[%s527] sm:$0x3] %v8246
        %s8248 = sand.u32 %s384, 1
        %s8249 = scalar_lea.sflag [#allocation10], %s8248
        %s8250 = sand.u32 %s384, 1
        %s8251 = smul.addr %s8250, 2
        %s8252 = scalar_lea.vmem [#allocation9], %s8251
        // Predicated region
        $region85: #{shuttlecock_forward.1} parent=83 // pred_check
          %p8253 = pneg %p394
        $region86: #{shuttlecock_forward.1} parent=83 // pred_check_branch
          %8255 = sbr.rel (%p8253) target = $region88
        $region87: #{shuttlecock_forward.1} parent=83 // pred_region
          %8257 = vsyncadd %s8249, 0
          %s8258 = smul.addr %s30, 2
          %s8259 = scalar_lea.hbm %s16, %s8258
          %s8261 = sshll.u32 %s8252, 4
          %s8262 = int_to_ptr.vmem [resolvable:$true] %s8261
          %s8263 = sshll.u32 %s8259, 4
          %s8264 = int_to_ptr.hbm [resolvable:$true] %s8263
          %8266 = dma.vmem_to_hbm [thread:$0]  %s8262, 32, %s8264, %s8249
        $region88: #{shuttlecock_forward.1} parent=83 // pred_fallthru
          _
      $region84: #{shuttlecock_forward.1} parent=5 // pred_fallthru
        _
      %p8267 = scmp.le.s32.totalorder 2, %s25
      // Predicated region
      $region89: #{shuttlecock_forward.1} parent=5 // pred_check
        %p8268 = pneg %p8267
      $region90: #{shuttlecock_forward.1} parent=5 // pred_check_branch
        %8270 = sbr.rel (%p8268) target = $region92
      $region91: #{shuttlecock_forward.1} parent=5 // pred_region
        %s8271 = ssub.s32 %s25, 2
        // Predicated region
        $region93: #{shuttlecock_forward.1} parent=91 // pred_check
          %p8272 = pneg %p400
        $region94: #{shuttlecock_forward.1} parent=91 // pred_check_branch
          %8274 = sbr.rel (%p8272) target = $region96
        $region95: #{shuttlecock_forward.1} parent=91 // pred_region
          %s8275 = sand.u32 %s385, 1
          %s8276 = scalar_lea.sflag [#allocation10], %s8275
          %s8277 = sand.u32 %s385, 1
          %s8278 = smul.addr %s8277, 2
          %s8279 = scalar_lea.vmem [#allocation9], %s8278
          %8281 = dma.done %s8276, 32
        $region96: #{shuttlecock_forward.1} parent=91 // pred_fallthru
          _
      $region92: #{shuttlecock_forward.1} parent=5 // pred_fallthru
        _
    $region6: #{shuttlecock_forward.1} parent=1 // loop_footer
      %s29 = sadd.s32 1, %s25
    $region7: #{shuttlecock_forward.1} parent=1 // loop_footer_branch
      %24 = sbr.rel target = $region3
    $region8: #{shuttlecock_forward.1} parent=1 // loop_exit
      _
    %8282 = vsyncpa [#allocation10], 1
    %s8283 = scalar_lea.sflag [#allocation10], 1
    %8284 = vsyncpa %s8283, 1

</llo_original>
